<compile_context>
chip_gen: v5e
topology: v5e:2x2
jax: 0.10.0
libtpu: 0.0.40
codegen_flags: <defaults>
</compile_context>

<pallas_src>
import math

import numpy as np

import jax
import jax.numpy as jnp
from jax.experimental import pallas as pl
from jax.experimental.pallas import tpu as pltpu


# (out_channels, kh, kw, has_bias) for f0..f3  (static config of the module)
_LAYER_CFG = (
    (15, 8, 8, True),
    (19, 12, 12, False),
    (63, 6, 6, False),
    (10, 5, 5, True),
)

_TB = 8  # samples per grid step; per-sample work is unrolled inside the kernel


# ---------------------------------------------------------------------------
# Fused network kernel: 4 convs (banded-GEMM form) + biases + log-softmax
# ---------------------------------------------------------------------------
def _fused_net_kernel(x_ref, w0_ref, b0_ref, w1_ref, w2_ref, w3_ref, b3_ref,
                      o_ref):
    """Runs the whole network for one batch tile, entirely in VMEM.

    x_ref : (tb, 28, 28)      input images, flat (H, W*C) layout with C=1
    wL_ref: (KH, W*C, OW*OC)  banded per-kernel-row weight matrices
    bL_ref: (1, OW*OC)        flattened bias rows (layers 0 and 3 only)
    o_ref : (tb, 10)          per-sample log-probabilities
    """
    tb = x_ref.shape[0]
    # Per-sample activations, each kept 2-D as (H, W*C).
    acts = [x_ref[b] for b in range(tb)]

    layers = ((w0_ref, b0_ref), (w1_ref, None), (w2_ref, None),
              (w3_ref, b3_ref))
    for w_ref, b_ref in layers:
        kh = w_ref.shape[0]
        oh = acts[0].shape[0] - kh + 1          # valid conv, stride 1, square
        accs = [None] * tb
        for i in range(kh):                     # conv = sum over kernel rows
            w_i = w_ref[i]                      # (W*C, OW*OC), loaded once
            for b in range(tb):
                part = jnp.dot(acts[b][i:i + oh, :], w_i,
                               preferred_element_type=jnp.float32)
                accs[b] = part if accs[b] is None else accs[b] + part
        if b_ref is not None:
            bias = b_ref[...]                   # (1, OW*OC)
            accs = [acc + bias for acc in accs]
        acts = accs                             # (OH, OW*OC) == next (H, W*C)

    # Final activations are (1, 10) logits per sample: fused log-softmax.
    for b in range(tb):
        logits = acts[b]
        m = jnp.max(logits, axis=-1, keepdims=True)
        s = logits - m
        lse = jnp.log(jnp.sum(jnp.exp(s), axis=-1, keepdims=True))
        o_ref[pl.ds(b, 1), :] = s - lse


@jax.jit
def forward(x, prep):
    """x: (B, 784) f32 -> (B, 10) log-probabilities (mirrors the nn.Module)."""
    B = x.shape[0]
    x3 = x.reshape(B, 28, 28)                   # metadata-only reshape in XLA
    tb = min(_TB, B)
    w0, b0, w1, w2, w3, b3 = prep
    return pl.pallas_call(
        _fused_net_kernel,
        out_shape=jax.ShapeDtypeStruct((B, 10), jnp.float32),
        grid=(pl.cdiv(B, tb),),
        in_specs=[
            pl.BlockSpec((tb, 28, 28), lambda n: (n, 0, 0)),
            # Grid-invariant weights / biases: constant block index, so the
            # pipeliner fetches them into VMEM once and keeps them resident.
            pl.BlockSpec(w0.shape, lambda n: (0, 0, 0)),
            pl.BlockSpec(b0.shape, lambda n: (0, 0)),
            pl.BlockSpec(w1.shape, lambda n: (0, 0, 0)),
            pl.BlockSpec(w2.shape, lambda n: (0, 0, 0)),
            pl.BlockSpec(w3.shape, lambda n: (0, 0, 0)),
            pl.BlockSpec(b3.shape, lambda n: (0, 0)),
        ],
        out_specs=pl.BlockSpec((tb, 10), lambda n: (n, 0)),
        compiler_params=pltpu.CompilerParams(
            dimension_semantics=("parallel",),      # v7x: 2 TCs split tiles
            vmem_limit_bytes=32 * 1024 * 1024,      # headroom on v5e
        ),
    )(x3, w0, b0, w1, w2, w3, b3)


# ---------------------------------------------------------------------------
# Parameter init (deterministic, PyTorch-default-style uniform)
# ---------------------------------------------------------------------------
def init_params(seed=42):
    keys = jax.random.split(jax.random.PRNGKey(seed), len(_LAYER_CFG))
    raw = []
    ic = 1
    for key, (oc, kh, kw, has_bias) in zip(keys, _LAYER_CFG):
        bound = 1.0 / math.sqrt(ic * kh * kw)
        kw_key, kb_key = jax.random.split(key)
        w = jax.random.uniform(kw_key, (oc, ic, kh, kw), jnp.float32,
                               -bound, bound)
        b = (jax.random.uniform(kb_key, (oc,), jnp.float32, -bound, bound)
             if has_bias else None)
        raw.append((w, b))
        ic = oc
    return raw


def prepare_params(raw):
    """Host-side, one-time conversion of conv weights into banded GEMM form.

    For a valid conv with weight w (OC, C, KH, KW) applied to an activation
    stored flat as (H, W*C) (minor axis = (w, c)), the kernel computes
        out[oh, ow*OC + oc] = sum_i (act[oh + i, :] @ A[i])[ow*OC + oc]
    with A[i][w*C + c, ow*OC + oc] = w[oc, c, i, w - ow] for 0 <= w - ow < KW
    (zero otherwise).  The output is again flat (OH, OW*OC), ready for the
    next layer, so no layout work is ever needed inside the kernel.
    """
    prep = []
    h = w_sz = 28
    for (w, b), _cfg in zip(raw, _LAYER_CFG):
        w_np = np.asarray(w)                    # (OC, C, KH, KW)
        OC, C, KH, KW = w_np.shape
        oh, ow_sz = h - KH + 1, w_sz - KW + 1
        A = np.zeros((KH, w_sz * C, ow_sz * OC), np.float32)
        for i in range(KH):
            for ow in range(ow_sz):
                for j in range(KW):
                    wp = ow + j
                    A[i, wp * C:(wp + 1) * C, ow * OC:(ow + 1) * OC] = \
                        w_np[:, :, i, j].T
        prep.append(jnp.asarray(A))
        if b is not None:
            b_row = np.tile(np.asarray(b), ow_sz).reshape(1, ow_sz * OC)
            prep.append(jnp.asarray(b_row.astype(np.float32)))
        h, w_sz = oh, ow_sz
    return tuple(prep)        # (A0, b0_row, A1, A2, A3, b3_row)


# ---------------------------------------------------------------------------
# Pure-JAX reference for the correctness check
# ---------------------------------------------------------------------------
def _ref_conv2d(x, w, b):
    out = jax.lax.conv_general_dilated(
        x, w, window_strides=(1, 1), padding="VALID",
        dimension_numbers=("NCHW", "OIHW", "NCHW"))
    if b is not None:
        out = out + b.reshape(1, -1, 1, 1)
    return out


def _ref_forward(x, raw):
    B = x.shape[0]
    a = x.reshape(B, 1, 28, 28)
    for (w, b) in raw:
        a = _ref_conv2d(a, w, b)
    return jax.nn.log_softmax(a.reshape(B, 10), axis=1)


if __name__ == "__main__":
    raw = init_params(seed=42)
    prep = prepare_params(raw)
    x = jax.random.normal(jax.random.PRNGKey(0), (2, 784), jnp.float32)

    out = jax.block_until_ready(forward(x, prep))

    ref = _ref_forward(x, raw)
    assert out.shape == (2, 10)
    max_diff = float(jnp.max(jnp.abs(out - ref)))
    # Tolerance covers MXU accumulation-order differences between the banded
    # per-row decomposition and XLA's conv lowering (both f32).
    assert jnp.allclose(out, ref, atol=1e-3, rtol=1e-3), (
        f"mismatch vs reference, max abs diff = {max_diff}")

    print("KERNEL_OK")
</pallas_src>

<mosaic_0001>
module attributes {stable_mosaic.version = 11 : i64} {
  func.func @_fused_net_kernel(%arg0: i32, %arg1: memref<2x28x28xf32, #tpu.memory_space<vmem>>, %arg2: memref<8x28x315xf32, #tpu.memory_space<vmem>>, %arg3: memref<1x315xf32, #tpu.memory_space<vmem>>, %arg4: memref<12x315x190xf32, #tpu.memory_space<vmem>>, %arg5: memref<6x190x315xf32, #tpu.memory_space<vmem>>, %arg6: memref<5x315x10xf32, #tpu.memory_space<vmem>>, %arg7: memref<1x10xf32, #tpu.memory_space<vmem>>, %arg8: memref<2x10xf32, #tpu.memory_space<vmem>>) attributes {dimension_semantics = [#tpu.dimension_semantics<parallel>], iteration_bounds = array<i64: 1>, scalar_prefetch = 0 : i64, scratch_operands = 0 : i64, tpu.core_type = #tpu.core_type<tc>, window_params = [{transform_indices = @transform_0, window_bounds = array<i64: 2, 28, 28>}, {pipeline_mode = #tpu.pipeline_mode<synchronous>, transform_indices = @transform_1, window_bounds = array<i64: 8, 28, 315>}, {pipeline_mode = #tpu.pipeline_mode<synchronous>, transform_indices = @transform_2, window_bounds = array<i64: 1, 315>}, {pipeline_mode = #tpu.pipeline_mode<synchronous>, transform_indices = @transform_3, window_bounds = array<i64: 12, 315, 190>}, {pipeline_mode = #tpu.pipeline_mode<synchronous>, transform_indices = @transform_4, window_bounds = array<i64: 6, 190, 315>}, {pipeline_mode = #tpu.pipeline_mode<synchronous>, transform_indices = @transform_5, window_bounds = array<i64: 5, 315, 10>}, {pipeline_mode = #tpu.pipeline_mode<synchronous>, transform_indices = @transform_6, window_bounds = array<i64: 1, 10>}, {transform_indices = @transform_7, window_bounds = array<i64: 2, 10>}]} {
    %c0 = arith.constant 0 : index
    %c0_0 = arith.constant 0 : index
    %c0_1 = arith.constant 0 : index
    %0 = vector.load %arg1[%c0, %c0_0, %c0_1] : memref<2x28x28xf32, #tpu.memory_space<vmem>>, vector<1x28x28xf32>
    %1 = vector.shape_cast %0 : vector<1x28x28xf32> to vector<28x28xf32>
    %c1 = arith.constant 1 : index
    %c0_2 = arith.constant 0 : index
    %c0_3 = arith.constant 0 : index
    %2 = vector.load %arg1[%c1, %c0_2, %c0_3] : memref<2x28x28xf32, #tpu.memory_space<vmem>>, vector<1x28x28xf32>
    %3 = vector.shape_cast %2 : vector<1x28x28xf32> to vector<28x28xf32>
    %c0_4 = arith.constant 0 : index
    %c0_5 = arith.constant 0 : index
    %c0_6 = arith.constant 0 : index
    %4 = vector.load %arg2[%c0_4, %c0_5, %c0_6] : memref<8x28x315xf32, #tpu.memory_space<vmem>>, vector<1x28x315xf32>
    %5 = vector.shape_cast %4 : vector<1x28x315xf32> to vector<28x315xf32>
    %6 = vector.extract_strided_slice %1 {offsets = [0, 0], sizes = [21, 28], strides = [1, 1]} : vector<28x28xf32> to vector<21x28xf32>
    %cst = arith.constant dense<0.000000e+00> : vector<21x315xf32>
    %7 = tpu.matmul %6, %5, %cst {dimension_numbers = #tpu.dot_dimension_numbers<[1], [0], [0], [1], [0, 0, 1, 1], [], []>} : vector<21x28xf32>, vector<28x315xf32>, vector<21x315xf32> -> vector<21x315xf32>
    %8 = vector.extract_strided_slice %3 {offsets = [0, 0], sizes = [21, 28], strides = [1, 1]} : vector<28x28xf32> to vector<21x28xf32>
    %cst_7 = arith.constant dense<0.000000e+00> : vector<21x315xf32>
    %9 = tpu.matmul %8, %5, %cst_7 {dimension_numbers = #tpu.dot_dimension_numbers<[1], [0], [0], [1], [0, 0, 1, 1], [], []>} : vector<21x28xf32>, vector<28x315xf32>, vector<21x315xf32> -> vector<21x315xf32>
    %c1_8 = arith.constant 1 : index
    %c0_9 = arith.constant 0 : index
    %c0_10 = arith.constant 0 : index
    %10 = vector.load %arg2[%c1_8, %c0_9, %c0_10] : memref<8x28x315xf32, #tpu.memory_space<vmem>>, vector<1x28x315xf32>
    %11 = vector.shape_cast %10 : vector<1x28x315xf32> to vector<28x315xf32>
    %12 = vector.extract_strided_slice %1 {offsets = [1, 0], sizes = [21, 28], strides = [1, 1]} : vector<28x28xf32> to vector<21x28xf32>
    %cst_11 = arith.constant dense<0.000000e+00> : vector<21x315xf32>
    %13 = tpu.matmul %12, %11, %cst_11 {dimension_numbers = #tpu.dot_dimension_numbers<[1], [0], [0], [1], [0, 0, 1, 1], [], []>} : vector<21x28xf32>, vector<28x315xf32>, vector<21x315xf32> -> vector<21x315xf32>
    %14 = arith.addf %7, %13 : vector<21x315xf32>
    %15 = vector.extract_strided_slice %3 {offsets = [1, 0], sizes = [21, 28], strides = [1, 1]} : vector<28x28xf32> to vector<21x28xf32>
    %cst_12 = arith.constant dense<0.000000e+00> : vector<21x315xf32>
    %16 = tpu.matmul %15, %11, %cst_12 {dimension_numbers = #tpu.dot_dimension_numbers<[1], [0], [0], [1], [0, 0, 1, 1], [], []>} : vector<21x28xf32>, vector<28x315xf32>, vector<21x315xf32> -> vector<21x315xf32>
    %17 = arith.addf %9, %16 : vector<21x315xf32>
    %c2 = arith.constant 2 : index
    %c0_13 = arith.constant 0 : index
    %c0_14 = arith.constant 0 : index
    %18 = vector.load %arg2[%c2, %c0_13, %c0_14] : memref<8x28x315xf32, #tpu.memory_space<vmem>>, vector<1x28x315xf32>
    %19 = vector.shape_cast %18 : vector<1x28x315xf32> to vector<28x315xf32>
    %20 = vector.extract_strided_slice %1 {offsets = [2, 0], sizes = [21, 28], strides = [1, 1]} : vector<28x28xf32> to vector<21x28xf32>
    %cst_15 = arith.constant dense<0.000000e+00> : vector<21x315xf32>
    %21 = tpu.matmul %20, %19, %cst_15 {dimension_numbers = #tpu.dot_dimension_numbers<[1], [0], [0], [1], [0, 0, 1, 1], [], []>} : vector<21x28xf32>, vector<28x315xf32>, vector<21x315xf32> -> vector<21x315xf32>
    %22 = arith.addf %14, %21 : vector<21x315xf32>
    %23 = vector.extract_strided_slice %3 {offsets = [2, 0], sizes = [21, 28], strides = [1, 1]} : vector<28x28xf32> to vector<21x28xf32>
    %cst_16 = arith.constant dense<0.000000e+00> : vector<21x315xf32>
    %24 = tpu.matmul %23, %19, %cst_16 {dimension_numbers = #tpu.dot_dimension_numbers<[1], [0], [0], [1], [0, 0, 1, 1], [], []>} : vector<21x28xf32>, vector<28x315xf32>, vector<21x315xf32> -> vector<21x315xf32>
    %25 = arith.addf %17, %24 : vector<21x315xf32>
    %c3 = arith.constant 3 : index
    %c0_17 = arith.constant 0 : index
    %c0_18 = arith.constant 0 : index
    %26 = vector.load %arg2[%c3, %c0_17, %c0_18] : memref<8x28x315xf32, #tpu.memory_space<vmem>>, vector<1x28x315xf32>
    %27 = vector.shape_cast %26 : vector<1x28x315xf32> to vector<28x315xf32>
    %28 = vector.extract_strided_slice %1 {offsets = [3, 0], sizes = [21, 28], strides = [1, 1]} : vector<28x28xf32> to vector<21x28xf32>
    %cst_19 = arith.constant dense<0.000000e+00> : vector<21x315xf32>
    %29 = tpu.matmul %28, %27, %cst_19 {dimension_numbers = #tpu.dot_dimension_numbers<[1], [0], [0], [1], [0, 0, 1, 1], [], []>} : vector<21x28xf32>, vector<28x315xf32>, vector<21x315xf32> -> vector<21x315xf32>
    %30 = arith.addf %22, %29 : vector<21x315xf32>
    %31 = vector.extract_strided_slice %3 {offsets = [3, 0], sizes = [21, 28], strides = [1, 1]} : vector<28x28xf32> to vector<21x28xf32>
    %cst_20 = arith.constant dense<0.000000e+00> : vector<21x315xf32>
    %32 = tpu.matmul %31, %27, %cst_20 {dimension_numbers = #tpu.dot_dimension_numbers<[1], [0], [0], [1], [0, 0, 1, 1], [], []>} : vector<21x28xf32>, vector<28x315xf32>, vector<21x315xf32> -> vector<21x315xf32>
    %33 = arith.addf %25, %32 : vector<21x315xf32>
    %c4 = arith.constant 4 : index
    %c0_21 = arith.constant 0 : index
    %c0_22 = arith.constant 0 : index
    %34 = vector.load %arg2[%c4, %c0_21, %c0_22] : memref<8x28x315xf32, #tpu.memory_space<vmem>>, vector<1x28x315xf32>
    %35 = vector.shape_cast %34 : vector<1x28x315xf32> to vector<28x315xf32>
    %36 = vector.extract_strided_slice %1 {offsets = [4, 0], sizes = [21, 28], strides = [1, 1]} : vector<28x28xf32> to vector<21x28xf32>
    %cst_23 = arith.constant dense<0.000000e+00> : vector<21x315xf32>
    %37 = tpu.matmul %36, %35, %cst_23 {dimension_numbers = #tpu.dot_dimension_numbers<[1], [0], [0], [1], [0, 0, 1, 1], [], []>} : vector<21x28xf32>, vector<28x315xf32>, vector<21x315xf32> -> vector<21x315xf32>
    %38 = arith.addf %30, %37 : vector<21x315xf32>
    %39 = vector.extract_strided_slice %3 {offsets = [4, 0], sizes = [21, 28], strides = [1, 1]} : vector<28x28xf32> to vector<21x28xf32>
    %cst_24 = arith.constant dense<0.000000e+00> : vector<21x315xf32>
    %40 = tpu.matmul %39, %35, %cst_24 {dimension_numbers = #tpu.dot_dimension_numbers<[1], [0], [0], [1], [0, 0, 1, 1], [], []>} : vector<21x28xf32>, vector<28x315xf32>, vector<21x315xf32> -> vector<21x315xf32>
    %41 = arith.addf %33, %40 : vector<21x315xf32>
    %c5 = arith.constant 5 : index
    %c0_25 = arith.constant 0 : index
    %c0_26 = arith.constant 0 : index
    %42 = vector.load %arg2[%c5, %c0_25, %c0_26] : memref<8x28x315xf32, #tpu.memory_space<vmem>>, vector<1x28x315xf32>
    %43 = vector.shape_cast %42 : vector<1x28x315xf32> to vector<28x315xf32>
    %44 = vector.extract_strided_slice %1 {offsets = [5, 0], sizes = [21, 28], strides = [1, 1]} : vector<28x28xf32> to vector<21x28xf32>
    %cst_27 = arith.constant dense<0.000000e+00> : vector<21x315xf32>
    %45 = tpu.matmul %44, %43, %cst_27 {dimension_numbers = #tpu.dot_dimension_numbers<[1], [0], [0], [1], [0, 0, 1, 1], [], []>} : vector<21x28xf32>, vector<28x315xf32>, vector<21x315xf32> -> vector<21x315xf32>
    %46 = arith.addf %38, %45 : vector<21x315xf32>
    %47 = vector.extract_strided_slice %3 {offsets = [5, 0], sizes = [21, 28], strides = [1, 1]} : vector<28x28xf32> to vector<21x28xf32>
    %cst_28 = arith.constant dense<0.000000e+00> : vector<21x315xf32>
    %48 = tpu.matmul %47, %43, %cst_28 {dimension_numbers = #tpu.dot_dimension_numbers<[1], [0], [0], [1], [0, 0, 1, 1], [], []>} : vector<21x28xf32>, vector<28x315xf32>, vector<21x315xf32> -> vector<21x315xf32>
    %49 = arith.addf %41, %48 : vector<21x315xf32>
    %c6 = arith.constant 6 : index
    %c0_29 = arith.constant 0 : index
    %c0_30 = arith.constant 0 : index
    %50 = vector.load %arg2[%c6, %c0_29, %c0_30] : memref<8x28x315xf32, #tpu.memory_space<vmem>>, vector<1x28x315xf32>
    %51 = vector.shape_cast %50 : vector<1x28x315xf32> to vector<28x315xf32>
    %52 = vector.extract_strided_slice %1 {offsets = [6, 0], sizes = [21, 28], strides = [1, 1]} : vector<28x28xf32> to vector<21x28xf32>
    %cst_31 = arith.constant dense<0.000000e+00> : vector<21x315xf32>
    %53 = tpu.matmul %52, %51, %cst_31 {dimension_numbers = #tpu.dot_dimension_numbers<[1], [0], [0], [1], [0, 0, 1, 1], [], []>} : vector<21x28xf32>, vector<28x315xf32>, vector<21x315xf32> -> vector<21x315xf32>
    %54 = arith.addf %46, %53 : vector<21x315xf32>
    %55 = vector.extract_strided_slice %3 {offsets = [6, 0], sizes = [21, 28], strides = [1, 1]} : vector<28x28xf32> to vector<21x28xf32>
    %cst_32 = arith.constant dense<0.000000e+00> : vector<21x315xf32>
    %56 = tpu.matmul %55, %51, %cst_32 {dimension_numbers = #tpu.dot_dimension_numbers<[1], [0], [0], [1], [0, 0, 1, 1], [], []>} : vector<21x28xf32>, vector<28x315xf32>, vector<21x315xf32> -> vector<21x315xf32>
    %57 = arith.addf %49, %56 : vector<21x315xf32>
    %c7 = arith.constant 7 : index
    %c0_33 = arith.constant 0 : index
    %c0_34 = arith.constant 0 : index
    %58 = vector.load %arg2[%c7, %c0_33, %c0_34] : memref<8x28x315xf32, #tpu.memory_space<vmem>>, vector<1x28x315xf32>
    %59 = vector.shape_cast %58 : vector<1x28x315xf32> to vector<28x315xf32>
    %60 = vector.extract_strided_slice %1 {offsets = [7, 0], sizes = [21, 28], strides = [1, 1]} : vector<28x28xf32> to vector<21x28xf32>
    %cst_35 = arith.constant dense<0.000000e+00> : vector<21x315xf32>
    %61 = tpu.matmul %60, %59, %cst_35 {dimension_numbers = #tpu.dot_dimension_numbers<[1], [0], [0], [1], [0, 0, 1, 1], [], []>} : vector<21x28xf32>, vector<28x315xf32>, vector<21x315xf32> -> vector<21x315xf32>
    %62 = arith.addf %54, %61 : vector<21x315xf32>
    %63 = vector.extract_strided_slice %3 {offsets = [7, 0], sizes = [21, 28], strides = [1, 1]} : vector<28x28xf32> to vector<21x28xf32>
    %cst_36 = arith.constant dense<0.000000e+00> : vector<21x315xf32>
    %64 = tpu.matmul %63, %59, %cst_36 {dimension_numbers = #tpu.dot_dimension_numbers<[1], [0], [0], [1], [0, 0, 1, 1], [], []>} : vector<21x28xf32>, vector<28x315xf32>, vector<21x315xf32> -> vector<21x315xf32>
    %65 = arith.addf %57, %64 : vector<21x315xf32>
    %c0_37 = arith.constant 0 : index
    %c0_38 = arith.constant 0 : index
    %66 = vector.load %arg3[%c0_37, %c0_38] : memref<1x315xf32, #tpu.memory_space<vmem>>, vector<1x315xf32>
    %67 = vector.broadcast %66 : vector<1x315xf32> to vector<21x315xf32>
    %68 = arith.addf %62, %67 : vector<21x315xf32>
    %69 = vector.broadcast %66 : vector<1x315xf32> to vector<21x315xf32>
    %70 = arith.addf %65, %69 : vector<21x315xf32>
    %c0_39 = arith.constant 0 : index
    %c0_40 = arith.constant 0 : index
    %c0_41 = arith.constant 0 : index
    %71 = vector.load %arg4[%c0_39, %c0_40, %c0_41] : memref<12x315x190xf32, #tpu.memory_space<vmem>>, vector<1x315x190xf32>
    %72 = vector.shape_cast %71 : vector<1x315x190xf32> to vector<315x190xf32>
    %73 = vector.extract_strided_slice %68 {offsets = [0, 0], sizes = [10, 315], strides = [1, 1]} : vector<21x315xf32> to vector<10x315xf32>
    %cst_42 = arith.constant dense<0.000000e+00> : vector<10x190xf32>
    %74 = tpu.matmul %73, %72, %cst_42 {dimension_numbers = #tpu.dot_dimension_numbers<[1], [0], [0], [1], [0, 0, 1, 1], [], []>} : vector<10x315xf32>, vector<315x190xf32>, vector<10x190xf32> -> vector<10x190xf32>
    %75 = vector.extract_strided_slice %70 {offsets = [0, 0], sizes = [10, 315], strides = [1, 1]} : vector<21x315xf32> to vector<10x315xf32>
    %cst_43 = arith.constant dense<0.000000e+00> : vector<10x190xf32>
    %76 = tpu.matmul %75, %72, %cst_43 {dimension_numbers = #tpu.dot_dimension_numbers<[1], [0], [0], [1], [0, 0, 1, 1], [], []>} : vector<10x315xf32>, vector<315x190xf32>, vector<10x190xf32> -> vector<10x190xf32>
    %c1_44 = arith.constant 1 : index
    %c0_45 = arith.constant 0 : index
    %c0_46 = arith.constant 0 : index
    %77 = vector.load %arg4[%c1_44, %c0_45, %c0_46] : memref<12x315x190xf32, #tpu.memory_space<vmem>>, vector<1x315x190xf32>
    %78 = vector.shape_cast %77 : vector<1x315x190xf32> to vector<315x190xf32>
    %79 = vector.extract_strided_slice %68 {offsets = [1, 0], sizes = [10, 315], strides = [1, 1]} : vector<21x315xf32> to vector<10x315xf32>
    %cst_47 = arith.constant dense<0.000000e+00> : vector<10x190xf32>
    %80 = tpu.matmul %79, %78, %cst_47 {dimension_numbers = #tpu.dot_dimension_numbers<[1], [0], [0], [1], [0, 0, 1, 1], [], []>} : vector<10x315xf32>, vector<315x190xf32>, vector<10x190xf32> -> vector<10x190xf32>
    %81 = arith.addf %74, %80 : vector<10x190xf32>
    %82 = vector.extract_strided_slice %70 {offsets = [1, 0], sizes = [10, 315], strides = [1, 1]} : vector<21x315xf32> to vector<10x315xf32>
    %cst_48 = arith.constant dense<0.000000e+00> : vector<10x190xf32>
    %83 = tpu.matmul %82, %78, %cst_48 {dimension_numbers = #tpu.dot_dimension_numbers<[1], [0], [0], [1], [0, 0, 1, 1], [], []>} : vector<10x315xf32>, vector<315x190xf32>, vector<10x190xf32> -> vector<10x190xf32>
    %84 = arith.addf %76, %83 : vector<10x190xf32>
    %c2_49 = arith.constant 2 : index
    %c0_50 = arith.constant 0 : index
    %c0_51 = arith.constant 0 : index
    %85 = vector.load %arg4[%c2_49, %c0_50, %c0_51] : memref<12x315x190xf32, #tpu.memory_space<vmem>>, vector<1x315x190xf32>
    %86 = vector.shape_cast %85 : vector<1x315x190xf32> to vector<315x190xf32>
    %87 = vector.extract_strided_slice %68 {offsets = [2, 0], sizes = [10, 315], strides = [1, 1]} : vector<21x315xf32> to vector<10x315xf32>
    %cst_52 = arith.constant dense<0.000000e+00> : vector<10x190xf32>
    %88 = tpu.matmul %87, %86, %cst_52 {dimension_numbers = #tpu.dot_dimension_numbers<[1], [0], [0], [1], [0, 0, 1, 1], [], []>} : vector<10x315xf32>, vector<315x190xf32>, vector<10x190xf32> -> vector<10x190xf32>
    %89 = arith.addf %81, %88 : vector<10x190xf32>
    %90 = vector.extract_strided_slice %70 {offsets = [2, 0], sizes = [10, 315], strides = [1, 1]} : vector<21x315xf32> to vector<10x315xf32>
    %cst_53 = arith.constant dense<0.000000e+00> : vector<10x190xf32>
    %91 = tpu.matmul %90, %86, %cst_53 {dimension_numbers = #tpu.dot_dimension_numbers<[1], [0], [0], [1], [0, 0, 1, 1], [], []>} : vector<10x315xf32>, vector<315x190xf32>, vector<10x190xf32> -> vector<10x190xf32>
    %92 = arith.addf %84, %91 : vector<10x190xf32>
    %c3_54 = arith.constant 3 : index
    %c0_55 = arith.constant 0 : index
    %c0_56 = arith.constant 0 : index
    %93 = vector.load %arg4[%c3_54, %c0_55, %c0_56] : memref<12x315x190xf32, #tpu.memory_space<vmem>>, vector<1x315x190xf32>
    %94 = vector.shape_cast %93 : vector<1x315x190xf32> to vector<315x190xf32>
    %95 = vector.extract_strided_slice %68 {offsets = [3, 0], sizes = [10, 315], strides = [1, 1]} : vector<21x315xf32> to vector<10x315xf32>
    %cst_57 = arith.constant dense<0.000000e+00> : vector<10x190xf32>
    %96 = tpu.matmul %95, %94, %cst_57 {dimension_numbers = #tpu.dot_dimension_numbers<[1], [0], [0], [1], [0, 0, 1, 1], [], []>} : vector<10x315xf32>, vector<315x190xf32>, vector<10x190xf32> -> vector<10x190xf32>
    %97 = arith.addf %89, %96 : vector<10x190xf32>
    %98 = vector.extract_strided_slice %70 {offsets = [3, 0], sizes = [10, 315], strides = [1, 1]} : vector<21x315xf32> to vector<10x315xf32>
    %cst_58 = arith.constant dense<0.000000e+00> : vector<10x190xf32>
    %99 = tpu.matmul %98, %94, %cst_58 {dimension_numbers = #tpu.dot_dimension_numbers<[1], [0], [0], [1], [0, 0, 1, 1], [], []>} : vector<10x315xf32>, vector<315x190xf32>, vector<10x190xf32> -> vector<10x190xf32>
    %100 = arith.addf %92, %99 : vector<10x190xf32>
    %c4_59 = arith.constant 4 : index
    %c0_60 = arith.constant 0 : index
    %c0_61 = arith.constant 0 : index
    %101 = vector.load %arg4[%c4_59, %c0_60, %c0_61] : memref<12x315x190xf32, #tpu.memory_space<vmem>>, vector<1x315x190xf32>
    %102 = vector.shape_cast %101 : vector<1x315x190xf32> to vector<315x190xf32>
    %103 = vector.extract_strided_slice %68 {offsets = [4, 0], sizes = [10, 315], strides = [1, 1]} : vector<21x315xf32> to vector<10x315xf32>
    %cst_62 = arith.constant dense<0.000000e+00> : vector<10x190xf32>
    %104 = tpu.matmul %103, %102, %cst_62 {dimension_numbers = #tpu.dot_dimension_numbers<[1], [0], [0], [1], [0, 0, 1, 1], [], []>} : vector<10x315xf32>, vector<315x190xf32>, vector<10x190xf32> -> vector<10x190xf32>
    %105 = arith.addf %97, %104 : vector<10x190xf32>
    %106 = vector.extract_strided_slice %70 {offsets = [4, 0], sizes = [10, 315], strides = [1, 1]} : vector<21x315xf32> to vector<10x315xf32>
    %cst_63 = arith.constant dense<0.000000e+00> : vector<10x190xf32>
    %107 = tpu.matmul %106, %102, %cst_63 {dimension_numbers = #tpu.dot_dimension_numbers<[1], [0], [0], [1], [0, 0, 1, 1], [], []>} : vector<10x315xf32>, vector<315x190xf32>, vector<10x190xf32> -> vector<10x190xf32>
    %108 = arith.addf %100, %107 : vector<10x190xf32>
    %c5_64 = arith.constant 5 : index
    %c0_65 = arith.constant 0 : index
    %c0_66 = arith.constant 0 : index
    %109 = vector.load %arg4[%c5_64, %c0_65, %c0_66] : memref<12x315x190xf32, #tpu.memory_space<vmem>>, vector<1x315x190xf32>
    %110 = vector.shape_cast %109 : vector<1x315x190xf32> to vector<315x190xf32>
    %111 = vector.extract_strided_slice %68 {offsets = [5, 0], sizes = [10, 315], strides = [1, 1]} : vector<21x315xf32> to vector<10x315xf32>
    %cst_67 = arith.constant dense<0.000000e+00> : vector<10x190xf32>
    %112 = tpu.matmul %111, %110, %cst_67 {dimension_numbers = #tpu.dot_dimension_numbers<[1], [0], [0], [1], [0, 0, 1, 1], [], []>} : vector<10x315xf32>, vector<315x190xf32>, vector<10x190xf32> -> vector<10x190xf32>
    %113 = arith.addf %105, %112 : vector<10x190xf32>
    %114 = vector.extract_strided_slice %70 {offsets = [5, 0], sizes = [10, 315], strides = [1, 1]} : vector<21x315xf32> to vector<10x315xf32>
    %cst_68 = arith.constant dense<0.000000e+00> : vector<10x190xf32>
    %115 = tpu.matmul %114, %110, %cst_68 {dimension_numbers = #tpu.dot_dimension_numbers<[1], [0], [0], [1], [0, 0, 1, 1], [], []>} : vector<10x315xf32>, vector<315x190xf32>, vector<10x190xf32> -> vector<10x190xf32>
    %116 = arith.addf %108, %115 : vector<10x190xf32>
    %c6_69 = arith.constant 6 : index
    %c0_70 = arith.constant 0 : index
    %c0_71 = arith.constant 0 : index
    %117 = vector.load %arg4[%c6_69, %c0_70, %c0_71] : memref<12x315x190xf32, #tpu.memory_space<vmem>>, vector<1x315x190xf32>
    %118 = vector.shape_cast %117 : vector<1x315x190xf32> to vector<315x190xf32>
    %119 = vector.extract_strided_slice %68 {offsets = [6, 0], sizes = [10, 315], strides = [1, 1]} : vector<21x315xf32> to vector<10x315xf32>
    %cst_72 = arith.constant dense<0.000000e+00> : vector<10x190xf32>
    %120 = tpu.matmul %119, %118, %cst_72 {dimension_numbers = #tpu.dot_dimension_numbers<[1], [0], [0], [1], [0, 0, 1, 1], [], []>} : vector<10x315xf32>, vector<315x190xf32>, vector<10x190xf32> -> vector<10x190xf32>
    %121 = arith.addf %113, %120 : vector<10x190xf32>
    %122 = vector.extract_strided_slice %70 {offsets = [6, 0], sizes = [10, 315], strides = [1, 1]} : vector<21x315xf32> to vector<10x315xf32>
    %cst_73 = arith.constant dense<0.000000e+00> : vector<10x190xf32>
    %123 = tpu.matmul %122, %118, %cst_73 {dimension_numbers = #tpu.dot_dimension_numbers<[1], [0], [0], [1], [0, 0, 1, 1], [], []>} : vector<10x315xf32>, vector<315x190xf32>, vector<10x190xf32> -> vector<10x190xf32>
    %124 = arith.addf %116, %123 : vector<10x190xf32>
    %c7_74 = arith.constant 7 : index
    %c0_75 = arith.constant 0 : index
    %c0_76 = arith.constant 0 : index
    %125 = vector.load %arg4[%c7_74, %c0_75, %c0_76] : memref<12x315x190xf32, #tpu.memory_space<vmem>>, vector<1x315x190xf32>
    %126 = vector.shape_cast %125 : vector<1x315x190xf32> to vector<315x190xf32>
    %127 = vector.extract_strided_slice %68 {offsets = [7, 0], sizes = [10, 315], strides = [1, 1]} : vector<21x315xf32> to vector<10x315xf32>
    %cst_77 = arith.constant dense<0.000000e+00> : vector<10x190xf32>
    %128 = tpu.matmul %127, %126, %cst_77 {dimension_numbers = #tpu.dot_dimension_numbers<[1], [0], [0], [1], [0, 0, 1, 1], [], []>} : vector<10x315xf32>, vector<315x190xf32>, vector<10x190xf32> -> vector<10x190xf32>
    %129 = arith.addf %121, %128 : vector<10x190xf32>
    %130 = vector.extract_strided_slice %70 {offsets = [7, 0], sizes = [10, 315], strides = [1, 1]} : vector<21x315xf32> to vector<10x315xf32>
    %cst_78 = arith.constant dense<0.000000e+00> : vector<10x190xf32>
    %131 = tpu.matmul %130, %126, %cst_78 {dimension_numbers = #tpu.dot_dimension_numbers<[1], [0], [0], [1], [0, 0, 1, 1], [], []>} : vector<10x315xf32>, vector<315x190xf32>, vector<10x190xf32> -> vector<10x190xf32>
    %132 = arith.addf %124, %131 : vector<10x190xf32>
    %c8 = arith.constant 8 : index
    %c0_79 = arith.constant 0 : index
    %c0_80 = arith.constant 0 : index
    %133 = vector.load %arg4[%c8, %c0_79, %c0_80] : memref<12x315x190xf32, #tpu.memory_space<vmem>>, vector<1x315x190xf32>
    %134 = vector.shape_cast %133 : vector<1x315x190xf32> to vector<315x190xf32>
    %135 = vector.extract_strided_slice %68 {offsets = [8, 0], sizes = [10, 315], strides = [1, 1]} : vector<21x315xf32> to vector<10x315xf32>
    %cst_81 = arith.constant dense<0.000000e+00> : vector<10x190xf32>
    %136 = tpu.matmul %135, %134, %cst_81 {dimension_numbers = #tpu.dot_dimension_numbers<[1], [0], [0], [1], [0, 0, 1, 1], [], []>} : vector<10x315xf32>, vector<315x190xf32>, vector<10x190xf32> -> vector<10x190xf32>
    %137 = arith.addf %129, %136 : vector<10x190xf32>
    %138 = vector.extract_strided_slice %70 {offsets = [8, 0], sizes = [10, 315], strides = [1, 1]} : vector<21x315xf32> to vector<10x315xf32>
    %cst_82 = arith.constant dense<0.000000e+00> : vector<10x190xf32>
    %139 = tpu.matmul %138, %134, %cst_82 {dimension_numbers = #tpu.dot_dimension_numbers<[1], [0], [0], [1], [0, 0, 1, 1], [], []>} : vector<10x315xf32>, vector<315x190xf32>, vector<10x190xf32> -> vector<10x190xf32>
    %140 = arith.addf %132, %139 : vector<10x190xf32>
    %c9 = arith.constant 9 : index
    %c0_83 = arith.constant 0 : index
    %c0_84 = arith.constant 0 : index
    %141 = vector.load %arg4[%c9, %c0_83, %c0_84] : memref<12x315x190xf32, #tpu.memory_space<vmem>>, vector<1x315x190xf32>
    %142 = vector.shape_cast %141 : vector<1x315x190xf32> to vector<315x190xf32>
    %143 = vector.extract_strided_slice %68 {offsets = [9, 0], sizes = [10, 315], strides = [1, 1]} : vector<21x315xf32> to vector<10x315xf32>
    %cst_85 = arith.constant dense<0.000000e+00> : vector<10x190xf32>
    %144 = tpu.matmul %143, %142, %cst_85 {dimension_numbers = #tpu.dot_dimension_numbers<[1], [0], [0], [1], [0, 0, 1, 1], [], []>} : vector<10x315xf32>, vector<315x190xf32>, vector<10x190xf32> -> vector<10x190xf32>
    %145 = arith.addf %137, %144 : vector<10x190xf32>
    %146 = vector.extract_strided_slice %70 {offsets = [9, 0], sizes = [10, 315], strides = [1, 1]} : vector<21x315xf32> to vector<10x315xf32>
    %cst_86 = arith.constant dense<0.000000e+00> : vector<10x190xf32>
    %147 = tpu.matmul %146, %142, %cst_86 {dimension_numbers = #tpu.dot_dimension_numbers<[1], [0], [0], [1], [0, 0, 1, 1], [], []>} : vector<10x315xf32>, vector<315x190xf32>, vector<10x190xf32> -> vector<10x190xf32>
    %148 = arith.addf %140, %147 : vector<10x190xf32>
    %c10 = arith.constant 10 : index
    %c0_87 = arith.constant 0 : index
    %c0_88 = arith.constant 0 : index
    %149 = vector.load %arg4[%c10, %c0_87, %c0_88] : memref<12x315x190xf32, #tpu.memory_space<vmem>>, vector<1x315x190xf32>
    %150 = vector.shape_cast %149 : vector<1x315x190xf32> to vector<315x190xf32>
    %151 = vector.extract_strided_slice %68 {offsets = [10, 0], sizes = [10, 315], strides = [1, 1]} : vector<21x315xf32> to vector<10x315xf32>
    %cst_89 = arith.constant dense<0.000000e+00> : vector<10x190xf32>
    %152 = tpu.matmul %151, %150, %cst_89 {dimension_numbers = #tpu.dot_dimension_numbers<[1], [0], [0], [1], [0, 0, 1, 1], [], []>} : vector<10x315xf32>, vector<315x190xf32>, vector<10x190xf32> -> vector<10x190xf32>
    %153 = arith.addf %145, %152 : vector<10x190xf32>
    %154 = vector.extract_strided_slice %70 {offsets = [10, 0], sizes = [10, 315], strides = [1, 1]} : vector<21x315xf32> to vector<10x315xf32>
    %cst_90 = arith.constant dense<0.000000e+00> : vector<10x190xf32>
    %155 = tpu.matmul %154, %150, %cst_90 {dimension_numbers = #tpu.dot_dimension_numbers<[1], [0], [0], [1], [0, 0, 1, 1], [], []>} : vector<10x315xf32>, vector<315x190xf32>, vector<10x190xf32> -> vector<10x190xf32>
    %156 = arith.addf %148, %155 : vector<10x190xf32>
    %c11 = arith.constant 11 : index
    %c0_91 = arith.constant 0 : index
    %c0_92 = arith.constant 0 : index
    %157 = vector.load %arg4[%c11, %c0_91, %c0_92] : memref<12x315x190xf32, #tpu.memory_space<vmem>>, vector<1x315x190xf32>
    %158 = vector.shape_cast %157 : vector<1x315x190xf32> to vector<315x190xf32>
    %159 = vector.extract_strided_slice %68 {offsets = [11, 0], sizes = [10, 315], strides = [1, 1]} : vector<21x315xf32> to vector<10x315xf32>
    %cst_93 = arith.constant dense<0.000000e+00> : vector<10x190xf32>
    %160 = tpu.matmul %159, %158, %cst_93 {dimension_numbers = #tpu.dot_dimension_numbers<[1], [0], [0], [1], [0, 0, 1, 1], [], []>} : vector<10x315xf32>, vector<315x190xf32>, vector<10x190xf32> -> vector<10x190xf32>
    %161 = arith.addf %153, %160 : vector<10x190xf32>
    %162 = vector.extract_strided_slice %70 {offsets = [11, 0], sizes = [10, 315], strides = [1, 1]} : vector<21x315xf32> to vector<10x315xf32>
    %cst_94 = arith.constant dense<0.000000e+00> : vector<10x190xf32>
    %163 = tpu.matmul %162, %158, %cst_94 {dimension_numbers = #tpu.dot_dimension_numbers<[1], [0], [0], [1], [0, 0, 1, 1], [], []>} : vector<10x315xf32>, vector<315x190xf32>, vector<10x190xf32> -> vector<10x190xf32>
    %164 = arith.addf %156, %163 : vector<10x190xf32>
    %c0_95 = arith.constant 0 : index
    %c0_96 = arith.constant 0 : index
    %c0_97 = arith.constant 0 : index
    %165 = vector.load %arg5[%c0_95, %c0_96, %c0_97] : memref<6x190x315xf32, #tpu.memory_space<vmem>>, vector<1x190x315xf32>
    %166 = vector.shape_cast %165 : vector<1x190x315xf32> to vector<190x315xf32>
    %167 = vector.extract_strided_slice %161 {offsets = [0, 0], sizes = [5, 190], strides = [1, 1]} : vector<10x190xf32> to vector<5x190xf32>
    %cst_98 = arith.constant dense<0.000000e+00> : vector<5x315xf32>
    %168 = tpu.matmul %167, %166, %cst_98 {dimension_numbers = #tpu.dot_dimension_numbers<[1], [0], [0], [1], [0, 0, 1, 1], [], []>} : vector<5x190xf32>, vector<190x315xf32>, vector<5x315xf32> -> vector<5x315xf32>
    %169 = vector.extract_strided_slice %164 {offsets = [0, 0], sizes = [5, 190], strides = [1, 1]} : vector<10x190xf32> to vector<5x190xf32>
    %cst_99 = arith.constant dense<0.000000e+00> : vector<5x315xf32>
    %170 = tpu.matmul %169, %166, %cst_99 {dimension_numbers = #tpu.dot_dimension_numbers<[1], [0], [0], [1], [0, 0, 1, 1], [], []>} : vector<5x190xf32>, vector<190x315xf32>, vector<5x315xf32> -> vector<5x315xf32>
    %c1_100 = arith.constant 1 : index
    %c0_101 = arith.constant 0 : index
    %c0_102 = arith.constant 0 : index
    %171 = vector.load %arg5[%c1_100, %c0_101, %c0_102] : memref<6x190x315xf32, #tpu.memory_space<vmem>>, vector<1x190x315xf32>
    %172 = vector.shape_cast %171 : vector<1x190x315xf32> to vector<190x315xf32>
    %173 = vector.extract_strided_slice %161 {offsets = [1, 0], sizes = [5, 190], strides = [1, 1]} : vector<10x190xf32> to vector<5x190xf32>
    %cst_103 = arith.constant dense<0.000000e+00> : vector<5x315xf32>
    %174 = tpu.matmul %173, %172, %cst_103 {dimension_numbers = #tpu.dot_dimension_numbers<[1], [0], [0], [1], [0, 0, 1, 1], [], []>} : vector<5x190xf32>, vector<190x315xf32>, vector<5x315xf32> -> vector<5x315xf32>
    %175 = arith.addf %168, %174 : vector<5x315xf32>
    %176 = vector.extract_strided_slice %164 {offsets = [1, 0], sizes = [5, 190], strides = [1, 1]} : vector<10x190xf32> to vector<5x190xf32>
    %cst_104 = arith.constant dense<0.000000e+00> : vector<5x315xf32>
    %177 = tpu.matmul %176, %172, %cst_104 {dimension_numbers = #tpu.dot_dimension_numbers<[1], [0], [0], [1], [0, 0, 1, 1], [], []>} : vector<5x190xf32>, vector<190x315xf32>, vector<5x315xf32> -> vector<5x315xf32>
    %178 = arith.addf %170, %177 : vector<5x315xf32>
    %c2_105 = arith.constant 2 : index
    %c0_106 = arith.constant 0 : index
    %c0_107 = arith.constant 0 : index
    %179 = vector.load %arg5[%c2_105, %c0_106, %c0_107] : memref<6x190x315xf32, #tpu.memory_space<vmem>>, vector<1x190x315xf32>
    %180 = vector.shape_cast %179 : vector<1x190x315xf32> to vector<190x315xf32>
    %181 = vector.extract_strided_slice %161 {offsets = [2, 0], sizes = [5, 190], strides = [1, 1]} : vector<10x190xf32> to vector<5x190xf32>
    %cst_108 = arith.constant dense<0.000000e+00> : vector<5x315xf32>
    %182 = tpu.matmul %181, %180, %cst_108 {dimension_numbers = #tpu.dot_dimension_numbers<[1], [0], [0], [1], [0, 0, 1, 1], [], []>} : vector<5x190xf32>, vector<190x315xf32>, vector<5x315xf32> -> vector<5x315xf32>
    %183 = arith.addf %175, %182 : vector<5x315xf32>
    %184 = vector.extract_strided_slice %164 {offsets = [2, 0], sizes = [5, 190], strides = [1, 1]} : vector<10x190xf32> to vector<5x190xf32>
    %cst_109 = arith.constant dense<0.000000e+00> : vector<5x315xf32>
    %185 = tpu.matmul %184, %180, %cst_109 {dimension_numbers = #tpu.dot_dimension_numbers<[1], [0], [0], [1], [0, 0, 1, 1], [], []>} : vector<5x190xf32>, vector<190x315xf32>, vector<5x315xf32> -> vector<5x315xf32>
    %186 = arith.addf %178, %185 : vector<5x315xf32>
    %c3_110 = arith.constant 3 : index
    %c0_111 = arith.constant 0 : index
    %c0_112 = arith.constant 0 : index
    %187 = vector.load %arg5[%c3_110, %c0_111, %c0_112] : memref<6x190x315xf32, #tpu.memory_space<vmem>>, vector<1x190x315xf32>
    %188 = vector.shape_cast %187 : vector<1x190x315xf32> to vector<190x315xf32>
    %189 = vector.extract_strided_slice %161 {offsets = [3, 0], sizes = [5, 190], strides = [1, 1]} : vector<10x190xf32> to vector<5x190xf32>
    %cst_113 = arith.constant dense<0.000000e+00> : vector<5x315xf32>
    %190 = tpu.matmul %189, %188, %cst_113 {dimension_numbers = #tpu.dot_dimension_numbers<[1], [0], [0], [1], [0, 0, 1, 1], [], []>} : vector<5x190xf32>, vector<190x315xf32>, vector<5x315xf32> -> vector<5x315xf32>
    %191 = arith.addf %183, %190 : vector<5x315xf32>
    %192 = vector.extract_strided_slice %164 {offsets = [3, 0], sizes = [5, 190], strides = [1, 1]} : vector<10x190xf32> to vector<5x190xf32>
    %cst_114 = arith.constant dense<0.000000e+00> : vector<5x315xf32>
    %193 = tpu.matmul %192, %188, %cst_114 {dimension_numbers = #tpu.dot_dimension_numbers<[1], [0], [0], [1], [0, 0, 1, 1], [], []>} : vector<5x190xf32>, vector<190x315xf32>, vector<5x315xf32> -> vector<5x315xf32>
    %194 = arith.addf %186, %193 : vector<5x315xf32>
    %c4_115 = arith.constant 4 : index
    %c0_116 = arith.constant 0 : index
    %c0_117 = arith.constant 0 : index
    %195 = vector.load %arg5[%c4_115, %c0_116, %c0_117] : memref<6x190x315xf32, #tpu.memory_space<vmem>>, vector<1x190x315xf32>
    %196 = vector.shape_cast %195 : vector<1x190x315xf32> to vector<190x315xf32>
    %197 = vector.extract_strided_slice %161 {offsets = [4, 0], sizes = [5, 190], strides = [1, 1]} : vector<10x190xf32> to vector<5x190xf32>
    %cst_118 = arith.constant dense<0.000000e+00> : vector<5x315xf32>
    %198 = tpu.matmul %197, %196, %cst_118 {dimension_numbers = #tpu.dot_dimension_numbers<[1], [0], [0], [1], [0, 0, 1, 1], [], []>} : vector<5x190xf32>, vector<190x315xf32>, vector<5x315xf32> -> vector<5x315xf32>
    %199 = arith.addf %191, %198 : vector<5x315xf32>
    %200 = vector.extract_strided_slice %164 {offsets = [4, 0], sizes = [5, 190], strides = [1, 1]} : vector<10x190xf32> to vector<5x190xf32>
    %cst_119 = arith.constant dense<0.000000e+00> : vector<5x315xf32>
    %201 = tpu.matmul %200, %196, %cst_119 {dimension_numbers = #tpu.dot_dimension_numbers<[1], [0], [0], [1], [0, 0, 1, 1], [], []>} : vector<5x190xf32>, vector<190x315xf32>, vector<5x315xf32> -> vector<5x315xf32>
    %202 = arith.addf %194, %201 : vector<5x315xf32>
    %c5_120 = arith.constant 5 : index
    %c0_121 = arith.constant 0 : index
    %c0_122 = arith.constant 0 : index
    %203 = vector.load %arg5[%c5_120, %c0_121, %c0_122] : memref<6x190x315xf32, #tpu.memory_space<vmem>>, vector<1x190x315xf32>
    %204 = vector.shape_cast %203 : vector<1x190x315xf32> to vector<190x315xf32>
    %205 = vector.extract_strided_slice %161 {offsets = [5, 0], sizes = [5, 190], strides = [1, 1]} : vector<10x190xf32> to vector<5x190xf32>
    %cst_123 = arith.constant dense<0.000000e+00> : vector<5x315xf32>
    %206 = tpu.matmul %205, %204, %cst_123 {dimension_numbers = #tpu.dot_dimension_numbers<[1], [0], [0], [1], [0, 0, 1, 1], [], []>} : vector<5x190xf32>, vector<190x315xf32>, vector<5x315xf32> -> vector<5x315xf32>
    %207 = arith.addf %199, %206 : vector<5x315xf32>
    %208 = vector.extract_strided_slice %164 {offsets = [5, 0], sizes = [5, 190], strides = [1, 1]} : vector<10x190xf32> to vector<5x190xf32>
    %cst_124 = arith.constant dense<0.000000e+00> : vector<5x315xf32>
    %209 = tpu.matmul %208, %204, %cst_124 {dimension_numbers = #tpu.dot_dimension_numbers<[1], [0], [0], [1], [0, 0, 1, 1], [], []>} : vector<5x190xf32>, vector<190x315xf32>, vector<5x315xf32> -> vector<5x315xf32>
    %210 = arith.addf %202, %209 : vector<5x315xf32>
    %c0_125 = arith.constant 0 : index
    %c0_126 = arith.constant 0 : index
    %c0_127 = arith.constant 0 : index
    %211 = vector.load %arg6[%c0_125, %c0_126, %c0_127] : memref<5x315x10xf32, #tpu.memory_space<vmem>>, vector<1x315x10xf32>
    %212 = vector.shape_cast %211 : vector<1x315x10xf32> to vector<315x10xf32>
    %213 = vector.extract_strided_slice %207 {offsets = [0, 0], sizes = [1, 315], strides = [1, 1]} : vector<5x315xf32> to vector<1x315xf32>
    %cst_128 = arith.constant dense<0.000000e+00> : vector<1x10xf32>
    %214 = tpu.matmul %213, %212, %cst_128 {dimension_numbers = #tpu.dot_dimension_numbers<[1], [0], [0], [1], [0, 0, 1, 1], [], []>} : vector<1x315xf32>, vector<315x10xf32>, vector<1x10xf32> -> vector<1x10xf32>
    %215 = vector.extract_strided_slice %210 {offsets = [0, 0], sizes = [1, 315], strides = [1, 1]} : vector<5x315xf32> to vector<1x315xf32>
    %cst_129 = arith.constant dense<0.000000e+00> : vector<1x10xf32>
    %216 = tpu.matmul %215, %212, %cst_129 {dimension_numbers = #tpu.dot_dimension_numbers<[1], [0], [0], [1], [0, 0, 1, 1], [], []>} : vector<1x315xf32>, vector<315x10xf32>, vector<1x10xf32> -> vector<1x10xf32>
    %c1_130 = arith.constant 1 : index
    %c0_131 = arith.constant 0 : index
    %c0_132 = arith.constant 0 : index
    %217 = vector.load %arg6[%c1_130, %c0_131, %c0_132] : memref<5x315x10xf32, #tpu.memory_space<vmem>>, vector<1x315x10xf32>
    %218 = vector.shape_cast %217 : vector<1x315x10xf32> to vector<315x10xf32>
    %219 = vector.extract_strided_slice %207 {offsets = [1, 0], sizes = [1, 315], strides = [1, 1]} : vector<5x315xf32> to vector<1x315xf32>
    %cst_133 = arith.constant dense<0.000000e+00> : vector<1x10xf32>
    %220 = tpu.matmul %219, %218, %cst_133 {dimension_numbers = #tpu.dot_dimension_numbers<[1], [0], [0], [1], [0, 0, 1, 1], [], []>} : vector<1x315xf32>, vector<315x10xf32>, vector<1x10xf32> -> vector<1x10xf32>
    %221 = arith.addf %214, %220 : vector<1x10xf32>
    %222 = vector.extract_strided_slice %210 {offsets = [1, 0], sizes = [1, 315], strides = [1, 1]} : vector<5x315xf32> to vector<1x315xf32>
    %cst_134 = arith.constant dense<0.000000e+00> : vector<1x10xf32>
    %223 = tpu.matmul %222, %218, %cst_134 {dimension_numbers = #tpu.dot_dimension_numbers<[1], [0], [0], [1], [0, 0, 1, 1], [], []>} : vector<1x315xf32>, vector<315x10xf32>, vector<1x10xf32> -> vector<1x10xf32>
    %224 = arith.addf %216, %223 : vector<1x10xf32>
    %c2_135 = arith.constant 2 : index
    %c0_136 = arith.constant 0 : index
    %c0_137 = arith.constant 0 : index
    %225 = vector.load %arg6[%c2_135, %c0_136, %c0_137] : memref<5x315x10xf32, #tpu.memory_space<vmem>>, vector<1x315x10xf32>
    %226 = vector.shape_cast %225 : vector<1x315x10xf32> to vector<315x10xf32>
    %227 = vector.extract_strided_slice %207 {offsets = [2, 0], sizes = [1, 315], strides = [1, 1]} : vector<5x315xf32> to vector<1x315xf32>
    %cst_138 = arith.constant dense<0.000000e+00> : vector<1x10xf32>
    %228 = tpu.matmul %227, %226, %cst_138 {dimension_numbers = #tpu.dot_dimension_numbers<[1], [0], [0], [1], [0, 0, 1, 1], [], []>} : vector<1x315xf32>, vector<315x10xf32>, vector<1x10xf32> -> vector<1x10xf32>
    %229 = arith.addf %221, %228 : vector<1x10xf32>
    %230 = vector.extract_strided_slice %210 {offsets = [2, 0], sizes = [1, 315], strides = [1, 1]} : vector<5x315xf32> to vector<1x315xf32>
    %cst_139 = arith.constant dense<0.000000e+00> : vector<1x10xf32>
    %231 = tpu.matmul %230, %226, %cst_139 {dimension_numbers = #tpu.dot_dimension_numbers<[1], [0], [0], [1], [0, 0, 1, 1], [], []>} : vector<1x315xf32>, vector<315x10xf32>, vector<1x10xf32> -> vector<1x10xf32>
    %232 = arith.addf %224, %231 : vector<1x10xf32>
    %c3_140 = arith.constant 3 : index
    %c0_141 = arith.constant 0 : index
    %c0_142 = arith.constant 0 : index
    %233 = vector.load %arg6[%c3_140, %c0_141, %c0_142] : memref<5x315x10xf32, #tpu.memory_space<vmem>>, vector<1x315x10xf32>
    %234 = vector.shape_cast %233 : vector<1x315x10xf32> to vector<315x10xf32>
    %235 = vector.extract_strided_slice %207 {offsets = [3, 0], sizes = [1, 315], strides = [1, 1]} : vector<5x315xf32> to vector<1x315xf32>
    %cst_143 = arith.constant dense<0.000000e+00> : vector<1x10xf32>
    %236 = tpu.matmul %235, %234, %cst_143 {dimension_numbers = #tpu.dot_dimension_numbers<[1], [0], [0], [1], [0, 0, 1, 1], [], []>} : vector<1x315xf32>, vector<315x10xf32>, vector<1x10xf32> -> vector<1x10xf32>
    %237 = arith.addf %229, %236 : vector<1x10xf32>
    %238 = vector.extract_strided_slice %210 {offsets = [3, 0], sizes = [1, 315], strides = [1, 1]} : vector<5x315xf32> to vector<1x315xf32>
    %cst_144 = arith.constant dense<0.000000e+00> : vector<1x10xf32>
    %239 = tpu.matmul %238, %234, %cst_144 {dimension_numbers = #tpu.dot_dimension_numbers<[1], [0], [0], [1], [0, 0, 1, 1], [], []>} : vector<1x315xf32>, vector<315x10xf32>, vector<1x10xf32> -> vector<1x10xf32>
    %240 = arith.addf %232, %239 : vector<1x10xf32>
    %c4_145 = arith.constant 4 : index
    %c0_146 = arith.constant 0 : index
    %c0_147 = arith.constant 0 : index
    %241 = vector.load %arg6[%c4_145, %c0_146, %c0_147] : memref<5x315x10xf32, #tpu.memory_space<vmem>>, vector<1x315x10xf32>
    %242 = vector.shape_cast %241 : vector<1x315x10xf32> to vector<315x10xf32>
    %243 = vector.extract_strided_slice %207 {offsets = [4, 0], sizes = [1, 315], strides = [1, 1]} : vector<5x315xf32> to vector<1x315xf32>
    %cst_148 = arith.constant dense<0.000000e+00> : vector<1x10xf32>
    %244 = tpu.matmul %243, %242, %cst_148 {dimension_numbers = #tpu.dot_dimension_numbers<[1], [0], [0], [1], [0, 0, 1, 1], [], []>} : vector<1x315xf32>, vector<315x10xf32>, vector<1x10xf32> -> vector<1x10xf32>
    %245 = arith.addf %237, %244 : vector<1x10xf32>
    %246 = vector.extract_strided_slice %210 {offsets = [4, 0], sizes = [1, 315], strides = [1, 1]} : vector<5x315xf32> to vector<1x315xf32>
    %cst_149 = arith.constant dense<0.000000e+00> : vector<1x10xf32>
    %247 = tpu.matmul %246, %242, %cst_149 {dimension_numbers = #tpu.dot_dimension_numbers<[1], [0], [0], [1], [0, 0, 1, 1], [], []>} : vector<1x315xf32>, vector<315x10xf32>, vector<1x10xf32> -> vector<1x10xf32>
    %248 = arith.addf %240, %247 : vector<1x10xf32>
    %c0_150 = arith.constant 0 : index
    %c0_151 = arith.constant 0 : index
    %249 = vector.load %arg7[%c0_150, %c0_151] : memref<1x10xf32, #tpu.memory_space<vmem>>, vector<1x10xf32>
    %250 = arith.addf %245, %249 : vector<1x10xf32>
    %251 = arith.addf %248, %249 : vector<1x10xf32>
    %cst_152 = arith.constant dense<0xFF800000> : vector<1xf32>
    %252 = vector.multi_reduction <maximumf>, %250, %cst_152 [1] : vector<1x10xf32> to vector<1xf32>
    %253 = vector.shape_cast %252 : vector<1xf32> to vector<1x1xf32>
    %254 = vector.broadcast %253 : vector<1x1xf32> to vector<1x10xf32>
    %255 = arith.subf %250, %254 : vector<1x10xf32>
    %256 = math.exp %255 : vector<1x10xf32>
    %cst_153 = arith.constant dense<0.000000e+00> : vector<1xf32>
    %257 = vector.multi_reduction <add>, %256, %cst_153 [1] : vector<1x10xf32> to vector<1xf32>
    %258 = vector.shape_cast %257 : vector<1xf32> to vector<1x1xf32>
    %259 = math.log %258 : vector<1x1xf32>
    %260 = vector.broadcast %259 : vector<1x1xf32> to vector<1x10xf32>
    %261 = arith.subf %255, %260 : vector<1x10xf32>
    %c0_154 = arith.constant 0 : index
    %c0_155 = arith.constant 0 : index
    %262 = vector.load %arg8[%c0_154, %c0_155] : memref<2x10xf32, #tpu.memory_space<vmem>>, vector<1x10xf32>
    tpu.vector_store %arg8[%c0_154, %c0_155], %261 {strides = array<i32>} : memref<2x10xf32, #tpu.memory_space<vmem>>, vector<1x10xf32>,
    %cst_156 = arith.constant dense<0xFF800000> : vector<1xf32>
    %263 = vector.multi_reduction <maximumf>, %251, %cst_156 [1] : vector<1x10xf32> to vector<1xf32>
    %264 = vector.shape_cast %263 : vector<1xf32> to vector<1x1xf32>
    %265 = vector.broadcast %264 : vector<1x1xf32> to vector<1x10xf32>
    %266 = arith.subf %251, %265 : vector<1x10xf32>
    %267 = math.exp %266 : vector<1x10xf32>
    %cst_157 = arith.constant dense<0.000000e+00> : vector<1xf32>
    %268 = vector.multi_reduction <add>, %267, %cst_157 [1] : vector<1x10xf32> to vector<1xf32>
    %269 = vector.shape_cast %268 : vector<1xf32> to vector<1x1xf32>
    %270 = math.log %269 : vector<1x1xf32>
    %271 = vector.broadcast %270 : vector<1x1xf32> to vector<1x10xf32>
    %272 = arith.subf %266, %271 : vector<1x10xf32>
    %c1_158 = arith.constant 1 : index
    %c0_159 = arith.constant 0 : index
    %273 = vector.load %arg8[%c1_158, %c0_159] : memref<2x10xf32, #tpu.memory_space<vmem>>, vector<1x10xf32>
    tpu.vector_store %arg8[%c1_158, %c0_159], %272 {strides = array<i32>} : memref<2x10xf32, #tpu.memory_space<vmem>>, vector<1x10xf32>,
    return
  }
  func.func @transform_0(%arg0: i32) -> (i32, i32, i32) {
    %c0_i32 = arith.constant 0 : i32
    %c0_i32_0 = arith.constant 0 : i32
    %c0_i32_1 = arith.constant 0 : i32
    return %arg0, %c0_i32, %c0_i32_0 : i32, i32, i32
  }
  func.func @transform_1(%arg0: i32) -> (i32, i32, i32) {
    %c0_i32 = arith.constant 0 : i32
    %c0_i32_0 = arith.constant 0 : i32
    %c0_i32_1 = arith.constant 0 : i32
    %c0_i32_2 = arith.constant 0 : i32
    return %c0_i32, %c0_i32_0, %c0_i32_1 : i32, i32, i32
  }
  func.func @transform_2(%arg0: i32) -> (i32, i32) {
    %c0_i32 = arith.constant 0 : i32
    %c0_i32_0 = arith.constant 0 : i32
    %c0_i32_1 = arith.constant 0 : i32
    return %c0_i32, %c0_i32_0 : i32, i32
  }
  func.func @transform_3(%arg0: i32) -> (i32, i32, i32) {
    %c0_i32 = arith.constant 0 : i32
    %c0_i32_0 = arith.constant 0 : i32
    %c0_i32_1 = arith.constant 0 : i32
    %c0_i32_2 = arith.constant 0 : i32
    return %c0_i32, %c0_i32_0, %c0_i32_1 : i32, i32, i32
  }
  func.func @transform_4(%arg0: i32) -> (i32, i32, i32) {
    %c0_i32 = arith.constant 0 : i32
    %c0_i32_0 = arith.constant 0 : i32
    %c0_i32_1 = arith.constant 0 : i32
    %c0_i32_2 = arith.constant 0 : i32
    return %c0_i32, %c0_i32_0, %c0_i32_1 : i32, i32, i32
  }
  func.func @transform_5(%arg0: i32) -> (i32, i32, i32) {
    %c0_i32 = arith.constant 0 : i32
    %c0_i32_0 = arith.constant 0 : i32
    %c0_i32_1 = arith.constant 0 : i32
    %c0_i32_2 = arith.constant 0 : i32
    return %c0_i32, %c0_i32_0, %c0_i32_1 : i32, i32, i32
  }
  func.func @transform_6(%arg0: i32) -> (i32, i32) {
    %c0_i32 = arith.constant 0 : i32
    %c0_i32_0 = arith.constant 0 : i32
    %c0_i32_1 = arith.constant 0 : i32
    return %c0_i32, %c0_i32_0 : i32, i32
  }
  func.func @transform_7(%arg0: i32) -> (i32, i32) {
    %c0_i32 = arith.constant 0 : i32
    %c0_i32_0 = arith.constant 0 : i32
    return %arg0, %c0_i32 : i32, i32
  }
}

</mosaic_0001>

<llo_original>
// kernel: forward.1
$region0: #{forward.1}
  #allocation0 [shape = 'u32[]', space=smem, size = 0x4, offset = 0x4, fixed_abs, tag = 'smem constant byte address 0x4 - core index']
  #allocation1 [shape = 'u32[72,128]{1,0:T(1,128)}', space=vmem, size = 0x9000, scoped, tag = 'internal scratch']
  %s0 = inlined_call_operand.vmem [shape: f32[2,28,28], index: 0, kind: input, shape index: {}]
  %s1 = inlined_call_operand.vmem [shape: f32[8,28,315], index: 1, kind: input, shape index: {}]
  %s2 = inlined_call_operand.vmem [shape: f32[1,315], index: 2, kind: input, shape index: {}]
  %s3 = inlined_call_operand.vmem [shape: f32[12,315,190], index: 3, kind: input, shape index: {}]
  %s4 = inlined_call_operand.vmem [shape: f32[6,190,315], index: 4, kind: input, shape index: {}]
  %s5 = inlined_call_operand.vmem [shape: f32[5,315,10], index: 5, kind: input, shape index: {}]
  %s6 = inlined_call_operand.vmem [shape: f32[1,10], index: 6, kind: input, shape index: {}]
  %s7 = inlined_call_operand.hbm [shape: f32[2,10], index: 7, kind: output, shape index: {}]
  %s8 = sld [smem:[#allocation0]]
  $region38: #{forward.1} parent=0
    _
  %s10 = ssub.s32 1, %s8
  %s11 = scalar_select 0, %s10, %s8
  $region1: #{forward.1} parent=0
    #allocation2 [shape = 'u8[1024]{0}', space=vmem, size = 0x400, scoped, tag = 'output window, operand 0, single buffered']
    #allocation3 [shape = 's32[1]{0}', space=sflag, size = 0x4, scoped, tag = 'scoped memory for forward.1']
    %12 = vsyncpa [#allocation3], 0
    // Predicated region
    $region2: #{forward.1} parent=1 // pred_check
      _
    $region3: #{forward.1} parent=1 // pred_check_branch
      %14 = sbr.rel (0) target = $region5
    $region4: #{forward.1} parent=1 // pred_region
      _
    $region5: #{forward.1} parent=1 // pred_fallthru
      _
    // Predicated region
    $region6: #{forward.1} parent=1 // pred_check
      _
    $region7: #{forward.1} parent=1 // pred_check_branch
      %16 = sbr.rel (0) target = $region9
    $region8: #{forward.1} parent=1 // pred_region
      _
    $region9: #{forward.1} parent=1 // pred_fallthru
      _
    // Predicated region
    $region10: #{forward.1} parent=1 // pred_check
      _
    $region11: #{forward.1} parent=1 // pred_check_branch
      %18 = sbr.rel (0) target = $region13
    $region12: #{forward.1} parent=1 // pred_region
      _
    $region13: #{forward.1} parent=1 // pred_fallthru
      _
    // Predicated region
    $region14: #{forward.1} parent=1 // pred_check
      _
    $region15: #{forward.1} parent=1 // pred_check_branch
      %20 = sbr.rel (0) target = $region17
    $region16: #{forward.1} parent=1 // pred_region
      _
    $region17: #{forward.1} parent=1 // pred_fallthru
      _
    // Predicated region
    $region18: #{forward.1} parent=1 // pred_check
      _
    $region19: #{forward.1} parent=1 // pred_check_branch
      %22 = sbr.rel (0) target = $region21
    $region20: #{forward.1} parent=1 // pred_region
      _
    $region21: #{forward.1} parent=1 // pred_fallthru
      _
    // Predicated region
    $region22: #{forward.1} parent=1 // pred_check
      _
    $region23: #{forward.1} parent=1 // pred_check_branch
      %24 = sbr.rel (0) target = $region25
    $region24: #{forward.1} parent=1 // pred_region
      _
    $region25: #{forward.1} parent=1 // pred_fallthru
      _
    // Predicated region
    $region26: #{forward.1} parent=1 // pred_check
      _
    $region27: #{forward.1} parent=1 // pred_check_branch
      %26 = sbr.rel (0) target = $region29
    $region28: #{forward.1} parent=1 // pred_region
      _
    $region29: #{forward.1} parent=1 // pred_fallthru
      _
    %v27 = vld [vmem:[%s0] sm:$0xff]
    %v28 = vld [vmem:[%s0 + $0x8] sm:$0xff]
    %v29 = vld [vmem:[%s0 + $0x10] sm:$0xff]
    %v30 = vld [vmem:[%s0 + $0x18] sm:$0xf]
    %s31 = scalar_lea.vmem %s0, 32
    %v32 = vld [vmem:[%s31] sm:$0xff]
    %v33 = vld [vmem:[%s31 + $0x8] sm:$0xff]
    %v34 = vld [vmem:[%s31 + $0x10] sm:$0xff]
    %v35 = vld [vmem:[%s31 + $0x18] sm:$0xf]
    %v36 = vld [vmem:[%s1] sm:$0xff]
    %v37 = vld [vmem:[%s1 + $0x8] sm:$0xff]
    %v38 = vld [vmem:[%s1 + $0x10] sm:$0xff]
    %v39 = vld [vmem:[%s1 + $0x18] sm:$0xff]
    %v40 = vld [vmem:[%s1 + $0x20] sm:$0xff]
    %v41 = vld [vmem:[%s1 + $0x28] sm:$0xff]
    %v42 = vld [vmem:[%s1 + $0x30] sm:$0xff]
    %v43 = vld [vmem:[%s1 + $0x38] sm:$0xff]
    %v44 = vld [vmem:[%s1 + $0x40] sm:$0xff]
    %v45 = vld [vmem:[%s1 + $0x48] sm:$0xf]
    %v46 = vld [vmem:[%s1 + $0x50] sm:$0xf]
    %v47 = vld [vmem:[%s1 + $0x58] sm:$0xf]
    %s48 = scalar_lea.vmem %s1, 96
    %v49 = vld [vmem:[%s48] sm:$0xff]
    %v50 = vld [vmem:[%s48 + $0x8] sm:$0xff]
    %v51 = vld [vmem:[%s48 + $0x10] sm:$0xff]
    %v52 = vld [vmem:[%s48 + $0x18] sm:$0xff]
    %v53 = vld [vmem:[%s48 + $0x20] sm:$0xff]
    %v54 = vld [vmem:[%s48 + $0x28] sm:$0xff]
    %v55 = vld [vmem:[%s48 + $0x30] sm:$0xff]
    %v56 = vld [vmem:[%s48 + $0x38] sm:$0xff]
    %v57 = vld [vmem:[%s48 + $0x40] sm:$0xff]
    %v58 = vld [vmem:[%s48 + $0x48] sm:$0xf]
    %v59 = vld [vmem:[%s48 + $0x50] sm:$0xf]
    %v60 = vld [vmem:[%s48 + $0x58] sm:$0xf]
    %vm64 = vcmask 1046528
    %v65 = vrot.slane %v27, 1
    %v66 = vrot.slane %v28, 1
    %v67 = vsel %vm64, %v65, %v66
    %v68 = vrot.slane %v29, 1
    %v69 = vsel %vm64, %v66, %v68
    %vm70 = vcmask 228352
    %v71 = vsel %vm70, %v67, 0
    %v73 = vsel %vm70, %v69, 0
    %v75 = vsel %vm70, %v68, 0
    %vm77 = vcmask 1043456
    %v79 = vsel %vm77, %v58, 0
    %v82 = vsel %vm77, %v59, 0
    %v85 = vsel %vm77, %v60, 0
    %87 = vmatpush.msra.mxu0 0.0
    %88 = vmatpush.msra.mxu0 0.0
    %89 = vmatpush.msra.mxu0 0.0
    %90 = vmatpush.msra.mxu0 0.0
    %91 = vmatpush.msra.mxu0 0.0
    %92 = vmatpush.msra.mxu0 0.0
    %93 = vmatpush.msra.mxu0 0.0
    %94 = vmatpush.msra.mxu0 0.0
    %95 = vmatpush.msra.mxu0 0.0
    %96 = vmatpush.msra.mxu0 0.0
    %97 = vmatpush.msra.mxu0 0.0
    %98 = vmatpush.msra.mxu0 0.0
    %99 = vmatpush.msra.mxu0 %v79
    %100 = vmatpush.msra.mxu0 %v55
    %101 = vmatpush.msra.mxu0 %v52
    %102 = vmatpush.msra.mxu0 %v49
    %103 = vmatmul.f32.gmra.mxu0 %v71
    %v104 = vpop.f32.mrf.mxu0
    %v105 = vadd.f32 0.0, %v104
    %106 = vmatmul.f32.gmra.mxu0 %v73
    %v107 = vpop.f32.mrf.mxu0
    %v108 = vadd.f32 0.0, %v107
    %109 = vmatmul.f32.gmra.mxu0 %v75
    %v110 = vpop.f32.mrf.mxu0
    %v111 = vadd.f32 0.0, %v110
    %112 = vdwg.mxu0
    %113 = vmatpush.msra.mxu0 0.0
    %114 = vmatpush.msra.mxu0 0.0
    %115 = vmatpush.msra.mxu0 0.0
    %116 = vmatpush.msra.mxu0 0.0
    %117 = vmatpush.msra.mxu0 0.0
    %118 = vmatpush.msra.mxu0 0.0
    %119 = vmatpush.msra.mxu0 0.0
    %120 = vmatpush.msra.mxu0 0.0
    %121 = vmatpush.msra.mxu0 0.0
    %122 = vmatpush.msra.mxu0 0.0
    %123 = vmatpush.msra.mxu0 0.0
    %124 = vmatpush.msra.mxu0 0.0
    %125 = vmatpush.msra.mxu0 %v82
    %126 = vmatpush.msra.mxu0 %v56
    %127 = vmatpush.msra.mxu0 %v53
    %128 = vmatpush.msra.mxu0 %v50
    %129 = vmatmul.f32.gmra.mxu0 %v71
    %v130 = vpop.f32.mrf.mxu0
    %v131 = vadd.f32 0.0, %v130
    %132 = vmatmul.f32.gmra.mxu0 %v73
    %v133 = vpop.f32.mrf.mxu0
    %v134 = vadd.f32 0.0, %v133
    %135 = vmatmul.f32.gmra.mxu0 %v75
    %v136 = vpop.f32.mrf.mxu0
    %v137 = vadd.f32 0.0, %v136
    %138 = vdwg.mxu0
    %139 = vmatpush.msra.mxu0 0.0
    %140 = vmatpush.msra.mxu0 0.0
    %141 = vmatpush.msra.mxu0 0.0
    %142 = vmatpush.msra.mxu0 0.0
    %143 = vmatpush.msra.mxu0 0.0
    %144 = vmatpush.msra.mxu0 0.0
    %145 = vmatpush.msra.mxu0 0.0
    %146 = vmatpush.msra.mxu0 0.0
    %147 = vmatpush.msra.mxu0 0.0
    %148 = vmatpush.msra.mxu0 0.0
    %149 = vmatpush.msra.mxu0 0.0
    %150 = vmatpush.msra.mxu0 0.0
    %151 = vmatpush.msra.mxu0 %v85
    %152 = vmatpush.msra.mxu0 %v57
    %153 = vmatpush.msra.mxu0 %v54
    %154 = vmatpush.msra.mxu0 %v51
    %155 = vmatmul.f32.gmra.mxu0 %v71
    %v156 = vpop.f32.mrf.mxu0
    %v157 = vadd.f32 0.0, %v156
    %158 = vmatmul.f32.gmra.mxu0 %v73
    %v159 = vpop.f32.mrf.mxu0
    %v160 = vadd.f32 0.0, %v159
    %161 = vmatmul.f32.gmra.mxu0 %v75
    %v162 = vpop.f32.mrf.mxu0
    %v163 = vadd.f32 0.0, %v162
    %164 = vdwg.mxu0
    %v165 = vsel %vm70, %v27, 0
    %v167 = vsel %vm70, %v28, 0
    %v169 = vsel %vm70, %v29, 0
    %v172 = vsel %vm77, %v45, 0
    %v175 = vsel %vm77, %v46, 0
    %v178 = vsel %vm77, %v47, 0
    %180 = vmatpush.msra.mxu0 0.0
    %181 = vmatpush.msra.mxu0 0.0
    %182 = vmatpush.msra.mxu0 0.0
    %183 = vmatpush.msra.mxu0 0.0
    %184 = vmatpush.msra.mxu0 0.0
    %185 = vmatpush.msra.mxu0 0.0
    %186 = vmatpush.msra.mxu0 0.0
    %187 = vmatpush.msra.mxu0 0.0
    %188 = vmatpush.msra.mxu0 0.0
    %189 = vmatpush.msra.mxu0 0.0
    %190 = vmatpush.msra.mxu0 0.0
    %191 = vmatpush.msra.mxu0 0.0
    %192 = vmatpush.msra.mxu0 %v172
    %193 = vmatpush.msra.mxu0 %v42
    %194 = vmatpush.msra.mxu0 %v39
    %195 = vmatpush.msra.mxu0 %v36
    %196 = vmatmul.f32.gmra.mxu0 %v165
    %v197 = vpop.f32.mrf.mxu0
    %v198 = vadd.f32 %v105, %v197
    %199 = vmatmul.f32.gmra.mxu0 %v167
    %v200 = vpop.f32.mrf.mxu0
    %v201 = vadd.f32 %v108, %v200
    %202 = vmatmul.f32.gmra.mxu0 %v169
    %v203 = vpop.f32.mrf.mxu0
    %v204 = vadd.f32 %v111, %v203
    %205 = vdwg.mxu0
    %206 = vmatpush.msra.mxu0 0.0
    %207 = vmatpush.msra.mxu0 0.0
    %208 = vmatpush.msra.mxu0 0.0
    %209 = vmatpush.msra.mxu0 0.0
    %210 = vmatpush.msra.mxu0 0.0
    %211 = vmatpush.msra.mxu0 0.0
    %212 = vmatpush.msra.mxu0 0.0
    %213 = vmatpush.msra.mxu0 0.0
    %214 = vmatpush.msra.mxu0 0.0
    %215 = vmatpush.msra.mxu0 0.0
    %216 = vmatpush.msra.mxu0 0.0
    %217 = vmatpush.msra.mxu0 0.0
    %218 = vmatpush.msra.mxu0 %v175
    %219 = vmatpush.msra.mxu0 %v43
    %220 = vmatpush.msra.mxu0 %v40
    %221 = vmatpush.msra.mxu0 %v37
    %222 = vmatmul.f32.gmra.mxu0 %v165
    %v223 = vpop.f32.mrf.mxu0
    %v224 = vadd.f32 %v131, %v223
    %225 = vmatmul.f32.gmra.mxu0 %v167
    %v226 = vpop.f32.mrf.mxu0
    %v227 = vadd.f32 %v134, %v226
    %228 = vmatmul.f32.gmra.mxu0 %v169
    %v229 = vpop.f32.mrf.mxu0
    %v230 = vadd.f32 %v137, %v229
    %231 = vdwg.mxu0
    %232 = vmatpush.msra.mxu0 0.0
    %233 = vmatpush.msra.mxu0 0.0
    %234 = vmatpush.msra.mxu0 0.0
    %235 = vmatpush.msra.mxu0 0.0
    %236 = vmatpush.msra.mxu0 0.0
    %237 = vmatpush.msra.mxu0 0.0
    %238 = vmatpush.msra.mxu0 0.0
    %239 = vmatpush.msra.mxu0 0.0
    %240 = vmatpush.msra.mxu0 0.0
    %241 = vmatpush.msra.mxu0 0.0
    %242 = vmatpush.msra.mxu0 0.0
    %243 = vmatpush.msra.mxu0 0.0
    %244 = vmatpush.msra.mxu0 %v178
    %245 = vmatpush.msra.mxu0 %v44
    %246 = vmatpush.msra.mxu0 %v41
    %247 = vmatpush.msra.mxu0 %v38
    %248 = vmatmul.f32.gmra.mxu0 %v165
    %v249 = vpop.f32.mrf.mxu0
    %v250 = vadd.f32 %v157, %v249
    %251 = vmatmul.f32.gmra.mxu0 %v167
    %v252 = vpop.f32.mrf.mxu0
    %v253 = vadd.f32 %v160, %v252
    %254 = vmatmul.f32.gmra.mxu0 %v169
    %v255 = vpop.f32.mrf.mxu0
    %v256 = vadd.f32 %v163, %v255
    %257 = vdwg.mxu0
    %v261 = vrot.slane %v32, 1
    %v262 = vrot.slane %v33, 1
    %v263 = vsel %vm64, %v261, %v262
    %v264 = vrot.slane %v34, 1
    %v265 = vsel %vm64, %v262, %v264
    %v266 = vsel %vm70, %v263, 0
    %v268 = vsel %vm70, %v265, 0
    %v270 = vsel %vm70, %v264, 0
    %272 = vmatpush.msra.mxu0 0.0
    %273 = vmatpush.msra.mxu0 0.0
    %274 = vmatpush.msra.mxu0 0.0
    %275 = vmatpush.msra.mxu0 0.0
    %276 = vmatpush.msra.mxu0 0.0
    %277 = vmatpush.msra.mxu0 0.0
    %278 = vmatpush.msra.mxu0 0.0
    %279 = vmatpush.msra.mxu0 0.0
    %280 = vmatpush.msra.mxu0 0.0
    %281 = vmatpush.msra.mxu0 0.0
    %282 = vmatpush.msra.mxu0 0.0
    %283 = vmatpush.msra.mxu0 0.0
    %284 = vmatpush.msra.mxu0 %v79
    %285 = vmatpush.msra.mxu0 %v55
    %286 = vmatpush.msra.mxu0 %v52
    %287 = vmatpush.msra.mxu0 %v49
    %288 = vmatmul.f32.gmra.mxu0 %v266
    %v289 = vpop.f32.mrf.mxu0
    %v290 = vadd.f32 0.0, %v289
    %291 = vmatmul.f32.gmra.mxu0 %v268
    %v292 = vpop.f32.mrf.mxu0
    %v293 = vadd.f32 0.0, %v292
    %294 = vmatmul.f32.gmra.mxu0 %v270
    %v295 = vpop.f32.mrf.mxu0
    %v296 = vadd.f32 0.0, %v295
    %297 = vdwg.mxu0
    %298 = vmatpush.msra.mxu0 0.0
    %299 = vmatpush.msra.mxu0 0.0
    %300 = vmatpush.msra.mxu0 0.0
    %301 = vmatpush.msra.mxu0 0.0
    %302 = vmatpush.msra.mxu0 0.0
    %303 = vmatpush.msra.mxu0 0.0
    %304 = vmatpush.msra.mxu0 0.0
    %305 = vmatpush.msra.mxu0 0.0
    %306 = vmatpush.msra.mxu0 0.0
    %307 = vmatpush.msra.mxu0 0.0
    %308 = vmatpush.msra.mxu0 0.0
    %309 = vmatpush.msra.mxu0 0.0
    %310 = vmatpush.msra.mxu0 %v82
    %311 = vmatpush.msra.mxu0 %v56
    %312 = vmatpush.msra.mxu0 %v53
    %313 = vmatpush.msra.mxu0 %v50
    %314 = vmatmul.f32.gmra.mxu0 %v266
    %v315 = vpop.f32.mrf.mxu0
    %v316 = vadd.f32 0.0, %v315
    %317 = vmatmul.f32.gmra.mxu0 %v268
    %v318 = vpop.f32.mrf.mxu0
    %v319 = vadd.f32 0.0, %v318
    %320 = vmatmul.f32.gmra.mxu0 %v270
    %v321 = vpop.f32.mrf.mxu0
    %v322 = vadd.f32 0.0, %v321
    %323 = vdwg.mxu0
    %324 = vmatpush.msra.mxu0 0.0
    %325 = vmatpush.msra.mxu0 0.0
    %326 = vmatpush.msra.mxu0 0.0
    %327 = vmatpush.msra.mxu0 0.0
    %328 = vmatpush.msra.mxu0 0.0
    %329 = vmatpush.msra.mxu0 0.0
    %330 = vmatpush.msra.mxu0 0.0
    %331 = vmatpush.msra.mxu0 0.0
    %332 = vmatpush.msra.mxu0 0.0
    %333 = vmatpush.msra.mxu0 0.0
    %334 = vmatpush.msra.mxu0 0.0
    %335 = vmatpush.msra.mxu0 0.0
    %336 = vmatpush.msra.mxu0 %v85
    %337 = vmatpush.msra.mxu0 %v57
    %338 = vmatpush.msra.mxu0 %v54
    %339 = vmatpush.msra.mxu0 %v51
    %340 = vmatmul.f32.gmra.mxu0 %v266
    %v341 = vpop.f32.mrf.mxu0
    %v342 = vadd.f32 0.0, %v341
    %343 = vmatmul.f32.gmra.mxu0 %v268
    %v344 = vpop.f32.mrf.mxu0
    %v345 = vadd.f32 0.0, %v344
    %346 = vmatmul.f32.gmra.mxu0 %v270
    %v347 = vpop.f32.mrf.mxu0
    %v348 = vadd.f32 0.0, %v347
    %349 = vdwg.mxu0
    %v350 = vsel %vm70, %v32, 0
    %v352 = vsel %vm70, %v33, 0
    %v354 = vsel %vm70, %v34, 0
    %356 = vmatpush.msra.mxu0 0.0
    %357 = vmatpush.msra.mxu0 0.0
    %358 = vmatpush.msra.mxu0 0.0
    %359 = vmatpush.msra.mxu0 0.0
    %360 = vmatpush.msra.mxu0 0.0
    %361 = vmatpush.msra.mxu0 0.0
    %362 = vmatpush.msra.mxu0 0.0
    %363 = vmatpush.msra.mxu0 0.0
    %364 = vmatpush.msra.mxu0 0.0
    %365 = vmatpush.msra.mxu0 0.0
    %366 = vmatpush.msra.mxu0 0.0
    %367 = vmatpush.msra.mxu0 0.0
    %368 = vmatpush.msra.mxu0 %v172
    %369 = vmatpush.msra.mxu0 %v42
    %370 = vmatpush.msra.mxu0 %v39
    %371 = vmatpush.msra.mxu0 %v36
    %372 = vmatmul.f32.gmra.mxu0 %v350
    %v373 = vpop.f32.mrf.mxu0
    %v374 = vadd.f32 %v290, %v373
    %375 = vmatmul.f32.gmra.mxu0 %v352
    %v376 = vpop.f32.mrf.mxu0
    %v377 = vadd.f32 %v293, %v376
    %378 = vmatmul.f32.gmra.mxu0 %v354
    %v379 = vpop.f32.mrf.mxu0
    %v380 = vadd.f32 %v296, %v379
    %381 = vdwg.mxu0
    %382 = vmatpush.msra.mxu0 0.0
    %383 = vmatpush.msra.mxu0 0.0
    %384 = vmatpush.msra.mxu0 0.0
    %385 = vmatpush.msra.mxu0 0.0
    %386 = vmatpush.msra.mxu0 0.0
    %387 = vmatpush.msra.mxu0 0.0
    %388 = vmatpush.msra.mxu0 0.0
    %389 = vmatpush.msra.mxu0 0.0
    %390 = vmatpush.msra.mxu0 0.0
    %391 = vmatpush.msra.mxu0 0.0
    %392 = vmatpush.msra.mxu0 0.0
    %393 = vmatpush.msra.mxu0 0.0
    %394 = vmatpush.msra.mxu0 %v175
    %395 = vmatpush.msra.mxu0 %v43
    %396 = vmatpush.msra.mxu0 %v40
    %397 = vmatpush.msra.mxu0 %v37
    %398 = vmatmul.f32.gmra.mxu0 %v350
    %v399 = vpop.f32.mrf.mxu0
    %v400 = vadd.f32 %v316, %v399
    %401 = vmatmul.f32.gmra.mxu0 %v352
    %v402 = vpop.f32.mrf.mxu0
    %v403 = vadd.f32 %v319, %v402
    %404 = vmatmul.f32.gmra.mxu0 %v354
    %v405 = vpop.f32.mrf.mxu0
    %v406 = vadd.f32 %v322, %v405
    %407 = vdwg.mxu0
    %408 = vmatpush.msra.mxu0 0.0
    %409 = vmatpush.msra.mxu0 0.0
    %410 = vmatpush.msra.mxu0 0.0
    %411 = vmatpush.msra.mxu0 0.0
    %412 = vmatpush.msra.mxu0 0.0
    %413 = vmatpush.msra.mxu0 0.0
    %414 = vmatpush.msra.mxu0 0.0
    %415 = vmatpush.msra.mxu0 0.0
    %416 = vmatpush.msra.mxu0 0.0
    %417 = vmatpush.msra.mxu0 0.0
    %418 = vmatpush.msra.mxu0 0.0
    %419 = vmatpush.msra.mxu0 0.0
    %420 = vmatpush.msra.mxu0 %v178
    %421 = vmatpush.msra.mxu0 %v44
    %422 = vmatpush.msra.mxu0 %v41
    %423 = vmatpush.msra.mxu0 %v38
    %424 = vmatmul.f32.gmra.mxu0 %v350
    %v425 = vpop.f32.mrf.mxu0
    %v426 = vadd.f32 %v342, %v425
    %427 = vmatmul.f32.gmra.mxu0 %v352
    %v428 = vpop.f32.mrf.mxu0
    %v429 = vadd.f32 %v345, %v428
    %430 = vmatmul.f32.gmra.mxu0 %v354
    %v431 = vpop.f32.mrf.mxu0
    %v432 = vadd.f32 %v348, %v431
    %433 = vdwg.mxu0
    %s434 = scalar_lea.vmem %s1, 192
    %v435 = vld [vmem:[%s434] sm:$0xff]
    %v436 = vld [vmem:[%s434 + $0x8] sm:$0xff]
    %v437 = vld [vmem:[%s434 + $0x10] sm:$0xff]
    %v438 = vld [vmem:[%s434 + $0x18] sm:$0xff]
    %v439 = vld [vmem:[%s434 + $0x20] sm:$0xff]
    %v440 = vld [vmem:[%s434 + $0x28] sm:$0xff]
    %v441 = vld [vmem:[%s434 + $0x30] sm:$0xff]
    %v442 = vld [vmem:[%s434 + $0x38] sm:$0xff]
    %v443 = vld [vmem:[%s434 + $0x40] sm:$0xff]
    %v444 = vld [vmem:[%s434 + $0x48] sm:$0xf]
    %v445 = vld [vmem:[%s434 + $0x50] sm:$0xf]
    %v446 = vld [vmem:[%s434 + $0x58] sm:$0xf]
    %vm447 = vcmask 1045504
    %v448 = vrot.slane %v27, 2
    %v449 = vrot.slane %v28, 2
    %v450 = vsel %vm447, %v448, %v449
    %v451 = vrot.slane %v29, 2
    %v452 = vsel %vm447, %v449, %v451
    %v453 = vsel %vm70, %v450, 0
    %v455 = vsel %vm70, %v452, 0
    %v457 = vsel %vm70, %v451, 0
    %v460 = vsel %vm77, %v444, 0
    %v463 = vsel %vm77, %v445, 0
    %v466 = vsel %vm77, %v446, 0
    %468 = vmatpush.msra.mxu0 0.0
    %469 = vmatpush.msra.mxu0 0.0
    %470 = vmatpush.msra.mxu0 0.0
    %471 = vmatpush.msra.mxu0 0.0
    %472 = vmatpush.msra.mxu0 0.0
    %473 = vmatpush.msra.mxu0 0.0
    %474 = vmatpush.msra.mxu0 0.0
    %475 = vmatpush.msra.mxu0 0.0
    %476 = vmatpush.msra.mxu0 0.0
    %477 = vmatpush.msra.mxu0 0.0
    %478 = vmatpush.msra.mxu0 0.0
    %479 = vmatpush.msra.mxu0 0.0
    %480 = vmatpush.msra.mxu0 %v460
    %481 = vmatpush.msra.mxu0 %v441
    %482 = vmatpush.msra.mxu0 %v438
    %483 = vmatpush.msra.mxu0 %v435
    %484 = vmatmul.f32.gmra.mxu0 %v453
    %v485 = vpop.f32.mrf.mxu0
    %v486 = vadd.f32 0.0, %v485
    %487 = vmatmul.f32.gmra.mxu0 %v455
    %v488 = vpop.f32.mrf.mxu0
    %v489 = vadd.f32 0.0, %v488
    %490 = vmatmul.f32.gmra.mxu0 %v457
    %v491 = vpop.f32.mrf.mxu0
    %v492 = vadd.f32 0.0, %v491
    %493 = vdwg.mxu0
    %494 = vmatpush.msra.mxu0 0.0
    %495 = vmatpush.msra.mxu0 0.0
    %496 = vmatpush.msra.mxu0 0.0
    %497 = vmatpush.msra.mxu0 0.0
    %498 = vmatpush.msra.mxu0 0.0
    %499 = vmatpush.msra.mxu0 0.0
    %500 = vmatpush.msra.mxu0 0.0
    %501 = vmatpush.msra.mxu0 0.0
    %502 = vmatpush.msra.mxu0 0.0
    %503 = vmatpush.msra.mxu0 0.0
    %504 = vmatpush.msra.mxu0 0.0
    %505 = vmatpush.msra.mxu0 0.0
    %506 = vmatpush.msra.mxu0 %v463
    %507 = vmatpush.msra.mxu0 %v442
    %508 = vmatpush.msra.mxu0 %v439
    %509 = vmatpush.msra.mxu0 %v436
    %510 = vmatmul.f32.gmra.mxu0 %v453
    %v511 = vpop.f32.mrf.mxu0
    %v512 = vadd.f32 0.0, %v511
    %513 = vmatmul.f32.gmra.mxu0 %v455
    %v514 = vpop.f32.mrf.mxu0
    %v515 = vadd.f32 0.0, %v514
    %516 = vmatmul.f32.gmra.mxu0 %v457
    %v517 = vpop.f32.mrf.mxu0
    %v518 = vadd.f32 0.0, %v517
    %519 = vdwg.mxu0
    %520 = vmatpush.msra.mxu0 0.0
    %521 = vmatpush.msra.mxu0 0.0
    %522 = vmatpush.msra.mxu0 0.0
    %523 = vmatpush.msra.mxu0 0.0
    %524 = vmatpush.msra.mxu0 0.0
    %525 = vmatpush.msra.mxu0 0.0
    %526 = vmatpush.msra.mxu0 0.0
    %527 = vmatpush.msra.mxu0 0.0
    %528 = vmatpush.msra.mxu0 0.0
    %529 = vmatpush.msra.mxu0 0.0
    %530 = vmatpush.msra.mxu0 0.0
    %531 = vmatpush.msra.mxu0 0.0
    %532 = vmatpush.msra.mxu0 %v466
    %533 = vmatpush.msra.mxu0 %v443
    %534 = vmatpush.msra.mxu0 %v440
    %535 = vmatpush.msra.mxu0 %v437
    %536 = vmatmul.f32.gmra.mxu0 %v453
    %v537 = vpop.f32.mrf.mxu0
    %v538 = vadd.f32 0.0, %v537
    %539 = vmatmul.f32.gmra.mxu0 %v455
    %v540 = vpop.f32.mrf.mxu0
    %v541 = vadd.f32 0.0, %v540
    %542 = vmatmul.f32.gmra.mxu0 %v457
    %v543 = vpop.f32.mrf.mxu0
    %v544 = vadd.f32 0.0, %v543
    %545 = vdwg.mxu0
    %v546 = vadd.f32 %v198, %v486
    %v547 = vadd.f32 %v224, %v512
    %v548 = vadd.f32 %v250, %v538
    %v549 = vadd.f32 %v201, %v489
    %v550 = vadd.f32 %v227, %v515
    %v551 = vadd.f32 %v253, %v541
    %v552 = vadd.f32 %v204, %v492
    %v553 = vadd.f32 %v230, %v518
    %v554 = vadd.f32 %v256, %v544
    %v555 = vrot.slane %v32, 2
    %v556 = vrot.slane %v33, 2
    %v557 = vsel %vm447, %v555, %v556
    %v558 = vrot.slane %v34, 2
    %v559 = vsel %vm447, %v556, %v558
    %v560 = vsel %vm70, %v557, 0
    %v562 = vsel %vm70, %v559, 0
    %v564 = vsel %vm70, %v558, 0
    %566 = vmatpush.msra.mxu0 0.0
    %567 = vmatpush.msra.mxu0 0.0
    %568 = vmatpush.msra.mxu0 0.0
    %569 = vmatpush.msra.mxu0 0.0
    %570 = vmatpush.msra.mxu0 0.0
    %571 = vmatpush.msra.mxu0 0.0
    %572 = vmatpush.msra.mxu0 0.0
    %573 = vmatpush.msra.mxu0 0.0
    %574 = vmatpush.msra.mxu0 0.0
    %575 = vmatpush.msra.mxu0 0.0
    %576 = vmatpush.msra.mxu0 0.0
    %577 = vmatpush.msra.mxu0 0.0
    %578 = vmatpush.msra.mxu0 %v460
    %579 = vmatpush.msra.mxu0 %v441
    %580 = vmatpush.msra.mxu0 %v438
    %581 = vmatpush.msra.mxu0 %v435
    %582 = vmatmul.f32.gmra.mxu0 %v560
    %v583 = vpop.f32.mrf.mxu0
    %v584 = vadd.f32 0.0, %v583
    %585 = vmatmul.f32.gmra.mxu0 %v562
    %v586 = vpop.f32.mrf.mxu0
    %v587 = vadd.f32 0.0, %v586
    %588 = vmatmul.f32.gmra.mxu0 %v564
    %v589 = vpop.f32.mrf.mxu0
    %v590 = vadd.f32 0.0, %v589
    %591 = vdwg.mxu0
    %592 = vmatpush.msra.mxu0 0.0
    %593 = vmatpush.msra.mxu0 0.0
    %594 = vmatpush.msra.mxu0 0.0
    %595 = vmatpush.msra.mxu0 0.0
    %596 = vmatpush.msra.mxu0 0.0
    %597 = vmatpush.msra.mxu0 0.0
    %598 = vmatpush.msra.mxu0 0.0
    %599 = vmatpush.msra.mxu0 0.0
    %600 = vmatpush.msra.mxu0 0.0
    %601 = vmatpush.msra.mxu0 0.0
    %602 = vmatpush.msra.mxu0 0.0
    %603 = vmatpush.msra.mxu0 0.0
    %604 = vmatpush.msra.mxu0 %v463
    %605 = vmatpush.msra.mxu0 %v442
    %606 = vmatpush.msra.mxu0 %v439
    %607 = vmatpush.msra.mxu0 %v436
    %608 = vmatmul.f32.gmra.mxu0 %v560
    %v609 = vpop.f32.mrf.mxu0
    %v610 = vadd.f32 0.0, %v609
    %611 = vmatmul.f32.gmra.mxu0 %v562
    %v612 = vpop.f32.mrf.mxu0
    %v613 = vadd.f32 0.0, %v612
    %614 = vmatmul.f32.gmra.mxu0 %v564
    %v615 = vpop.f32.mrf.mxu0
    %v616 = vadd.f32 0.0, %v615
    %617 = vdwg.mxu0
    %618 = vmatpush.msra.mxu0 0.0
    %619 = vmatpush.msra.mxu0 0.0
    %620 = vmatpush.msra.mxu0 0.0
    %621 = vmatpush.msra.mxu0 0.0
    %622 = vmatpush.msra.mxu0 0.0
    %623 = vmatpush.msra.mxu0 0.0
    %624 = vmatpush.msra.mxu0 0.0
    %625 = vmatpush.msra.mxu0 0.0
    %626 = vmatpush.msra.mxu0 0.0
    %627 = vmatpush.msra.mxu0 0.0
    %628 = vmatpush.msra.mxu0 0.0
    %629 = vmatpush.msra.mxu0 0.0
    %630 = vmatpush.msra.mxu0 %v466
    %631 = vmatpush.msra.mxu0 %v443
    %632 = vmatpush.msra.mxu0 %v440
    %633 = vmatpush.msra.mxu0 %v437
    %634 = vmatmul.f32.gmra.mxu0 %v560
    %v635 = vpop.f32.mrf.mxu0
    %v636 = vadd.f32 0.0, %v635
    %637 = vmatmul.f32.gmra.mxu0 %v562
    %v638 = vpop.f32.mrf.mxu0
    %v639 = vadd.f32 0.0, %v638
    %640 = vmatmul.f32.gmra.mxu0 %v564
    %v641 = vpop.f32.mrf.mxu0
    %v642 = vadd.f32 0.0, %v641
    %643 = vdwg.mxu0
    %v644 = vadd.f32 %v374, %v584
    %v645 = vadd.f32 %v400, %v610
    %v646 = vadd.f32 %v426, %v636
    %v647 = vadd.f32 %v377, %v587
    %v648 = vadd.f32 %v403, %v613
    %v649 = vadd.f32 %v429, %v639
    %v650 = vadd.f32 %v380, %v590
    %v651 = vadd.f32 %v406, %v616
    %v652 = vadd.f32 %v432, %v642
    %s653 = scalar_lea.vmem %s1, 288
    %v654 = vld [vmem:[%s653] sm:$0xff]
    %v655 = vld [vmem:[%s653 + $0x8] sm:$0xff]
    %v656 = vld [vmem:[%s653 + $0x10] sm:$0xff]
    %v657 = vld [vmem:[%s653 + $0x18] sm:$0xff]
    %v658 = vld [vmem:[%s653 + $0x20] sm:$0xff]
    %v659 = vld [vmem:[%s653 + $0x28] sm:$0xff]
    %v660 = vld [vmem:[%s653 + $0x30] sm:$0xff]
    %v661 = vld [vmem:[%s653 + $0x38] sm:$0xff]
    %v662 = vld [vmem:[%s653 + $0x40] sm:$0xff]
    %v663 = vld [vmem:[%s653 + $0x48] sm:$0xf]
    %v664 = vld [vmem:[%s653 + $0x50] sm:$0xf]
    %v665 = vld [vmem:[%s653 + $0x58] sm:$0xf]
    %vm666 = vcmask 1044480
    %v667 = vrot.slane %v27, 3
    %v668 = vrot.slane %v28, 3
    %v669 = vsel %vm666, %v667, %v668
    %v670 = vrot.slane %v29, 3
    %v671 = vsel %vm666, %v668, %v670
    %v672 = vsel %vm70, %v669, 0
    %v674 = vsel %vm70, %v671, 0
    %v676 = vsel %vm70, %v670, 0
    %v679 = vsel %vm77, %v663, 0
    %v682 = vsel %vm77, %v664, 0
    %v685 = vsel %vm77, %v665, 0
    %687 = vmatpush.msra.mxu0 0.0
    %688 = vmatpush.msra.mxu0 0.0
    %689 = vmatpush.msra.mxu0 0.0
    %690 = vmatpush.msra.mxu0 0.0
    %691 = vmatpush.msra.mxu0 0.0
    %692 = vmatpush.msra.mxu0 0.0
    %693 = vmatpush.msra.mxu0 0.0
    %694 = vmatpush.msra.mxu0 0.0
    %695 = vmatpush.msra.mxu0 0.0
    %696 = vmatpush.msra.mxu0 0.0
    %697 = vmatpush.msra.mxu0 0.0
    %698 = vmatpush.msra.mxu0 0.0
    %699 = vmatpush.msra.mxu0 %v679
    %700 = vmatpush.msra.mxu0 %v660
    %701 = vmatpush.msra.mxu0 %v657
    %702 = vmatpush.msra.mxu0 %v654
    %703 = vmatmul.f32.gmra.mxu0 %v672
    %v704 = vpop.f32.mrf.mxu0
    %v705 = vadd.f32 0.0, %v704
    %706 = vmatmul.f32.gmra.mxu0 %v674
    %v707 = vpop.f32.mrf.mxu0
    %v708 = vadd.f32 0.0, %v707
    %709 = vmatmul.f32.gmra.mxu0 %v676
    %v710 = vpop.f32.mrf.mxu0
    %v711 = vadd.f32 0.0, %v710
    %712 = vdwg.mxu0
    %713 = vmatpush.msra.mxu0 0.0
    %714 = vmatpush.msra.mxu0 0.0
    %715 = vmatpush.msra.mxu0 0.0
    %716 = vmatpush.msra.mxu0 0.0
    %717 = vmatpush.msra.mxu0 0.0
    %718 = vmatpush.msra.mxu0 0.0
    %719 = vmatpush.msra.mxu0 0.0
    %720 = vmatpush.msra.mxu0 0.0
    %721 = vmatpush.msra.mxu0 0.0
    %722 = vmatpush.msra.mxu0 0.0
    %723 = vmatpush.msra.mxu0 0.0
    %724 = vmatpush.msra.mxu0 0.0
    %725 = vmatpush.msra.mxu0 %v682
    %726 = vmatpush.msra.mxu0 %v661
    %727 = vmatpush.msra.mxu0 %v658
    %728 = vmatpush.msra.mxu0 %v655
    %729 = vmatmul.f32.gmra.mxu0 %v672
    %v730 = vpop.f32.mrf.mxu0
    %v731 = vadd.f32 0.0, %v730
    %732 = vmatmul.f32.gmra.mxu0 %v674
    %v733 = vpop.f32.mrf.mxu0
    %v734 = vadd.f32 0.0, %v733
    %735 = vmatmul.f32.gmra.mxu0 %v676
    %v736 = vpop.f32.mrf.mxu0
    %v737 = vadd.f32 0.0, %v736
    %738 = vdwg.mxu0
    %739 = vmatpush.msra.mxu0 0.0
    %740 = vmatpush.msra.mxu0 0.0
    %741 = vmatpush.msra.mxu0 0.0
    %742 = vmatpush.msra.mxu0 0.0
    %743 = vmatpush.msra.mxu0 0.0
    %744 = vmatpush.msra.mxu0 0.0
    %745 = vmatpush.msra.mxu0 0.0
    %746 = vmatpush.msra.mxu0 0.0
    %747 = vmatpush.msra.mxu0 0.0
    %748 = vmatpush.msra.mxu0 0.0
    %749 = vmatpush.msra.mxu0 0.0
    %750 = vmatpush.msra.mxu0 0.0
    %751 = vmatpush.msra.mxu0 %v685
    %752 = vmatpush.msra.mxu0 %v662
    %753 = vmatpush.msra.mxu0 %v659
    %754 = vmatpush.msra.mxu0 %v656
    %755 = vmatmul.f32.gmra.mxu0 %v672
    %v756 = vpop.f32.mrf.mxu0
    %v757 = vadd.f32 0.0, %v756
    %758 = vmatmul.f32.gmra.mxu0 %v674
    %v759 = vpop.f32.mrf.mxu0
    %v760 = vadd.f32 0.0, %v759
    %761 = vmatmul.f32.gmra.mxu0 %v676
    %v762 = vpop.f32.mrf.mxu0
    %v763 = vadd.f32 0.0, %v762
    %764 = vdwg.mxu0
    %v765 = vadd.f32 %v546, %v705
    %v766 = vadd.f32 %v547, %v731
    %v767 = vadd.f32 %v548, %v757
    %v768 = vadd.f32 %v549, %v708
    %v769 = vadd.f32 %v550, %v734
    %v770 = vadd.f32 %v551, %v760
    %v771 = vadd.f32 %v552, %v711
    %v772 = vadd.f32 %v553, %v737
    %v773 = vadd.f32 %v554, %v763
    %v774 = vrot.slane %v32, 3
    %v775 = vrot.slane %v33, 3
    %v776 = vsel %vm666, %v774, %v775
    %v777 = vrot.slane %v34, 3
    %v778 = vsel %vm666, %v775, %v777
    %v779 = vsel %vm70, %v776, 0
    %v781 = vsel %vm70, %v778, 0
    %v783 = vsel %vm70, %v777, 0
    %785 = vmatpush.msra.mxu0 0.0
    %786 = vmatpush.msra.mxu0 0.0
    %787 = vmatpush.msra.mxu0 0.0
    %788 = vmatpush.msra.mxu0 0.0
    %789 = vmatpush.msra.mxu0 0.0
    %790 = vmatpush.msra.mxu0 0.0
    %791 = vmatpush.msra.mxu0 0.0
    %792 = vmatpush.msra.mxu0 0.0
    %793 = vmatpush.msra.mxu0 0.0
    %794 = vmatpush.msra.mxu0 0.0
    %795 = vmatpush.msra.mxu0 0.0
    %796 = vmatpush.msra.mxu0 0.0
    %797 = vmatpush.msra.mxu0 %v679
    %798 = vmatpush.msra.mxu0 %v660
    %799 = vmatpush.msra.mxu0 %v657
    %800 = vmatpush.msra.mxu0 %v654
    %801 = vmatmul.f32.gmra.mxu0 %v779
    %v802 = vpop.f32.mrf.mxu0
    %v803 = vadd.f32 0.0, %v802
    %804 = vmatmul.f32.gmra.mxu0 %v781
    %v805 = vpop.f32.mrf.mxu0
    %v806 = vadd.f32 0.0, %v805
    %807 = vmatmul.f32.gmra.mxu0 %v783
    %v808 = vpop.f32.mrf.mxu0
    %v809 = vadd.f32 0.0, %v808
    %810 = vdwg.mxu0
    %811 = vmatpush.msra.mxu0 0.0
    %812 = vmatpush.msra.mxu0 0.0
    %813 = vmatpush.msra.mxu0 0.0
    %814 = vmatpush.msra.mxu0 0.0
    %815 = vmatpush.msra.mxu0 0.0
    %816 = vmatpush.msra.mxu0 0.0
    %817 = vmatpush.msra.mxu0 0.0
    %818 = vmatpush.msra.mxu0 0.0
    %819 = vmatpush.msra.mxu0 0.0
    %820 = vmatpush.msra.mxu0 0.0
    %821 = vmatpush.msra.mxu0 0.0
    %822 = vmatpush.msra.mxu0 0.0
    %823 = vmatpush.msra.mxu0 %v682
    %824 = vmatpush.msra.mxu0 %v661
    %825 = vmatpush.msra.mxu0 %v658
    %826 = vmatpush.msra.mxu0 %v655
    %827 = vmatmul.f32.gmra.mxu0 %v779
    %v828 = vpop.f32.mrf.mxu0
    %v829 = vadd.f32 0.0, %v828
    %830 = vmatmul.f32.gmra.mxu0 %v781
    %v831 = vpop.f32.mrf.mxu0
    %v832 = vadd.f32 0.0, %v831
    %833 = vmatmul.f32.gmra.mxu0 %v783
    %v834 = vpop.f32.mrf.mxu0
    %v835 = vadd.f32 0.0, %v834
    %836 = vdwg.mxu0
    %837 = vmatpush.msra.mxu0 0.0
    %838 = vmatpush.msra.mxu0 0.0
    %839 = vmatpush.msra.mxu0 0.0
    %840 = vmatpush.msra.mxu0 0.0
    %841 = vmatpush.msra.mxu0 0.0
    %842 = vmatpush.msra.mxu0 0.0
    %843 = vmatpush.msra.mxu0 0.0
    %844 = vmatpush.msra.mxu0 0.0
    %845 = vmatpush.msra.mxu0 0.0
    %846 = vmatpush.msra.mxu0 0.0
    %847 = vmatpush.msra.mxu0 0.0
    %848 = vmatpush.msra.mxu0 0.0
    %849 = vmatpush.msra.mxu0 %v685
    %850 = vmatpush.msra.mxu0 %v662
    %851 = vmatpush.msra.mxu0 %v659
    %852 = vmatpush.msra.mxu0 %v656
    %853 = vmatmul.f32.gmra.mxu0 %v779
    %v854 = vpop.f32.mrf.mxu0
    %v855 = vadd.f32 0.0, %v854
    %856 = vmatmul.f32.gmra.mxu0 %v781
    %v857 = vpop.f32.mrf.mxu0
    %v858 = vadd.f32 0.0, %v857
    %859 = vmatmul.f32.gmra.mxu0 %v783
    %v860 = vpop.f32.mrf.mxu0
    %v861 = vadd.f32 0.0, %v860
    %862 = vdwg.mxu0
    %v863 = vadd.f32 %v644, %v803
    %v864 = vadd.f32 %v645, %v829
    %v865 = vadd.f32 %v646, %v855
    %v866 = vadd.f32 %v647, %v806
    %v867 = vadd.f32 %v648, %v832
    %v868 = vadd.f32 %v649, %v858
    %v869 = vadd.f32 %v650, %v809
    %v870 = vadd.f32 %v651, %v835
    %v871 = vadd.f32 %v652, %v861
    %s872 = scalar_lea.vmem %s1, 384
    %v873 = vld [vmem:[%s872] sm:$0xff]
    %v874 = vld [vmem:[%s872 + $0x8] sm:$0xff]
    %v875 = vld [vmem:[%s872 + $0x10] sm:$0xff]
    %v876 = vld [vmem:[%s872 + $0x18] sm:$0xff]
    %v877 = vld [vmem:[%s872 + $0x20] sm:$0xff]
    %v878 = vld [vmem:[%s872 + $0x28] sm:$0xff]
    %v879 = vld [vmem:[%s872 + $0x30] sm:$0xff]
    %v880 = vld [vmem:[%s872 + $0x38] sm:$0xff]
    %v881 = vld [vmem:[%s872 + $0x40] sm:$0xff]
    %v882 = vld [vmem:[%s872 + $0x48] sm:$0xf]
    %v883 = vld [vmem:[%s872 + $0x50] sm:$0xf]
    %v884 = vld [vmem:[%s872 + $0x58] sm:$0xf]
    %v886 = vrot.slane %v27, 4
    %v887 = vrot.slane %v28, 4
    %v888 = vsel %vm77, %v886, %v887
    %v889 = vrot.slane %v29, 4
    %v890 = vsel %vm77, %v887, %v889
    %v891 = vrot.slane %v30, 4
    %v892 = vsel %vm77, %v889, %v891
    %v893 = vsel %vm70, %v888, 0
    %v895 = vsel %vm70, %v890, 0
    %v897 = vsel %vm70, %v892, 0
    %v900 = vsel %vm77, %v882, 0
    %v903 = vsel %vm77, %v883, 0
    %v906 = vsel %vm77, %v884, 0
    %908 = vmatpush.msra.mxu0 0.0
    %909 = vmatpush.msra.mxu0 0.0
    %910 = vmatpush.msra.mxu0 0.0
    %911 = vmatpush.msra.mxu0 0.0
    %912 = vmatpush.msra.mxu0 0.0
    %913 = vmatpush.msra.mxu0 0.0
    %914 = vmatpush.msra.mxu0 0.0
    %915 = vmatpush.msra.mxu0 0.0
    %916 = vmatpush.msra.mxu0 0.0
    %917 = vmatpush.msra.mxu0 0.0
    %918 = vmatpush.msra.mxu0 0.0
    %919 = vmatpush.msra.mxu0 0.0
    %920 = vmatpush.msra.mxu0 %v900
    %921 = vmatpush.msra.mxu0 %v879
    %922 = vmatpush.msra.mxu0 %v876
    %923 = vmatpush.msra.mxu0 %v873
    %924 = vmatmul.f32.gmra.mxu0 %v893
    %v925 = vpop.f32.mrf.mxu0
    %v926 = vadd.f32 0.0, %v925
    %927 = vmatmul.f32.gmra.mxu0 %v895
    %v928 = vpop.f32.mrf.mxu0
    %v929 = vadd.f32 0.0, %v928
    %930 = vmatmul.f32.gmra.mxu0 %v897
    %v931 = vpop.f32.mrf.mxu0
    %v932 = vadd.f32 0.0, %v931
    %933 = vdwg.mxu0
    %934 = vmatpush.msra.mxu0 0.0
    %935 = vmatpush.msra.mxu0 0.0
    %936 = vmatpush.msra.mxu0 0.0
    %937 = vmatpush.msra.mxu0 0.0
    %938 = vmatpush.msra.mxu0 0.0
    %939 = vmatpush.msra.mxu0 0.0
    %940 = vmatpush.msra.mxu0 0.0
    %941 = vmatpush.msra.mxu0 0.0
    %942 = vmatpush.msra.mxu0 0.0
    %943 = vmatpush.msra.mxu0 0.0
    %944 = vmatpush.msra.mxu0 0.0
    %945 = vmatpush.msra.mxu0 0.0
    %946 = vmatpush.msra.mxu0 %v903
    %947 = vmatpush.msra.mxu0 %v880
    %948 = vmatpush.msra.mxu0 %v877
    %949 = vmatpush.msra.mxu0 %v874
    %950 = vmatmul.f32.gmra.mxu0 %v893
    %v951 = vpop.f32.mrf.mxu0
    %v952 = vadd.f32 0.0, %v951
    %953 = vmatmul.f32.gmra.mxu0 %v895
    %v954 = vpop.f32.mrf.mxu0
    %v955 = vadd.f32 0.0, %v954
    %956 = vmatmul.f32.gmra.mxu0 %v897
    %v957 = vpop.f32.mrf.mxu0
    %v958 = vadd.f32 0.0, %v957
    %959 = vdwg.mxu0
    %960 = vmatpush.msra.mxu0 0.0
    %961 = vmatpush.msra.mxu0 0.0
    %962 = vmatpush.msra.mxu0 0.0
    %963 = vmatpush.msra.mxu0 0.0
    %964 = vmatpush.msra.mxu0 0.0
    %965 = vmatpush.msra.mxu0 0.0
    %966 = vmatpush.msra.mxu0 0.0
    %967 = vmatpush.msra.mxu0 0.0
    %968 = vmatpush.msra.mxu0 0.0
    %969 = vmatpush.msra.mxu0 0.0
    %970 = vmatpush.msra.mxu0 0.0
    %971 = vmatpush.msra.mxu0 0.0
    %972 = vmatpush.msra.mxu0 %v906
    %973 = vmatpush.msra.mxu0 %v881
    %974 = vmatpush.msra.mxu0 %v878
    %975 = vmatpush.msra.mxu0 %v875
    %976 = vmatmul.f32.gmra.mxu0 %v893
    %v977 = vpop.f32.mrf.mxu0
    %v978 = vadd.f32 0.0, %v977
    %979 = vmatmul.f32.gmra.mxu0 %v895
    %v980 = vpop.f32.mrf.mxu0
    %v981 = vadd.f32 0.0, %v980
    %982 = vmatmul.f32.gmra.mxu0 %v897
    %v983 = vpop.f32.mrf.mxu0
    %v984 = vadd.f32 0.0, %v983
    %985 = vdwg.mxu0
    %v986 = vadd.f32 %v765, %v926
    %v987 = vadd.f32 %v766, %v952
    %v988 = vadd.f32 %v767, %v978
    %v989 = vadd.f32 %v768, %v929
    %v990 = vadd.f32 %v769, %v955
    %v991 = vadd.f32 %v770, %v981
    %v992 = vadd.f32 %v771, %v932
    %v993 = vadd.f32 %v772, %v958
    %v994 = vadd.f32 %v773, %v984
    %v996 = vrot.slane %v32, 4
    %v997 = vrot.slane %v33, 4
    %v998 = vsel %vm77, %v996, %v997
    %v999 = vrot.slane %v34, 4
    %v1000 = vsel %vm77, %v997, %v999
    %v1001 = vrot.slane %v35, 4
    %v1002 = vsel %vm77, %v999, %v1001
    %v1003 = vsel %vm70, %v998, 0
    %v1005 = vsel %vm70, %v1000, 0
    %v1007 = vsel %vm70, %v1002, 0
    %1009 = vmatpush.msra.mxu0 0.0
    %1010 = vmatpush.msra.mxu0 0.0
    %1011 = vmatpush.msra.mxu0 0.0
    %1012 = vmatpush.msra.mxu0 0.0
    %1013 = vmatpush.msra.mxu0 0.0
    %1014 = vmatpush.msra.mxu0 0.0
    %1015 = vmatpush.msra.mxu0 0.0
    %1016 = vmatpush.msra.mxu0 0.0
    %1017 = vmatpush.msra.mxu0 0.0
    %1018 = vmatpush.msra.mxu0 0.0
    %1019 = vmatpush.msra.mxu0 0.0
    %1020 = vmatpush.msra.mxu0 0.0
    %1021 = vmatpush.msra.mxu0 %v900
    %1022 = vmatpush.msra.mxu0 %v879
    %1023 = vmatpush.msra.mxu0 %v876
    %1024 = vmatpush.msra.mxu0 %v873
    %1025 = vmatmul.f32.gmra.mxu0 %v1003
    %v1026 = vpop.f32.mrf.mxu0
    %v1027 = vadd.f32 0.0, %v1026
    %1028 = vmatmul.f32.gmra.mxu0 %v1005
    %v1029 = vpop.f32.mrf.mxu0
    %v1030 = vadd.f32 0.0, %v1029
    %1031 = vmatmul.f32.gmra.mxu0 %v1007
    %v1032 = vpop.f32.mrf.mxu0
    %v1033 = vadd.f32 0.0, %v1032
    %1034 = vdwg.mxu0
    %1035 = vmatpush.msra.mxu0 0.0
    %1036 = vmatpush.msra.mxu0 0.0
    %1037 = vmatpush.msra.mxu0 0.0
    %1038 = vmatpush.msra.mxu0 0.0
    %1039 = vmatpush.msra.mxu0 0.0
    %1040 = vmatpush.msra.mxu0 0.0
    %1041 = vmatpush.msra.mxu0 0.0
    %1042 = vmatpush.msra.mxu0 0.0
    %1043 = vmatpush.msra.mxu0 0.0
    %1044 = vmatpush.msra.mxu0 0.0
    %1045 = vmatpush.msra.mxu0 0.0
    %1046 = vmatpush.msra.mxu0 0.0
    %1047 = vmatpush.msra.mxu0 %v903
    %1048 = vmatpush.msra.mxu0 %v880
    %1049 = vmatpush.msra.mxu0 %v877
    %1050 = vmatpush.msra.mxu0 %v874
    %1051 = vmatmul.f32.gmra.mxu0 %v1003
    %v1052 = vpop.f32.mrf.mxu0
    %v1053 = vadd.f32 0.0, %v1052
    %1054 = vmatmul.f32.gmra.mxu0 %v1005
    %v1055 = vpop.f32.mrf.mxu0
    %v1056 = vadd.f32 0.0, %v1055
    %1057 = vmatmul.f32.gmra.mxu0 %v1007
    %v1058 = vpop.f32.mrf.mxu0
    %v1059 = vadd.f32 0.0, %v1058
    %1060 = vdwg.mxu0
    %1061 = vmatpush.msra.mxu0 0.0
    %1062 = vmatpush.msra.mxu0 0.0
    %1063 = vmatpush.msra.mxu0 0.0
    %1064 = vmatpush.msra.mxu0 0.0
    %1065 = vmatpush.msra.mxu0 0.0
    %1066 = vmatpush.msra.mxu0 0.0
    %1067 = vmatpush.msra.mxu0 0.0
    %1068 = vmatpush.msra.mxu0 0.0
    %1069 = vmatpush.msra.mxu0 0.0
    %1070 = vmatpush.msra.mxu0 0.0
    %1071 = vmatpush.msra.mxu0 0.0
    %1072 = vmatpush.msra.mxu0 0.0
    %1073 = vmatpush.msra.mxu0 %v906
    %1074 = vmatpush.msra.mxu0 %v881
    %1075 = vmatpush.msra.mxu0 %v878
    %1076 = vmatpush.msra.mxu0 %v875
    %1077 = vmatmul.f32.gmra.mxu0 %v1003
    %v1078 = vpop.f32.mrf.mxu0
    %v1079 = vadd.f32 0.0, %v1078
    %1080 = vmatmul.f32.gmra.mxu0 %v1005
    %v1081 = vpop.f32.mrf.mxu0
    %v1082 = vadd.f32 0.0, %v1081
    %1083 = vmatmul.f32.gmra.mxu0 %v1007
    %v1084 = vpop.f32.mrf.mxu0
    %v1085 = vadd.f32 0.0, %v1084
    %1086 = vdwg.mxu0
    %v1087 = vadd.f32 %v863, %v1027
    %v1088 = vadd.f32 %v864, %v1053
    %v1089 = vadd.f32 %v865, %v1079
    %v1090 = vadd.f32 %v866, %v1030
    %v1091 = vadd.f32 %v867, %v1056
    %v1092 = vadd.f32 %v868, %v1082
    %v1093 = vadd.f32 %v869, %v1033
    %v1094 = vadd.f32 %v870, %v1059
    %v1095 = vadd.f32 %v871, %v1085
    %s1096 = scalar_lea.vmem %s1, 480
    %v1097 = vld [vmem:[%s1096] sm:$0xff]
    %v1098 = vld [vmem:[%s1096 + $0x8] sm:$0xff]
    %v1099 = vld [vmem:[%s1096 + $0x10] sm:$0xff]
    %v1100 = vld [vmem:[%s1096 + $0x18] sm:$0xff]
    %v1101 = vld [vmem:[%s1096 + $0x20] sm:$0xff]
    %v1102 = vld [vmem:[%s1096 + $0x28] sm:$0xff]
    %v1103 = vld [vmem:[%s1096 + $0x30] sm:$0xff]
    %v1104 = vld [vmem:[%s1096 + $0x38] sm:$0xff]
    %v1105 = vld [vmem:[%s1096 + $0x40] sm:$0xff]
    %v1106 = vld [vmem:[%s1096 + $0x48] sm:$0xf]
    %v1107 = vld [vmem:[%s1096 + $0x50] sm:$0xf]
    %v1108 = vld [vmem:[%s1096 + $0x58] sm:$0xf]
    %vm1109 = vcmask 1042432
    %v1110 = vrot.slane %v27, 5
    %v1111 = vrot.slane %v28, 5
    %v1112 = vsel %vm1109, %v1110, %v1111
    %v1113 = vrot.slane %v29, 5
    %v1114 = vsel %vm1109, %v1111, %v1113
    %v1115 = vrot.slane %v30, 5
    %v1116 = vsel %vm1109, %v1113, %v1115
    %v1117 = vsel %vm70, %v1112, 0
    %v1119 = vsel %vm70, %v1114, 0
    %v1121 = vsel %vm70, %v1116, 0
    %v1124 = vsel %vm77, %v1106, 0
    %v1127 = vsel %vm77, %v1107, 0
    %v1130 = vsel %vm77, %v1108, 0
    %1132 = vmatpush.msra.mxu0 0.0
    %1133 = vmatpush.msra.mxu0 0.0
    %1134 = vmatpush.msra.mxu0 0.0
    %1135 = vmatpush.msra.mxu0 0.0
    %1136 = vmatpush.msra.mxu0 0.0
    %1137 = vmatpush.msra.mxu0 0.0
    %1138 = vmatpush.msra.mxu0 0.0
    %1139 = vmatpush.msra.mxu0 0.0
    %1140 = vmatpush.msra.mxu0 0.0
    %1141 = vmatpush.msra.mxu0 0.0
    %1142 = vmatpush.msra.mxu0 0.0
    %1143 = vmatpush.msra.mxu0 0.0
    %1144 = vmatpush.msra.mxu0 %v1124
    %1145 = vmatpush.msra.mxu0 %v1103
    %1146 = vmatpush.msra.mxu0 %v1100
    %1147 = vmatpush.msra.mxu0 %v1097
    %1148 = vmatmul.f32.gmra.mxu0 %v1117
    %v1149 = vpop.f32.mrf.mxu0
    %v1150 = vadd.f32 0.0, %v1149
    %1151 = vmatmul.f32.gmra.mxu0 %v1119
    %v1152 = vpop.f32.mrf.mxu0
    %v1153 = vadd.f32 0.0, %v1152
    %1154 = vmatmul.f32.gmra.mxu0 %v1121
    %v1155 = vpop.f32.mrf.mxu0
    %v1156 = vadd.f32 0.0, %v1155
    %1157 = vdwg.mxu0
    %1158 = vmatpush.msra.mxu0 0.0
    %1159 = vmatpush.msra.mxu0 0.0
    %1160 = vmatpush.msra.mxu0 0.0
    %1161 = vmatpush.msra.mxu0 0.0
    %1162 = vmatpush.msra.mxu0 0.0
    %1163 = vmatpush.msra.mxu0 0.0
    %1164 = vmatpush.msra.mxu0 0.0
    %1165 = vmatpush.msra.mxu0 0.0
    %1166 = vmatpush.msra.mxu0 0.0
    %1167 = vmatpush.msra.mxu0 0.0
    %1168 = vmatpush.msra.mxu0 0.0
    %1169 = vmatpush.msra.mxu0 0.0
    %1170 = vmatpush.msra.mxu0 %v1127
    %1171 = vmatpush.msra.mxu0 %v1104
    %1172 = vmatpush.msra.mxu0 %v1101
    %1173 = vmatpush.msra.mxu0 %v1098
    %1174 = vmatmul.f32.gmra.mxu0 %v1117
    %v1175 = vpop.f32.mrf.mxu0
    %v1176 = vadd.f32 0.0, %v1175
    %1177 = vmatmul.f32.gmra.mxu0 %v1119
    %v1178 = vpop.f32.mrf.mxu0
    %v1179 = vadd.f32 0.0, %v1178
    %1180 = vmatmul.f32.gmra.mxu0 %v1121
    %v1181 = vpop.f32.mrf.mxu0
    %v1182 = vadd.f32 0.0, %v1181
    %1183 = vdwg.mxu0
    %1184 = vmatpush.msra.mxu0 0.0
    %1185 = vmatpush.msra.mxu0 0.0
    %1186 = vmatpush.msra.mxu0 0.0
    %1187 = vmatpush.msra.mxu0 0.0
    %1188 = vmatpush.msra.mxu0 0.0
    %1189 = vmatpush.msra.mxu0 0.0
    %1190 = vmatpush.msra.mxu0 0.0
    %1191 = vmatpush.msra.mxu0 0.0
    %1192 = vmatpush.msra.mxu0 0.0
    %1193 = vmatpush.msra.mxu0 0.0
    %1194 = vmatpush.msra.mxu0 0.0
    %1195 = vmatpush.msra.mxu0 0.0
    %1196 = vmatpush.msra.mxu0 %v1130
    %1197 = vmatpush.msra.mxu0 %v1105
    %1198 = vmatpush.msra.mxu0 %v1102
    %1199 = vmatpush.msra.mxu0 %v1099
    %1200 = vmatmul.f32.gmra.mxu0 %v1117
    %v1201 = vpop.f32.mrf.mxu0
    %v1202 = vadd.f32 0.0, %v1201
    %1203 = vmatmul.f32.gmra.mxu0 %v1119
    %v1204 = vpop.f32.mrf.mxu0
    %v1205 = vadd.f32 0.0, %v1204
    %1206 = vmatmul.f32.gmra.mxu0 %v1121
    %v1207 = vpop.f32.mrf.mxu0
    %v1208 = vadd.f32 0.0, %v1207
    %1209 = vdwg.mxu0
    %v1210 = vadd.f32 %v986, %v1150
    %v1211 = vadd.f32 %v987, %v1176
    %v1212 = vadd.f32 %v988, %v1202
    %v1213 = vadd.f32 %v989, %v1153
    %v1214 = vadd.f32 %v990, %v1179
    %v1215 = vadd.f32 %v991, %v1205
    %v1216 = vadd.f32 %v992, %v1156
    %v1217 = vadd.f32 %v993, %v1182
    %v1218 = vadd.f32 %v994, %v1208
    %v1219 = vrot.slane %v32, 5
    %v1220 = vrot.slane %v33, 5
    %v1221 = vsel %vm1109, %v1219, %v1220
    %v1222 = vrot.slane %v34, 5
    %v1223 = vsel %vm1109, %v1220, %v1222
    %v1224 = vrot.slane %v35, 5
    %v1225 = vsel %vm1109, %v1222, %v1224
    %v1226 = vsel %vm70, %v1221, 0
    %v1228 = vsel %vm70, %v1223, 0
    %v1230 = vsel %vm70, %v1225, 0
    %1232 = vmatpush.msra.mxu0 0.0
    %1233 = vmatpush.msra.mxu0 0.0
    %1234 = vmatpush.msra.mxu0 0.0
    %1235 = vmatpush.msra.mxu0 0.0
    %1236 = vmatpush.msra.mxu0 0.0
    %1237 = vmatpush.msra.mxu0 0.0
    %1238 = vmatpush.msra.mxu0 0.0
    %1239 = vmatpush.msra.mxu0 0.0
    %1240 = vmatpush.msra.mxu0 0.0
    %1241 = vmatpush.msra.mxu0 0.0
    %1242 = vmatpush.msra.mxu0 0.0
    %1243 = vmatpush.msra.mxu0 0.0
    %1244 = vmatpush.msra.mxu0 %v1124
    %1245 = vmatpush.msra.mxu0 %v1103
    %1246 = vmatpush.msra.mxu0 %v1100
    %1247 = vmatpush.msra.mxu0 %v1097
    %1248 = vmatmul.f32.gmra.mxu0 %v1226
    %v1249 = vpop.f32.mrf.mxu0
    %v1250 = vadd.f32 0.0, %v1249
    %1251 = vmatmul.f32.gmra.mxu0 %v1228
    %v1252 = vpop.f32.mrf.mxu0
    %v1253 = vadd.f32 0.0, %v1252
    %1254 = vmatmul.f32.gmra.mxu0 %v1230
    %v1255 = vpop.f32.mrf.mxu0
    %v1256 = vadd.f32 0.0, %v1255
    %1257 = vdwg.mxu0
    %1258 = vmatpush.msra.mxu0 0.0
    %1259 = vmatpush.msra.mxu0 0.0
    %1260 = vmatpush.msra.mxu0 0.0
    %1261 = vmatpush.msra.mxu0 0.0
    %1262 = vmatpush.msra.mxu0 0.0
    %1263 = vmatpush.msra.mxu0 0.0
    %1264 = vmatpush.msra.mxu0 0.0
    %1265 = vmatpush.msra.mxu0 0.0
    %1266 = vmatpush.msra.mxu0 0.0
    %1267 = vmatpush.msra.mxu0 0.0
    %1268 = vmatpush.msra.mxu0 0.0
    %1269 = vmatpush.msra.mxu0 0.0
    %1270 = vmatpush.msra.mxu0 %v1127
    %1271 = vmatpush.msra.mxu0 %v1104
    %1272 = vmatpush.msra.mxu0 %v1101
    %1273 = vmatpush.msra.mxu0 %v1098
    %1274 = vmatmul.f32.gmra.mxu0 %v1226
    %v1275 = vpop.f32.mrf.mxu0
    %v1276 = vadd.f32 0.0, %v1275
    %1277 = vmatmul.f32.gmra.mxu0 %v1228
    %v1278 = vpop.f32.mrf.mxu0
    %v1279 = vadd.f32 0.0, %v1278
    %1280 = vmatmul.f32.gmra.mxu0 %v1230
    %v1281 = vpop.f32.mrf.mxu0
    %v1282 = vadd.f32 0.0, %v1281
    %1283 = vdwg.mxu0
    %1284 = vmatpush.msra.mxu0 0.0
    %1285 = vmatpush.msra.mxu0 0.0
    %1286 = vmatpush.msra.mxu0 0.0
    %1287 = vmatpush.msra.mxu0 0.0
    %1288 = vmatpush.msra.mxu0 0.0
    %1289 = vmatpush.msra.mxu0 0.0
    %1290 = vmatpush.msra.mxu0 0.0
    %1291 = vmatpush.msra.mxu0 0.0
    %1292 = vmatpush.msra.mxu0 0.0
    %1293 = vmatpush.msra.mxu0 0.0
    %1294 = vmatpush.msra.mxu0 0.0
    %1295 = vmatpush.msra.mxu0 0.0
    %1296 = vmatpush.msra.mxu0 %v1130
    %1297 = vmatpush.msra.mxu0 %v1105
    %1298 = vmatpush.msra.mxu0 %v1102
    %1299 = vmatpush.msra.mxu0 %v1099
    %1300 = vmatmul.f32.gmra.mxu0 %v1226
    %v1301 = vpop.f32.mrf.mxu0
    %v1302 = vadd.f32 0.0, %v1301
    %1303 = vmatmul.f32.gmra.mxu0 %v1228
    %v1304 = vpop.f32.mrf.mxu0
    %v1305 = vadd.f32 0.0, %v1304
    %1306 = vmatmul.f32.gmra.mxu0 %v1230
    %v1307 = vpop.f32.mrf.mxu0
    %v1308 = vadd.f32 0.0, %v1307
    %1309 = vdwg.mxu0
    %v1310 = vadd.f32 %v1087, %v1250
    %v1311 = vadd.f32 %v1088, %v1276
    %v1312 = vadd.f32 %v1089, %v1302
    %v1313 = vadd.f32 %v1090, %v1253
    %v1314 = vadd.f32 %v1091, %v1279
    %v1315 = vadd.f32 %v1092, %v1305
    %v1316 = vadd.f32 %v1093, %v1256
    %v1317 = vadd.f32 %v1094, %v1282
    %v1318 = vadd.f32 %v1095, %v1308
    %s1319 = scalar_lea.vmem %s1, 576
    %v1320 = vld [vmem:[%s1319] sm:$0xff]
    %v1321 = vld [vmem:[%s1319 + $0x8] sm:$0xff]
    %v1322 = vld [vmem:[%s1319 + $0x10] sm:$0xff]
    %v1323 = vld [vmem:[%s1319 + $0x18] sm:$0xff]
    %v1324 = vld [vmem:[%s1319 + $0x20] sm:$0xff]
    %v1325 = vld [vmem:[%s1319 + $0x28] sm:$0xff]
    %v1326 = vld [vmem:[%s1319 + $0x30] sm:$0xff]
    %v1327 = vld [vmem:[%s1319 + $0x38] sm:$0xff]
    %v1328 = vld [vmem:[%s1319 + $0x40] sm:$0xff]
    %v1329 = vld [vmem:[%s1319 + $0x48] sm:$0xf]
    %v1330 = vld [vmem:[%s1319 + $0x50] sm:$0xf]
    %v1331 = vld [vmem:[%s1319 + $0x58] sm:$0xf]
    %vm1332 = vcmask 1041408
    %v1333 = vrot.slane %v27, 6
    %v1334 = vrot.slane %v28, 6
    %v1335 = vsel %vm1332, %v1333, %v1334
    %v1336 = vrot.slane %v29, 6
    %v1337 = vsel %vm1332, %v1334, %v1336
    %v1338 = vrot.slane %v30, 6
    %v1339 = vsel %vm1332, %v1336, %v1338
    %v1340 = vsel %vm70, %v1335, 0
    %v1342 = vsel %vm70, %v1337, 0
    %v1344 = vsel %vm70, %v1339, 0
    %v1347 = vsel %vm77, %v1329, 0
    %v1350 = vsel %vm77, %v1330, 0
    %v1353 = vsel %vm77, %v1331, 0
    %1355 = vmatpush.msra.mxu0 0.0
    %1356 = vmatpush.msra.mxu0 0.0
    %1357 = vmatpush.msra.mxu0 0.0
    %1358 = vmatpush.msra.mxu0 0.0
    %1359 = vmatpush.msra.mxu0 0.0
    %1360 = vmatpush.msra.mxu0 0.0
    %1361 = vmatpush.msra.mxu0 0.0
    %1362 = vmatpush.msra.mxu0 0.0
    %1363 = vmatpush.msra.mxu0 0.0
    %1364 = vmatpush.msra.mxu0 0.0
    %1365 = vmatpush.msra.mxu0 0.0
    %1366 = vmatpush.msra.mxu0 0.0
    %1367 = vmatpush.msra.mxu0 %v1347
    %1368 = vmatpush.msra.mxu0 %v1326
    %1369 = vmatpush.msra.mxu0 %v1323
    %1370 = vmatpush.msra.mxu0 %v1320
    %1371 = vmatmul.f32.gmra.mxu0 %v1340
    %v1372 = vpop.f32.mrf.mxu0
    %v1373 = vadd.f32 0.0, %v1372
    %1374 = vmatmul.f32.gmra.mxu0 %v1342
    %v1375 = vpop.f32.mrf.mxu0
    %v1376 = vadd.f32 0.0, %v1375
    %1377 = vmatmul.f32.gmra.mxu0 %v1344
    %v1378 = vpop.f32.mrf.mxu0
    %v1379 = vadd.f32 0.0, %v1378
    %1380 = vdwg.mxu0
    %1381 = vmatpush.msra.mxu0 0.0
    %1382 = vmatpush.msra.mxu0 0.0
    %1383 = vmatpush.msra.mxu0 0.0
    %1384 = vmatpush.msra.mxu0 0.0
    %1385 = vmatpush.msra.mxu0 0.0
    %1386 = vmatpush.msra.mxu0 0.0
    %1387 = vmatpush.msra.mxu0 0.0
    %1388 = vmatpush.msra.mxu0 0.0
    %1389 = vmatpush.msra.mxu0 0.0
    %1390 = vmatpush.msra.mxu0 0.0
    %1391 = vmatpush.msra.mxu0 0.0
    %1392 = vmatpush.msra.mxu0 0.0
    %1393 = vmatpush.msra.mxu0 %v1350
    %1394 = vmatpush.msra.mxu0 %v1327
    %1395 = vmatpush.msra.mxu0 %v1324
    %1396 = vmatpush.msra.mxu0 %v1321
    %1397 = vmatmul.f32.gmra.mxu0 %v1340
    %v1398 = vpop.f32.mrf.mxu0
    %v1399 = vadd.f32 0.0, %v1398
    %1400 = vmatmul.f32.gmra.mxu0 %v1342
    %v1401 = vpop.f32.mrf.mxu0
    %v1402 = vadd.f32 0.0, %v1401
    %1403 = vmatmul.f32.gmra.mxu0 %v1344
    %v1404 = vpop.f32.mrf.mxu0
    %v1405 = vadd.f32 0.0, %v1404
    %1406 = vdwg.mxu0
    %1407 = vmatpush.msra.mxu0 0.0
    %1408 = vmatpush.msra.mxu0 0.0
    %1409 = vmatpush.msra.mxu0 0.0
    %1410 = vmatpush.msra.mxu0 0.0
    %1411 = vmatpush.msra.mxu0 0.0
    %1412 = vmatpush.msra.mxu0 0.0
    %1413 = vmatpush.msra.mxu0 0.0
    %1414 = vmatpush.msra.mxu0 0.0
    %1415 = vmatpush.msra.mxu0 0.0
    %1416 = vmatpush.msra.mxu0 0.0
    %1417 = vmatpush.msra.mxu0 0.0
    %1418 = vmatpush.msra.mxu0 0.0
    %1419 = vmatpush.msra.mxu0 %v1353
    %1420 = vmatpush.msra.mxu0 %v1328
    %1421 = vmatpush.msra.mxu0 %v1325
    %1422 = vmatpush.msra.mxu0 %v1322
    %1423 = vmatmul.f32.gmra.mxu0 %v1340
    %v1424 = vpop.f32.mrf.mxu0
    %v1425 = vadd.f32 0.0, %v1424
    %1426 = vmatmul.f32.gmra.mxu0 %v1342
    %v1427 = vpop.f32.mrf.mxu0
    %v1428 = vadd.f32 0.0, %v1427
    %1429 = vmatmul.f32.gmra.mxu0 %v1344
    %v1430 = vpop.f32.mrf.mxu0
    %v1431 = vadd.f32 0.0, %v1430
    %1432 = vdwg.mxu0
    %v1433 = vadd.f32 %v1210, %v1373
    %v1434 = vadd.f32 %v1211, %v1399
    %v1435 = vadd.f32 %v1212, %v1425
    %v1436 = vadd.f32 %v1213, %v1376
    %v1437 = vadd.f32 %v1214, %v1402
    %v1438 = vadd.f32 %v1215, %v1428
    %v1439 = vadd.f32 %v1216, %v1379
    %v1440 = vadd.f32 %v1217, %v1405
    %v1441 = vadd.f32 %v1218, %v1431
    %v1442 = vrot.slane %v32, 6
    %v1443 = vrot.slane %v33, 6
    %v1444 = vsel %vm1332, %v1442, %v1443
    %v1445 = vrot.slane %v34, 6
    %v1446 = vsel %vm1332, %v1443, %v1445
    %v1447 = vrot.slane %v35, 6
    %v1448 = vsel %vm1332, %v1445, %v1447
    %v1449 = vsel %vm70, %v1444, 0
    %v1451 = vsel %vm70, %v1446, 0
    %v1453 = vsel %vm70, %v1448, 0
    %1455 = vmatpush.msra.mxu0 0.0
    %1456 = vmatpush.msra.mxu0 0.0
    %1457 = vmatpush.msra.mxu0 0.0
    %1458 = vmatpush.msra.mxu0 0.0
    %1459 = vmatpush.msra.mxu0 0.0
    %1460 = vmatpush.msra.mxu0 0.0
    %1461 = vmatpush.msra.mxu0 0.0
    %1462 = vmatpush.msra.mxu0 0.0
    %1463 = vmatpush.msra.mxu0 0.0
    %1464 = vmatpush.msra.mxu0 0.0
    %1465 = vmatpush.msra.mxu0 0.0
    %1466 = vmatpush.msra.mxu0 0.0
    %1467 = vmatpush.msra.mxu0 %v1347
    %1468 = vmatpush.msra.mxu0 %v1326
    %1469 = vmatpush.msra.mxu0 %v1323
    %1470 = vmatpush.msra.mxu0 %v1320
    %1471 = vmatmul.f32.gmra.mxu0 %v1449
    %v1472 = vpop.f32.mrf.mxu0
    %v1473 = vadd.f32 0.0, %v1472
    %1474 = vmatmul.f32.gmra.mxu0 %v1451
    %v1475 = vpop.f32.mrf.mxu0
    %v1476 = vadd.f32 0.0, %v1475
    %1477 = vmatmul.f32.gmra.mxu0 %v1453
    %v1478 = vpop.f32.mrf.mxu0
    %v1479 = vadd.f32 0.0, %v1478
    %1480 = vdwg.mxu0
    %1481 = vmatpush.msra.mxu0 0.0
    %1482 = vmatpush.msra.mxu0 0.0
    %1483 = vmatpush.msra.mxu0 0.0
    %1484 = vmatpush.msra.mxu0 0.0
    %1485 = vmatpush.msra.mxu0 0.0
    %1486 = vmatpush.msra.mxu0 0.0
    %1487 = vmatpush.msra.mxu0 0.0
    %1488 = vmatpush.msra.mxu0 0.0
    %1489 = vmatpush.msra.mxu0 0.0
    %1490 = vmatpush.msra.mxu0 0.0
    %1491 = vmatpush.msra.mxu0 0.0
    %1492 = vmatpush.msra.mxu0 0.0
    %1493 = vmatpush.msra.mxu0 %v1350
    %1494 = vmatpush.msra.mxu0 %v1327
    %1495 = vmatpush.msra.mxu0 %v1324
    %1496 = vmatpush.msra.mxu0 %v1321
    %1497 = vmatmul.f32.gmra.mxu0 %v1449
    %v1498 = vpop.f32.mrf.mxu0
    %v1499 = vadd.f32 0.0, %v1498
    %1500 = vmatmul.f32.gmra.mxu0 %v1451
    %v1501 = vpop.f32.mrf.mxu0
    %v1502 = vadd.f32 0.0, %v1501
    %1503 = vmatmul.f32.gmra.mxu0 %v1453
    %v1504 = vpop.f32.mrf.mxu0
    %v1505 = vadd.f32 0.0, %v1504
    %1506 = vdwg.mxu0
    %1507 = vmatpush.msra.mxu0 0.0
    %1508 = vmatpush.msra.mxu0 0.0
    %1509 = vmatpush.msra.mxu0 0.0
    %1510 = vmatpush.msra.mxu0 0.0
    %1511 = vmatpush.msra.mxu0 0.0
    %1512 = vmatpush.msra.mxu0 0.0
    %1513 = vmatpush.msra.mxu0 0.0
    %1514 = vmatpush.msra.mxu0 0.0
    %1515 = vmatpush.msra.mxu0 0.0
    %1516 = vmatpush.msra.mxu0 0.0
    %1517 = vmatpush.msra.mxu0 0.0
    %1518 = vmatpush.msra.mxu0 0.0
    %1519 = vmatpush.msra.mxu0 %v1353
    %1520 = vmatpush.msra.mxu0 %v1328
    %1521 = vmatpush.msra.mxu0 %v1325
    %1522 = vmatpush.msra.mxu0 %v1322
    %1523 = vmatmul.f32.gmra.mxu0 %v1449
    %v1524 = vpop.f32.mrf.mxu0
    %v1525 = vadd.f32 0.0, %v1524
    %1526 = vmatmul.f32.gmra.mxu0 %v1451
    %v1527 = vpop.f32.mrf.mxu0
    %v1528 = vadd.f32 0.0, %v1527
    %1529 = vmatmul.f32.gmra.mxu0 %v1453
    %v1530 = vpop.f32.mrf.mxu0
    %v1531 = vadd.f32 0.0, %v1530
    %1532 = vdwg.mxu0
    %v1533 = vadd.f32 %v1310, %v1473
    %v1534 = vadd.f32 %v1311, %v1499
    %v1535 = vadd.f32 %v1312, %v1525
    %v1536 = vadd.f32 %v1313, %v1476
    %v1537 = vadd.f32 %v1314, %v1502
    %v1538 = vadd.f32 %v1315, %v1528
    %v1539 = vadd.f32 %v1316, %v1479
    %v1540 = vadd.f32 %v1317, %v1505
    %v1541 = vadd.f32 %v1318, %v1531
    %s1542 = scalar_lea.vmem %s1, 672
    %v1543 = vld [vmem:[%s1542] sm:$0xff]
    %v1544 = vld [vmem:[%s1542 + $0x8] sm:$0xff]
    %v1545 = vld [vmem:[%s1542 + $0x10] sm:$0xff]
    %v1546 = vld [vmem:[%s1542 + $0x18] sm:$0xff]
    %v1547 = vld [vmem:[%s1542 + $0x20] sm:$0xff]
    %v1548 = vld [vmem:[%s1542 + $0x28] sm:$0xff]
    %v1549 = vld [vmem:[%s1542 + $0x30] sm:$0xff]
    %v1550 = vld [vmem:[%s1542 + $0x38] sm:$0xff]
    %v1551 = vld [vmem:[%s1542 + $0x40] sm:$0xff]
    %v1552 = vld [vmem:[%s1542 + $0x48] sm:$0xf]
    %v1553 = vld [vmem:[%s1542 + $0x50] sm:$0xf]
    %v1554 = vld [vmem:[%s1542 + $0x58] sm:$0xf]
    %vm1555 = vcmask 1040384
    %v1556 = vrot.slane %v27, 7
    %v1557 = vrot.slane %v28, 7
    %v1558 = vsel %vm1555, %v1556, %v1557
    %v1559 = vrot.slane %v29, 7
    %v1560 = vsel %vm1555, %v1557, %v1559
    %v1561 = vrot.slane %v30, 7
    %v1562 = vsel %vm1555, %v1559, %v1561
    %v1563 = vsel %vm70, %v1558, 0
    %v1565 = vsel %vm70, %v1560, 0
    %v1567 = vsel %vm70, %v1562, 0
    %v1570 = vsel %vm77, %v1552, 0
    %v1573 = vsel %vm77, %v1553, 0
    %v1576 = vsel %vm77, %v1554, 0
    %1578 = vmatpush.msra.mxu0 0.0
    %1579 = vmatpush.msra.mxu0 0.0
    %1580 = vmatpush.msra.mxu0 0.0
    %1581 = vmatpush.msra.mxu0 0.0
    %1582 = vmatpush.msra.mxu0 0.0
    %1583 = vmatpush.msra.mxu0 0.0
    %1584 = vmatpush.msra.mxu0 0.0
    %1585 = vmatpush.msra.mxu0 0.0
    %1586 = vmatpush.msra.mxu0 0.0
    %1587 = vmatpush.msra.mxu0 0.0
    %1588 = vmatpush.msra.mxu0 0.0
    %1589 = vmatpush.msra.mxu0 0.0
    %1590 = vmatpush.msra.mxu0 %v1570
    %1591 = vmatpush.msra.mxu0 %v1549
    %1592 = vmatpush.msra.mxu0 %v1546
    %1593 = vmatpush.msra.mxu0 %v1543
    %1594 = vmatmul.f32.gmra.mxu0 %v1563
    %v1595 = vpop.f32.mrf.mxu0
    %v1596 = vadd.f32 0.0, %v1595
    %1597 = vmatmul.f32.gmra.mxu0 %v1565
    %v1598 = vpop.f32.mrf.mxu0
    %v1599 = vadd.f32 0.0, %v1598
    %1600 = vmatmul.f32.gmra.mxu0 %v1567
    %v1601 = vpop.f32.mrf.mxu0
    %v1602 = vadd.f32 0.0, %v1601
    %1603 = vdwg.mxu0
    %1604 = vmatpush.msra.mxu0 0.0
    %1605 = vmatpush.msra.mxu0 0.0
    %1606 = vmatpush.msra.mxu0 0.0
    %1607 = vmatpush.msra.mxu0 0.0
    %1608 = vmatpush.msra.mxu0 0.0
    %1609 = vmatpush.msra.mxu0 0.0
    %1610 = vmatpush.msra.mxu0 0.0
    %1611 = vmatpush.msra.mxu0 0.0
    %1612 = vmatpush.msra.mxu0 0.0
    %1613 = vmatpush.msra.mxu0 0.0
    %1614 = vmatpush.msra.mxu0 0.0
    %1615 = vmatpush.msra.mxu0 0.0
    %1616 = vmatpush.msra.mxu0 %v1573
    %1617 = vmatpush.msra.mxu0 %v1550
    %1618 = vmatpush.msra.mxu0 %v1547
    %1619 = vmatpush.msra.mxu0 %v1544
    %1620 = vmatmul.f32.gmra.mxu0 %v1563
    %v1621 = vpop.f32.mrf.mxu0
    %v1622 = vadd.f32 0.0, %v1621
    %1623 = vmatmul.f32.gmra.mxu0 %v1565
    %v1624 = vpop.f32.mrf.mxu0
    %v1625 = vadd.f32 0.0, %v1624
    %1626 = vmatmul.f32.gmra.mxu0 %v1567
    %v1627 = vpop.f32.mrf.mxu0
    %v1628 = vadd.f32 0.0, %v1627
    %1629 = vdwg.mxu0
    %1630 = vmatpush.msra.mxu0 0.0
    %1631 = vmatpush.msra.mxu0 0.0
    %1632 = vmatpush.msra.mxu0 0.0
    %1633 = vmatpush.msra.mxu0 0.0
    %1634 = vmatpush.msra.mxu0 0.0
    %1635 = vmatpush.msra.mxu0 0.0
    %1636 = vmatpush.msra.mxu0 0.0
    %1637 = vmatpush.msra.mxu0 0.0
    %1638 = vmatpush.msra.mxu0 0.0
    %1639 = vmatpush.msra.mxu0 0.0
    %1640 = vmatpush.msra.mxu0 0.0
    %1641 = vmatpush.msra.mxu0 0.0
    %1642 = vmatpush.msra.mxu0 %v1576
    %1643 = vmatpush.msra.mxu0 %v1551
    %1644 = vmatpush.msra.mxu0 %v1548
    %1645 = vmatpush.msra.mxu0 %v1545
    %1646 = vmatmul.f32.gmra.mxu0 %v1563
    %v1647 = vpop.f32.mrf.mxu0
    %v1648 = vadd.f32 0.0, %v1647
    %1649 = vmatmul.f32.gmra.mxu0 %v1565
    %v1650 = vpop.f32.mrf.mxu0
    %v1651 = vadd.f32 0.0, %v1650
    %1652 = vmatmul.f32.gmra.mxu0 %v1567
    %v1653 = vpop.f32.mrf.mxu0
    %v1654 = vadd.f32 0.0, %v1653
    %1655 = vdwg.mxu0
    %v1656 = vadd.f32 %v1433, %v1596
    %v1657 = vadd.f32 %v1434, %v1622
    %v1658 = vadd.f32 %v1435, %v1648
    %v1659 = vadd.f32 %v1436, %v1599
    %v1660 = vadd.f32 %v1437, %v1625
    %v1661 = vadd.f32 %v1438, %v1651
    %v1662 = vadd.f32 %v1439, %v1602
    %v1663 = vadd.f32 %v1440, %v1628
    %v1664 = vadd.f32 %v1441, %v1654
    %v1665 = vrot.slane %v32, 7
    %v1666 = vrot.slane %v33, 7
    %v1667 = vsel %vm1555, %v1665, %v1666
    %v1668 = vrot.slane %v34, 7
    %v1669 = vsel %vm1555, %v1666, %v1668
    %v1670 = vrot.slane %v35, 7
    %v1671 = vsel %vm1555, %v1668, %v1670
    %v1672 = vsel %vm70, %v1667, 0
    %v1674 = vsel %vm70, %v1669, 0
    %v1676 = vsel %vm70, %v1671, 0
    %1678 = vmatpush.msra.mxu0 0.0
    %1679 = vmatpush.msra.mxu0 0.0
    %1680 = vmatpush.msra.mxu0 0.0
    %1681 = vmatpush.msra.mxu0 0.0
    %1682 = vmatpush.msra.mxu0 0.0
    %1683 = vmatpush.msra.mxu0 0.0
    %1684 = vmatpush.msra.mxu0 0.0
    %1685 = vmatpush.msra.mxu0 0.0
    %1686 = vmatpush.msra.mxu0 0.0
    %1687 = vmatpush.msra.mxu0 0.0
    %1688 = vmatpush.msra.mxu0 0.0
    %1689 = vmatpush.msra.mxu0 0.0
    %1690 = vmatpush.msra.mxu0 %v1570
    %1691 = vmatpush.msra.mxu0 %v1549
    %1692 = vmatpush.msra.mxu0 %v1546
    %1693 = vmatpush.msra.mxu0 %v1543
    %1694 = vmatmul.f32.gmra.mxu0 %v1672
    %v1695 = vpop.f32.mrf.mxu0
    %v1696 = vadd.f32 0.0, %v1695
    %1697 = vmatmul.f32.gmra.mxu0 %v1674
    %v1698 = vpop.f32.mrf.mxu0
    %v1699 = vadd.f32 0.0, %v1698
    %1700 = vmatmul.f32.gmra.mxu0 %v1676
    %v1701 = vpop.f32.mrf.mxu0
    %v1702 = vadd.f32 0.0, %v1701
    %1703 = vdwg.mxu0
    %1704 = vmatpush.msra.mxu0 0.0
    %1705 = vmatpush.msra.mxu0 0.0
    %1706 = vmatpush.msra.mxu0 0.0
    %1707 = vmatpush.msra.mxu0 0.0
    %1708 = vmatpush.msra.mxu0 0.0
    %1709 = vmatpush.msra.mxu0 0.0
    %1710 = vmatpush.msra.mxu0 0.0
    %1711 = vmatpush.msra.mxu0 0.0
    %1712 = vmatpush.msra.mxu0 0.0
    %1713 = vmatpush.msra.mxu0 0.0
    %1714 = vmatpush.msra.mxu0 0.0
    %1715 = vmatpush.msra.mxu0 0.0
    %1716 = vmatpush.msra.mxu0 %v1573
    %1717 = vmatpush.msra.mxu0 %v1550
    %1718 = vmatpush.msra.mxu0 %v1547
    %1719 = vmatpush.msra.mxu0 %v1544
    %1720 = vmatmul.f32.gmra.mxu0 %v1672
    %v1721 = vpop.f32.mrf.mxu0
    %v1722 = vadd.f32 0.0, %v1721
    %1723 = vmatmul.f32.gmra.mxu0 %v1674
    %v1724 = vpop.f32.mrf.mxu0
    %v1725 = vadd.f32 0.0, %v1724
    %1726 = vmatmul.f32.gmra.mxu0 %v1676
    %v1727 = vpop.f32.mrf.mxu0
    %v1728 = vadd.f32 0.0, %v1727
    %1729 = vdwg.mxu0
    %1730 = vmatpush.msra.mxu0 0.0
    %1731 = vmatpush.msra.mxu0 0.0
    %1732 = vmatpush.msra.mxu0 0.0
    %1733 = vmatpush.msra.mxu0 0.0
    %1734 = vmatpush.msra.mxu0 0.0
    %1735 = vmatpush.msra.mxu0 0.0
    %1736 = vmatpush.msra.mxu0 0.0
    %1737 = vmatpush.msra.mxu0 0.0
    %1738 = vmatpush.msra.mxu0 0.0
    %1739 = vmatpush.msra.mxu0 0.0
    %1740 = vmatpush.msra.mxu0 0.0
    %1741 = vmatpush.msra.mxu0 0.0
    %1742 = vmatpush.msra.mxu0 %v1576
    %1743 = vmatpush.msra.mxu0 %v1551
    %1744 = vmatpush.msra.mxu0 %v1548
    %1745 = vmatpush.msra.mxu0 %v1545
    %1746 = vmatmul.f32.gmra.mxu0 %v1672
    %v1747 = vpop.f32.mrf.mxu0
    %v1748 = vadd.f32 0.0, %v1747
    %1749 = vmatmul.f32.gmra.mxu0 %v1674
    %v1750 = vpop.f32.mrf.mxu0
    %v1751 = vadd.f32 0.0, %v1750
    %1752 = vmatmul.f32.gmra.mxu0 %v1676
    %v1753 = vpop.f32.mrf.mxu0
    %v1754 = vadd.f32 0.0, %v1753
    %1755 = vdwg.mxu0
    %v1756 = vadd.f32 %v1533, %v1696
    %v1757 = vadd.f32 %v1534, %v1722
    %v1758 = vadd.f32 %v1535, %v1748
    %v1759 = vadd.f32 %v1536, %v1699
    %v1760 = vadd.f32 %v1537, %v1725
    %v1761 = vadd.f32 %v1538, %v1751
    %v1762 = vadd.f32 %v1539, %v1702
    %v1763 = vadd.f32 %v1540, %v1728
    %v1764 = vadd.f32 %v1541, %v1754
    %v1765 = vld [vmem:[%s2] sm:$0x7]
    %v1767 = vperm.slane %v1765, 0
    %v1768 = vperm.slane %v1765, 1
    %v1769 = vperm.slane %v1765, 2
    %v1773 = vadd.f32 %v1656, %v1767
    %v1774 = vadd.f32 %v1657, %v1768
    %v1775 = vadd.f32 %v1658, %v1769
    %v1776 = vadd.f32 %v1659, %v1767
    %v1777 = vadd.f32 %v1660, %v1768
    %v1778 = vadd.f32 %v1661, %v1769
    %v1779 = vadd.f32 %v1662, %v1767
    %v1780 = vadd.f32 %v1663, %v1768
    %v1781 = vadd.f32 %v1664, %v1769
    %v1782 = vadd.f32 %v1756, %v1767
    %v1783 = vadd.f32 %v1757, %v1768
    %v1784 = vadd.f32 %v1758, %v1769
    %v1785 = vadd.f32 %v1759, %v1767
    %v1786 = vadd.f32 %v1760, %v1768
    %v1787 = vadd.f32 %v1761, %v1769
    %v1788 = vadd.f32 %v1762, %v1767
    %v1789 = vadd.f32 %v1763, %v1768
    %v1790 = vadd.f32 %v1764, %v1769
    %v1791 = vld [vmem:[%s3] sm:$0xff]
    %v1792 = vld [vmem:[%s3 + $0x8] sm:$0xff]
    %v1793 = vld [vmem:[%s3 + $0x10] sm:$0xff]
    %v1794 = vld [vmem:[%s3 + $0x18] sm:$0xff]
    %v1795 = vld [vmem:[%s3 + $0x20] sm:$0xff]
    %v1796 = vld [vmem:[%s3 + $0x28] sm:$0xff]
    %v1797 = vld [vmem:[%s3 + $0x30] sm:$0xff]
    %v1798 = vld [vmem:[%s3 + $0x38] sm:$0xff]
    %v1799 = vld [vmem:[%s3 + $0x40] sm:$0xff]
    %v1800 = vld [vmem:[%s3 + $0x48] sm:$0xff]
    %v1801 = vld [vmem:[%s3 + $0x50] sm:$0xff]
    %v1802 = vld [vmem:[%s3 + $0x58] sm:$0xff]
    %v1803 = vld [vmem:[%s3 + $0x60] sm:$0xff]
    %v1804 = vld [vmem:[%s3 + $0x68] sm:$0xff]
    %v1805 = vld [vmem:[%s3 + $0x70] sm:$0xff]
    %v1806 = vld [vmem:[%s3 + $0x78] sm:$0xff]
    %v1807 = vld [vmem:[%s3 + $0x80] sm:$0xff]
    %v1808 = vld [vmem:[%s3 + $0x88] sm:$0xff]
    %v1809 = vld [vmem:[%s3 + $0x90] sm:$0xff]
    %v1810 = vld [vmem:[%s3 + $0x98] sm:$0xff]
    %v1811 = vld [vmem:[%s3 + $0xa0] sm:$0xff]
    %v1812 = vld [vmem:[%s3 + $0xa8] sm:$0xff]
    %v1813 = vld [vmem:[%s3 + $0xb0] sm:$0xff]
    %v1814 = vld [vmem:[%s3 + $0xb8] sm:$0xff]
    %v1815 = vld [vmem:[%s3 + $0xc0] sm:$0xff]
    %v1816 = vld [vmem:[%s3 + $0xc8] sm:$0xff]
    %v1817 = vld [vmem:[%s3 + $0xd0] sm:$0xff]
    %v1818 = vld [vmem:[%s3 + $0xd8] sm:$0xff]
    %v1819 = vld [vmem:[%s3 + $0xe0] sm:$0xff]
    %v1820 = vld [vmem:[%s3 + $0xe8] sm:$0xff]
    %v1821 = vld [vmem:[%s3 + $0xf0] sm:$0xff]
    %v1822 = vld [vmem:[%s3 + $0xf8] sm:$0xff]
    %v1823 = vld [vmem:[%s3 + $0x100] sm:$0xff]
    %v1824 = vld [vmem:[%s3 + $0x108] sm:$0xff]
    %v1825 = vld [vmem:[%s3 + $0x110] sm:$0xff]
    %v1826 = vld [vmem:[%s3 + $0x118] sm:$0xff]
    %v1827 = vld [vmem:[%s3 + $0x120] sm:$0xff]
    %v1828 = vld [vmem:[%s3 + $0x128] sm:$0xff]
    %v1829 = vld [vmem:[%s3 + $0x130] sm:$0xff]
    %v1830 = vld [vmem:[%s3 + $0x138] sm:$0xff]
    %v1831 = vld [vmem:[%s3 + $0x140] sm:$0xff]
    %v1832 = vld [vmem:[%s3 + $0x148] sm:$0xff]
    %v1833 = vld [vmem:[%s3 + $0x150] sm:$0xff]
    %v1834 = vld [vmem:[%s3 + $0x158] sm:$0xff]
    %v1835 = vld [vmem:[%s3 + $0x160] sm:$0xff]
    %v1836 = vld [vmem:[%s3 + $0x168] sm:$0xff]
    %v1837 = vld [vmem:[%s3 + $0x170] sm:$0xff]
    %v1838 = vld [vmem:[%s3 + $0x178] sm:$0xff]
    %v1839 = vld [vmem:[%s3 + $0x180] sm:$0xff]
    %v1840 = vld [vmem:[%s3 + $0x188] sm:$0xff]
    %v1841 = vld [vmem:[%s3 + $0x190] sm:$0xff]
    %v1842 = vld [vmem:[%s3 + $0x198] sm:$0xff]
    %v1843 = vld [vmem:[%s3 + $0x1a0] sm:$0xff]
    %v1844 = vld [vmem:[%s3 + $0x1a8] sm:$0xff]
    %v1845 = vld [vmem:[%s3 + $0x1b0] sm:$0xff]
    %v1846 = vld [vmem:[%s3 + $0x1b8] sm:$0xff]
    %v1847 = vld [vmem:[%s3 + $0x1c0] sm:$0xff]
    %v1848 = vld [vmem:[%s3 + $0x1c8] sm:$0xff]
    %v1849 = vld [vmem:[%s3 + $0x1d0] sm:$0xff]
    %v1850 = vld [vmem:[%s3 + $0x1d8] sm:$0xff]
    %v1851 = vld [vmem:[%s3 + $0x1e0] sm:$0xff]
    %v1852 = vld [vmem:[%s3 + $0x1e8] sm:$0xff]
    %v1853 = vld [vmem:[%s3 + $0x1f0] sm:$0xff]
    %v1854 = vld [vmem:[%s3 + $0x1f8] sm:$0xff]
    %v1855 = vld [vmem:[%s3 + $0x200] sm:$0xff]
    %v1856 = vld [vmem:[%s3 + $0x208] sm:$0xff]
    %v1857 = vld [vmem:[%s3 + $0x210] sm:$0xff]
    %v1858 = vld [vmem:[%s3 + $0x218] sm:$0xff]
    %v1859 = vld [vmem:[%s3 + $0x220] sm:$0xff]
    %v1860 = vld [vmem:[%s3 + $0x228] sm:$0xff]
    %v1861 = vld [vmem:[%s3 + $0x230] sm:$0xff]
    %v1862 = vld [vmem:[%s3 + $0x238] sm:$0xff]
    %v1863 = vld [vmem:[%s3 + $0x240] sm:$0xff]
    %v1864 = vld [vmem:[%s3 + $0x248] sm:$0xff]
    %v1865 = vld [vmem:[%s3 + $0x250] sm:$0xff]
    %v1866 = vld [vmem:[%s3 + $0x258] sm:$0xff]
    %v1867 = vld [vmem:[%s3 + $0x260] sm:$0xff]
    %v1868 = vld [vmem:[%s3 + $0x268] sm:$0xff]
    %v1869 = vld [vmem:[%s3 + $0x270] sm:$0x7]
    %v1870 = vld [vmem:[%s3 + $0x278] sm:$0x7]
    %s1871 = scalar_lea.vmem %s3, 640
    %v1872 = vld [vmem:[%s1871] sm:$0xff]
    %v1873 = vld [vmem:[%s1871 + $0x8] sm:$0xff]
    %v1874 = vld [vmem:[%s1871 + $0x10] sm:$0xff]
    %v1875 = vld [vmem:[%s1871 + $0x18] sm:$0xff]
    %v1876 = vld [vmem:[%s1871 + $0x20] sm:$0xff]
    %v1877 = vld [vmem:[%s1871 + $0x28] sm:$0xff]
    %v1878 = vld [vmem:[%s1871 + $0x30] sm:$0xff]
    %v1879 = vld [vmem:[%s1871 + $0x38] sm:$0xff]
    %v1880 = vld [vmem:[%s1871 + $0x40] sm:$0xff]
    %v1881 = vld [vmem:[%s1871 + $0x48] sm:$0xff]
    %v1882 = vld [vmem:[%s1871 + $0x50] sm:$0xff]
    %v1883 = vld [vmem:[%s1871 + $0x58] sm:$0xff]
    %v1884 = vld [vmem:[%s1871 + $0x60] sm:$0xff]
    %v1885 = vld [vmem:[%s1871 + $0x68] sm:$0xff]
    %v1886 = vld [vmem:[%s1871 + $0x70] sm:$0xff]
    %v1887 = vld [vmem:[%s1871 + $0x78] sm:$0xff]
    %v1888 = vld [vmem:[%s1871 + $0x80] sm:$0xff]
    %v1889 = vld [vmem:[%s1871 + $0x88] sm:$0xff]
    %v1890 = vld [vmem:[%s1871 + $0x90] sm:$0xff]
    %v1891 = vld [vmem:[%s1871 + $0x98] sm:$0xff]
    %v1892 = vld [vmem:[%s1871 + $0xa0] sm:$0xff]
    %v1893 = vld [vmem:[%s1871 + $0xa8] sm:$0xff]
    %v1894 = vld [vmem:[%s1871 + $0xb0] sm:$0xff]
    %v1895 = vld [vmem:[%s1871 + $0xb8] sm:$0xff]
    %v1896 = vld [vmem:[%s1871 + $0xc0] sm:$0xff]
    %v1897 = vld [vmem:[%s1871 + $0xc8] sm:$0xff]
    %v1898 = vld [vmem:[%s1871 + $0xd0] sm:$0xff]
    %v1899 = vld [vmem:[%s1871 + $0xd8] sm:$0xff]
    %v1900 = vld [vmem:[%s1871 + $0xe0] sm:$0xff]
    %v1901 = vld [vmem:[%s1871 + $0xe8] sm:$0xff]
    %v1902 = vld [vmem:[%s1871 + $0xf0] sm:$0xff]
    %v1903 = vld [vmem:[%s1871 + $0xf8] sm:$0xff]
    %v1904 = vld [vmem:[%s1871 + $0x100] sm:$0xff]
    %v1905 = vld [vmem:[%s1871 + $0x108] sm:$0xff]
    %v1906 = vld [vmem:[%s1871 + $0x110] sm:$0xff]
    %v1907 = vld [vmem:[%s1871 + $0x118] sm:$0xff]
    %v1908 = vld [vmem:[%s1871 + $0x120] sm:$0xff]
    %v1909 = vld [vmem:[%s1871 + $0x128] sm:$0xff]
    %v1910 = vld [vmem:[%s1871 + $0x130] sm:$0xff]
    %v1911 = vld [vmem:[%s1871 + $0x138] sm:$0xff]
    %v1912 = vld [vmem:[%s1871 + $0x140] sm:$0xff]
    %v1913 = vld [vmem:[%s1871 + $0x148] sm:$0xff]
    %v1914 = vld [vmem:[%s1871 + $0x150] sm:$0xff]
    %v1915 = vld [vmem:[%s1871 + $0x158] sm:$0xff]
    %v1916 = vld [vmem:[%s1871 + $0x160] sm:$0xff]
    %v1917 = vld [vmem:[%s1871 + $0x168] sm:$0xff]
    %v1918 = vld [vmem:[%s1871 + $0x170] sm:$0xff]
    %v1919 = vld [vmem:[%s1871 + $0x178] sm:$0xff]
    %v1920 = vld [vmem:[%s1871 + $0x180] sm:$0xff]
    %v1921 = vld [vmem:[%s1871 + $0x188] sm:$0xff]
    %v1922 = vld [vmem:[%s1871 + $0x190] sm:$0xff]
    %v1923 = vld [vmem:[%s1871 + $0x198] sm:$0xff]
    %v1924 = vld [vmem:[%s1871 + $0x1a0] sm:$0xff]
    %v1925 = vld [vmem:[%s1871 + $0x1a8] sm:$0xff]
    %v1926 = vld [vmem:[%s1871 + $0x1b0] sm:$0xff]
    %v1927 = vld [vmem:[%s1871 + $0x1b8] sm:$0xff]
    %v1928 = vld [vmem:[%s1871 + $0x1c0] sm:$0xff]
    %v1929 = vld [vmem:[%s1871 + $0x1c8] sm:$0xff]
    %v1930 = vld [vmem:[%s1871 + $0x1d0] sm:$0xff]
    %v1931 = vld [vmem:[%s1871 + $0x1d8] sm:$0xff]
    %v1932 = vld [vmem:[%s1871 + $0x1e0] sm:$0xff]
    %v1933 = vld [vmem:[%s1871 + $0x1e8] sm:$0xff]
    %v1934 = vld [vmem:[%s1871 + $0x1f0] sm:$0xff]
    %v1935 = vld [vmem:[%s1871 + $0x1f8] sm:$0xff]
    %v1936 = vld [vmem:[%s1871 + $0x200] sm:$0xff]
    %v1937 = vld [vmem:[%s1871 + $0x208] sm:$0xff]
    %v1938 = vld [vmem:[%s1871 + $0x210] sm:$0xff]
    %v1939 = vld [vmem:[%s1871 + $0x218] sm:$0xff]
    %v1940 = vld [vmem:[%s1871 + $0x220] sm:$0xff]
    %v1941 = vld [vmem:[%s1871 + $0x228] sm:$0xff]
    %v1942 = vld [vmem:[%s1871 + $0x230] sm:$0xff]
    %v1943 = vld [vmem:[%s1871 + $0x238] sm:$0xff]
    %v1944 = vld [vmem:[%s1871 + $0x240] sm:$0xff]
    %v1945 = vld [vmem:[%s1871 + $0x248] sm:$0xff]
    %v1946 = vld [vmem:[%s1871 + $0x250] sm:$0xff]
    %v1947 = vld [vmem:[%s1871 + $0x258] sm:$0xff]
    %v1948 = vld [vmem:[%s1871 + $0x260] sm:$0xff]
    %v1949 = vld [vmem:[%s1871 + $0x268] sm:$0xff]
    %v1950 = vld [vmem:[%s1871 + $0x270] sm:$0x7]
    %v1951 = vld [vmem:[%s1871 + $0x278] sm:$0x7]
    %v1958 = vrot.slane %v1773, 1
    %v1959 = vrot.slane %v1776, 1
    %v1960 = vsel %vm64, %v1958, %v1959
    %v1961 = vrot.slane %v1774, 1
    %v1962 = vrot.slane %v1777, 1
    %v1963 = vsel %vm64, %v1961, %v1962
    %v1964 = vrot.slane %v1775, 1
    %v1965 = vrot.slane %v1778, 1
    %v1966 = vsel %vm64, %v1964, %v1965
    %vm1971 = vcmask 482304
    %v1972 = vsel %vm1971, %v1966, 0
    %v1974 = vsel %vm1971, %v1965, 0
    %v1977 = vsel %vm1109, %v1950, 0
    %v1980 = vsel %vm1109, %v1951, 0
    %1982 = vmatpush.msra.mxu0 %v1902
    %1983 = vmatpush.msra.mxu0 %v1900
    %1984 = vmatpush.msra.mxu0 %v1898
    %1985 = vmatpush.msra.mxu0 %v1896
    %1986 = vmatpush.msra.mxu0 %v1894
    %1987 = vmatpush.msra.mxu0 %v1892
    %1988 = vmatpush.msra.mxu0 %v1890
    %1989 = vmatpush.msra.mxu0 %v1888
    %1990 = vmatpush.msra.mxu0 %v1886
    %1991 = vmatpush.msra.mxu0 %v1884
    %1992 = vmatpush.msra.mxu0 %v1882
    %1993 = vmatpush.msra.mxu0 %v1880
    %1994 = vmatpush.msra.mxu0 %v1878
    %1995 = vmatpush.msra.mxu0 %v1876
    %1996 = vmatpush.msra.mxu0 %v1874
    %1997 = vmatpush.msra.mxu0 %v1872
    %1998 = vmatmul.f32.gmra.mxu0 %v1960
    %v1999 = vpop.f32.mrf.mxu0
    %v2000 = vadd.f32 0.0, %v1999
    %2001 = vmatmul.f32.gmra.mxu0 %v1959
    %v2002 = vpop.f32.mrf.mxu0
    %v2003 = vadd.f32 0.0, %v2002
    %2004 = vdwg.mxu0
    %2005 = vmatpush.msra.mxu0 %v1934
    %2006 = vmatpush.msra.mxu0 %v1932
    %2007 = vmatpush.msra.mxu0 %v1930
    %2008 = vmatpush.msra.mxu0 %v1928
    %2009 = vmatpush.msra.mxu0 %v1926
    %2010 = vmatpush.msra.mxu0 %v1924
    %2011 = vmatpush.msra.mxu0 %v1922
    %2012 = vmatpush.msra.mxu0 %v1920
    %2013 = vmatpush.msra.mxu0 %v1918
    %2014 = vmatpush.msra.mxu0 %v1916
    %2015 = vmatpush.msra.mxu0 %v1914
    %2016 = vmatpush.msra.mxu0 %v1912
    %2017 = vmatpush.msra.mxu0 %v1910
    %2018 = vmatpush.msra.mxu0 %v1908
    %2019 = vmatpush.msra.mxu0 %v1906
    %2020 = vmatpush.msra.mxu0 %v1904
    %2021 = vmatmul.f32.gmra.mxu0 %v1963
    %v2022 = vpop.f32.mrf.mxu0
    %v2023 = vadd.f32 %v2000, %v2022
    %2024 = vmatmul.f32.gmra.mxu0 %v1962
    %v2025 = vpop.f32.mrf.mxu0
    %v2026 = vadd.f32 %v2003, %v2025
    %2027 = vdwg.mxu0
    %2028 = vmatpush.msra.mxu0 0.0
    %2029 = vmatpush.msra.mxu0 0.0
    %2030 = vmatpush.msra.mxu0 0.0
    %2031 = vmatpush.msra.mxu0 0.0
    %2032 = vmatpush.msra.mxu0 0.0
    %2033 = vmatpush.msra.mxu0 0.0
    %2034 = vmatpush.msra.mxu0 0.0
    %2035 = vmatpush.msra.mxu0 0.0
    %2036 = vmatpush.msra.mxu0 %v1977
    %2037 = vmatpush.msra.mxu0 %v1948
    %2038 = vmatpush.msra.mxu0 %v1946
    %2039 = vmatpush.msra.mxu0 %v1944
    %2040 = vmatpush.msra.mxu0 %v1942
    %2041 = vmatpush.msra.mxu0 %v1940
    %2042 = vmatpush.msra.mxu0 %v1938
    %2043 = vmatpush.msra.mxu0 %v1936
    %2044 = vmatmul.f32.gmra.mxu0 %v1972
    %v2045 = vpop.f32.mrf.mxu0
    %v2046 = vadd.f32 %v2023, %v2045
    %2047 = vmatmul.f32.gmra.mxu0 %v1974
    %v2048 = vpop.f32.mrf.mxu0
    %v2049 = vadd.f32 %v2026, %v2048
    %2050 = vdwg.mxu0
    %2051 = vmatpush.msra.mxu0 %v1903
    %2052 = vmatpush.msra.mxu0 %v1901
    %2053 = vmatpush.msra.mxu0 %v1899
    %2054 = vmatpush.msra.mxu0 %v1897
    %2055 = vmatpush.msra.mxu0 %v1895
    %2056 = vmatpush.msra.mxu0 %v1893
    %2057 = vmatpush.msra.mxu0 %v1891
    %2058 = vmatpush.msra.mxu0 %v1889
    %2059 = vmatpush.msra.mxu0 %v1887
    %2060 = vmatpush.msra.mxu0 %v1885
    %2061 = vmatpush.msra.mxu0 %v1883
    %2062 = vmatpush.msra.mxu0 %v1881
    %2063 = vmatpush.msra.mxu0 %v1879
    %2064 = vmatpush.msra.mxu0 %v1877
    %2065 = vmatpush.msra.mxu0 %v1875
    %2066 = vmatpush.msra.mxu0 %v1873
    %2067 = vmatmul.f32.gmra.mxu0 %v1960
    %v2068 = vpop.f32.mrf.mxu0
    %v2069 = vadd.f32 0.0, %v2068
    %2070 = vmatmul.f32.gmra.mxu0 %v1959
    %v2071 = vpop.f32.mrf.mxu0
    %v2072 = vadd.f32 0.0, %v2071
    %2073 = vdwg.mxu0
    %2074 = vmatpush.msra.mxu0 %v1935
    %2075 = vmatpush.msra.mxu0 %v1933
    %2076 = vmatpush.msra.mxu0 %v1931
    %2077 = vmatpush.msra.mxu0 %v1929
    %2078 = vmatpush.msra.mxu0 %v1927
    %2079 = vmatpush.msra.mxu0 %v1925
    %2080 = vmatpush.msra.mxu0 %v1923
    %2081 = vmatpush.msra.mxu0 %v1921
    %2082 = vmatpush.msra.mxu0 %v1919
    %2083 = vmatpush.msra.mxu0 %v1917
    %2084 = vmatpush.msra.mxu0 %v1915
    %2085 = vmatpush.msra.mxu0 %v1913
    %2086 = vmatpush.msra.mxu0 %v1911
    %2087 = vmatpush.msra.mxu0 %v1909
    %2088 = vmatpush.msra.mxu0 %v1907
    %2089 = vmatpush.msra.mxu0 %v1905
    %2090 = vmatmul.f32.gmra.mxu0 %v1963
    %v2091 = vpop.f32.mrf.mxu0
    %v2092 = vadd.f32 %v2069, %v2091
    %2093 = vmatmul.f32.gmra.mxu0 %v1962
    %v2094 = vpop.f32.mrf.mxu0
    %v2095 = vadd.f32 %v2072, %v2094
    %2096 = vdwg.mxu0
    %2097 = vmatpush.msra.mxu0 0.0
    %2098 = vmatpush.msra.mxu0 0.0
    %2099 = vmatpush.msra.mxu0 0.0
    %2100 = vmatpush.msra.mxu0 0.0
    %2101 = vmatpush.msra.mxu0 0.0
    %2102 = vmatpush.msra.mxu0 0.0
    %2103 = vmatpush.msra.mxu0 0.0
    %2104 = vmatpush.msra.mxu0 0.0
    %2105 = vmatpush.msra.mxu0 %v1980
    %2106 = vmatpush.msra.mxu0 %v1949
    %2107 = vmatpush.msra.mxu0 %v1947
    %2108 = vmatpush.msra.mxu0 %v1945
    %2109 = vmatpush.msra.mxu0 %v1943
    %2110 = vmatpush.msra.mxu0 %v1941
    %2111 = vmatpush.msra.mxu0 %v1939
    %2112 = vmatpush.msra.mxu0 %v1937
    %2113 = vmatmul.f32.gmra.mxu0 %v1972
    %v2114 = vpop.f32.mrf.mxu0
    %v2115 = vadd.f32 %v2092, %v2114
    %2116 = vmatmul.f32.gmra.mxu0 %v1974
    %v2117 = vpop.f32.mrf.mxu0
    %v2118 = vadd.f32 %v2095, %v2117
    %2119 = vdwg.mxu0
    %v2120 = vsel %vm1971, %v1775, 0
    %v2122 = vsel %vm1971, %v1778, 0
    %v2125 = vsel %vm1109, %v1869, 0
    %v2128 = vsel %vm1109, %v1870, 0
    %2130 = vmatpush.msra.mxu0 %v1821
    %2131 = vmatpush.msra.mxu0 %v1819
    %2132 = vmatpush.msra.mxu0 %v1817
    %2133 = vmatpush.msra.mxu0 %v1815
    %2134 = vmatpush.msra.mxu0 %v1813
    %2135 = vmatpush.msra.mxu0 %v1811
    %2136 = vmatpush.msra.mxu0 %v1809
    %2137 = vmatpush.msra.mxu0 %v1807
    %2138 = vmatpush.msra.mxu0 %v1805
    %2139 = vmatpush.msra.mxu0 %v1803
    %2140 = vmatpush.msra.mxu0 %v1801
    %2141 = vmatpush.msra.mxu0 %v1799
    %2142 = vmatpush.msra.mxu0 %v1797
    %2143 = vmatpush.msra.mxu0 %v1795
    %2144 = vmatpush.msra.mxu0 %v1793
    %2145 = vmatpush.msra.mxu0 %v1791
    %2146 = vmatmul.f32.gmra.mxu0 %v1773
    %v2147 = vpop.f32.mrf.mxu0
    %v2148 = vadd.f32 %v2046, %v2147
    %2149 = vmatmul.f32.gmra.mxu0 %v1776
    %v2150 = vpop.f32.mrf.mxu0
    %v2151 = vadd.f32 %v2049, %v2150
    %2152 = vdwg.mxu0
    %2153 = vmatpush.msra.mxu0 %v1853
    %2154 = vmatpush.msra.mxu0 %v1851
    %2155 = vmatpush.msra.mxu0 %v1849
    %2156 = vmatpush.msra.mxu0 %v1847
    %2157 = vmatpush.msra.mxu0 %v1845
    %2158 = vmatpush.msra.mxu0 %v1843
    %2159 = vmatpush.msra.mxu0 %v1841
    %2160 = vmatpush.msra.mxu0 %v1839
    %2161 = vmatpush.msra.mxu0 %v1837
    %2162 = vmatpush.msra.mxu0 %v1835
    %2163 = vmatpush.msra.mxu0 %v1833
    %2164 = vmatpush.msra.mxu0 %v1831
    %2165 = vmatpush.msra.mxu0 %v1829
    %2166 = vmatpush.msra.mxu0 %v1827
    %2167 = vmatpush.msra.mxu0 %v1825
    %2168 = vmatpush.msra.mxu0 %v1823
    %2169 = vmatmul.f32.gmra.mxu0 %v1774
    %v2170 = vpop.f32.mrf.mxu0
    %v2171 = vadd.f32 %v2148, %v2170
    %2172 = vmatmul.f32.gmra.mxu0 %v1777
    %v2173 = vpop.f32.mrf.mxu0
    %v2174 = vadd.f32 %v2151, %v2173
    %2175 = vdwg.mxu0
    %2176 = vmatpush.msra.mxu0 0.0
    %2177 = vmatpush.msra.mxu0 0.0
    %2178 = vmatpush.msra.mxu0 0.0
    %2179 = vmatpush.msra.mxu0 0.0
    %2180 = vmatpush.msra.mxu0 0.0
    %2181 = vmatpush.msra.mxu0 0.0
    %2182 = vmatpush.msra.mxu0 0.0
    %2183 = vmatpush.msra.mxu0 0.0
    %2184 = vmatpush.msra.mxu0 %v2125
    %2185 = vmatpush.msra.mxu0 %v1867
    %2186 = vmatpush.msra.mxu0 %v1865
    %2187 = vmatpush.msra.mxu0 %v1863
    %2188 = vmatpush.msra.mxu0 %v1861
    %2189 = vmatpush.msra.mxu0 %v1859
    %2190 = vmatpush.msra.mxu0 %v1857
    %2191 = vmatpush.msra.mxu0 %v1855
    %2192 = vmatmul.f32.gmra.mxu0 %v2120
    %v2193 = vpop.f32.mrf.mxu0
    %v2194 = vadd.f32 %v2171, %v2193
    %2195 = vmatmul.f32.gmra.mxu0 %v2122
    %v2196 = vpop.f32.mrf.mxu0
    %v2197 = vadd.f32 %v2174, %v2196
    %2198 = vdwg.mxu0
    %2199 = vmatpush.msra.mxu0 %v1822
    %2200 = vmatpush.msra.mxu0 %v1820
    %2201 = vmatpush.msra.mxu0 %v1818
    %2202 = vmatpush.msra.mxu0 %v1816
    %2203 = vmatpush.msra.mxu0 %v1814
    %2204 = vmatpush.msra.mxu0 %v1812
    %2205 = vmatpush.msra.mxu0 %v1810
    %2206 = vmatpush.msra.mxu0 %v1808
    %2207 = vmatpush.msra.mxu0 %v1806
    %2208 = vmatpush.msra.mxu0 %v1804
    %2209 = vmatpush.msra.mxu0 %v1802
    %2210 = vmatpush.msra.mxu0 %v1800
    %2211 = vmatpush.msra.mxu0 %v1798
    %2212 = vmatpush.msra.mxu0 %v1796
    %2213 = vmatpush.msra.mxu0 %v1794
    %2214 = vmatpush.msra.mxu0 %v1792
    %2215 = vmatmul.f32.gmra.mxu0 %v1773
    %v2216 = vpop.f32.mrf.mxu0
    %v2217 = vadd.f32 %v2115, %v2216
    %2218 = vmatmul.f32.gmra.mxu0 %v1776
    %v2219 = vpop.f32.mrf.mxu0
    %v2220 = vadd.f32 %v2118, %v2219
    %2221 = vdwg.mxu0
    %2222 = vmatpush.msra.mxu0 %v1854
    %2223 = vmatpush.msra.mxu0 %v1852
    %2224 = vmatpush.msra.mxu0 %v1850
    %2225 = vmatpush.msra.mxu0 %v1848
    %2226 = vmatpush.msra.mxu0 %v1846
    %2227 = vmatpush.msra.mxu0 %v1844
    %2228 = vmatpush.msra.mxu0 %v1842
    %2229 = vmatpush.msra.mxu0 %v1840
    %2230 = vmatpush.msra.mxu0 %v1838
    %2231 = vmatpush.msra.mxu0 %v1836
    %2232 = vmatpush.msra.mxu0 %v1834
    %2233 = vmatpush.msra.mxu0 %v1832
    %2234 = vmatpush.msra.mxu0 %v1830
    %2235 = vmatpush.msra.mxu0 %v1828
    %2236 = vmatpush.msra.mxu0 %v1826
    %2237 = vmatpush.msra.mxu0 %v1824
    %2238 = vmatmul.f32.gmra.mxu0 %v1774
    %v2239 = vpop.f32.mrf.mxu0
    %v2240 = vadd.f32 %v2217, %v2239
    %2241 = vmatmul.f32.gmra.mxu0 %v1777
    %v2242 = vpop.f32.mrf.mxu0
    %v2243 = vadd.f32 %v2220, %v2242
    %2244 = vdwg.mxu0
    %2245 = vmatpush.msra.mxu0 0.0
    %2246 = vmatpush.msra.mxu0 0.0
    %2247 = vmatpush.msra.mxu0 0.0
    %2248 = vmatpush.msra.mxu0 0.0
    %2249 = vmatpush.msra.mxu0 0.0
    %2250 = vmatpush.msra.mxu0 0.0
    %2251 = vmatpush.msra.mxu0 0.0
    %2252 = vmatpush.msra.mxu0 0.0
    %2253 = vmatpush.msra.mxu0 %v2128
    %2254 = vmatpush.msra.mxu0 %v1868
    %2255 = vmatpush.msra.mxu0 %v1866
    %2256 = vmatpush.msra.mxu0 %v1864
    %2257 = vmatpush.msra.mxu0 %v1862
    %2258 = vmatpush.msra.mxu0 %v1860
    %2259 = vmatpush.msra.mxu0 %v1858
    %2260 = vmatpush.msra.mxu0 %v1856
    %2261 = vmatmul.f32.gmra.mxu0 %v2120
    %v2262 = vpop.f32.mrf.mxu0
    %v2263 = vadd.f32 %v2240, %v2262
    %2264 = vmatmul.f32.gmra.mxu0 %v2122
    %v2265 = vpop.f32.mrf.mxu0
    %v2266 = vadd.f32 %v2243, %v2265
    %2267 = vdwg.mxu0
    %v2274 = vrot.slane %v1782, 1
    %v2275 = vrot.slane %v1785, 1
    %v2276 = vsel %vm64, %v2274, %v2275
    %v2277 = vrot.slane %v1783, 1
    %v2278 = vrot.slane %v1786, 1
    %v2279 = vsel %vm64, %v2277, %v2278
    %v2280 = vrot.slane %v1784, 1
    %v2281 = vrot.slane %v1787, 1
    %v2282 = vsel %vm64, %v2280, %v2281
    %v2287 = vsel %vm1971, %v2282, 0
    %v2289 = vsel %vm1971, %v2281, 0
    %2291 = vmatpush.msra.mxu0 %v1902
    %2292 = vmatpush.msra.mxu0 %v1900
    %2293 = vmatpush.msra.mxu0 %v1898
    %2294 = vmatpush.msra.mxu0 %v1896
    %2295 = vmatpush.msra.mxu0 %v1894
    %2296 = vmatpush.msra.mxu0 %v1892
    %2297 = vmatpush.msra.mxu0 %v1890
    %2298 = vmatpush.msra.mxu0 %v1888
    %2299 = vmatpush.msra.mxu0 %v1886
    %2300 = vmatpush.msra.mxu0 %v1884
    %2301 = vmatpush.msra.mxu0 %v1882
    %2302 = vmatpush.msra.mxu0 %v1880
    %2303 = vmatpush.msra.mxu0 %v1878
    %2304 = vmatpush.msra.mxu0 %v1876
    %2305 = vmatpush.msra.mxu0 %v1874
    %2306 = vmatpush.msra.mxu0 %v1872
    %2307 = vmatmul.f32.gmra.mxu0 %v2276
    %v2308 = vpop.f32.mrf.mxu0
    %v2309 = vadd.f32 0.0, %v2308
    %2310 = vmatmul.f32.gmra.mxu0 %v2275
    %v2311 = vpop.f32.mrf.mxu0
    %v2312 = vadd.f32 0.0, %v2311
    %2313 = vdwg.mxu0
    %2314 = vmatpush.msra.mxu0 %v1934
    %2315 = vmatpush.msra.mxu0 %v1932
    %2316 = vmatpush.msra.mxu0 %v1930
    %2317 = vmatpush.msra.mxu0 %v1928
    %2318 = vmatpush.msra.mxu0 %v1926
    %2319 = vmatpush.msra.mxu0 %v1924
    %2320 = vmatpush.msra.mxu0 %v1922
    %2321 = vmatpush.msra.mxu0 %v1920
    %2322 = vmatpush.msra.mxu0 %v1918
    %2323 = vmatpush.msra.mxu0 %v1916
    %2324 = vmatpush.msra.mxu0 %v1914
    %2325 = vmatpush.msra.mxu0 %v1912
    %2326 = vmatpush.msra.mxu0 %v1910
    %2327 = vmatpush.msra.mxu0 %v1908
    %2328 = vmatpush.msra.mxu0 %v1906
    %2329 = vmatpush.msra.mxu0 %v1904
    %2330 = vmatmul.f32.gmra.mxu0 %v2279
    %v2331 = vpop.f32.mrf.mxu0
    %v2332 = vadd.f32 %v2309, %v2331
    %2333 = vmatmul.f32.gmra.mxu0 %v2278
    %v2334 = vpop.f32.mrf.mxu0
    %v2335 = vadd.f32 %v2312, %v2334
    %2336 = vdwg.mxu0
    %2337 = vmatpush.msra.mxu0 0.0
    %2338 = vmatpush.msra.mxu0 0.0
    %2339 = vmatpush.msra.mxu0 0.0
    %2340 = vmatpush.msra.mxu0 0.0
    %2341 = vmatpush.msra.mxu0 0.0
    %2342 = vmatpush.msra.mxu0 0.0
    %2343 = vmatpush.msra.mxu0 0.0
    %2344 = vmatpush.msra.mxu0 0.0
    %2345 = vmatpush.msra.mxu0 %v1977
    %2346 = vmatpush.msra.mxu0 %v1948
    %2347 = vmatpush.msra.mxu0 %v1946
    %2348 = vmatpush.msra.mxu0 %v1944
    %2349 = vmatpush.msra.mxu0 %v1942
    %2350 = vmatpush.msra.mxu0 %v1940
    %2351 = vmatpush.msra.mxu0 %v1938
    %2352 = vmatpush.msra.mxu0 %v1936
    %2353 = vmatmul.f32.gmra.mxu0 %v2287
    %v2354 = vpop.f32.mrf.mxu0
    %v2355 = vadd.f32 %v2332, %v2354
    %2356 = vmatmul.f32.gmra.mxu0 %v2289
    %v2357 = vpop.f32.mrf.mxu0
    %v2358 = vadd.f32 %v2335, %v2357
    %2359 = vdwg.mxu0
    %2360 = vmatpush.msra.mxu0 %v1903
    %2361 = vmatpush.msra.mxu0 %v1901
    %2362 = vmatpush.msra.mxu0 %v1899
    %2363 = vmatpush.msra.mxu0 %v1897
    %2364 = vmatpush.msra.mxu0 %v1895
    %2365 = vmatpush.msra.mxu0 %v1893
    %2366 = vmatpush.msra.mxu0 %v1891
    %2367 = vmatpush.msra.mxu0 %v1889
    %2368 = vmatpush.msra.mxu0 %v1887
    %2369 = vmatpush.msra.mxu0 %v1885
    %2370 = vmatpush.msra.mxu0 %v1883
    %2371 = vmatpush.msra.mxu0 %v1881
    %2372 = vmatpush.msra.mxu0 %v1879
    %2373 = vmatpush.msra.mxu0 %v1877
    %2374 = vmatpush.msra.mxu0 %v1875
    %2375 = vmatpush.msra.mxu0 %v1873
    %2376 = vmatmul.f32.gmra.mxu0 %v2276
    %v2377 = vpop.f32.mrf.mxu0
    %v2378 = vadd.f32 0.0, %v2377
    %2379 = vmatmul.f32.gmra.mxu0 %v2275
    %v2380 = vpop.f32.mrf.mxu0
    %v2381 = vadd.f32 0.0, %v2380
    %2382 = vdwg.mxu0
    %2383 = vmatpush.msra.mxu0 %v1935
    %2384 = vmatpush.msra.mxu0 %v1933
    %2385 = vmatpush.msra.mxu0 %v1931
    %2386 = vmatpush.msra.mxu0 %v1929
    %2387 = vmatpush.msra.mxu0 %v1927
    %2388 = vmatpush.msra.mxu0 %v1925
    %2389 = vmatpush.msra.mxu0 %v1923
    %2390 = vmatpush.msra.mxu0 %v1921
    %2391 = vmatpush.msra.mxu0 %v1919
    %2392 = vmatpush.msra.mxu0 %v1917
    %2393 = vmatpush.msra.mxu0 %v1915
    %2394 = vmatpush.msra.mxu0 %v1913
    %2395 = vmatpush.msra.mxu0 %v1911
    %2396 = vmatpush.msra.mxu0 %v1909
    %2397 = vmatpush.msra.mxu0 %v1907
    %2398 = vmatpush.msra.mxu0 %v1905
    %2399 = vmatmul.f32.gmra.mxu0 %v2279
    %v2400 = vpop.f32.mrf.mxu0
    %v2401 = vadd.f32 %v2378, %v2400
    %2402 = vmatmul.f32.gmra.mxu0 %v2278
    %v2403 = vpop.f32.mrf.mxu0
    %v2404 = vadd.f32 %v2381, %v2403
    %2405 = vdwg.mxu0
    %2406 = vmatpush.msra.mxu0 0.0
    %2407 = vmatpush.msra.mxu0 0.0
    %2408 = vmatpush.msra.mxu0 0.0
    %2409 = vmatpush.msra.mxu0 0.0
    %2410 = vmatpush.msra.mxu0 0.0
    %2411 = vmatpush.msra.mxu0 0.0
    %2412 = vmatpush.msra.mxu0 0.0
    %2413 = vmatpush.msra.mxu0 0.0
    %2414 = vmatpush.msra.mxu0 %v1980
    %2415 = vmatpush.msra.mxu0 %v1949
    %2416 = vmatpush.msra.mxu0 %v1947
    %2417 = vmatpush.msra.mxu0 %v1945
    %2418 = vmatpush.msra.mxu0 %v1943
    %2419 = vmatpush.msra.mxu0 %v1941
    %2420 = vmatpush.msra.mxu0 %v1939
    %2421 = vmatpush.msra.mxu0 %v1937
    %2422 = vmatmul.f32.gmra.mxu0 %v2287
    %v2423 = vpop.f32.mrf.mxu0
    %v2424 = vadd.f32 %v2401, %v2423
    %2425 = vmatmul.f32.gmra.mxu0 %v2289
    %v2426 = vpop.f32.mrf.mxu0
    %v2427 = vadd.f32 %v2404, %v2426
    %2428 = vdwg.mxu0
    %v2429 = vsel %vm1971, %v1784, 0
    %v2431 = vsel %vm1971, %v1787, 0
    %2433 = vmatpush.msra.mxu0 %v1821
    %2434 = vmatpush.msra.mxu0 %v1819
    %2435 = vmatpush.msra.mxu0 %v1817
    %2436 = vmatpush.msra.mxu0 %v1815
    %2437 = vmatpush.msra.mxu0 %v1813
    %2438 = vmatpush.msra.mxu0 %v1811
    %2439 = vmatpush.msra.mxu0 %v1809
    %2440 = vmatpush.msra.mxu0 %v1807
    %2441 = vmatpush.msra.mxu0 %v1805
    %2442 = vmatpush.msra.mxu0 %v1803
    %2443 = vmatpush.msra.mxu0 %v1801
    %2444 = vmatpush.msra.mxu0 %v1799
    %2445 = vmatpush.msra.mxu0 %v1797
    %2446 = vmatpush.msra.mxu0 %v1795
    %2447 = vmatpush.msra.mxu0 %v1793
    %2448 = vmatpush.msra.mxu0 %v1791
    %2449 = vmatmul.f32.gmra.mxu0 %v1782
    %v2450 = vpop.f32.mrf.mxu0
    %v2451 = vadd.f32 %v2355, %v2450
    %2452 = vmatmul.f32.gmra.mxu0 %v1785
    %v2453 = vpop.f32.mrf.mxu0
    %v2454 = vadd.f32 %v2358, %v2453
    %2455 = vdwg.mxu0
    %2456 = vmatpush.msra.mxu0 %v1853
    %2457 = vmatpush.msra.mxu0 %v1851
    %2458 = vmatpush.msra.mxu0 %v1849
    %2459 = vmatpush.msra.mxu0 %v1847
    %2460 = vmatpush.msra.mxu0 %v1845
    %2461 = vmatpush.msra.mxu0 %v1843
    %2462 = vmatpush.msra.mxu0 %v1841
    %2463 = vmatpush.msra.mxu0 %v1839
    %2464 = vmatpush.msra.mxu0 %v1837
    %2465 = vmatpush.msra.mxu0 %v1835
    %2466 = vmatpush.msra.mxu0 %v1833
    %2467 = vmatpush.msra.mxu0 %v1831
    %2468 = vmatpush.msra.mxu0 %v1829
    %2469 = vmatpush.msra.mxu0 %v1827
    %2470 = vmatpush.msra.mxu0 %v1825
    %2471 = vmatpush.msra.mxu0 %v1823
    %2472 = vmatmul.f32.gmra.mxu0 %v1783
    %v2473 = vpop.f32.mrf.mxu0
    %v2474 = vadd.f32 %v2451, %v2473
    %2475 = vmatmul.f32.gmra.mxu0 %v1786
    %v2476 = vpop.f32.mrf.mxu0
    %v2477 = vadd.f32 %v2454, %v2476
    %2478 = vdwg.mxu0
    %2479 = vmatpush.msra.mxu0 0.0
    %2480 = vmatpush.msra.mxu0 0.0
    %2481 = vmatpush.msra.mxu0 0.0
    %2482 = vmatpush.msra.mxu0 0.0
    %2483 = vmatpush.msra.mxu0 0.0
    %2484 = vmatpush.msra.mxu0 0.0
    %2485 = vmatpush.msra.mxu0 0.0
    %2486 = vmatpush.msra.mxu0 0.0
    %2487 = vmatpush.msra.mxu0 %v2125
    %2488 = vmatpush.msra.mxu0 %v1867
    %2489 = vmatpush.msra.mxu0 %v1865
    %2490 = vmatpush.msra.mxu0 %v1863
    %2491 = vmatpush.msra.mxu0 %v1861
    %2492 = vmatpush.msra.mxu0 %v1859
    %2493 = vmatpush.msra.mxu0 %v1857
    %2494 = vmatpush.msra.mxu0 %v1855
    %2495 = vmatmul.f32.gmra.mxu0 %v2429
    %v2496 = vpop.f32.mrf.mxu0
    %v2497 = vadd.f32 %v2474, %v2496
    %2498 = vmatmul.f32.gmra.mxu0 %v2431
    %v2499 = vpop.f32.mrf.mxu0
    %v2500 = vadd.f32 %v2477, %v2499
    %2501 = vdwg.mxu0
    %2502 = vmatpush.msra.mxu0 %v1822
    %2503 = vmatpush.msra.mxu0 %v1820
    %2504 = vmatpush.msra.mxu0 %v1818
    %2505 = vmatpush.msra.mxu0 %v1816
    %2506 = vmatpush.msra.mxu0 %v1814
    %2507 = vmatpush.msra.mxu0 %v1812
    %2508 = vmatpush.msra.mxu0 %v1810
    %2509 = vmatpush.msra.mxu0 %v1808
    %2510 = vmatpush.msra.mxu0 %v1806
    %2511 = vmatpush.msra.mxu0 %v1804
    %2512 = vmatpush.msra.mxu0 %v1802
    %2513 = vmatpush.msra.mxu0 %v1800
    %2514 = vmatpush.msra.mxu0 %v1798
    %2515 = vmatpush.msra.mxu0 %v1796
    %2516 = vmatpush.msra.mxu0 %v1794
    %2517 = vmatpush.msra.mxu0 %v1792
    %2518 = vmatmul.f32.gmra.mxu0 %v1782
    %v2519 = vpop.f32.mrf.mxu0
    %v2520 = vadd.f32 %v2424, %v2519
    %2521 = vmatmul.f32.gmra.mxu0 %v1785
    %v2522 = vpop.f32.mrf.mxu0
    %v2523 = vadd.f32 %v2427, %v2522
    %2524 = vdwg.mxu0
    %2525 = vmatpush.msra.mxu0 %v1854
    %2526 = vmatpush.msra.mxu0 %v1852
    %2527 = vmatpush.msra.mxu0 %v1850
    %2528 = vmatpush.msra.mxu0 %v1848
    %2529 = vmatpush.msra.mxu0 %v1846
    %2530 = vmatpush.msra.mxu0 %v1844
    %2531 = vmatpush.msra.mxu0 %v1842
    %2532 = vmatpush.msra.mxu0 %v1840
    %2533 = vmatpush.msra.mxu0 %v1838
    %2534 = vmatpush.msra.mxu0 %v1836
    %2535 = vmatpush.msra.mxu0 %v1834
    %2536 = vmatpush.msra.mxu0 %v1832
    %2537 = vmatpush.msra.mxu0 %v1830
    %2538 = vmatpush.msra.mxu0 %v1828
    %2539 = vmatpush.msra.mxu0 %v1826
    %2540 = vmatpush.msra.mxu0 %v1824
    %2541 = vmatmul.f32.gmra.mxu0 %v1783
    %v2542 = vpop.f32.mrf.mxu0
    %v2543 = vadd.f32 %v2520, %v2542
    %2544 = vmatmul.f32.gmra.mxu0 %v1786
    %v2545 = vpop.f32.mrf.mxu0
    %v2546 = vadd.f32 %v2523, %v2545
    %2547 = vdwg.mxu0
    %2548 = vmatpush.msra.mxu0 0.0
    %2549 = vmatpush.msra.mxu0 0.0
    %2550 = vmatpush.msra.mxu0 0.0
    %2551 = vmatpush.msra.mxu0 0.0
    %2552 = vmatpush.msra.mxu0 0.0
    %2553 = vmatpush.msra.mxu0 0.0
    %2554 = vmatpush.msra.mxu0 0.0
    %2555 = vmatpush.msra.mxu0 0.0
    %2556 = vmatpush.msra.mxu0 %v2128
    %2557 = vmatpush.msra.mxu0 %v1868
    %2558 = vmatpush.msra.mxu0 %v1866
    %2559 = vmatpush.msra.mxu0 %v1864
    %2560 = vmatpush.msra.mxu0 %v1862
    %2561 = vmatpush.msra.mxu0 %v1860
    %2562 = vmatpush.msra.mxu0 %v1858
    %2563 = vmatpush.msra.mxu0 %v1856
    %2564 = vmatmul.f32.gmra.mxu0 %v2429
    %v2565 = vpop.f32.mrf.mxu0
    %v2566 = vadd.f32 %v2543, %v2565
    %2567 = vmatmul.f32.gmra.mxu0 %v2431
    %v2568 = vpop.f32.mrf.mxu0
    %v2569 = vadd.f32 %v2546, %v2568
    %2570 = vdwg.mxu0
    %s2571 = scalar_lea.vmem %s3, 1280
    %v2572 = vld [vmem:[%s2571] sm:$0xff]
    %v2573 = vld [vmem:[%s2571 + $0x8] sm:$0xff]
    %v2574 = vld [vmem:[%s2571 + $0x10] sm:$0xff]
    %v2575 = vld [vmem:[%s2571 + $0x18] sm:$0xff]
    %v2576 = vld [vmem:[%s2571 + $0x20] sm:$0xff]
    %v2577 = vld [vmem:[%s2571 + $0x28] sm:$0xff]
    %v2578 = vld [vmem:[%s2571 + $0x30] sm:$0xff]
    %v2579 = vld [vmem:[%s2571 + $0x38] sm:$0xff]
    %v2580 = vld [vmem:[%s2571 + $0x40] sm:$0xff]
    %v2581 = vld [vmem:[%s2571 + $0x48] sm:$0xff]
    %v2582 = vld [vmem:[%s2571 + $0x50] sm:$0xff]
    %v2583 = vld [vmem:[%s2571 + $0x58] sm:$0xff]
    %v2584 = vld [vmem:[%s2571 + $0x60] sm:$0xff]
    %v2585 = vld [vmem:[%s2571 + $0x68] sm:$0xff]
    %v2586 = vld [vmem:[%s2571 + $0x70] sm:$0xff]
    %v2587 = vld [vmem:[%s2571 + $0x78] sm:$0xff]
    %v2588 = vld [vmem:[%s2571 + $0x80] sm:$0xff]
    %v2589 = vld [vmem:[%s2571 + $0x88] sm:$0xff]
    %v2590 = vld [vmem:[%s2571 + $0x90] sm:$0xff]
    %v2591 = vld [vmem:[%s2571 + $0x98] sm:$0xff]
    %v2592 = vld [vmem:[%s2571 + $0xa0] sm:$0xff]
    %v2593 = vld [vmem:[%s2571 + $0xa8] sm:$0xff]
    %v2594 = vld [vmem:[%s2571 + $0xb0] sm:$0xff]
    %v2595 = vld [vmem:[%s2571 + $0xb8] sm:$0xff]
    %v2596 = vld [vmem:[%s2571 + $0xc0] sm:$0xff]
    %v2597 = vld [vmem:[%s2571 + $0xc8] sm:$0xff]
    %v2598 = vld [vmem:[%s2571 + $0xd0] sm:$0xff]
    %v2599 = vld [vmem:[%s2571 + $0xd8] sm:$0xff]
    %v2600 = vld [vmem:[%s2571 + $0xe0] sm:$0xff]
    %v2601 = vld [vmem:[%s2571 + $0xe8] sm:$0xff]
    %v2602 = vld [vmem:[%s2571 + $0xf0] sm:$0xff]
    %v2603 = vld [vmem:[%s2571 + $0xf8] sm:$0xff]
    %v2604 = vld [vmem:[%s2571 + $0x100] sm:$0xff]
    %v2605 = vld [vmem:[%s2571 + $0x108] sm:$0xff]
    %v2606 = vld [vmem:[%s2571 + $0x110] sm:$0xff]
    %v2607 = vld [vmem:[%s2571 + $0x118] sm:$0xff]
    %v2608 = vld [vmem:[%s2571 + $0x120] sm:$0xff]
    %v2609 = vld [vmem:[%s2571 + $0x128] sm:$0xff]
    %v2610 = vld [vmem:[%s2571 + $0x130] sm:$0xff]
    %v2611 = vld [vmem:[%s2571 + $0x138] sm:$0xff]
    %v2612 = vld [vmem:[%s2571 + $0x140] sm:$0xff]
    %v2613 = vld [vmem:[%s2571 + $0x148] sm:$0xff]
    %v2614 = vld [vmem:[%s2571 + $0x150] sm:$0xff]
    %v2615 = vld [vmem:[%s2571 + $0x158] sm:$0xff]
    %v2616 = vld [vmem:[%s2571 + $0x160] sm:$0xff]
    %v2617 = vld [vmem:[%s2571 + $0x168] sm:$0xff]
    %v2618 = vld [vmem:[%s2571 + $0x170] sm:$0xff]
    %v2619 = vld [vmem:[%s2571 + $0x178] sm:$0xff]
    %v2620 = vld [vmem:[%s2571 + $0x180] sm:$0xff]
    %v2621 = vld [vmem:[%s2571 + $0x188] sm:$0xff]
    %v2622 = vld [vmem:[%s2571 + $0x190] sm:$0xff]
    %v2623 = vld [vmem:[%s2571 + $0x198] sm:$0xff]
    %v2624 = vld [vmem:[%s2571 + $0x1a0] sm:$0xff]
    %v2625 = vld [vmem:[%s2571 + $0x1a8] sm:$0xff]
    %v2626 = vld [vmem:[%s2571 + $0x1b0] sm:$0xff]
    %v2627 = vld [vmem:[%s2571 + $0x1b8] sm:$0xff]
    %v2628 = vld [vmem:[%s2571 + $0x1c0] sm:$0xff]
    %v2629 = vld [vmem:[%s2571 + $0x1c8] sm:$0xff]
    %v2630 = vld [vmem:[%s2571 + $0x1d0] sm:$0xff]
    %v2631 = vld [vmem:[%s2571 + $0x1d8] sm:$0xff]
    %v2632 = vld [vmem:[%s2571 + $0x1e0] sm:$0xff]
    %v2633 = vld [vmem:[%s2571 + $0x1e8] sm:$0xff]
    %v2634 = vld [vmem:[%s2571 + $0x1f0] sm:$0xff]
    %v2635 = vld [vmem:[%s2571 + $0x1f8] sm:$0xff]
    %v2636 = vld [vmem:[%s2571 + $0x200] sm:$0xff]
    %v2637 = vld [vmem:[%s2571 + $0x208] sm:$0xff]
    %v2638 = vld [vmem:[%s2571 + $0x210] sm:$0xff]
    %v2639 = vld [vmem:[%s2571 + $0x218] sm:$0xff]
    %v2640 = vld [vmem:[%s2571 + $0x220] sm:$0xff]
    %v2641 = vld [vmem:[%s2571 + $0x228] sm:$0xff]
    %v2642 = vld [vmem:[%s2571 + $0x230] sm:$0xff]
    %v2643 = vld [vmem:[%s2571 + $0x238] sm:$0xff]
    %v2644 = vld [vmem:[%s2571 + $0x240] sm:$0xff]
    %v2645 = vld [vmem:[%s2571 + $0x248] sm:$0xff]
    %v2646 = vld [vmem:[%s2571 + $0x250] sm:$0xff]
    %v2647 = vld [vmem:[%s2571 + $0x258] sm:$0xff]
    %v2648 = vld [vmem:[%s2571 + $0x260] sm:$0xff]
    %v2649 = vld [vmem:[%s2571 + $0x268] sm:$0xff]
    %v2650 = vld [vmem:[%s2571 + $0x270] sm:$0x7]
    %v2651 = vld [vmem:[%s2571 + $0x278] sm:$0x7]
    %v2652 = vrot.slane %v1773, 2
    %v2653 = vrot.slane %v1776, 2
    %v2654 = vsel %vm447, %v2652, %v2653
    %v2655 = vrot.slane %v1774, 2
    %v2656 = vrot.slane %v1777, 2
    %v2657 = vsel %vm447, %v2655, %v2656
    %v2658 = vrot.slane %v1775, 2
    %v2659 = vrot.slane %v1778, 2
    %v2660 = vsel %vm447, %v2658, %v2659
    %v2665 = vsel %vm1971, %v2660, 0
    %v2667 = vsel %vm1971, %v2659, 0
    %v2670 = vsel %vm1109, %v2650, 0
    %v2673 = vsel %vm1109, %v2651, 0
    %2675 = vmatpush.msra.mxu0 %v2602
    %2676 = vmatpush.msra.mxu0 %v2600
    %2677 = vmatpush.msra.mxu0 %v2598
    %2678 = vmatpush.msra.mxu0 %v2596
    %2679 = vmatpush.msra.mxu0 %v2594
    %2680 = vmatpush.msra.mxu0 %v2592
    %2681 = vmatpush.msra.mxu0 %v2590
    %2682 = vmatpush.msra.mxu0 %v2588
    %2683 = vmatpush.msra.mxu0 %v2586
    %2684 = vmatpush.msra.mxu0 %v2584
    %2685 = vmatpush.msra.mxu0 %v2582
    %2686 = vmatpush.msra.mxu0 %v2580
    %2687 = vmatpush.msra.mxu0 %v2578
    %2688 = vmatpush.msra.mxu0 %v2576
    %2689 = vmatpush.msra.mxu0 %v2574
    %2690 = vmatpush.msra.mxu0 %v2572
    %2691 = vmatmul.f32.gmra.mxu0 %v2654
    %v2692 = vpop.f32.mrf.mxu0
    %v2693 = vadd.f32 0.0, %v2692
    %2694 = vmatmul.f32.gmra.mxu0 %v2653
    %v2695 = vpop.f32.mrf.mxu0
    %v2696 = vadd.f32 0.0, %v2695
    %2697 = vdwg.mxu0
    %2698 = vmatpush.msra.mxu0 %v2634
    %2699 = vmatpush.msra.mxu0 %v2632
    %2700 = vmatpush.msra.mxu0 %v2630
    %2701 = vmatpush.msra.mxu0 %v2628
    %2702 = vmatpush.msra.mxu0 %v2626
    %2703 = vmatpush.msra.mxu0 %v2624
    %2704 = vmatpush.msra.mxu0 %v2622
    %2705 = vmatpush.msra.mxu0 %v2620
    %2706 = vmatpush.msra.mxu0 %v2618
    %2707 = vmatpush.msra.mxu0 %v2616
    %2708 = vmatpush.msra.mxu0 %v2614
    %2709 = vmatpush.msra.mxu0 %v2612
    %2710 = vmatpush.msra.mxu0 %v2610
    %2711 = vmatpush.msra.mxu0 %v2608
    %2712 = vmatpush.msra.mxu0 %v2606
    %2713 = vmatpush.msra.mxu0 %v2604
    %2714 = vmatmul.f32.gmra.mxu0 %v2657
    %v2715 = vpop.f32.mrf.mxu0
    %v2716 = vadd.f32 %v2693, %v2715
    %2717 = vmatmul.f32.gmra.mxu0 %v2656
    %v2718 = vpop.f32.mrf.mxu0
    %v2719 = vadd.f32 %v2696, %v2718
    %2720 = vdwg.mxu0
    %2721 = vmatpush.msra.mxu0 0.0
    %2722 = vmatpush.msra.mxu0 0.0
    %2723 = vmatpush.msra.mxu0 0.0
    %2724 = vmatpush.msra.mxu0 0.0
    %2725 = vmatpush.msra.mxu0 0.0
    %2726 = vmatpush.msra.mxu0 0.0
    %2727 = vmatpush.msra.mxu0 0.0
    %2728 = vmatpush.msra.mxu0 0.0
    %2729 = vmatpush.msra.mxu0 %v2670
    %2730 = vmatpush.msra.mxu0 %v2648
    %2731 = vmatpush.msra.mxu0 %v2646
    %2732 = vmatpush.msra.mxu0 %v2644
    %2733 = vmatpush.msra.mxu0 %v2642
    %2734 = vmatpush.msra.mxu0 %v2640
    %2735 = vmatpush.msra.mxu0 %v2638
    %2736 = vmatpush.msra.mxu0 %v2636
    %2737 = vmatmul.f32.gmra.mxu0 %v2665
    %v2738 = vpop.f32.mrf.mxu0
    %v2739 = vadd.f32 %v2716, %v2738
    %2740 = vmatmul.f32.gmra.mxu0 %v2667
    %v2741 = vpop.f32.mrf.mxu0
    %v2742 = vadd.f32 %v2719, %v2741
    %2743 = vdwg.mxu0
    %2744 = vmatpush.msra.mxu0 %v2603
    %2745 = vmatpush.msra.mxu0 %v2601
    %2746 = vmatpush.msra.mxu0 %v2599
    %2747 = vmatpush.msra.mxu0 %v2597
    %2748 = vmatpush.msra.mxu0 %v2595
    %2749 = vmatpush.msra.mxu0 %v2593
    %2750 = vmatpush.msra.mxu0 %v2591
    %2751 = vmatpush.msra.mxu0 %v2589
    %2752 = vmatpush.msra.mxu0 %v2587
    %2753 = vmatpush.msra.mxu0 %v2585
    %2754 = vmatpush.msra.mxu0 %v2583
    %2755 = vmatpush.msra.mxu0 %v2581
    %2756 = vmatpush.msra.mxu0 %v2579
    %2757 = vmatpush.msra.mxu0 %v2577
    %2758 = vmatpush.msra.mxu0 %v2575
    %2759 = vmatpush.msra.mxu0 %v2573
    %2760 = vmatmul.f32.gmra.mxu0 %v2654
    %v2761 = vpop.f32.mrf.mxu0
    %v2762 = vadd.f32 0.0, %v2761
    %2763 = vmatmul.f32.gmra.mxu0 %v2653
    %v2764 = vpop.f32.mrf.mxu0
    %v2765 = vadd.f32 0.0, %v2764
    %2766 = vdwg.mxu0
    %2767 = vmatpush.msra.mxu0 %v2635
    %2768 = vmatpush.msra.mxu0 %v2633
    %2769 = vmatpush.msra.mxu0 %v2631
    %2770 = vmatpush.msra.mxu0 %v2629
    %2771 = vmatpush.msra.mxu0 %v2627
    %2772 = vmatpush.msra.mxu0 %v2625
    %2773 = vmatpush.msra.mxu0 %v2623
    %2774 = vmatpush.msra.mxu0 %v2621
    %2775 = vmatpush.msra.mxu0 %v2619
    %2776 = vmatpush.msra.mxu0 %v2617
    %2777 = vmatpush.msra.mxu0 %v2615
    %2778 = vmatpush.msra.mxu0 %v2613
    %2779 = vmatpush.msra.mxu0 %v2611
    %2780 = vmatpush.msra.mxu0 %v2609
    %2781 = vmatpush.msra.mxu0 %v2607
    %2782 = vmatpush.msra.mxu0 %v2605
    %2783 = vmatmul.f32.gmra.mxu0 %v2657
    %v2784 = vpop.f32.mrf.mxu0
    %v2785 = vadd.f32 %v2762, %v2784
    %2786 = vmatmul.f32.gmra.mxu0 %v2656
    %v2787 = vpop.f32.mrf.mxu0
    %v2788 = vadd.f32 %v2765, %v2787
    %2789 = vdwg.mxu0
    %2790 = vmatpush.msra.mxu0 0.0
    %2791 = vmatpush.msra.mxu0 0.0
    %2792 = vmatpush.msra.mxu0 0.0
    %2793 = vmatpush.msra.mxu0 0.0
    %2794 = vmatpush.msra.mxu0 0.0
    %2795 = vmatpush.msra.mxu0 0.0
    %2796 = vmatpush.msra.mxu0 0.0
    %2797 = vmatpush.msra.mxu0 0.0
    %2798 = vmatpush.msra.mxu0 %v2673
    %2799 = vmatpush.msra.mxu0 %v2649
    %2800 = vmatpush.msra.mxu0 %v2647
    %2801 = vmatpush.msra.mxu0 %v2645
    %2802 = vmatpush.msra.mxu0 %v2643
    %2803 = vmatpush.msra.mxu0 %v2641
    %2804 = vmatpush.msra.mxu0 %v2639
    %2805 = vmatpush.msra.mxu0 %v2637
    %2806 = vmatmul.f32.gmra.mxu0 %v2665
    %v2807 = vpop.f32.mrf.mxu0
    %v2808 = vadd.f32 %v2785, %v2807
    %2809 = vmatmul.f32.gmra.mxu0 %v2667
    %v2810 = vpop.f32.mrf.mxu0
    %v2811 = vadd.f32 %v2788, %v2810
    %2812 = vdwg.mxu0
    %v2813 = vadd.f32 %v2194, %v2739
    %v2814 = vadd.f32 %v2263, %v2808
    %v2815 = vadd.f32 %v2197, %v2742
    %v2816 = vadd.f32 %v2266, %v2811
    %v2817 = vrot.slane %v1782, 2
    %v2818 = vrot.slane %v1785, 2
    %v2819 = vsel %vm447, %v2817, %v2818
    %v2820 = vrot.slane %v1783, 2
    %v2821 = vrot.slane %v1786, 2
    %v2822 = vsel %vm447, %v2820, %v2821
    %v2823 = vrot.slane %v1784, 2
    %v2824 = vrot.slane %v1787, 2
    %v2825 = vsel %vm447, %v2823, %v2824
    %v2830 = vsel %vm1971, %v2825, 0
    %v2832 = vsel %vm1971, %v2824, 0
    %2834 = vmatpush.msra.mxu0 %v2602
    %2835 = vmatpush.msra.mxu0 %v2600
    %2836 = vmatpush.msra.mxu0 %v2598
    %2837 = vmatpush.msra.mxu0 %v2596
    %2838 = vmatpush.msra.mxu0 %v2594
    %2839 = vmatpush.msra.mxu0 %v2592
    %2840 = vmatpush.msra.mxu0 %v2590
    %2841 = vmatpush.msra.mxu0 %v2588
    %2842 = vmatpush.msra.mxu0 %v2586
    %2843 = vmatpush.msra.mxu0 %v2584
    %2844 = vmatpush.msra.mxu0 %v2582
    %2845 = vmatpush.msra.mxu0 %v2580
    %2846 = vmatpush.msra.mxu0 %v2578
    %2847 = vmatpush.msra.mxu0 %v2576
    %2848 = vmatpush.msra.mxu0 %v2574
    %2849 = vmatpush.msra.mxu0 %v2572
    %2850 = vmatmul.f32.gmra.mxu0 %v2819
    %v2851 = vpop.f32.mrf.mxu0
    %v2852 = vadd.f32 0.0, %v2851
    %2853 = vmatmul.f32.gmra.mxu0 %v2818
    %v2854 = vpop.f32.mrf.mxu0
    %v2855 = vadd.f32 0.0, %v2854
    %2856 = vdwg.mxu0
    %2857 = vmatpush.msra.mxu0 %v2634
    %2858 = vmatpush.msra.mxu0 %v2632
    %2859 = vmatpush.msra.mxu0 %v2630
    %2860 = vmatpush.msra.mxu0 %v2628
    %2861 = vmatpush.msra.mxu0 %v2626
    %2862 = vmatpush.msra.mxu0 %v2624
    %2863 = vmatpush.msra.mxu0 %v2622
    %2864 = vmatpush.msra.mxu0 %v2620
    %2865 = vmatpush.msra.mxu0 %v2618
    %2866 = vmatpush.msra.mxu0 %v2616
    %2867 = vmatpush.msra.mxu0 %v2614
    %2868 = vmatpush.msra.mxu0 %v2612
    %2869 = vmatpush.msra.mxu0 %v2610
    %2870 = vmatpush.msra.mxu0 %v2608
    %2871 = vmatpush.msra.mxu0 %v2606
    %2872 = vmatpush.msra.mxu0 %v2604
    %2873 = vmatmul.f32.gmra.mxu0 %v2822
    %v2874 = vpop.f32.mrf.mxu0
    %v2875 = vadd.f32 %v2852, %v2874
    %2876 = vmatmul.f32.gmra.mxu0 %v2821
    %v2877 = vpop.f32.mrf.mxu0
    %v2878 = vadd.f32 %v2855, %v2877
    %2879 = vdwg.mxu0
    %2880 = vmatpush.msra.mxu0 0.0
    %2881 = vmatpush.msra.mxu0 0.0
    %2882 = vmatpush.msra.mxu0 0.0
    %2883 = vmatpush.msra.mxu0 0.0
    %2884 = vmatpush.msra.mxu0 0.0
    %2885 = vmatpush.msra.mxu0 0.0
    %2886 = vmatpush.msra.mxu0 0.0
    %2887 = vmatpush.msra.mxu0 0.0
    %2888 = vmatpush.msra.mxu0 %v2670
    %2889 = vmatpush.msra.mxu0 %v2648
    %2890 = vmatpush.msra.mxu0 %v2646
    %2891 = vmatpush.msra.mxu0 %v2644
    %2892 = vmatpush.msra.mxu0 %v2642
    %2893 = vmatpush.msra.mxu0 %v2640
    %2894 = vmatpush.msra.mxu0 %v2638
    %2895 = vmatpush.msra.mxu0 %v2636
    %2896 = vmatmul.f32.gmra.mxu0 %v2830
    %v2897 = vpop.f32.mrf.mxu0
    %v2898 = vadd.f32 %v2875, %v2897
    %2899 = vmatmul.f32.gmra.mxu0 %v2832
    %v2900 = vpop.f32.mrf.mxu0
    %v2901 = vadd.f32 %v2878, %v2900
    %2902 = vdwg.mxu0
    %2903 = vmatpush.msra.mxu0 %v2603
    %2904 = vmatpush.msra.mxu0 %v2601
    %2905 = vmatpush.msra.mxu0 %v2599
    %2906 = vmatpush.msra.mxu0 %v2597
    %2907 = vmatpush.msra.mxu0 %v2595
    %2908 = vmatpush.msra.mxu0 %v2593
    %2909 = vmatpush.msra.mxu0 %v2591
    %2910 = vmatpush.msra.mxu0 %v2589
    %2911 = vmatpush.msra.mxu0 %v2587
    %2912 = vmatpush.msra.mxu0 %v2585
    %2913 = vmatpush.msra.mxu0 %v2583
    %2914 = vmatpush.msra.mxu0 %v2581
    %2915 = vmatpush.msra.mxu0 %v2579
    %2916 = vmatpush.msra.mxu0 %v2577
    %2917 = vmatpush.msra.mxu0 %v2575
    %2918 = vmatpush.msra.mxu0 %v2573
    %2919 = vmatmul.f32.gmra.mxu0 %v2819
    %v2920 = vpop.f32.mrf.mxu0
    %v2921 = vadd.f32 0.0, %v2920
    %2922 = vmatmul.f32.gmra.mxu0 %v2818
    %v2923 = vpop.f32.mrf.mxu0
    %v2924 = vadd.f32 0.0, %v2923
    %2925 = vdwg.mxu0
    %2926 = vmatpush.msra.mxu0 %v2635
    %2927 = vmatpush.msra.mxu0 %v2633
    %2928 = vmatpush.msra.mxu0 %v2631
    %2929 = vmatpush.msra.mxu0 %v2629
    %2930 = vmatpush.msra.mxu0 %v2627
    %2931 = vmatpush.msra.mxu0 %v2625
    %2932 = vmatpush.msra.mxu0 %v2623
    %2933 = vmatpush.msra.mxu0 %v2621
    %2934 = vmatpush.msra.mxu0 %v2619
    %2935 = vmatpush.msra.mxu0 %v2617
    %2936 = vmatpush.msra.mxu0 %v2615
    %2937 = vmatpush.msra.mxu0 %v2613
    %2938 = vmatpush.msra.mxu0 %v2611
    %2939 = vmatpush.msra.mxu0 %v2609
    %2940 = vmatpush.msra.mxu0 %v2607
    %2941 = vmatpush.msra.mxu0 %v2605
    %2942 = vmatmul.f32.gmra.mxu0 %v2822
    %v2943 = vpop.f32.mrf.mxu0
    %v2944 = vadd.f32 %v2921, %v2943
    %2945 = vmatmul.f32.gmra.mxu0 %v2821
    %v2946 = vpop.f32.mrf.mxu0
    %v2947 = vadd.f32 %v2924, %v2946
    %2948 = vdwg.mxu0
    %2949 = vmatpush.msra.mxu0 0.0
    %2950 = vmatpush.msra.mxu0 0.0
    %2951 = vmatpush.msra.mxu0 0.0
    %2952 = vmatpush.msra.mxu0 0.0
    %2953 = vmatpush.msra.mxu0 0.0
    %2954 = vmatpush.msra.mxu0 0.0
    %2955 = vmatpush.msra.mxu0 0.0
    %2956 = vmatpush.msra.mxu0 0.0
    %2957 = vmatpush.msra.mxu0 %v2673
    %2958 = vmatpush.msra.mxu0 %v2649
    %2959 = vmatpush.msra.mxu0 %v2647
    %2960 = vmatpush.msra.mxu0 %v2645
    %2961 = vmatpush.msra.mxu0 %v2643
    %2962 = vmatpush.msra.mxu0 %v2641
    %2963 = vmatpush.msra.mxu0 %v2639
    %2964 = vmatpush.msra.mxu0 %v2637
    %2965 = vmatmul.f32.gmra.mxu0 %v2830
    %v2966 = vpop.f32.mrf.mxu0
    %v2967 = vadd.f32 %v2944, %v2966
    %2968 = vmatmul.f32.gmra.mxu0 %v2832
    %v2969 = vpop.f32.mrf.mxu0
    %v2970 = vadd.f32 %v2947, %v2969
    %2971 = vdwg.mxu0
    %v2972 = vadd.f32 %v2497, %v2898
    %v2973 = vadd.f32 %v2566, %v2967
    %v2974 = vadd.f32 %v2500, %v2901
    %v2975 = vadd.f32 %v2569, %v2970
    %s2976 = scalar_lea.vmem %s3, 1920
    %v2977 = vld [vmem:[%s2976] sm:$0xff]
    %v2978 = vld [vmem:[%s2976 + $0x8] sm:$0xff]
    %v2979 = vld [vmem:[%s2976 + $0x10] sm:$0xff]
    %v2980 = vld [vmem:[%s2976 + $0x18] sm:$0xff]
    %v2981 = vld [vmem:[%s2976 + $0x20] sm:$0xff]
    %v2982 = vld [vmem:[%s2976 + $0x28] sm:$0xff]
    %v2983 = vld [vmem:[%s2976 + $0x30] sm:$0xff]
    %v2984 = vld [vmem:[%s2976 + $0x38] sm:$0xff]
    %v2985 = vld [vmem:[%s2976 + $0x40] sm:$0xff]
    %v2986 = vld [vmem:[%s2976 + $0x48] sm:$0xff]
    %v2987 = vld [vmem:[%s2976 + $0x50] sm:$0xff]
    %v2988 = vld [vmem:[%s2976 + $0x58] sm:$0xff]
    %v2989 = vld [vmem:[%s2976 + $0x60] sm:$0xff]
    %v2990 = vld [vmem:[%s2976 + $0x68] sm:$0xff]
    %v2991 = vld [vmem:[%s2976 + $0x70] sm:$0xff]
    %v2992 = vld [vmem:[%s2976 + $0x78] sm:$0xff]
    %v2993 = vld [vmem:[%s2976 + $0x80] sm:$0xff]
    %v2994 = vld [vmem:[%s2976 + $0x88] sm:$0xff]
    %v2995 = vld [vmem:[%s2976 + $0x90] sm:$0xff]
    %v2996 = vld [vmem:[%s2976 + $0x98] sm:$0xff]
    %v2997 = vld [vmem:[%s2976 + $0xa0] sm:$0xff]
    %v2998 = vld [vmem:[%s2976 + $0xa8] sm:$0xff]
    %v2999 = vld [vmem:[%s2976 + $0xb0] sm:$0xff]
    %v3000 = vld [vmem:[%s2976 + $0xb8] sm:$0xff]
    %v3001 = vld [vmem:[%s2976 + $0xc0] sm:$0xff]
    %v3002 = vld [vmem:[%s2976 + $0xc8] sm:$0xff]
    %v3003 = vld [vmem:[%s2976 + $0xd0] sm:$0xff]
    %v3004 = vld [vmem:[%s2976 + $0xd8] sm:$0xff]
    %v3005 = vld [vmem:[%s2976 + $0xe0] sm:$0xff]
    %v3006 = vld [vmem:[%s2976 + $0xe8] sm:$0xff]
    %v3007 = vld [vmem:[%s2976 + $0xf0] sm:$0xff]
    %v3008 = vld [vmem:[%s2976 + $0xf8] sm:$0xff]
    %v3009 = vld [vmem:[%s2976 + $0x100] sm:$0xff]
    %v3010 = vld [vmem:[%s2976 + $0x108] sm:$0xff]
    %v3011 = vld [vmem:[%s2976 + $0x110] sm:$0xff]
    %v3012 = vld [vmem:[%s2976 + $0x118] sm:$0xff]
    %v3013 = vld [vmem:[%s2976 + $0x120] sm:$0xff]
    %v3014 = vld [vmem:[%s2976 + $0x128] sm:$0xff]
    %v3015 = vld [vmem:[%s2976 + $0x130] sm:$0xff]
    %v3016 = vld [vmem:[%s2976 + $0x138] sm:$0xff]
    %v3017 = vld [vmem:[%s2976 + $0x140] sm:$0xff]
    %v3018 = vld [vmem:[%s2976 + $0x148] sm:$0xff]
    %v3019 = vld [vmem:[%s2976 + $0x150] sm:$0xff]
    %v3020 = vld [vmem:[%s2976 + $0x158] sm:$0xff]
    %v3021 = vld [vmem:[%s2976 + $0x160] sm:$0xff]
    %v3022 = vld [vmem:[%s2976 + $0x168] sm:$0xff]
    %v3023 = vld [vmem:[%s2976 + $0x170] sm:$0xff]
    %v3024 = vld [vmem:[%s2976 + $0x178] sm:$0xff]
    %v3025 = vld [vmem:[%s2976 + $0x180] sm:$0xff]
    %v3026 = vld [vmem:[%s2976 + $0x188] sm:$0xff]
    %v3027 = vld [vmem:[%s2976 + $0x190] sm:$0xff]
    %v3028 = vld [vmem:[%s2976 + $0x198] sm:$0xff]
    %v3029 = vld [vmem:[%s2976 + $0x1a0] sm:$0xff]
    %v3030 = vld [vmem:[%s2976 + $0x1a8] sm:$0xff]
    %v3031 = vld [vmem:[%s2976 + $0x1b0] sm:$0xff]
    %v3032 = vld [vmem:[%s2976 + $0x1b8] sm:$0xff]
    %v3033 = vld [vmem:[%s2976 + $0x1c0] sm:$0xff]
    %v3034 = vld [vmem:[%s2976 + $0x1c8] sm:$0xff]
    %v3035 = vld [vmem:[%s2976 + $0x1d0] sm:$0xff]
    %v3036 = vld [vmem:[%s2976 + $0x1d8] sm:$0xff]
    %v3037 = vld [vmem:[%s2976 + $0x1e0] sm:$0xff]
    %v3038 = vld [vmem:[%s2976 + $0x1e8] sm:$0xff]
    %v3039 = vld [vmem:[%s2976 + $0x1f0] sm:$0xff]
    %v3040 = vld [vmem:[%s2976 + $0x1f8] sm:$0xff]
    %v3041 = vld [vmem:[%s2976 + $0x200] sm:$0xff]
    %v3042 = vld [vmem:[%s2976 + $0x208] sm:$0xff]
    %v3043 = vld [vmem:[%s2976 + $0x210] sm:$0xff]
    %v3044 = vld [vmem:[%s2976 + $0x218] sm:$0xff]
    %v3045 = vld [vmem:[%s2976 + $0x220] sm:$0xff]
    %v3046 = vld [vmem:[%s2976 + $0x228] sm:$0xff]
    %v3047 = vld [vmem:[%s2976 + $0x230] sm:$0xff]
    %v3048 = vld [vmem:[%s2976 + $0x238] sm:$0xff]
    %v3049 = vld [vmem:[%s2976 + $0x240] sm:$0xff]
    %v3050 = vld [vmem:[%s2976 + $0x248] sm:$0xff]
    %v3051 = vld [vmem:[%s2976 + $0x250] sm:$0xff]
    %v3052 = vld [vmem:[%s2976 + $0x258] sm:$0xff]
    %v3053 = vld [vmem:[%s2976 + $0x260] sm:$0xff]
    %v3054 = vld [vmem:[%s2976 + $0x268] sm:$0xff]
    %v3055 = vld [vmem:[%s2976 + $0x270] sm:$0x7]
    %v3056 = vld [vmem:[%s2976 + $0x278] sm:$0x7]
    %v3057 = vrot.slane %v1773, 3
    %v3058 = vrot.slane %v1776, 3
    %v3059 = vsel %vm666, %v3057, %v3058
    %v3060 = vrot.slane %v1774, 3
    %v3061 = vrot.slane %v1777, 3
    %v3062 = vsel %vm666, %v3060, %v3061
    %v3063 = vrot.slane %v1775, 3
    %v3064 = vrot.slane %v1778, 3
    %v3065 = vsel %vm666, %v3063, %v3064
    %v3070 = vsel %vm1971, %v3065, 0
    %v3072 = vsel %vm1971, %v3064, 0
    %v3075 = vsel %vm1109, %v3055, 0
    %v3078 = vsel %vm1109, %v3056, 0
    %3080 = vmatpush.msra.mxu0 %v3007
    %3081 = vmatpush.msra.mxu0 %v3005
    %3082 = vmatpush.msra.mxu0 %v3003
    %3083 = vmatpush.msra.mxu0 %v3001
    %3084 = vmatpush.msra.mxu0 %v2999
    %3085 = vmatpush.msra.mxu0 %v2997
    %3086 = vmatpush.msra.mxu0 %v2995
    %3087 = vmatpush.msra.mxu0 %v2993
    %3088 = vmatpush.msra.mxu0 %v2991
    %3089 = vmatpush.msra.mxu0 %v2989
    %3090 = vmatpush.msra.mxu0 %v2987
    %3091 = vmatpush.msra.mxu0 %v2985
    %3092 = vmatpush.msra.mxu0 %v2983
    %3093 = vmatpush.msra.mxu0 %v2981
    %3094 = vmatpush.msra.mxu0 %v2979
    %3095 = vmatpush.msra.mxu0 %v2977
    %3096 = vmatmul.f32.gmra.mxu0 %v3059
    %v3097 = vpop.f32.mrf.mxu0
    %v3098 = vadd.f32 0.0, %v3097
    %3099 = vmatmul.f32.gmra.mxu0 %v3058
    %v3100 = vpop.f32.mrf.mxu0
    %v3101 = vadd.f32 0.0, %v3100
    %3102 = vdwg.mxu0
    %3103 = vmatpush.msra.mxu0 %v3039
    %3104 = vmatpush.msra.mxu0 %v3037
    %3105 = vmatpush.msra.mxu0 %v3035
    %3106 = vmatpush.msra.mxu0 %v3033
    %3107 = vmatpush.msra.mxu0 %v3031
    %3108 = vmatpush.msra.mxu0 %v3029
    %3109 = vmatpush.msra.mxu0 %v3027
    %3110 = vmatpush.msra.mxu0 %v3025
    %3111 = vmatpush.msra.mxu0 %v3023
    %3112 = vmatpush.msra.mxu0 %v3021
    %3113 = vmatpush.msra.mxu0 %v3019
    %3114 = vmatpush.msra.mxu0 %v3017
    %3115 = vmatpush.msra.mxu0 %v3015
    %3116 = vmatpush.msra.mxu0 %v3013
    %3117 = vmatpush.msra.mxu0 %v3011
    %3118 = vmatpush.msra.mxu0 %v3009
    %3119 = vmatmul.f32.gmra.mxu0 %v3062
    %v3120 = vpop.f32.mrf.mxu0
    %v3121 = vadd.f32 %v3098, %v3120
    %3122 = vmatmul.f32.gmra.mxu0 %v3061
    %v3123 = vpop.f32.mrf.mxu0
    %v3124 = vadd.f32 %v3101, %v3123
    %3125 = vdwg.mxu0
    %3126 = vmatpush.msra.mxu0 0.0
    %3127 = vmatpush.msra.mxu0 0.0
    %3128 = vmatpush.msra.mxu0 0.0
    %3129 = vmatpush.msra.mxu0 0.0
    %3130 = vmatpush.msra.mxu0 0.0
    %3131 = vmatpush.msra.mxu0 0.0
    %3132 = vmatpush.msra.mxu0 0.0
    %3133 = vmatpush.msra.mxu0 0.0
    %3134 = vmatpush.msra.mxu0 %v3075
    %3135 = vmatpush.msra.mxu0 %v3053
    %3136 = vmatpush.msra.mxu0 %v3051
    %3137 = vmatpush.msra.mxu0 %v3049
    %3138 = vmatpush.msra.mxu0 %v3047
    %3139 = vmatpush.msra.mxu0 %v3045
    %3140 = vmatpush.msra.mxu0 %v3043
    %3141 = vmatpush.msra.mxu0 %v3041
    %3142 = vmatmul.f32.gmra.mxu0 %v3070
    %v3143 = vpop.f32.mrf.mxu0
    %v3144 = vadd.f32 %v3121, %v3143
    %3145 = vmatmul.f32.gmra.mxu0 %v3072
    %v3146 = vpop.f32.mrf.mxu0
    %v3147 = vadd.f32 %v3124, %v3146
    %3148 = vdwg.mxu0
    %3149 = vmatpush.msra.mxu0 %v3008
    %3150 = vmatpush.msra.mxu0 %v3006
    %3151 = vmatpush.msra.mxu0 %v3004
    %3152 = vmatpush.msra.mxu0 %v3002
    %3153 = vmatpush.msra.mxu0 %v3000
    %3154 = vmatpush.msra.mxu0 %v2998
    %3155 = vmatpush.msra.mxu0 %v2996
    %3156 = vmatpush.msra.mxu0 %v2994
    %3157 = vmatpush.msra.mxu0 %v2992
    %3158 = vmatpush.msra.mxu0 %v2990
    %3159 = vmatpush.msra.mxu0 %v2988
    %3160 = vmatpush.msra.mxu0 %v2986
    %3161 = vmatpush.msra.mxu0 %v2984
    %3162 = vmatpush.msra.mxu0 %v2982
    %3163 = vmatpush.msra.mxu0 %v2980
    %3164 = vmatpush.msra.mxu0 %v2978
    %3165 = vmatmul.f32.gmra.mxu0 %v3059
    %v3166 = vpop.f32.mrf.mxu0
    %v3167 = vadd.f32 0.0, %v3166
    %3168 = vmatmul.f32.gmra.mxu0 %v3058
    %v3169 = vpop.f32.mrf.mxu0
    %v3170 = vadd.f32 0.0, %v3169
    %3171 = vdwg.mxu0
    %3172 = vmatpush.msra.mxu0 %v3040
    %3173 = vmatpush.msra.mxu0 %v3038
    %3174 = vmatpush.msra.mxu0 %v3036
    %3175 = vmatpush.msra.mxu0 %v3034
    %3176 = vmatpush.msra.mxu0 %v3032
    %3177 = vmatpush.msra.mxu0 %v3030
    %3178 = vmatpush.msra.mxu0 %v3028
    %3179 = vmatpush.msra.mxu0 %v3026
    %3180 = vmatpush.msra.mxu0 %v3024
    %3181 = vmatpush.msra.mxu0 %v3022
    %3182 = vmatpush.msra.mxu0 %v3020
    %3183 = vmatpush.msra.mxu0 %v3018
    %3184 = vmatpush.msra.mxu0 %v3016
    %3185 = vmatpush.msra.mxu0 %v3014
    %3186 = vmatpush.msra.mxu0 %v3012
    %3187 = vmatpush.msra.mxu0 %v3010
    %3188 = vmatmul.f32.gmra.mxu0 %v3062
    %v3189 = vpop.f32.mrf.mxu0
    %v3190 = vadd.f32 %v3167, %v3189
    %3191 = vmatmul.f32.gmra.mxu0 %v3061
    %v3192 = vpop.f32.mrf.mxu0
    %v3193 = vadd.f32 %v3170, %v3192
    %3194 = vdwg.mxu0
    %3195 = vmatpush.msra.mxu0 0.0
    %3196 = vmatpush.msra.mxu0 0.0
    %3197 = vmatpush.msra.mxu0 0.0
    %3198 = vmatpush.msra.mxu0 0.0
    %3199 = vmatpush.msra.mxu0 0.0
    %3200 = vmatpush.msra.mxu0 0.0
    %3201 = vmatpush.msra.mxu0 0.0
    %3202 = vmatpush.msra.mxu0 0.0
    %3203 = vmatpush.msra.mxu0 %v3078
    %3204 = vmatpush.msra.mxu0 %v3054
    %3205 = vmatpush.msra.mxu0 %v3052
    %3206 = vmatpush.msra.mxu0 %v3050
    %3207 = vmatpush.msra.mxu0 %v3048
    %3208 = vmatpush.msra.mxu0 %v3046
    %3209 = vmatpush.msra.mxu0 %v3044
    %3210 = vmatpush.msra.mxu0 %v3042
    %3211 = vmatmul.f32.gmra.mxu0 %v3070
    %v3212 = vpop.f32.mrf.mxu0
    %v3213 = vadd.f32 %v3190, %v3212
    %3214 = vmatmul.f32.gmra.mxu0 %v3072
    %v3215 = vpop.f32.mrf.mxu0
    %v3216 = vadd.f32 %v3193, %v3215
    %3217 = vdwg.mxu0
    %v3218 = vadd.f32 %v2813, %v3144
    %v3219 = vadd.f32 %v2814, %v3213
    %v3220 = vadd.f32 %v2815, %v3147
    %v3221 = vadd.f32 %v2816, %v3216
    %v3222 = vrot.slane %v1782, 3
    %v3223 = vrot.slane %v1785, 3
    %v3224 = vsel %vm666, %v3222, %v3223
    %v3225 = vrot.slane %v1783, 3
    %v3226 = vrot.slane %v1786, 3
    %v3227 = vsel %vm666, %v3225, %v3226
    %v3228 = vrot.slane %v1784, 3
    %v3229 = vrot.slane %v1787, 3
    %v3230 = vsel %vm666, %v3228, %v3229
    %v3235 = vsel %vm1971, %v3230, 0
    %v3237 = vsel %vm1971, %v3229, 0
    %3239 = vmatpush.msra.mxu0 %v3007
    %3240 = vmatpush.msra.mxu0 %v3005
    %3241 = vmatpush.msra.mxu0 %v3003
    %3242 = vmatpush.msra.mxu0 %v3001
    %3243 = vmatpush.msra.mxu0 %v2999
    %3244 = vmatpush.msra.mxu0 %v2997
    %3245 = vmatpush.msra.mxu0 %v2995
    %3246 = vmatpush.msra.mxu0 %v2993
    %3247 = vmatpush.msra.mxu0 %v2991
    %3248 = vmatpush.msra.mxu0 %v2989
    %3249 = vmatpush.msra.mxu0 %v2987
    %3250 = vmatpush.msra.mxu0 %v2985
    %3251 = vmatpush.msra.mxu0 %v2983
    %3252 = vmatpush.msra.mxu0 %v2981
    %3253 = vmatpush.msra.mxu0 %v2979
    %3254 = vmatpush.msra.mxu0 %v2977
    %3255 = vmatmul.f32.gmra.mxu0 %v3224
    %v3256 = vpop.f32.mrf.mxu0
    %v3257 = vadd.f32 0.0, %v3256
    %3258 = vmatmul.f32.gmra.mxu0 %v3223
    %v3259 = vpop.f32.mrf.mxu0
    %v3260 = vadd.f32 0.0, %v3259
    %3261 = vdwg.mxu0
    %3262 = vmatpush.msra.mxu0 %v3039
    %3263 = vmatpush.msra.mxu0 %v3037
    %3264 = vmatpush.msra.mxu0 %v3035
    %3265 = vmatpush.msra.mxu0 %v3033
    %3266 = vmatpush.msra.mxu0 %v3031
    %3267 = vmatpush.msra.mxu0 %v3029
    %3268 = vmatpush.msra.mxu0 %v3027
    %3269 = vmatpush.msra.mxu0 %v3025
    %3270 = vmatpush.msra.mxu0 %v3023
    %3271 = vmatpush.msra.mxu0 %v3021
    %3272 = vmatpush.msra.mxu0 %v3019
    %3273 = vmatpush.msra.mxu0 %v3017
    %3274 = vmatpush.msra.mxu0 %v3015
    %3275 = vmatpush.msra.mxu0 %v3013
    %3276 = vmatpush.msra.mxu0 %v3011
    %3277 = vmatpush.msra.mxu0 %v3009
    %3278 = vmatmul.f32.gmra.mxu0 %v3227
    %v3279 = vpop.f32.mrf.mxu0
    %v3280 = vadd.f32 %v3257, %v3279
    %3281 = vmatmul.f32.gmra.mxu0 %v3226
    %v3282 = vpop.f32.mrf.mxu0
    %v3283 = vadd.f32 %v3260, %v3282
    %3284 = vdwg.mxu0
    %3285 = vmatpush.msra.mxu0 0.0
    %3286 = vmatpush.msra.mxu0 0.0
    %3287 = vmatpush.msra.mxu0 0.0
    %3288 = vmatpush.msra.mxu0 0.0
    %3289 = vmatpush.msra.mxu0 0.0
    %3290 = vmatpush.msra.mxu0 0.0
    %3291 = vmatpush.msra.mxu0 0.0
    %3292 = vmatpush.msra.mxu0 0.0
    %3293 = vmatpush.msra.mxu0 %v3075
    %3294 = vmatpush.msra.mxu0 %v3053
    %3295 = vmatpush.msra.mxu0 %v3051
    %3296 = vmatpush.msra.mxu0 %v3049
    %3297 = vmatpush.msra.mxu0 %v3047
    %3298 = vmatpush.msra.mxu0 %v3045
    %3299 = vmatpush.msra.mxu0 %v3043
    %3300 = vmatpush.msra.mxu0 %v3041
    %3301 = vmatmul.f32.gmra.mxu0 %v3235
    %v3302 = vpop.f32.mrf.mxu0
    %v3303 = vadd.f32 %v3280, %v3302
    %3304 = vmatmul.f32.gmra.mxu0 %v3237
    %v3305 = vpop.f32.mrf.mxu0
    %v3306 = vadd.f32 %v3283, %v3305
    %3307 = vdwg.mxu0
    %3308 = vmatpush.msra.mxu0 %v3008
    %3309 = vmatpush.msra.mxu0 %v3006
    %3310 = vmatpush.msra.mxu0 %v3004
    %3311 = vmatpush.msra.mxu0 %v3002
    %3312 = vmatpush.msra.mxu0 %v3000
    %3313 = vmatpush.msra.mxu0 %v2998
    %3314 = vmatpush.msra.mxu0 %v2996
    %3315 = vmatpush.msra.mxu0 %v2994
    %3316 = vmatpush.msra.mxu0 %v2992
    %3317 = vmatpush.msra.mxu0 %v2990
    %3318 = vmatpush.msra.mxu0 %v2988
    %3319 = vmatpush.msra.mxu0 %v2986
    %3320 = vmatpush.msra.mxu0 %v2984
    %3321 = vmatpush.msra.mxu0 %v2982
    %3322 = vmatpush.msra.mxu0 %v2980
    %3323 = vmatpush.msra.mxu0 %v2978
    %3324 = vmatmul.f32.gmra.mxu0 %v3224
    %v3325 = vpop.f32.mrf.mxu0
    %v3326 = vadd.f32 0.0, %v3325
    %3327 = vmatmul.f32.gmra.mxu0 %v3223
    %v3328 = vpop.f32.mrf.mxu0
    %v3329 = vadd.f32 0.0, %v3328
    %3330 = vdwg.mxu0
    %3331 = vmatpush.msra.mxu0 %v3040
    %3332 = vmatpush.msra.mxu0 %v3038
    %3333 = vmatpush.msra.mxu0 %v3036
    %3334 = vmatpush.msra.mxu0 %v3034
    %3335 = vmatpush.msra.mxu0 %v3032
    %3336 = vmatpush.msra.mxu0 %v3030
    %3337 = vmatpush.msra.mxu0 %v3028
    %3338 = vmatpush.msra.mxu0 %v3026
    %3339 = vmatpush.msra.mxu0 %v3024
    %3340 = vmatpush.msra.mxu0 %v3022
    %3341 = vmatpush.msra.mxu0 %v3020
    %3342 = vmatpush.msra.mxu0 %v3018
    %3343 = vmatpush.msra.mxu0 %v3016
    %3344 = vmatpush.msra.mxu0 %v3014
    %3345 = vmatpush.msra.mxu0 %v3012
    %3346 = vmatpush.msra.mxu0 %v3010
    %3347 = vmatmul.f32.gmra.mxu0 %v3227
    %v3348 = vpop.f32.mrf.mxu0
    %v3349 = vadd.f32 %v3326, %v3348
    %3350 = vmatmul.f32.gmra.mxu0 %v3226
    %v3351 = vpop.f32.mrf.mxu0
    %v3352 = vadd.f32 %v3329, %v3351
    %3353 = vdwg.mxu0
    %3354 = vmatpush.msra.mxu0 0.0
    %3355 = vmatpush.msra.mxu0 0.0
    %3356 = vmatpush.msra.mxu0 0.0
    %3357 = vmatpush.msra.mxu0 0.0
    %3358 = vmatpush.msra.mxu0 0.0
    %3359 = vmatpush.msra.mxu0 0.0
    %3360 = vmatpush.msra.mxu0 0.0
    %3361 = vmatpush.msra.mxu0 0.0
    %3362 = vmatpush.msra.mxu0 %v3078
    %3363 = vmatpush.msra.mxu0 %v3054
    %3364 = vmatpush.msra.mxu0 %v3052
    %3365 = vmatpush.msra.mxu0 %v3050
    %3366 = vmatpush.msra.mxu0 %v3048
    %3367 = vmatpush.msra.mxu0 %v3046
    %3368 = vmatpush.msra.mxu0 %v3044
    %3369 = vmatpush.msra.mxu0 %v3042
    %3370 = vmatmul.f32.gmra.mxu0 %v3235
    %v3371 = vpop.f32.mrf.mxu0
    %v3372 = vadd.f32 %v3349, %v3371
    %3373 = vmatmul.f32.gmra.mxu0 %v3237
    %v3374 = vpop.f32.mrf.mxu0
    %v3375 = vadd.f32 %v3352, %v3374
    %3376 = vdwg.mxu0
    %v3377 = vadd.f32 %v2972, %v3303
    %v3378 = vadd.f32 %v2973, %v3372
    %v3379 = vadd.f32 %v2974, %v3306
    %v3380 = vadd.f32 %v2975, %v3375
    %s3381 = scalar_lea.vmem %s3, 2560
    %v3382 = vld [vmem:[%s3381] sm:$0xff]
    %v3383 = vld [vmem:[%s3381 + $0x8] sm:$0xff]
    %v3384 = vld [vmem:[%s3381 + $0x10] sm:$0xff]
    %v3385 = vld [vmem:[%s3381 + $0x18] sm:$0xff]
    %v3386 = vld [vmem:[%s3381 + $0x20] sm:$0xff]
    %v3387 = vld [vmem:[%s3381 + $0x28] sm:$0xff]
    %v3388 = vld [vmem:[%s3381 + $0x30] sm:$0xff]
    %v3389 = vld [vmem:[%s3381 + $0x38] sm:$0xff]
    %v3390 = vld [vmem:[%s3381 + $0x40] sm:$0xff]
    %v3391 = vld [vmem:[%s3381 + $0x48] sm:$0xff]
    %v3392 = vld [vmem:[%s3381 + $0x50] sm:$0xff]
    %v3393 = vld [vmem:[%s3381 + $0x58] sm:$0xff]
    %v3394 = vld [vmem:[%s3381 + $0x60] sm:$0xff]
    %v3395 = vld [vmem:[%s3381 + $0x68] sm:$0xff]
    %v3396 = vld [vmem:[%s3381 + $0x70] sm:$0xff]
    %v3397 = vld [vmem:[%s3381 + $0x78] sm:$0xff]
    %v3398 = vld [vmem:[%s3381 + $0x80] sm:$0xff]
    %v3399 = vld [vmem:[%s3381 + $0x88] sm:$0xff]
    %v3400 = vld [vmem:[%s3381 + $0x90] sm:$0xff]
    %v3401 = vld [vmem:[%s3381 + $0x98] sm:$0xff]
    %v3402 = vld [vmem:[%s3381 + $0xa0] sm:$0xff]
    %v3403 = vld [vmem:[%s3381 + $0xa8] sm:$0xff]
    %v3404 = vld [vmem:[%s3381 + $0xb0] sm:$0xff]
    %v3405 = vld [vmem:[%s3381 + $0xb8] sm:$0xff]
    %v3406 = vld [vmem:[%s3381 + $0xc0] sm:$0xff]
    %v3407 = vld [vmem:[%s3381 + $0xc8] sm:$0xff]
    %v3408 = vld [vmem:[%s3381 + $0xd0] sm:$0xff]
    %v3409 = vld [vmem:[%s3381 + $0xd8] sm:$0xff]
    %v3410 = vld [vmem:[%s3381 + $0xe0] sm:$0xff]
    %v3411 = vld [vmem:[%s3381 + $0xe8] sm:$0xff]
    %v3412 = vld [vmem:[%s3381 + $0xf0] sm:$0xff]
    %v3413 = vld [vmem:[%s3381 + $0xf8] sm:$0xff]
    %v3414 = vld [vmem:[%s3381 + $0x100] sm:$0xff]
    %v3415 = vld [vmem:[%s3381 + $0x108] sm:$0xff]
    %v3416 = vld [vmem:[%s3381 + $0x110] sm:$0xff]
    %v3417 = vld [vmem:[%s3381 + $0x118] sm:$0xff]
    %v3418 = vld [vmem:[%s3381 + $0x120] sm:$0xff]
    %v3419 = vld [vmem:[%s3381 + $0x128] sm:$0xff]
    %v3420 = vld [vmem:[%s3381 + $0x130] sm:$0xff]
    %v3421 = vld [vmem:[%s3381 + $0x138] sm:$0xff]
    %v3422 = vld [vmem:[%s3381 + $0x140] sm:$0xff]
    %v3423 = vld [vmem:[%s3381 + $0x148] sm:$0xff]
    %v3424 = vld [vmem:[%s3381 + $0x150] sm:$0xff]
    %v3425 = vld [vmem:[%s3381 + $0x158] sm:$0xff]
    %v3426 = vld [vmem:[%s3381 + $0x160] sm:$0xff]
    %v3427 = vld [vmem:[%s3381 + $0x168] sm:$0xff]
    %v3428 = vld [vmem:[%s3381 + $0x170] sm:$0xff]
    %v3429 = vld [vmem:[%s3381 + $0x178] sm:$0xff]
    %v3430 = vld [vmem:[%s3381 + $0x180] sm:$0xff]
    %v3431 = vld [vmem:[%s3381 + $0x188] sm:$0xff]
    %v3432 = vld [vmem:[%s3381 + $0x190] sm:$0xff]
    %v3433 = vld [vmem:[%s3381 + $0x198] sm:$0xff]
    %v3434 = vld [vmem:[%s3381 + $0x1a0] sm:$0xff]
    %v3435 = vld [vmem:[%s3381 + $0x1a8] sm:$0xff]
    %v3436 = vld [vmem:[%s3381 + $0x1b0] sm:$0xff]
    %v3437 = vld [vmem:[%s3381 + $0x1b8] sm:$0xff]
    %v3438 = vld [vmem:[%s3381 + $0x1c0] sm:$0xff]
    %v3439 = vld [vmem:[%s3381 + $0x1c8] sm:$0xff]
    %v3440 = vld [vmem:[%s3381 + $0x1d0] sm:$0xff]
    %v3441 = vld [vmem:[%s3381 + $0x1d8] sm:$0xff]
    %v3442 = vld [vmem:[%s3381 + $0x1e0] sm:$0xff]
    %v3443 = vld [vmem:[%s3381 + $0x1e8] sm:$0xff]
    %v3444 = vld [vmem:[%s3381 + $0x1f0] sm:$0xff]
    %v3445 = vld [vmem:[%s3381 + $0x1f8] sm:$0xff]
    %v3446 = vld [vmem:[%s3381 + $0x200] sm:$0xff]
    %v3447 = vld [vmem:[%s3381 + $0x208] sm:$0xff]
    %v3448 = vld [vmem:[%s3381 + $0x210] sm:$0xff]
    %v3449 = vld [vmem:[%s3381 + $0x218] sm:$0xff]
    %v3450 = vld [vmem:[%s3381 + $0x220] sm:$0xff]
    %v3451 = vld [vmem:[%s3381 + $0x228] sm:$0xff]
    %v3452 = vld [vmem:[%s3381 + $0x230] sm:$0xff]
    %v3453 = vld [vmem:[%s3381 + $0x238] sm:$0xff]
    %v3454 = vld [vmem:[%s3381 + $0x240] sm:$0xff]
    %v3455 = vld [vmem:[%s3381 + $0x248] sm:$0xff]
    %v3456 = vld [vmem:[%s3381 + $0x250] sm:$0xff]
    %v3457 = vld [vmem:[%s3381 + $0x258] sm:$0xff]
    %v3458 = vld [vmem:[%s3381 + $0x260] sm:$0xff]
    %v3459 = vld [vmem:[%s3381 + $0x268] sm:$0xff]
    %v3460 = vld [vmem:[%s3381 + $0x270] sm:$0x7]
    %v3461 = vld [vmem:[%s3381 + $0x278] sm:$0x7]
    %v3462 = vrot.slane %v1773, 4
    %v3463 = vrot.slane %v1776, 4
    %v3464 = vsel %vm77, %v3462, %v3463
    %v3465 = vrot.slane %v1774, 4
    %v3466 = vrot.slane %v1777, 4
    %v3467 = vsel %vm77, %v3465, %v3466
    %v3468 = vrot.slane %v1775, 4
    %v3469 = vrot.slane %v1778, 4
    %v3470 = vsel %vm77, %v3468, %v3469
    %v3475 = vsel %vm1971, %v3470, 0
    %v3477 = vsel %vm1971, %v3469, 0
    %v3480 = vsel %vm1109, %v3460, 0
    %v3483 = vsel %vm1109, %v3461, 0
    %3485 = vmatpush.msra.mxu0 %v3412
    %3486 = vmatpush.msra.mxu0 %v3410
    %3487 = vmatpush.msra.mxu0 %v3408
    %3488 = vmatpush.msra.mxu0 %v3406
    %3489 = vmatpush.msra.mxu0 %v3404
    %3490 = vmatpush.msra.mxu0 %v3402
    %3491 = vmatpush.msra.mxu0 %v3400
    %3492 = vmatpush.msra.mxu0 %v3398
    %3493 = vmatpush.msra.mxu0 %v3396
    %3494 = vmatpush.msra.mxu0 %v3394
    %3495 = vmatpush.msra.mxu0 %v3392
    %3496 = vmatpush.msra.mxu0 %v3390
    %3497 = vmatpush.msra.mxu0 %v3388
    %3498 = vmatpush.msra.mxu0 %v3386
    %3499 = vmatpush.msra.mxu0 %v3384
    %3500 = vmatpush.msra.mxu0 %v3382
    %3501 = vmatmul.f32.gmra.mxu0 %v3464
    %v3502 = vpop.f32.mrf.mxu0
    %v3503 = vadd.f32 0.0, %v3502
    %3504 = vmatmul.f32.gmra.mxu0 %v3463
    %v3505 = vpop.f32.mrf.mxu0
    %v3506 = vadd.f32 0.0, %v3505
    %3507 = vdwg.mxu0
    %3508 = vmatpush.msra.mxu0 %v3444
    %3509 = vmatpush.msra.mxu0 %v3442
    %3510 = vmatpush.msra.mxu0 %v3440
    %3511 = vmatpush.msra.mxu0 %v3438
    %3512 = vmatpush.msra.mxu0 %v3436
    %3513 = vmatpush.msra.mxu0 %v3434
    %3514 = vmatpush.msra.mxu0 %v3432
    %3515 = vmatpush.msra.mxu0 %v3430
    %3516 = vmatpush.msra.mxu0 %v3428
    %3517 = vmatpush.msra.mxu0 %v3426
    %3518 = vmatpush.msra.mxu0 %v3424
    %3519 = vmatpush.msra.mxu0 %v3422
    %3520 = vmatpush.msra.mxu0 %v3420
    %3521 = vmatpush.msra.mxu0 %v3418
    %3522 = vmatpush.msra.mxu0 %v3416
    %3523 = vmatpush.msra.mxu0 %v3414
    %3524 = vmatmul.f32.gmra.mxu0 %v3467
    %v3525 = vpop.f32.mrf.mxu0
    %v3526 = vadd.f32 %v3503, %v3525
    %3527 = vmatmul.f32.gmra.mxu0 %v3466
    %v3528 = vpop.f32.mrf.mxu0
    %v3529 = vadd.f32 %v3506, %v3528
    %3530 = vdwg.mxu0
    %3531 = vmatpush.msra.mxu0 0.0
    %3532 = vmatpush.msra.mxu0 0.0
    %3533 = vmatpush.msra.mxu0 0.0
    %3534 = vmatpush.msra.mxu0 0.0
    %3535 = vmatpush.msra.mxu0 0.0
    %3536 = vmatpush.msra.mxu0 0.0
    %3537 = vmatpush.msra.mxu0 0.0
    %3538 = vmatpush.msra.mxu0 0.0
    %3539 = vmatpush.msra.mxu0 %v3480
    %3540 = vmatpush.msra.mxu0 %v3458
    %3541 = vmatpush.msra.mxu0 %v3456
    %3542 = vmatpush.msra.mxu0 %v3454
    %3543 = vmatpush.msra.mxu0 %v3452
    %3544 = vmatpush.msra.mxu0 %v3450
    %3545 = vmatpush.msra.mxu0 %v3448
    %3546 = vmatpush.msra.mxu0 %v3446
    %3547 = vmatmul.f32.gmra.mxu0 %v3475
    %v3548 = vpop.f32.mrf.mxu0
    %v3549 = vadd.f32 %v3526, %v3548
    %3550 = vmatmul.f32.gmra.mxu0 %v3477
    %v3551 = vpop.f32.mrf.mxu0
    %v3552 = vadd.f32 %v3529, %v3551
    %3553 = vdwg.mxu0
    %3554 = vmatpush.msra.mxu0 %v3413
    %3555 = vmatpush.msra.mxu0 %v3411
    %3556 = vmatpush.msra.mxu0 %v3409
    %3557 = vmatpush.msra.mxu0 %v3407
    %3558 = vmatpush.msra.mxu0 %v3405
    %3559 = vmatpush.msra.mxu0 %v3403
    %3560 = vmatpush.msra.mxu0 %v3401
    %3561 = vmatpush.msra.mxu0 %v3399
    %3562 = vmatpush.msra.mxu0 %v3397
    %3563 = vmatpush.msra.mxu0 %v3395
    %3564 = vmatpush.msra.mxu0 %v3393
    %3565 = vmatpush.msra.mxu0 %v3391
    %3566 = vmatpush.msra.mxu0 %v3389
    %3567 = vmatpush.msra.mxu0 %v3387
    %3568 = vmatpush.msra.mxu0 %v3385
    %3569 = vmatpush.msra.mxu0 %v3383
    %3570 = vmatmul.f32.gmra.mxu0 %v3464
    %v3571 = vpop.f32.mrf.mxu0
    %v3572 = vadd.f32 0.0, %v3571
    %3573 = vmatmul.f32.gmra.mxu0 %v3463
    %v3574 = vpop.f32.mrf.mxu0
    %v3575 = vadd.f32 0.0, %v3574
    %3576 = vdwg.mxu0
    %3577 = vmatpush.msra.mxu0 %v3445
    %3578 = vmatpush.msra.mxu0 %v3443
    %3579 = vmatpush.msra.mxu0 %v3441
    %3580 = vmatpush.msra.mxu0 %v3439
    %3581 = vmatpush.msra.mxu0 %v3437
    %3582 = vmatpush.msra.mxu0 %v3435
    %3583 = vmatpush.msra.mxu0 %v3433
    %3584 = vmatpush.msra.mxu0 %v3431
    %3585 = vmatpush.msra.mxu0 %v3429
    %3586 = vmatpush.msra.mxu0 %v3427
    %3587 = vmatpush.msra.mxu0 %v3425
    %3588 = vmatpush.msra.mxu0 %v3423
    %3589 = vmatpush.msra.mxu0 %v3421
    %3590 = vmatpush.msra.mxu0 %v3419
    %3591 = vmatpush.msra.mxu0 %v3417
    %3592 = vmatpush.msra.mxu0 %v3415
    %3593 = vmatmul.f32.gmra.mxu0 %v3467
    %v3594 = vpop.f32.mrf.mxu0
    %v3595 = vadd.f32 %v3572, %v3594
    %3596 = vmatmul.f32.gmra.mxu0 %v3466
    %v3597 = vpop.f32.mrf.mxu0
    %v3598 = vadd.f32 %v3575, %v3597
    %3599 = vdwg.mxu0
    %3600 = vmatpush.msra.mxu0 0.0
    %3601 = vmatpush.msra.mxu0 0.0
    %3602 = vmatpush.msra.mxu0 0.0
    %3603 = vmatpush.msra.mxu0 0.0
    %3604 = vmatpush.msra.mxu0 0.0
    %3605 = vmatpush.msra.mxu0 0.0
    %3606 = vmatpush.msra.mxu0 0.0
    %3607 = vmatpush.msra.mxu0 0.0
    %3608 = vmatpush.msra.mxu0 %v3483
    %3609 = vmatpush.msra.mxu0 %v3459
    %3610 = vmatpush.msra.mxu0 %v3457
    %3611 = vmatpush.msra.mxu0 %v3455
    %3612 = vmatpush.msra.mxu0 %v3453
    %3613 = vmatpush.msra.mxu0 %v3451
    %3614 = vmatpush.msra.mxu0 %v3449
    %3615 = vmatpush.msra.mxu0 %v3447
    %3616 = vmatmul.f32.gmra.mxu0 %v3475
    %v3617 = vpop.f32.mrf.mxu0
    %v3618 = vadd.f32 %v3595, %v3617
    %3619 = vmatmul.f32.gmra.mxu0 %v3477
    %v3620 = vpop.f32.mrf.mxu0
    %v3621 = vadd.f32 %v3598, %v3620
    %3622 = vdwg.mxu0
    %v3623 = vadd.f32 %v3218, %v3549
    %v3624 = vadd.f32 %v3219, %v3618
    %v3625 = vadd.f32 %v3220, %v3552
    %v3626 = vadd.f32 %v3221, %v3621
    %v3627 = vrot.slane %v1782, 4
    %v3628 = vrot.slane %v1785, 4
    %v3629 = vsel %vm77, %v3627, %v3628
    %v3630 = vrot.slane %v1783, 4
    %v3631 = vrot.slane %v1786, 4
    %v3632 = vsel %vm77, %v3630, %v3631
    %v3633 = vrot.slane %v1784, 4
    %v3634 = vrot.slane %v1787, 4
    %v3635 = vsel %vm77, %v3633, %v3634
    %v3640 = vsel %vm1971, %v3635, 0
    %v3642 = vsel %vm1971, %v3634, 0
    %3644 = vmatpush.msra.mxu0 %v3412
    %3645 = vmatpush.msra.mxu0 %v3410
    %3646 = vmatpush.msra.mxu0 %v3408
    %3647 = vmatpush.msra.mxu0 %v3406
    %3648 = vmatpush.msra.mxu0 %v3404
    %3649 = vmatpush.msra.mxu0 %v3402
    %3650 = vmatpush.msra.mxu0 %v3400
    %3651 = vmatpush.msra.mxu0 %v3398
    %3652 = vmatpush.msra.mxu0 %v3396
    %3653 = vmatpush.msra.mxu0 %v3394
    %3654 = vmatpush.msra.mxu0 %v3392
    %3655 = vmatpush.msra.mxu0 %v3390
    %3656 = vmatpush.msra.mxu0 %v3388
    %3657 = vmatpush.msra.mxu0 %v3386
    %3658 = vmatpush.msra.mxu0 %v3384
    %3659 = vmatpush.msra.mxu0 %v3382
    %3660 = vmatmul.f32.gmra.mxu0 %v3629
    %v3661 = vpop.f32.mrf.mxu0
    %v3662 = vadd.f32 0.0, %v3661
    %3663 = vmatmul.f32.gmra.mxu0 %v3628
    %v3664 = vpop.f32.mrf.mxu0
    %v3665 = vadd.f32 0.0, %v3664
    %3666 = vdwg.mxu0
    %3667 = vmatpush.msra.mxu0 %v3444
    %3668 = vmatpush.msra.mxu0 %v3442
    %3669 = vmatpush.msra.mxu0 %v3440
    %3670 = vmatpush.msra.mxu0 %v3438
    %3671 = vmatpush.msra.mxu0 %v3436
    %3672 = vmatpush.msra.mxu0 %v3434
    %3673 = vmatpush.msra.mxu0 %v3432
    %3674 = vmatpush.msra.mxu0 %v3430
    %3675 = vmatpush.msra.mxu0 %v3428
    %3676 = vmatpush.msra.mxu0 %v3426
    %3677 = vmatpush.msra.mxu0 %v3424
    %3678 = vmatpush.msra.mxu0 %v3422
    %3679 = vmatpush.msra.mxu0 %v3420
    %3680 = vmatpush.msra.mxu0 %v3418
    %3681 = vmatpush.msra.mxu0 %v3416
    %3682 = vmatpush.msra.mxu0 %v3414
    %3683 = vmatmul.f32.gmra.mxu0 %v3632
    %v3684 = vpop.f32.mrf.mxu0
    %v3685 = vadd.f32 %v3662, %v3684
    %3686 = vmatmul.f32.gmra.mxu0 %v3631
    %v3687 = vpop.f32.mrf.mxu0
    %v3688 = vadd.f32 %v3665, %v3687
    %3689 = vdwg.mxu0
    %3690 = vmatpush.msra.mxu0 0.0
    %3691 = vmatpush.msra.mxu0 0.0
    %3692 = vmatpush.msra.mxu0 0.0
    %3693 = vmatpush.msra.mxu0 0.0
    %3694 = vmatpush.msra.mxu0 0.0
    %3695 = vmatpush.msra.mxu0 0.0
    %3696 = vmatpush.msra.mxu0 0.0
    %3697 = vmatpush.msra.mxu0 0.0
    %3698 = vmatpush.msra.mxu0 %v3480
    %3699 = vmatpush.msra.mxu0 %v3458
    %3700 = vmatpush.msra.mxu0 %v3456
    %3701 = vmatpush.msra.mxu0 %v3454
    %3702 = vmatpush.msra.mxu0 %v3452
    %3703 = vmatpush.msra.mxu0 %v3450
    %3704 = vmatpush.msra.mxu0 %v3448
    %3705 = vmatpush.msra.mxu0 %v3446
    %3706 = vmatmul.f32.gmra.mxu0 %v3640
    %v3707 = vpop.f32.mrf.mxu0
    %v3708 = vadd.f32 %v3685, %v3707
    %3709 = vmatmul.f32.gmra.mxu0 %v3642
    %v3710 = vpop.f32.mrf.mxu0
    %v3711 = vadd.f32 %v3688, %v3710
    %3712 = vdwg.mxu0
    %3713 = vmatpush.msra.mxu0 %v3413
    %3714 = vmatpush.msra.mxu0 %v3411
    %3715 = vmatpush.msra.mxu0 %v3409
    %3716 = vmatpush.msra.mxu0 %v3407
    %3717 = vmatpush.msra.mxu0 %v3405
    %3718 = vmatpush.msra.mxu0 %v3403
    %3719 = vmatpush.msra.mxu0 %v3401
    %3720 = vmatpush.msra.mxu0 %v3399
    %3721 = vmatpush.msra.mxu0 %v3397
    %3722 = vmatpush.msra.mxu0 %v3395
    %3723 = vmatpush.msra.mxu0 %v3393
    %3724 = vmatpush.msra.mxu0 %v3391
    %3725 = vmatpush.msra.mxu0 %v3389
    %3726 = vmatpush.msra.mxu0 %v3387
    %3727 = vmatpush.msra.mxu0 %v3385
    %3728 = vmatpush.msra.mxu0 %v3383
    %3729 = vmatmul.f32.gmra.mxu0 %v3629
    %v3730 = vpop.f32.mrf.mxu0
    %v3731 = vadd.f32 0.0, %v3730
    %3732 = vmatmul.f32.gmra.mxu0 %v3628
    %v3733 = vpop.f32.mrf.mxu0
    %v3734 = vadd.f32 0.0, %v3733
    %3735 = vdwg.mxu0
    %3736 = vmatpush.msra.mxu0 %v3445
    %3737 = vmatpush.msra.mxu0 %v3443
    %3738 = vmatpush.msra.mxu0 %v3441
    %3739 = vmatpush.msra.mxu0 %v3439
    %3740 = vmatpush.msra.mxu0 %v3437
    %3741 = vmatpush.msra.mxu0 %v3435
    %3742 = vmatpush.msra.mxu0 %v3433
    %3743 = vmatpush.msra.mxu0 %v3431
    %3744 = vmatpush.msra.mxu0 %v3429
    %3745 = vmatpush.msra.mxu0 %v3427
    %3746 = vmatpush.msra.mxu0 %v3425
    %3747 = vmatpush.msra.mxu0 %v3423
    %3748 = vmatpush.msra.mxu0 %v3421
    %3749 = vmatpush.msra.mxu0 %v3419
    %3750 = vmatpush.msra.mxu0 %v3417
    %3751 = vmatpush.msra.mxu0 %v3415
    %3752 = vmatmul.f32.gmra.mxu0 %v3632
    %v3753 = vpop.f32.mrf.mxu0
    %v3754 = vadd.f32 %v3731, %v3753
    %3755 = vmatmul.f32.gmra.mxu0 %v3631
    %v3756 = vpop.f32.mrf.mxu0
    %v3757 = vadd.f32 %v3734, %v3756
    %3758 = vdwg.mxu0
    %3759 = vmatpush.msra.mxu0 0.0
    %3760 = vmatpush.msra.mxu0 0.0
    %3761 = vmatpush.msra.mxu0 0.0
    %3762 = vmatpush.msra.mxu0 0.0
    %3763 = vmatpush.msra.mxu0 0.0
    %3764 = vmatpush.msra.mxu0 0.0
    %3765 = vmatpush.msra.mxu0 0.0
    %3766 = vmatpush.msra.mxu0 0.0
    %3767 = vmatpush.msra.mxu0 %v3483
    %3768 = vmatpush.msra.mxu0 %v3459
    %3769 = vmatpush.msra.mxu0 %v3457
    %3770 = vmatpush.msra.mxu0 %v3455
    %3771 = vmatpush.msra.mxu0 %v3453
    %3772 = vmatpush.msra.mxu0 %v3451
    %3773 = vmatpush.msra.mxu0 %v3449
    %3774 = vmatpush.msra.mxu0 %v3447
    %3775 = vmatmul.f32.gmra.mxu0 %v3640
    %v3776 = vpop.f32.mrf.mxu0
    %v3777 = vadd.f32 %v3754, %v3776
    %3778 = vmatmul.f32.gmra.mxu0 %v3642
    %v3779 = vpop.f32.mrf.mxu0
    %v3780 = vadd.f32 %v3757, %v3779
    %3781 = vdwg.mxu0
    %v3782 = vadd.f32 %v3377, %v3708
    %v3783 = vadd.f32 %v3378, %v3777
    %v3784 = vadd.f32 %v3379, %v3711
    %v3785 = vadd.f32 %v3380, %v3780
    %s3786 = scalar_lea.vmem %s3, 3200
    %v3787 = vld [vmem:[%s3786] sm:$0xff]
    %v3788 = vld [vmem:[%s3786 + $0x8] sm:$0xff]
    %v3789 = vld [vmem:[%s3786 + $0x10] sm:$0xff]
    %v3790 = vld [vmem:[%s3786 + $0x18] sm:$0xff]
    %v3791 = vld [vmem:[%s3786 + $0x20] sm:$0xff]
    %v3792 = vld [vmem:[%s3786 + $0x28] sm:$0xff]
    %v3793 = vld [vmem:[%s3786 + $0x30] sm:$0xff]
    %v3794 = vld [vmem:[%s3786 + $0x38] sm:$0xff]
    %v3795 = vld [vmem:[%s3786 + $0x40] sm:$0xff]
    %v3796 = vld [vmem:[%s3786 + $0x48] sm:$0xff]
    %v3797 = vld [vmem:[%s3786 + $0x50] sm:$0xff]
    %v3798 = vld [vmem:[%s3786 + $0x58] sm:$0xff]
    %v3799 = vld [vmem:[%s3786 + $0x60] sm:$0xff]
    %v3800 = vld [vmem:[%s3786 + $0x68] sm:$0xff]
    %v3801 = vld [vmem:[%s3786 + $0x70] sm:$0xff]
    %v3802 = vld [vmem:[%s3786 + $0x78] sm:$0xff]
    %v3803 = vld [vmem:[%s3786 + $0x80] sm:$0xff]
    %v3804 = vld [vmem:[%s3786 + $0x88] sm:$0xff]
    %v3805 = vld [vmem:[%s3786 + $0x90] sm:$0xff]
    %v3806 = vld [vmem:[%s3786 + $0x98] sm:$0xff]
    %v3807 = vld [vmem:[%s3786 + $0xa0] sm:$0xff]
    %v3808 = vld [vmem:[%s3786 + $0xa8] sm:$0xff]
    %v3809 = vld [vmem:[%s3786 + $0xb0] sm:$0xff]
    %v3810 = vld [vmem:[%s3786 + $0xb8] sm:$0xff]
    %v3811 = vld [vmem:[%s3786 + $0xc0] sm:$0xff]
    %v3812 = vld [vmem:[%s3786 + $0xc8] sm:$0xff]
    %v3813 = vld [vmem:[%s3786 + $0xd0] sm:$0xff]
    %v3814 = vld [vmem:[%s3786 + $0xd8] sm:$0xff]
    %v3815 = vld [vmem:[%s3786 + $0xe0] sm:$0xff]
    %v3816 = vld [vmem:[%s3786 + $0xe8] sm:$0xff]
    %v3817 = vld [vmem:[%s3786 + $0xf0] sm:$0xff]
    %v3818 = vld [vmem:[%s3786 + $0xf8] sm:$0xff]
    %v3819 = vld [vmem:[%s3786 + $0x100] sm:$0xff]
    %v3820 = vld [vmem:[%s3786 + $0x108] sm:$0xff]
    %v3821 = vld [vmem:[%s3786 + $0x110] sm:$0xff]
    %v3822 = vld [vmem:[%s3786 + $0x118] sm:$0xff]
    %v3823 = vld [vmem:[%s3786 + $0x120] sm:$0xff]
    %v3824 = vld [vmem:[%s3786 + $0x128] sm:$0xff]
    %v3825 = vld [vmem:[%s3786 + $0x130] sm:$0xff]
    %v3826 = vld [vmem:[%s3786 + $0x138] sm:$0xff]
    %v3827 = vld [vmem:[%s3786 + $0x140] sm:$0xff]
    %v3828 = vld [vmem:[%s3786 + $0x148] sm:$0xff]
    %v3829 = vld [vmem:[%s3786 + $0x150] sm:$0xff]
    %v3830 = vld [vmem:[%s3786 + $0x158] sm:$0xff]
    %v3831 = vld [vmem:[%s3786 + $0x160] sm:$0xff]
    %v3832 = vld [vmem:[%s3786 + $0x168] sm:$0xff]
    %v3833 = vld [vmem:[%s3786 + $0x170] sm:$0xff]
    %v3834 = vld [vmem:[%s3786 + $0x178] sm:$0xff]
    %v3835 = vld [vmem:[%s3786 + $0x180] sm:$0xff]
    %v3836 = vld [vmem:[%s3786 + $0x188] sm:$0xff]
    %v3837 = vld [vmem:[%s3786 + $0x190] sm:$0xff]
    %v3838 = vld [vmem:[%s3786 + $0x198] sm:$0xff]
    %v3839 = vld [vmem:[%s3786 + $0x1a0] sm:$0xff]
    %v3840 = vld [vmem:[%s3786 + $0x1a8] sm:$0xff]
    %v3841 = vld [vmem:[%s3786 + $0x1b0] sm:$0xff]
    %v3842 = vld [vmem:[%s3786 + $0x1b8] sm:$0xff]
    %v3843 = vld [vmem:[%s3786 + $0x1c0] sm:$0xff]
    %v3844 = vld [vmem:[%s3786 + $0x1c8] sm:$0xff]
    %v3845 = vld [vmem:[%s3786 + $0x1d0] sm:$0xff]
    %v3846 = vld [vmem:[%s3786 + $0x1d8] sm:$0xff]
    %v3847 = vld [vmem:[%s3786 + $0x1e0] sm:$0xff]
    %v3848 = vld [vmem:[%s3786 + $0x1e8] sm:$0xff]
    %v3849 = vld [vmem:[%s3786 + $0x1f0] sm:$0xff]
    %v3850 = vld [vmem:[%s3786 + $0x1f8] sm:$0xff]
    %v3851 = vld [vmem:[%s3786 + $0x200] sm:$0xff]
    %v3852 = vld [vmem:[%s3786 + $0x208] sm:$0xff]
    %v3853 = vld [vmem:[%s3786 + $0x210] sm:$0xff]
    %v3854 = vld [vmem:[%s3786 + $0x218] sm:$0xff]
    %v3855 = vld [vmem:[%s3786 + $0x220] sm:$0xff]
    %v3856 = vld [vmem:[%s3786 + $0x228] sm:$0xff]
    %v3857 = vld [vmem:[%s3786 + $0x230] sm:$0xff]
    %v3858 = vld [vmem:[%s3786 + $0x238] sm:$0xff]
    %v3859 = vld [vmem:[%s3786 + $0x240] sm:$0xff]
    %v3860 = vld [vmem:[%s3786 + $0x248] sm:$0xff]
    %v3861 = vld [vmem:[%s3786 + $0x250] sm:$0xff]
    %v3862 = vld [vmem:[%s3786 + $0x258] sm:$0xff]
    %v3863 = vld [vmem:[%s3786 + $0x260] sm:$0xff]
    %v3864 = vld [vmem:[%s3786 + $0x268] sm:$0xff]
    %v3865 = vld [vmem:[%s3786 + $0x270] sm:$0x7]
    %v3866 = vld [vmem:[%s3786 + $0x278] sm:$0x7]
    %v3867 = vrot.slane %v1773, 5
    %v3868 = vrot.slane %v1776, 5
    %v3869 = vsel %vm1109, %v3867, %v3868
    %v3870 = vrot.slane %v1774, 5
    %v3871 = vrot.slane %v1777, 5
    %v3872 = vsel %vm1109, %v3870, %v3871
    %v3873 = vrot.slane %v1775, 5
    %v3874 = vrot.slane %v1778, 5
    %v3875 = vsel %vm1109, %v3873, %v3874
    %v3880 = vsel %vm1971, %v3875, 0
    %v3882 = vsel %vm1971, %v3874, 0
    %v3885 = vsel %vm1109, %v3865, 0
    %v3888 = vsel %vm1109, %v3866, 0
    %3890 = vmatpush.msra.mxu0 %v3817
    %3891 = vmatpush.msra.mxu0 %v3815
    %3892 = vmatpush.msra.mxu0 %v3813
    %3893 = vmatpush.msra.mxu0 %v3811
    %3894 = vmatpush.msra.mxu0 %v3809
    %3895 = vmatpush.msra.mxu0 %v3807
    %3896 = vmatpush.msra.mxu0 %v3805
    %3897 = vmatpush.msra.mxu0 %v3803
    %3898 = vmatpush.msra.mxu0 %v3801
    %3899 = vmatpush.msra.mxu0 %v3799
    %3900 = vmatpush.msra.mxu0 %v3797
    %3901 = vmatpush.msra.mxu0 %v3795
    %3902 = vmatpush.msra.mxu0 %v3793
    %3903 = vmatpush.msra.mxu0 %v3791
    %3904 = vmatpush.msra.mxu0 %v3789
    %3905 = vmatpush.msra.mxu0 %v3787
    %3906 = vmatmul.f32.gmra.mxu0 %v3869
    %v3907 = vpop.f32.mrf.mxu0
    %v3908 = vadd.f32 0.0, %v3907
    %3909 = vmatmul.f32.gmra.mxu0 %v3868
    %v3910 = vpop.f32.mrf.mxu0
    %v3911 = vadd.f32 0.0, %v3910
    %3912 = vdwg.mxu0
    %3913 = vmatpush.msra.mxu0 %v3849
    %3914 = vmatpush.msra.mxu0 %v3847
    %3915 = vmatpush.msra.mxu0 %v3845
    %3916 = vmatpush.msra.mxu0 %v3843
    %3917 = vmatpush.msra.mxu0 %v3841
    %3918 = vmatpush.msra.mxu0 %v3839
    %3919 = vmatpush.msra.mxu0 %v3837
    %3920 = vmatpush.msra.mxu0 %v3835
    %3921 = vmatpush.msra.mxu0 %v3833
    %3922 = vmatpush.msra.mxu0 %v3831
    %3923 = vmatpush.msra.mxu0 %v3829
    %3924 = vmatpush.msra.mxu0 %v3827
    %3925 = vmatpush.msra.mxu0 %v3825
    %3926 = vmatpush.msra.mxu0 %v3823
    %3927 = vmatpush.msra.mxu0 %v3821
    %3928 = vmatpush.msra.mxu0 %v3819
    %3929 = vmatmul.f32.gmra.mxu0 %v3872
    %v3930 = vpop.f32.mrf.mxu0
    %v3931 = vadd.f32 %v3908, %v3930
    %3932 = vmatmul.f32.gmra.mxu0 %v3871
    %v3933 = vpop.f32.mrf.mxu0
    %v3934 = vadd.f32 %v3911, %v3933
    %3935 = vdwg.mxu0
    %3936 = vmatpush.msra.mxu0 0.0
    %3937 = vmatpush.msra.mxu0 0.0
    %3938 = vmatpush.msra.mxu0 0.0
    %3939 = vmatpush.msra.mxu0 0.0
    %3940 = vmatpush.msra.mxu0 0.0
    %3941 = vmatpush.msra.mxu0 0.0
    %3942 = vmatpush.msra.mxu0 0.0
    %3943 = vmatpush.msra.mxu0 0.0
    %3944 = vmatpush.msra.mxu0 %v3885
    %3945 = vmatpush.msra.mxu0 %v3863
    %3946 = vmatpush.msra.mxu0 %v3861
    %3947 = vmatpush.msra.mxu0 %v3859
    %3948 = vmatpush.msra.mxu0 %v3857
    %3949 = vmatpush.msra.mxu0 %v3855
    %3950 = vmatpush.msra.mxu0 %v3853
    %3951 = vmatpush.msra.mxu0 %v3851
    %3952 = vmatmul.f32.gmra.mxu0 %v3880
    %v3953 = vpop.f32.mrf.mxu0
    %v3954 = vadd.f32 %v3931, %v3953
    %3955 = vmatmul.f32.gmra.mxu0 %v3882
    %v3956 = vpop.f32.mrf.mxu0
    %v3957 = vadd.f32 %v3934, %v3956
    %3958 = vdwg.mxu0
    %3959 = vmatpush.msra.mxu0 %v3818
    %3960 = vmatpush.msra.mxu0 %v3816
    %3961 = vmatpush.msra.mxu0 %v3814
    %3962 = vmatpush.msra.mxu0 %v3812
    %3963 = vmatpush.msra.mxu0 %v3810
    %3964 = vmatpush.msra.mxu0 %v3808
    %3965 = vmatpush.msra.mxu0 %v3806
    %3966 = vmatpush.msra.mxu0 %v3804
    %3967 = vmatpush.msra.mxu0 %v3802
    %3968 = vmatpush.msra.mxu0 %v3800
    %3969 = vmatpush.msra.mxu0 %v3798
    %3970 = vmatpush.msra.mxu0 %v3796
    %3971 = vmatpush.msra.mxu0 %v3794
    %3972 = vmatpush.msra.mxu0 %v3792
    %3973 = vmatpush.msra.mxu0 %v3790
    %3974 = vmatpush.msra.mxu0 %v3788
    %3975 = vmatmul.f32.gmra.mxu0 %v3869
    %v3976 = vpop.f32.mrf.mxu0
    %v3977 = vadd.f32 0.0, %v3976
    %3978 = vmatmul.f32.gmra.mxu0 %v3868
    %v3979 = vpop.f32.mrf.mxu0
    %v3980 = vadd.f32 0.0, %v3979
    %3981 = vdwg.mxu0
    %3982 = vmatpush.msra.mxu0 %v3850
    %3983 = vmatpush.msra.mxu0 %v3848
    %3984 = vmatpush.msra.mxu0 %v3846
    %3985 = vmatpush.msra.mxu0 %v3844
    %3986 = vmatpush.msra.mxu0 %v3842
    %3987 = vmatpush.msra.mxu0 %v3840
    %3988 = vmatpush.msra.mxu0 %v3838
    %3989 = vmatpush.msra.mxu0 %v3836
    %3990 = vmatpush.msra.mxu0 %v3834
    %3991 = vmatpush.msra.mxu0 %v3832
    %3992 = vmatpush.msra.mxu0 %v3830
    %3993 = vmatpush.msra.mxu0 %v3828
    %3994 = vmatpush.msra.mxu0 %v3826
    %3995 = vmatpush.msra.mxu0 %v3824
    %3996 = vmatpush.msra.mxu0 %v3822
    %3997 = vmatpush.msra.mxu0 %v3820
    %3998 = vmatmul.f32.gmra.mxu0 %v3872
    %v3999 = vpop.f32.mrf.mxu0
    %v4000 = vadd.f32 %v3977, %v3999
    %4001 = vmatmul.f32.gmra.mxu0 %v3871
    %v4002 = vpop.f32.mrf.mxu0
    %v4003 = vadd.f32 %v3980, %v4002
    %4004 = vdwg.mxu0
    %4005 = vmatpush.msra.mxu0 0.0
    %4006 = vmatpush.msra.mxu0 0.0
    %4007 = vmatpush.msra.mxu0 0.0
    %4008 = vmatpush.msra.mxu0 0.0
    %4009 = vmatpush.msra.mxu0 0.0
    %4010 = vmatpush.msra.mxu0 0.0
    %4011 = vmatpush.msra.mxu0 0.0
    %4012 = vmatpush.msra.mxu0 0.0
    %4013 = vmatpush.msra.mxu0 %v3888
    %4014 = vmatpush.msra.mxu0 %v3864
    %4015 = vmatpush.msra.mxu0 %v3862
    %4016 = vmatpush.msra.mxu0 %v3860
    %4017 = vmatpush.msra.mxu0 %v3858
    %4018 = vmatpush.msra.mxu0 %v3856
    %4019 = vmatpush.msra.mxu0 %v3854
    %4020 = vmatpush.msra.mxu0 %v3852
    %4021 = vmatmul.f32.gmra.mxu0 %v3880
    %v4022 = vpop.f32.mrf.mxu0
    %v4023 = vadd.f32 %v4000, %v4022
    %4024 = vmatmul.f32.gmra.mxu0 %v3882
    %v4025 = vpop.f32.mrf.mxu0
    %v4026 = vadd.f32 %v4003, %v4025
    %4027 = vdwg.mxu0
    %v4028 = vadd.f32 %v3623, %v3954
    %v4029 = vadd.f32 %v3624, %v4023
    %v4030 = vadd.f32 %v3625, %v3957
    %v4031 = vadd.f32 %v3626, %v4026
    %v4032 = vrot.slane %v1782, 5
    %v4033 = vrot.slane %v1785, 5
    %v4034 = vsel %vm1109, %v4032, %v4033
    %v4035 = vrot.slane %v1783, 5
    %v4036 = vrot.slane %v1786, 5
    %v4037 = vsel %vm1109, %v4035, %v4036
    %v4038 = vrot.slane %v1784, 5
    %v4039 = vrot.slane %v1787, 5
    %v4040 = vsel %vm1109, %v4038, %v4039
    %v4045 = vsel %vm1971, %v4040, 0
    %v4047 = vsel %vm1971, %v4039, 0
    %4049 = vmatpush.msra.mxu0 %v3817
    %4050 = vmatpush.msra.mxu0 %v3815
    %4051 = vmatpush.msra.mxu0 %v3813
    %4052 = vmatpush.msra.mxu0 %v3811
    %4053 = vmatpush.msra.mxu0 %v3809
    %4054 = vmatpush.msra.mxu0 %v3807
    %4055 = vmatpush.msra.mxu0 %v3805
    %4056 = vmatpush.msra.mxu0 %v3803
    %4057 = vmatpush.msra.mxu0 %v3801
    %4058 = vmatpush.msra.mxu0 %v3799
    %4059 = vmatpush.msra.mxu0 %v3797
    %4060 = vmatpush.msra.mxu0 %v3795
    %4061 = vmatpush.msra.mxu0 %v3793
    %4062 = vmatpush.msra.mxu0 %v3791
    %4063 = vmatpush.msra.mxu0 %v3789
    %4064 = vmatpush.msra.mxu0 %v3787
    %4065 = vmatmul.f32.gmra.mxu0 %v4034
    %v4066 = vpop.f32.mrf.mxu0
    %v4067 = vadd.f32 0.0, %v4066
    %4068 = vmatmul.f32.gmra.mxu0 %v4033
    %v4069 = vpop.f32.mrf.mxu0
    %v4070 = vadd.f32 0.0, %v4069
    %4071 = vdwg.mxu0
    %4072 = vmatpush.msra.mxu0 %v3849
    %4073 = vmatpush.msra.mxu0 %v3847
    %4074 = vmatpush.msra.mxu0 %v3845
    %4075 = vmatpush.msra.mxu0 %v3843
    %4076 = vmatpush.msra.mxu0 %v3841
    %4077 = vmatpush.msra.mxu0 %v3839
    %4078 = vmatpush.msra.mxu0 %v3837
    %4079 = vmatpush.msra.mxu0 %v3835
    %4080 = vmatpush.msra.mxu0 %v3833
    %4081 = vmatpush.msra.mxu0 %v3831
    %4082 = vmatpush.msra.mxu0 %v3829
    %4083 = vmatpush.msra.mxu0 %v3827
    %4084 = vmatpush.msra.mxu0 %v3825
    %4085 = vmatpush.msra.mxu0 %v3823
    %4086 = vmatpush.msra.mxu0 %v3821
    %4087 = vmatpush.msra.mxu0 %v3819
    %4088 = vmatmul.f32.gmra.mxu0 %v4037
    %v4089 = vpop.f32.mrf.mxu0
    %v4090 = vadd.f32 %v4067, %v4089
    %4091 = vmatmul.f32.gmra.mxu0 %v4036
    %v4092 = vpop.f32.mrf.mxu0
    %v4093 = vadd.f32 %v4070, %v4092
    %4094 = vdwg.mxu0
    %4095 = vmatpush.msra.mxu0 0.0
    %4096 = vmatpush.msra.mxu0 0.0
    %4097 = vmatpush.msra.mxu0 0.0
    %4098 = vmatpush.msra.mxu0 0.0
    %4099 = vmatpush.msra.mxu0 0.0
    %4100 = vmatpush.msra.mxu0 0.0
    %4101 = vmatpush.msra.mxu0 0.0
    %4102 = vmatpush.msra.mxu0 0.0
    %4103 = vmatpush.msra.mxu0 %v3885
    %4104 = vmatpush.msra.mxu0 %v3863
    %4105 = vmatpush.msra.mxu0 %v3861
    %4106 = vmatpush.msra.mxu0 %v3859
    %4107 = vmatpush.msra.mxu0 %v3857
    %4108 = vmatpush.msra.mxu0 %v3855
    %4109 = vmatpush.msra.mxu0 %v3853
    %4110 = vmatpush.msra.mxu0 %v3851
    %4111 = vmatmul.f32.gmra.mxu0 %v4045
    %v4112 = vpop.f32.mrf.mxu0
    %v4113 = vadd.f32 %v4090, %v4112
    %4114 = vmatmul.f32.gmra.mxu0 %v4047
    %v4115 = vpop.f32.mrf.mxu0
    %v4116 = vadd.f32 %v4093, %v4115
    %4117 = vdwg.mxu0
    %4118 = vmatpush.msra.mxu0 %v3818
    %4119 = vmatpush.msra.mxu0 %v3816
    %4120 = vmatpush.msra.mxu0 %v3814
    %4121 = vmatpush.msra.mxu0 %v3812
    %4122 = vmatpush.msra.mxu0 %v3810
    %4123 = vmatpush.msra.mxu0 %v3808
    %4124 = vmatpush.msra.mxu0 %v3806
    %4125 = vmatpush.msra.mxu0 %v3804
    %4126 = vmatpush.msra.mxu0 %v3802
    %4127 = vmatpush.msra.mxu0 %v3800
    %4128 = vmatpush.msra.mxu0 %v3798
    %4129 = vmatpush.msra.mxu0 %v3796
    %4130 = vmatpush.msra.mxu0 %v3794
    %4131 = vmatpush.msra.mxu0 %v3792
    %4132 = vmatpush.msra.mxu0 %v3790
    %4133 = vmatpush.msra.mxu0 %v3788
    %4134 = vmatmul.f32.gmra.mxu0 %v4034
    %v4135 = vpop.f32.mrf.mxu0
    %v4136 = vadd.f32 0.0, %v4135
    %4137 = vmatmul.f32.gmra.mxu0 %v4033
    %v4138 = vpop.f32.mrf.mxu0
    %v4139 = vadd.f32 0.0, %v4138
    %4140 = vdwg.mxu0
    %4141 = vmatpush.msra.mxu0 %v3850
    %4142 = vmatpush.msra.mxu0 %v3848
    %4143 = vmatpush.msra.mxu0 %v3846
    %4144 = vmatpush.msra.mxu0 %v3844
    %4145 = vmatpush.msra.mxu0 %v3842
    %4146 = vmatpush.msra.mxu0 %v3840
    %4147 = vmatpush.msra.mxu0 %v3838
    %4148 = vmatpush.msra.mxu0 %v3836
    %4149 = vmatpush.msra.mxu0 %v3834
    %4150 = vmatpush.msra.mxu0 %v3832
    %4151 = vmatpush.msra.mxu0 %v3830
    %4152 = vmatpush.msra.mxu0 %v3828
    %4153 = vmatpush.msra.mxu0 %v3826
    %4154 = vmatpush.msra.mxu0 %v3824
    %4155 = vmatpush.msra.mxu0 %v3822
    %4156 = vmatpush.msra.mxu0 %v3820
    %4157 = vmatmul.f32.gmra.mxu0 %v4037
    %v4158 = vpop.f32.mrf.mxu0
    %v4159 = vadd.f32 %v4136, %v4158
    %4160 = vmatmul.f32.gmra.mxu0 %v4036
    %v4161 = vpop.f32.mrf.mxu0
    %v4162 = vadd.f32 %v4139, %v4161
    %4163 = vdwg.mxu0
    %4164 = vmatpush.msra.mxu0 0.0
    %4165 = vmatpush.msra.mxu0 0.0
    %4166 = vmatpush.msra.mxu0 0.0
    %4167 = vmatpush.msra.mxu0 0.0
    %4168 = vmatpush.msra.mxu0 0.0
    %4169 = vmatpush.msra.mxu0 0.0
    %4170 = vmatpush.msra.mxu0 0.0
    %4171 = vmatpush.msra.mxu0 0.0
    %4172 = vmatpush.msra.mxu0 %v3888
    %4173 = vmatpush.msra.mxu0 %v3864
    %4174 = vmatpush.msra.mxu0 %v3862
    %4175 = vmatpush.msra.mxu0 %v3860
    %4176 = vmatpush.msra.mxu0 %v3858
    %4177 = vmatpush.msra.mxu0 %v3856
    %4178 = vmatpush.msra.mxu0 %v3854
    %4179 = vmatpush.msra.mxu0 %v3852
    %4180 = vmatmul.f32.gmra.mxu0 %v4045
    %v4181 = vpop.f32.mrf.mxu0
    %v4182 = vadd.f32 %v4159, %v4181
    %4183 = vmatmul.f32.gmra.mxu0 %v4047
    %v4184 = vpop.f32.mrf.mxu0
    %v4185 = vadd.f32 %v4162, %v4184
    %4186 = vdwg.mxu0
    %v4187 = vadd.f32 %v3782, %v4113
    %v4188 = vadd.f32 %v3783, %v4182
    %v4189 = vadd.f32 %v3784, %v4116
    %v4190 = vadd.f32 %v3785, %v4185
    %s4191 = scalar_lea.vmem %s3, 3840
    %v4192 = vld [vmem:[%s4191] sm:$0xff]
    %v4193 = vld [vmem:[%s4191 + $0x8] sm:$0xff]
    %v4194 = vld [vmem:[%s4191 + $0x10] sm:$0xff]
    %v4195 = vld [vmem:[%s4191 + $0x18] sm:$0xff]
    %v4196 = vld [vmem:[%s4191 + $0x20] sm:$0xff]
    %v4197 = vld [vmem:[%s4191 + $0x28] sm:$0xff]
    %v4198 = vld [vmem:[%s4191 + $0x30] sm:$0xff]
    %v4199 = vld [vmem:[%s4191 + $0x38] sm:$0xff]
    %v4200 = vld [vmem:[%s4191 + $0x40] sm:$0xff]
    %v4201 = vld [vmem:[%s4191 + $0x48] sm:$0xff]
    %v4202 = vld [vmem:[%s4191 + $0x50] sm:$0xff]
    %v4203 = vld [vmem:[%s4191 + $0x58] sm:$0xff]
    %v4204 = vld [vmem:[%s4191 + $0x60] sm:$0xff]
    %v4205 = vld [vmem:[%s4191 + $0x68] sm:$0xff]
    %v4206 = vld [vmem:[%s4191 + $0x70] sm:$0xff]
    %v4207 = vld [vmem:[%s4191 + $0x78] sm:$0xff]
    %v4208 = vld [vmem:[%s4191 + $0x80] sm:$0xff]
    %v4209 = vld [vmem:[%s4191 + $0x88] sm:$0xff]
    %v4210 = vld [vmem:[%s4191 + $0x90] sm:$0xff]
    %v4211 = vld [vmem:[%s4191 + $0x98] sm:$0xff]
    %v4212 = vld [vmem:[%s4191 + $0xa0] sm:$0xff]
    %v4213 = vld [vmem:[%s4191 + $0xa8] sm:$0xff]
    %v4214 = vld [vmem:[%s4191 + $0xb0] sm:$0xff]
    %v4215 = vld [vmem:[%s4191 + $0xb8] sm:$0xff]
    %v4216 = vld [vmem:[%s4191 + $0xc0] sm:$0xff]
    %v4217 = vld [vmem:[%s4191 + $0xc8] sm:$0xff]
    %v4218 = vld [vmem:[%s4191 + $0xd0] sm:$0xff]
    %v4219 = vld [vmem:[%s4191 + $0xd8] sm:$0xff]
    %v4220 = vld [vmem:[%s4191 + $0xe0] sm:$0xff]
    %v4221 = vld [vmem:[%s4191 + $0xe8] sm:$0xff]
    %v4222 = vld [vmem:[%s4191 + $0xf0] sm:$0xff]
    %v4223 = vld [vmem:[%s4191 + $0xf8] sm:$0xff]
    %v4224 = vld [vmem:[%s4191 + $0x100] sm:$0xff]
    %v4225 = vld [vmem:[%s4191 + $0x108] sm:$0xff]
    %v4226 = vld [vmem:[%s4191 + $0x110] sm:$0xff]
    %v4227 = vld [vmem:[%s4191 + $0x118] sm:$0xff]
    %v4228 = vld [vmem:[%s4191 + $0x120] sm:$0xff]
    %v4229 = vld [vmem:[%s4191 + $0x128] sm:$0xff]
    %v4230 = vld [vmem:[%s4191 + $0x130] sm:$0xff]
    %v4231 = vld [vmem:[%s4191 + $0x138] sm:$0xff]
    %v4232 = vld [vmem:[%s4191 + $0x140] sm:$0xff]
    %v4233 = vld [vmem:[%s4191 + $0x148] sm:$0xff]
    %v4234 = vld [vmem:[%s4191 + $0x150] sm:$0xff]
    %v4235 = vld [vmem:[%s4191 + $0x158] sm:$0xff]
    %v4236 = vld [vmem:[%s4191 + $0x160] sm:$0xff]
    %v4237 = vld [vmem:[%s4191 + $0x168] sm:$0xff]
    %v4238 = vld [vmem:[%s4191 + $0x170] sm:$0xff]
    %v4239 = vld [vmem:[%s4191 + $0x178] sm:$0xff]
    %v4240 = vld [vmem:[%s4191 + $0x180] sm:$0xff]
    %v4241 = vld [vmem:[%s4191 + $0x188] sm:$0xff]
    %v4242 = vld [vmem:[%s4191 + $0x190] sm:$0xff]
    %v4243 = vld [vmem:[%s4191 + $0x198] sm:$0xff]
    %v4244 = vld [vmem:[%s4191 + $0x1a0] sm:$0xff]
    %v4245 = vld [vmem:[%s4191 + $0x1a8] sm:$0xff]
    %v4246 = vld [vmem:[%s4191 + $0x1b0] sm:$0xff]
    %v4247 = vld [vmem:[%s4191 + $0x1b8] sm:$0xff]
    %v4248 = vld [vmem:[%s4191 + $0x1c0] sm:$0xff]
    %v4249 = vld [vmem:[%s4191 + $0x1c8] sm:$0xff]
    %v4250 = vld [vmem:[%s4191 + $0x1d0] sm:$0xff]
    %v4251 = vld [vmem:[%s4191 + $0x1d8] sm:$0xff]
    %v4252 = vld [vmem:[%s4191 + $0x1e0] sm:$0xff]
    %v4253 = vld [vmem:[%s4191 + $0x1e8] sm:$0xff]
    %v4254 = vld [vmem:[%s4191 + $0x1f0] sm:$0xff]
    %v4255 = vld [vmem:[%s4191 + $0x1f8] sm:$0xff]
    %v4256 = vld [vmem:[%s4191 + $0x200] sm:$0xff]
    %v4257 = vld [vmem:[%s4191 + $0x208] sm:$0xff]
    %v4258 = vld [vmem:[%s4191 + $0x210] sm:$0xff]
    %v4259 = vld [vmem:[%s4191 + $0x218] sm:$0xff]
    %v4260 = vld [vmem:[%s4191 + $0x220] sm:$0xff]
    %v4261 = vld [vmem:[%s4191 + $0x228] sm:$0xff]
    %v4262 = vld [vmem:[%s4191 + $0x230] sm:$0xff]
    %v4263 = vld [vmem:[%s4191 + $0x238] sm:$0xff]
    %v4264 = vld [vmem:[%s4191 + $0x240] sm:$0xff]
    %v4265 = vld [vmem:[%s4191 + $0x248] sm:$0xff]
    %v4266 = vld [vmem:[%s4191 + $0x250] sm:$0xff]
    %v4267 = vld [vmem:[%s4191 + $0x258] sm:$0xff]
    %v4268 = vld [vmem:[%s4191 + $0x260] sm:$0xff]
    %v4269 = vld [vmem:[%s4191 + $0x268] sm:$0xff]
    %v4270 = vld [vmem:[%s4191 + $0x270] sm:$0x7]
    %v4271 = vld [vmem:[%s4191 + $0x278] sm:$0x7]
    %v4272 = vrot.slane %v1773, 6
    %v4273 = vrot.slane %v1776, 6
    %v4274 = vsel %vm1332, %v4272, %v4273
    %v4275 = vrot.slane %v1774, 6
    %v4276 = vrot.slane %v1777, 6
    %v4277 = vsel %vm1332, %v4275, %v4276
    %v4278 = vrot.slane %v1775, 6
    %v4279 = vrot.slane %v1778, 6
    %v4280 = vsel %vm1332, %v4278, %v4279
    %v4285 = vsel %vm1971, %v4280, 0
    %v4287 = vsel %vm1971, %v4279, 0
    %v4290 = vsel %vm1109, %v4270, 0
    %v4293 = vsel %vm1109, %v4271, 0
    %4295 = vmatpush.msra.mxu0 %v4222
    %4296 = vmatpush.msra.mxu0 %v4220
    %4297 = vmatpush.msra.mxu0 %v4218
    %4298 = vmatpush.msra.mxu0 %v4216
    %4299 = vmatpush.msra.mxu0 %v4214
    %4300 = vmatpush.msra.mxu0 %v4212
    %4301 = vmatpush.msra.mxu0 %v4210
    %4302 = vmatpush.msra.mxu0 %v4208
    %4303 = vmatpush.msra.mxu0 %v4206
    %4304 = vmatpush.msra.mxu0 %v4204
    %4305 = vmatpush.msra.mxu0 %v4202
    %4306 = vmatpush.msra.mxu0 %v4200
    %4307 = vmatpush.msra.mxu0 %v4198
    %4308 = vmatpush.msra.mxu0 %v4196
    %4309 = vmatpush.msra.mxu0 %v4194
    %4310 = vmatpush.msra.mxu0 %v4192
    %4311 = vmatmul.f32.gmra.mxu0 %v4274
    %v4312 = vpop.f32.mrf.mxu0
    %v4313 = vadd.f32 0.0, %v4312
    %4314 = vmatmul.f32.gmra.mxu0 %v4273
    %v4315 = vpop.f32.mrf.mxu0
    %v4316 = vadd.f32 0.0, %v4315
    %4317 = vdwg.mxu0
    %4318 = vmatpush.msra.mxu0 %v4254
    %4319 = vmatpush.msra.mxu0 %v4252
    %4320 = vmatpush.msra.mxu0 %v4250
    %4321 = vmatpush.msra.mxu0 %v4248
    %4322 = vmatpush.msra.mxu0 %v4246
    %4323 = vmatpush.msra.mxu0 %v4244
    %4324 = vmatpush.msra.mxu0 %v4242
    %4325 = vmatpush.msra.mxu0 %v4240
    %4326 = vmatpush.msra.mxu0 %v4238
    %4327 = vmatpush.msra.mxu0 %v4236
    %4328 = vmatpush.msra.mxu0 %v4234
    %4329 = vmatpush.msra.mxu0 %v4232
    %4330 = vmatpush.msra.mxu0 %v4230
    %4331 = vmatpush.msra.mxu0 %v4228
    %4332 = vmatpush.msra.mxu0 %v4226
    %4333 = vmatpush.msra.mxu0 %v4224
    %4334 = vmatmul.f32.gmra.mxu0 %v4277
    %v4335 = vpop.f32.mrf.mxu0
    %v4336 = vadd.f32 %v4313, %v4335
    %4337 = vmatmul.f32.gmra.mxu0 %v4276
    %v4338 = vpop.f32.mrf.mxu0
    %v4339 = vadd.f32 %v4316, %v4338
    %4340 = vdwg.mxu0
    %4341 = vmatpush.msra.mxu0 0.0
    %4342 = vmatpush.msra.mxu0 0.0
    %4343 = vmatpush.msra.mxu0 0.0
    %4344 = vmatpush.msra.mxu0 0.0
    %4345 = vmatpush.msra.mxu0 0.0
    %4346 = vmatpush.msra.mxu0 0.0
    %4347 = vmatpush.msra.mxu0 0.0
    %4348 = vmatpush.msra.mxu0 0.0
    %4349 = vmatpush.msra.mxu0 %v4290
    %4350 = vmatpush.msra.mxu0 %v4268
    %4351 = vmatpush.msra.mxu0 %v4266
    %4352 = vmatpush.msra.mxu0 %v4264
    %4353 = vmatpush.msra.mxu0 %v4262
    %4354 = vmatpush.msra.mxu0 %v4260
    %4355 = vmatpush.msra.mxu0 %v4258
    %4356 = vmatpush.msra.mxu0 %v4256
    %4357 = vmatmul.f32.gmra.mxu0 %v4285
    %v4358 = vpop.f32.mrf.mxu0
    %v4359 = vadd.f32 %v4336, %v4358
    %4360 = vmatmul.f32.gmra.mxu0 %v4287
    %v4361 = vpop.f32.mrf.mxu0
    %v4362 = vadd.f32 %v4339, %v4361
    %4363 = vdwg.mxu0
    %4364 = vmatpush.msra.mxu0 %v4223
    %4365 = vmatpush.msra.mxu0 %v4221
    %4366 = vmatpush.msra.mxu0 %v4219
    %4367 = vmatpush.msra.mxu0 %v4217
    %4368 = vmatpush.msra.mxu0 %v4215
    %4369 = vmatpush.msra.mxu0 %v4213
    %4370 = vmatpush.msra.mxu0 %v4211
    %4371 = vmatpush.msra.mxu0 %v4209
    %4372 = vmatpush.msra.mxu0 %v4207
    %4373 = vmatpush.msra.mxu0 %v4205
    %4374 = vmatpush.msra.mxu0 %v4203
    %4375 = vmatpush.msra.mxu0 %v4201
    %4376 = vmatpush.msra.mxu0 %v4199
    %4377 = vmatpush.msra.mxu0 %v4197
    %4378 = vmatpush.msra.mxu0 %v4195
    %4379 = vmatpush.msra.mxu0 %v4193
    %4380 = vmatmul.f32.gmra.mxu0 %v4274
    %v4381 = vpop.f32.mrf.mxu0
    %v4382 = vadd.f32 0.0, %v4381
    %4383 = vmatmul.f32.gmra.mxu0 %v4273
    %v4384 = vpop.f32.mrf.mxu0
    %v4385 = vadd.f32 0.0, %v4384
    %4386 = vdwg.mxu0
    %4387 = vmatpush.msra.mxu0 %v4255
    %4388 = vmatpush.msra.mxu0 %v4253
    %4389 = vmatpush.msra.mxu0 %v4251
    %4390 = vmatpush.msra.mxu0 %v4249
    %4391 = vmatpush.msra.mxu0 %v4247
    %4392 = vmatpush.msra.mxu0 %v4245
    %4393 = vmatpush.msra.mxu0 %v4243
    %4394 = vmatpush.msra.mxu0 %v4241
    %4395 = vmatpush.msra.mxu0 %v4239
    %4396 = vmatpush.msra.mxu0 %v4237
    %4397 = vmatpush.msra.mxu0 %v4235
    %4398 = vmatpush.msra.mxu0 %v4233
    %4399 = vmatpush.msra.mxu0 %v4231
    %4400 = vmatpush.msra.mxu0 %v4229
    %4401 = vmatpush.msra.mxu0 %v4227
    %4402 = vmatpush.msra.mxu0 %v4225
    %4403 = vmatmul.f32.gmra.mxu0 %v4277
    %v4404 = vpop.f32.mrf.mxu0
    %v4405 = vadd.f32 %v4382, %v4404
    %4406 = vmatmul.f32.gmra.mxu0 %v4276
    %v4407 = vpop.f32.mrf.mxu0
    %v4408 = vadd.f32 %v4385, %v4407
    %4409 = vdwg.mxu0
    %4410 = vmatpush.msra.mxu0 0.0
    %4411 = vmatpush.msra.mxu0 0.0
    %4412 = vmatpush.msra.mxu0 0.0
    %4413 = vmatpush.msra.mxu0 0.0
    %4414 = vmatpush.msra.mxu0 0.0
    %4415 = vmatpush.msra.mxu0 0.0
    %4416 = vmatpush.msra.mxu0 0.0
    %4417 = vmatpush.msra.mxu0 0.0
    %4418 = vmatpush.msra.mxu0 %v4293
    %4419 = vmatpush.msra.mxu0 %v4269
    %4420 = vmatpush.msra.mxu0 %v4267
    %4421 = vmatpush.msra.mxu0 %v4265
    %4422 = vmatpush.msra.mxu0 %v4263
    %4423 = vmatpush.msra.mxu0 %v4261
    %4424 = vmatpush.msra.mxu0 %v4259
    %4425 = vmatpush.msra.mxu0 %v4257
    %4426 = vmatmul.f32.gmra.mxu0 %v4285
    %v4427 = vpop.f32.mrf.mxu0
    %v4428 = vadd.f32 %v4405, %v4427
    %4429 = vmatmul.f32.gmra.mxu0 %v4287
    %v4430 = vpop.f32.mrf.mxu0
    %v4431 = vadd.f32 %v4408, %v4430
    %4432 = vdwg.mxu0
    %v4433 = vadd.f32 %v4028, %v4359
    %v4434 = vadd.f32 %v4029, %v4428
    %v4435 = vadd.f32 %v4030, %v4362
    %v4436 = vadd.f32 %v4031, %v4431
    %v4437 = vrot.slane %v1782, 6
    %v4438 = vrot.slane %v1785, 6
    %v4439 = vsel %vm1332, %v4437, %v4438
    %v4440 = vrot.slane %v1783, 6
    %v4441 = vrot.slane %v1786, 6
    %v4442 = vsel %vm1332, %v4440, %v4441
    %v4443 = vrot.slane %v1784, 6
    %v4444 = vrot.slane %v1787, 6
    %v4445 = vsel %vm1332, %v4443, %v4444
    %v4450 = vsel %vm1971, %v4445, 0
    %v4452 = vsel %vm1971, %v4444, 0
    %4454 = vmatpush.msra.mxu0 %v4222
    %4455 = vmatpush.msra.mxu0 %v4220
    %4456 = vmatpush.msra.mxu0 %v4218
    %4457 = vmatpush.msra.mxu0 %v4216
    %4458 = vmatpush.msra.mxu0 %v4214
    %4459 = vmatpush.msra.mxu0 %v4212
    %4460 = vmatpush.msra.mxu0 %v4210
    %4461 = vmatpush.msra.mxu0 %v4208
    %4462 = vmatpush.msra.mxu0 %v4206
    %4463 = vmatpush.msra.mxu0 %v4204
    %4464 = vmatpush.msra.mxu0 %v4202
    %4465 = vmatpush.msra.mxu0 %v4200
    %4466 = vmatpush.msra.mxu0 %v4198
    %4467 = vmatpush.msra.mxu0 %v4196
    %4468 = vmatpush.msra.mxu0 %v4194
    %4469 = vmatpush.msra.mxu0 %v4192
    %4470 = vmatmul.f32.gmra.mxu0 %v4439
    %v4471 = vpop.f32.mrf.mxu0
    %v4472 = vadd.f32 0.0, %v4471
    %4473 = vmatmul.f32.gmra.mxu0 %v4438
    %v4474 = vpop.f32.mrf.mxu0
    %v4475 = vadd.f32 0.0, %v4474
    %4476 = vdwg.mxu0
    %4477 = vmatpush.msra.mxu0 %v4254
    %4478 = vmatpush.msra.mxu0 %v4252
    %4479 = vmatpush.msra.mxu0 %v4250
    %4480 = vmatpush.msra.mxu0 %v4248
    %4481 = vmatpush.msra.mxu0 %v4246
    %4482 = vmatpush.msra.mxu0 %v4244
    %4483 = vmatpush.msra.mxu0 %v4242
    %4484 = vmatpush.msra.mxu0 %v4240
    %4485 = vmatpush.msra.mxu0 %v4238
    %4486 = vmatpush.msra.mxu0 %v4236
    %4487 = vmatpush.msra.mxu0 %v4234
    %4488 = vmatpush.msra.mxu0 %v4232
    %4489 = vmatpush.msra.mxu0 %v4230
    %4490 = vmatpush.msra.mxu0 %v4228
    %4491 = vmatpush.msra.mxu0 %v4226
    %4492 = vmatpush.msra.mxu0 %v4224
    %4493 = vmatmul.f32.gmra.mxu0 %v4442
    %v4494 = vpop.f32.mrf.mxu0
    %v4495 = vadd.f32 %v4472, %v4494
    %4496 = vmatmul.f32.gmra.mxu0 %v4441
    %v4497 = vpop.f32.mrf.mxu0
    %v4498 = vadd.f32 %v4475, %v4497
    %4499 = vdwg.mxu0
    %4500 = vmatpush.msra.mxu0 0.0
    %4501 = vmatpush.msra.mxu0 0.0
    %4502 = vmatpush.msra.mxu0 0.0
    %4503 = vmatpush.msra.mxu0 0.0
    %4504 = vmatpush.msra.mxu0 0.0
    %4505 = vmatpush.msra.mxu0 0.0
    %4506 = vmatpush.msra.mxu0 0.0
    %4507 = vmatpush.msra.mxu0 0.0
    %4508 = vmatpush.msra.mxu0 %v4290
    %4509 = vmatpush.msra.mxu0 %v4268
    %4510 = vmatpush.msra.mxu0 %v4266
    %4511 = vmatpush.msra.mxu0 %v4264
    %4512 = vmatpush.msra.mxu0 %v4262
    %4513 = vmatpush.msra.mxu0 %v4260
    %4514 = vmatpush.msra.mxu0 %v4258
    %4515 = vmatpush.msra.mxu0 %v4256
    %4516 = vmatmul.f32.gmra.mxu0 %v4450
    %v4517 = vpop.f32.mrf.mxu0
    %v4518 = vadd.f32 %v4495, %v4517
    %4519 = vmatmul.f32.gmra.mxu0 %v4452
    %v4520 = vpop.f32.mrf.mxu0
    %v4521 = vadd.f32 %v4498, %v4520
    %4522 = vdwg.mxu0
    %4523 = vmatpush.msra.mxu0 %v4223
    %4524 = vmatpush.msra.mxu0 %v4221
    %4525 = vmatpush.msra.mxu0 %v4219
    %4526 = vmatpush.msra.mxu0 %v4217
    %4527 = vmatpush.msra.mxu0 %v4215
    %4528 = vmatpush.msra.mxu0 %v4213
    %4529 = vmatpush.msra.mxu0 %v4211
    %4530 = vmatpush.msra.mxu0 %v4209
    %4531 = vmatpush.msra.mxu0 %v4207
    %4532 = vmatpush.msra.mxu0 %v4205
    %4533 = vmatpush.msra.mxu0 %v4203
    %4534 = vmatpush.msra.mxu0 %v4201
    %4535 = vmatpush.msra.mxu0 %v4199
    %4536 = vmatpush.msra.mxu0 %v4197
    %4537 = vmatpush.msra.mxu0 %v4195
    %4538 = vmatpush.msra.mxu0 %v4193
    %4539 = vmatmul.f32.gmra.mxu0 %v4439
    %v4540 = vpop.f32.mrf.mxu0
    %v4541 = vadd.f32 0.0, %v4540
    %4542 = vmatmul.f32.gmra.mxu0 %v4438
    %v4543 = vpop.f32.mrf.mxu0
    %v4544 = vadd.f32 0.0, %v4543
    %4545 = vdwg.mxu0
    %4546 = vmatpush.msra.mxu0 %v4255
    %4547 = vmatpush.msra.mxu0 %v4253
    %4548 = vmatpush.msra.mxu0 %v4251
    %4549 = vmatpush.msra.mxu0 %v4249
    %4550 = vmatpush.msra.mxu0 %v4247
    %4551 = vmatpush.msra.mxu0 %v4245
    %4552 = vmatpush.msra.mxu0 %v4243
    %4553 = vmatpush.msra.mxu0 %v4241
    %4554 = vmatpush.msra.mxu0 %v4239
    %4555 = vmatpush.msra.mxu0 %v4237
    %4556 = vmatpush.msra.mxu0 %v4235
    %4557 = vmatpush.msra.mxu0 %v4233
    %4558 = vmatpush.msra.mxu0 %v4231
    %4559 = vmatpush.msra.mxu0 %v4229
    %4560 = vmatpush.msra.mxu0 %v4227
    %4561 = vmatpush.msra.mxu0 %v4225
    %4562 = vmatmul.f32.gmra.mxu0 %v4442
    %v4563 = vpop.f32.mrf.mxu0
    %v4564 = vadd.f32 %v4541, %v4563
    %4565 = vmatmul.f32.gmra.mxu0 %v4441
    %v4566 = vpop.f32.mrf.mxu0
    %v4567 = vadd.f32 %v4544, %v4566
    %4568 = vdwg.mxu0
    %4569 = vmatpush.msra.mxu0 0.0
    %4570 = vmatpush.msra.mxu0 0.0
    %4571 = vmatpush.msra.mxu0 0.0
    %4572 = vmatpush.msra.mxu0 0.0
    %4573 = vmatpush.msra.mxu0 0.0
    %4574 = vmatpush.msra.mxu0 0.0
    %4575 = vmatpush.msra.mxu0 0.0
    %4576 = vmatpush.msra.mxu0 0.0
    %4577 = vmatpush.msra.mxu0 %v4293
    %4578 = vmatpush.msra.mxu0 %v4269
    %4579 = vmatpush.msra.mxu0 %v4267
    %4580 = vmatpush.msra.mxu0 %v4265
    %4581 = vmatpush.msra.mxu0 %v4263
    %4582 = vmatpush.msra.mxu0 %v4261
    %4583 = vmatpush.msra.mxu0 %v4259
    %4584 = vmatpush.msra.mxu0 %v4257
    %4585 = vmatmul.f32.gmra.mxu0 %v4450
    %v4586 = vpop.f32.mrf.mxu0
    %v4587 = vadd.f32 %v4564, %v4586
    %4588 = vmatmul.f32.gmra.mxu0 %v4452
    %v4589 = vpop.f32.mrf.mxu0
    %v4590 = vadd.f32 %v4567, %v4589
    %4591 = vdwg.mxu0
    %v4592 = vadd.f32 %v4187, %v4518
    %v4593 = vadd.f32 %v4188, %v4587
    %v4594 = vadd.f32 %v4189, %v4521
    %v4595 = vadd.f32 %v4190, %v4590
    %s4596 = scalar_lea.vmem %s3, 4480
    %v4597 = vld [vmem:[%s4596] sm:$0xff]
    %v4598 = vld [vmem:[%s4596 + $0x8] sm:$0xff]
    %v4599 = vld [vmem:[%s4596 + $0x10] sm:$0xff]
    %v4600 = vld [vmem:[%s4596 + $0x18] sm:$0xff]
    %v4601 = vld [vmem:[%s4596 + $0x20] sm:$0xff]
    %v4602 = vld [vmem:[%s4596 + $0x28] sm:$0xff]
    %v4603 = vld [vmem:[%s4596 + $0x30] sm:$0xff]
    %v4604 = vld [vmem:[%s4596 + $0x38] sm:$0xff]
    %v4605 = vld [vmem:[%s4596 + $0x40] sm:$0xff]
    %v4606 = vld [vmem:[%s4596 + $0x48] sm:$0xff]
    %v4607 = vld [vmem:[%s4596 + $0x50] sm:$0xff]
    %v4608 = vld [vmem:[%s4596 + $0x58] sm:$0xff]
    %v4609 = vld [vmem:[%s4596 + $0x60] sm:$0xff]
    %v4610 = vld [vmem:[%s4596 + $0x68] sm:$0xff]
    %v4611 = vld [vmem:[%s4596 + $0x70] sm:$0xff]
    %v4612 = vld [vmem:[%s4596 + $0x78] sm:$0xff]
    %v4613 = vld [vmem:[%s4596 + $0x80] sm:$0xff]
    %v4614 = vld [vmem:[%s4596 + $0x88] sm:$0xff]
    %v4615 = vld [vmem:[%s4596 + $0x90] sm:$0xff]
    %v4616 = vld [vmem:[%s4596 + $0x98] sm:$0xff]
    %v4617 = vld [vmem:[%s4596 + $0xa0] sm:$0xff]
    %v4618 = vld [vmem:[%s4596 + $0xa8] sm:$0xff]
    %v4619 = vld [vmem:[%s4596 + $0xb0] sm:$0xff]
    %v4620 = vld [vmem:[%s4596 + $0xb8] sm:$0xff]
    %v4621 = vld [vmem:[%s4596 + $0xc0] sm:$0xff]
    %v4622 = vld [vmem:[%s4596 + $0xc8] sm:$0xff]
    %v4623 = vld [vmem:[%s4596 + $0xd0] sm:$0xff]
    %v4624 = vld [vmem:[%s4596 + $0xd8] sm:$0xff]
    %v4625 = vld [vmem:[%s4596 + $0xe0] sm:$0xff]
    %v4626 = vld [vmem:[%s4596 + $0xe8] sm:$0xff]
    %v4627 = vld [vmem:[%s4596 + $0xf0] sm:$0xff]
    %v4628 = vld [vmem:[%s4596 + $0xf8] sm:$0xff]
    %v4629 = vld [vmem:[%s4596 + $0x100] sm:$0xff]
    %v4630 = vld [vmem:[%s4596 + $0x108] sm:$0xff]
    %v4631 = vld [vmem:[%s4596 + $0x110] sm:$0xff]
    %v4632 = vld [vmem:[%s4596 + $0x118] sm:$0xff]
    %v4633 = vld [vmem:[%s4596 + $0x120] sm:$0xff]
    %v4634 = vld [vmem:[%s4596 + $0x128] sm:$0xff]
    %v4635 = vld [vmem:[%s4596 + $0x130] sm:$0xff]
    %v4636 = vld [vmem:[%s4596 + $0x138] sm:$0xff]
    %v4637 = vld [vmem:[%s4596 + $0x140] sm:$0xff]
    %v4638 = vld [vmem:[%s4596 + $0x148] sm:$0xff]
    %v4639 = vld [vmem:[%s4596 + $0x150] sm:$0xff]
    %v4640 = vld [vmem:[%s4596 + $0x158] sm:$0xff]
    %v4641 = vld [vmem:[%s4596 + $0x160] sm:$0xff]
    %v4642 = vld [vmem:[%s4596 + $0x168] sm:$0xff]
    %v4643 = vld [vmem:[%s4596 + $0x170] sm:$0xff]
    %v4644 = vld [vmem:[%s4596 + $0x178] sm:$0xff]
    %v4645 = vld [vmem:[%s4596 + $0x180] sm:$0xff]
    %v4646 = vld [vmem:[%s4596 + $0x188] sm:$0xff]
    %v4647 = vld [vmem:[%s4596 + $0x190] sm:$0xff]
    %v4648 = vld [vmem:[%s4596 + $0x198] sm:$0xff]
    %v4649 = vld [vmem:[%s4596 + $0x1a0] sm:$0xff]
    %v4650 = vld [vmem:[%s4596 + $0x1a8] sm:$0xff]
    %v4651 = vld [vmem:[%s4596 + $0x1b0] sm:$0xff]
    %v4652 = vld [vmem:[%s4596 + $0x1b8] sm:$0xff]
    %v4653 = vld [vmem:[%s4596 + $0x1c0] sm:$0xff]
    %v4654 = vld [vmem:[%s4596 + $0x1c8] sm:$0xff]
    %v4655 = vld [vmem:[%s4596 + $0x1d0] sm:$0xff]
    %v4656 = vld [vmem:[%s4596 + $0x1d8] sm:$0xff]
    %v4657 = vld [vmem:[%s4596 + $0x1e0] sm:$0xff]
    %v4658 = vld [vmem:[%s4596 + $0x1e8] sm:$0xff]
    %v4659 = vld [vmem:[%s4596 + $0x1f0] sm:$0xff]
    %v4660 = vld [vmem:[%s4596 + $0x1f8] sm:$0xff]
    %v4661 = vld [vmem:[%s4596 + $0x200] sm:$0xff]
    %v4662 = vld [vmem:[%s4596 + $0x208] sm:$0xff]
    %v4663 = vld [vmem:[%s4596 + $0x210] sm:$0xff]
    %v4664 = vld [vmem:[%s4596 + $0x218] sm:$0xff]
    %v4665 = vld [vmem:[%s4596 + $0x220] sm:$0xff]
    %v4666 = vld [vmem:[%s4596 + $0x228] sm:$0xff]
    %v4667 = vld [vmem:[%s4596 + $0x230] sm:$0xff]
    %v4668 = vld [vmem:[%s4596 + $0x238] sm:$0xff]
    %v4669 = vld [vmem:[%s4596 + $0x240] sm:$0xff]
    %v4670 = vld [vmem:[%s4596 + $0x248] sm:$0xff]
    %v4671 = vld [vmem:[%s4596 + $0x250] sm:$0xff]
    %v4672 = vld [vmem:[%s4596 + $0x258] sm:$0xff]
    %v4673 = vld [vmem:[%s4596 + $0x260] sm:$0xff]
    %v4674 = vld [vmem:[%s4596 + $0x268] sm:$0xff]
    %v4675 = vld [vmem:[%s4596 + $0x270] sm:$0x7]
    %v4676 = vld [vmem:[%s4596 + $0x278] sm:$0x7]
    %v4680 = vrot.slane %v1773, 7
    %v4681 = vrot.slane %v1776, 7
    %v4682 = vsel %vm1555, %v4680, %v4681
    %v4683 = vrot.slane %v1774, 7
    %v4684 = vrot.slane %v1777, 7
    %v4685 = vsel %vm1555, %v4683, %v4684
    %v4686 = vrot.slane %v1775, 7
    %v4687 = vrot.slane %v1778, 7
    %v4688 = vsel %vm1555, %v4686, %v4687
    %v4689 = vrot.slane %v1779, 7
    %v4690 = vsel %vm1555, %v4681, %v4689
    %v4691 = vrot.slane %v1780, 7
    %v4692 = vsel %vm1555, %v4684, %v4691
    %v4693 = vrot.slane %v1781, 7
    %v4694 = vsel %vm1555, %v4687, %v4693
    %v4699 = vsel %vm1971, %v4688, 0
    %v4701 = vsel %vm1971, %v4694, 0
    %v4704 = vsel %vm1109, %v4675, 0
    %v4707 = vsel %vm1109, %v4676, 0
    %4709 = vmatpush.msra.mxu0 %v4627
    %4710 = vmatpush.msra.mxu0 %v4625
    %4711 = vmatpush.msra.mxu0 %v4623
    %4712 = vmatpush.msra.mxu0 %v4621
    %4713 = vmatpush.msra.mxu0 %v4619
    %4714 = vmatpush.msra.mxu0 %v4617
    %4715 = vmatpush.msra.mxu0 %v4615
    %4716 = vmatpush.msra.mxu0 %v4613
    %4717 = vmatpush.msra.mxu0 %v4611
    %4718 = vmatpush.msra.mxu0 %v4609
    %4719 = vmatpush.msra.mxu0 %v4607
    %4720 = vmatpush.msra.mxu0 %v4605
    %4721 = vmatpush.msra.mxu0 %v4603
    %4722 = vmatpush.msra.mxu0 %v4601
    %4723 = vmatpush.msra.mxu0 %v4599
    %4724 = vmatpush.msra.mxu0 %v4597
    %4725 = vmatmul.f32.gmra.mxu0 %v4682
    %v4726 = vpop.f32.mrf.mxu0
    %v4727 = vadd.f32 0.0, %v4726
    %4728 = vmatmul.f32.gmra.mxu0 %v4690
    %v4729 = vpop.f32.mrf.mxu0
    %v4730 = vadd.f32 0.0, %v4729
    %4731 = vdwg.mxu0
    %4732 = vmatpush.msra.mxu0 %v4659
    %4733 = vmatpush.msra.mxu0 %v4657
    %4734 = vmatpush.msra.mxu0 %v4655
    %4735 = vmatpush.msra.mxu0 %v4653
    %4736 = vmatpush.msra.mxu0 %v4651
    %4737 = vmatpush.msra.mxu0 %v4649
    %4738 = vmatpush.msra.mxu0 %v4647
    %4739 = vmatpush.msra.mxu0 %v4645
    %4740 = vmatpush.msra.mxu0 %v4643
    %4741 = vmatpush.msra.mxu0 %v4641
    %4742 = vmatpush.msra.mxu0 %v4639
    %4743 = vmatpush.msra.mxu0 %v4637
    %4744 = vmatpush.msra.mxu0 %v4635
    %4745 = vmatpush.msra.mxu0 %v4633
    %4746 = vmatpush.msra.mxu0 %v4631
    %4747 = vmatpush.msra.mxu0 %v4629
    %4748 = vmatmul.f32.gmra.mxu0 %v4685
    %v4749 = vpop.f32.mrf.mxu0
    %v4750 = vadd.f32 %v4727, %v4749
    %4751 = vmatmul.f32.gmra.mxu0 %v4692
    %v4752 = vpop.f32.mrf.mxu0
    %v4753 = vadd.f32 %v4730, %v4752
    %4754 = vdwg.mxu0
    %4755 = vmatpush.msra.mxu0 0.0
    %4756 = vmatpush.msra.mxu0 0.0
    %4757 = vmatpush.msra.mxu0 0.0
    %4758 = vmatpush.msra.mxu0 0.0
    %4759 = vmatpush.msra.mxu0 0.0
    %4760 = vmatpush.msra.mxu0 0.0
    %4761 = vmatpush.msra.mxu0 0.0
    %4762 = vmatpush.msra.mxu0 0.0
    %4763 = vmatpush.msra.mxu0 %v4704
    %4764 = vmatpush.msra.mxu0 %v4673
    %4765 = vmatpush.msra.mxu0 %v4671
    %4766 = vmatpush.msra.mxu0 %v4669
    %4767 = vmatpush.msra.mxu0 %v4667
    %4768 = vmatpush.msra.mxu0 %v4665
    %4769 = vmatpush.msra.mxu0 %v4663
    %4770 = vmatpush.msra.mxu0 %v4661
    %4771 = vmatmul.f32.gmra.mxu0 %v4699
    %v4772 = vpop.f32.mrf.mxu0
    %v4773 = vadd.f32 %v4750, %v4772
    %4774 = vmatmul.f32.gmra.mxu0 %v4701
    %v4775 = vpop.f32.mrf.mxu0
    %v4776 = vadd.f32 %v4753, %v4775
    %4777 = vdwg.mxu0
    %4778 = vmatpush.msra.mxu0 %v4628
    %4779 = vmatpush.msra.mxu0 %v4626
    %4780 = vmatpush.msra.mxu0 %v4624
    %4781 = vmatpush.msra.mxu0 %v4622
    %4782 = vmatpush.msra.mxu0 %v4620
    %4783 = vmatpush.msra.mxu0 %v4618
    %4784 = vmatpush.msra.mxu0 %v4616
    %4785 = vmatpush.msra.mxu0 %v4614
    %4786 = vmatpush.msra.mxu0 %v4612
    %4787 = vmatpush.msra.mxu0 %v4610
    %4788 = vmatpush.msra.mxu0 %v4608
    %4789 = vmatpush.msra.mxu0 %v4606
    %4790 = vmatpush.msra.mxu0 %v4604
    %4791 = vmatpush.msra.mxu0 %v4602
    %4792 = vmatpush.msra.mxu0 %v4600
    %4793 = vmatpush.msra.mxu0 %v4598
    %4794 = vmatmul.f32.gmra.mxu0 %v4682
    %v4795 = vpop.f32.mrf.mxu0
    %v4796 = vadd.f32 0.0, %v4795
    %4797 = vmatmul.f32.gmra.mxu0 %v4690
    %v4798 = vpop.f32.mrf.mxu0
    %v4799 = vadd.f32 0.0, %v4798
    %4800 = vdwg.mxu0
    %4801 = vmatpush.msra.mxu0 %v4660
    %4802 = vmatpush.msra.mxu0 %v4658
    %4803 = vmatpush.msra.mxu0 %v4656
    %4804 = vmatpush.msra.mxu0 %v4654
    %4805 = vmatpush.msra.mxu0 %v4652
    %4806 = vmatpush.msra.mxu0 %v4650
    %4807 = vmatpush.msra.mxu0 %v4648
    %4808 = vmatpush.msra.mxu0 %v4646
    %4809 = vmatpush.msra.mxu0 %v4644
    %4810 = vmatpush.msra.mxu0 %v4642
    %4811 = vmatpush.msra.mxu0 %v4640
    %4812 = vmatpush.msra.mxu0 %v4638
    %4813 = vmatpush.msra.mxu0 %v4636
    %4814 = vmatpush.msra.mxu0 %v4634
    %4815 = vmatpush.msra.mxu0 %v4632
    %4816 = vmatpush.msra.mxu0 %v4630
    %4817 = vmatmul.f32.gmra.mxu0 %v4685
    %v4818 = vpop.f32.mrf.mxu0
    %v4819 = vadd.f32 %v4796, %v4818
    %4820 = vmatmul.f32.gmra.mxu0 %v4692
    %v4821 = vpop.f32.mrf.mxu0
    %v4822 = vadd.f32 %v4799, %v4821
    %4823 = vdwg.mxu0
    %4824 = vmatpush.msra.mxu0 0.0
    %4825 = vmatpush.msra.mxu0 0.0
    %4826 = vmatpush.msra.mxu0 0.0
    %4827 = vmatpush.msra.mxu0 0.0
    %4828 = vmatpush.msra.mxu0 0.0
    %4829 = vmatpush.msra.mxu0 0.0
    %4830 = vmatpush.msra.mxu0 0.0
    %4831 = vmatpush.msra.mxu0 0.0
    %4832 = vmatpush.msra.mxu0 %v4707
    %4833 = vmatpush.msra.mxu0 %v4674
    %4834 = vmatpush.msra.mxu0 %v4672
    %4835 = vmatpush.msra.mxu0 %v4670
    %4836 = vmatpush.msra.mxu0 %v4668
    %4837 = vmatpush.msra.mxu0 %v4666
    %4838 = vmatpush.msra.mxu0 %v4664
    %4839 = vmatpush.msra.mxu0 %v4662
    %4840 = vmatmul.f32.gmra.mxu0 %v4699
    %v4841 = vpop.f32.mrf.mxu0
    %v4842 = vadd.f32 %v4819, %v4841
    %4843 = vmatmul.f32.gmra.mxu0 %v4701
    %v4844 = vpop.f32.mrf.mxu0
    %v4845 = vadd.f32 %v4822, %v4844
    %4846 = vdwg.mxu0
    %v4847 = vadd.f32 %v4433, %v4773
    %v4848 = vadd.f32 %v4434, %v4842
    %v4849 = vadd.f32 %v4435, %v4776
    %v4850 = vadd.f32 %v4436, %v4845
    %v4854 = vrot.slane %v1782, 7
    %v4855 = vrot.slane %v1785, 7
    %v4856 = vsel %vm1555, %v4854, %v4855
    %v4857 = vrot.slane %v1783, 7
    %v4858 = vrot.slane %v1786, 7
    %v4859 = vsel %vm1555, %v4857, %v4858
    %v4860 = vrot.slane %v1784, 7
    %v4861 = vrot.slane %v1787, 7
    %v4862 = vsel %vm1555, %v4860, %v4861
    %v4863 = vrot.slane %v1788, 7
    %v4864 = vsel %vm1555, %v4855, %v4863
    %v4865 = vrot.slane %v1789, 7
    %v4866 = vsel %vm1555, %v4858, %v4865
    %v4867 = vrot.slane %v1790, 7
    %v4868 = vsel %vm1555, %v4861, %v4867
    %v4873 = vsel %vm1971, %v4862, 0
    %v4875 = vsel %vm1971, %v4868, 0
    %4877 = vmatpush.msra.mxu0 %v4627
    %4878 = vmatpush.msra.mxu0 %v4625
    %4879 = vmatpush.msra.mxu0 %v4623
    %4880 = vmatpush.msra.mxu0 %v4621
    %4881 = vmatpush.msra.mxu0 %v4619
    %4882 = vmatpush.msra.mxu0 %v4617
    %4883 = vmatpush.msra.mxu0 %v4615
    %4884 = vmatpush.msra.mxu0 %v4613
    %4885 = vmatpush.msra.mxu0 %v4611
    %4886 = vmatpush.msra.mxu0 %v4609
    %4887 = vmatpush.msra.mxu0 %v4607
    %4888 = vmatpush.msra.mxu0 %v4605
    %4889 = vmatpush.msra.mxu0 %v4603
    %4890 = vmatpush.msra.mxu0 %v4601
    %4891 = vmatpush.msra.mxu0 %v4599
    %4892 = vmatpush.msra.mxu0 %v4597
    %4893 = vmatmul.f32.gmra.mxu0 %v4856
    %v4894 = vpop.f32.mrf.mxu0
    %v4895 = vadd.f32 0.0, %v4894
    %4896 = vmatmul.f32.gmra.mxu0 %v4864
    %v4897 = vpop.f32.mrf.mxu0
    %v4898 = vadd.f32 0.0, %v4897
    %4899 = vdwg.mxu0
    %4900 = vmatpush.msra.mxu0 %v4659
    %4901 = vmatpush.msra.mxu0 %v4657
    %4902 = vmatpush.msra.mxu0 %v4655
    %4903 = vmatpush.msra.mxu0 %v4653
    %4904 = vmatpush.msra.mxu0 %v4651
    %4905 = vmatpush.msra.mxu0 %v4649
    %4906 = vmatpush.msra.mxu0 %v4647
    %4907 = vmatpush.msra.mxu0 %v4645
    %4908 = vmatpush.msra.mxu0 %v4643
    %4909 = vmatpush.msra.mxu0 %v4641
    %4910 = vmatpush.msra.mxu0 %v4639
    %4911 = vmatpush.msra.mxu0 %v4637
    %4912 = vmatpush.msra.mxu0 %v4635
    %4913 = vmatpush.msra.mxu0 %v4633
    %4914 = vmatpush.msra.mxu0 %v4631
    %4915 = vmatpush.msra.mxu0 %v4629
    %4916 = vmatmul.f32.gmra.mxu0 %v4859
    %v4917 = vpop.f32.mrf.mxu0
    %v4918 = vadd.f32 %v4895, %v4917
    %4919 = vmatmul.f32.gmra.mxu0 %v4866
    %v4920 = vpop.f32.mrf.mxu0
    %v4921 = vadd.f32 %v4898, %v4920
    %4922 = vdwg.mxu0
    %4923 = vmatpush.msra.mxu0 0.0
    %4924 = vmatpush.msra.mxu0 0.0
    %4925 = vmatpush.msra.mxu0 0.0
    %4926 = vmatpush.msra.mxu0 0.0
    %4927 = vmatpush.msra.mxu0 0.0
    %4928 = vmatpush.msra.mxu0 0.0
    %4929 = vmatpush.msra.mxu0 0.0
    %4930 = vmatpush.msra.mxu0 0.0
    %4931 = vmatpush.msra.mxu0 %v4704
    %4932 = vmatpush.msra.mxu0 %v4673
    %4933 = vmatpush.msra.mxu0 %v4671
    %4934 = vmatpush.msra.mxu0 %v4669
    %4935 = vmatpush.msra.mxu0 %v4667
    %4936 = vmatpush.msra.mxu0 %v4665
    %4937 = vmatpush.msra.mxu0 %v4663
    %4938 = vmatpush.msra.mxu0 %v4661
    %4939 = vmatmul.f32.gmra.mxu0 %v4873
    %v4940 = vpop.f32.mrf.mxu0
    %v4941 = vadd.f32 %v4918, %v4940
    %4942 = vmatmul.f32.gmra.mxu0 %v4875
    %v4943 = vpop.f32.mrf.mxu0
    %v4944 = vadd.f32 %v4921, %v4943
    %4945 = vdwg.mxu0
    %4946 = vmatpush.msra.mxu0 %v4628
    %4947 = vmatpush.msra.mxu0 %v4626
    %4948 = vmatpush.msra.mxu0 %v4624
    %4949 = vmatpush.msra.mxu0 %v4622
    %4950 = vmatpush.msra.mxu0 %v4620
    %4951 = vmatpush.msra.mxu0 %v4618
    %4952 = vmatpush.msra.mxu0 %v4616
    %4953 = vmatpush.msra.mxu0 %v4614
    %4954 = vmatpush.msra.mxu0 %v4612
    %4955 = vmatpush.msra.mxu0 %v4610
    %4956 = vmatpush.msra.mxu0 %v4608
    %4957 = vmatpush.msra.mxu0 %v4606
    %4958 = vmatpush.msra.mxu0 %v4604
    %4959 = vmatpush.msra.mxu0 %v4602
    %4960 = vmatpush.msra.mxu0 %v4600
    %4961 = vmatpush.msra.mxu0 %v4598
    %4962 = vmatmul.f32.gmra.mxu0 %v4856
    %v4963 = vpop.f32.mrf.mxu0
    %v4964 = vadd.f32 0.0, %v4963
    %4965 = vmatmul.f32.gmra.mxu0 %v4864
    %v4966 = vpop.f32.mrf.mxu0
    %v4967 = vadd.f32 0.0, %v4966
    %4968 = vdwg.mxu0
    %4969 = vmatpush.msra.mxu0 %v4660
    %4970 = vmatpush.msra.mxu0 %v4658
    %4971 = vmatpush.msra.mxu0 %v4656
    %4972 = vmatpush.msra.mxu0 %v4654
    %4973 = vmatpush.msra.mxu0 %v4652
    %4974 = vmatpush.msra.mxu0 %v4650
    %4975 = vmatpush.msra.mxu0 %v4648
    %4976 = vmatpush.msra.mxu0 %v4646
    %4977 = vmatpush.msra.mxu0 %v4644
    %4978 = vmatpush.msra.mxu0 %v4642
    %4979 = vmatpush.msra.mxu0 %v4640
    %4980 = vmatpush.msra.mxu0 %v4638
    %4981 = vmatpush.msra.mxu0 %v4636
    %4982 = vmatpush.msra.mxu0 %v4634
    %4983 = vmatpush.msra.mxu0 %v4632
    %4984 = vmatpush.msra.mxu0 %v4630
    %4985 = vmatmul.f32.gmra.mxu0 %v4859
    %v4986 = vpop.f32.mrf.mxu0
    %v4987 = vadd.f32 %v4964, %v4986
    %4988 = vmatmul.f32.gmra.mxu0 %v4866
    %v4989 = vpop.f32.mrf.mxu0
    %v4990 = vadd.f32 %v4967, %v4989
    %4991 = vdwg.mxu0
    %4992 = vmatpush.msra.mxu0 0.0
    %4993 = vmatpush.msra.mxu0 0.0
    %4994 = vmatpush.msra.mxu0 0.0
    %4995 = vmatpush.msra.mxu0 0.0
    %4996 = vmatpush.msra.mxu0 0.0
    %4997 = vmatpush.msra.mxu0 0.0
    %4998 = vmatpush.msra.mxu0 0.0
    %4999 = vmatpush.msra.mxu0 0.0
    %5000 = vmatpush.msra.mxu0 %v4707
    %5001 = vmatpush.msra.mxu0 %v4674
    %5002 = vmatpush.msra.mxu0 %v4672
    %5003 = vmatpush.msra.mxu0 %v4670
    %5004 = vmatpush.msra.mxu0 %v4668
    %5005 = vmatpush.msra.mxu0 %v4666
    %5006 = vmatpush.msra.mxu0 %v4664
    %5007 = vmatpush.msra.mxu0 %v4662
    %5008 = vmatmul.f32.gmra.mxu0 %v4873
    %v5009 = vpop.f32.mrf.mxu0
    %v5010 = vadd.f32 %v4987, %v5009
    %5011 = vmatmul.f32.gmra.mxu0 %v4875
    %v5012 = vpop.f32.mrf.mxu0
    %v5013 = vadd.f32 %v4990, %v5012
    %5014 = vdwg.mxu0
    %v5015 = vadd.f32 %v4592, %v4941
    %v5016 = vadd.f32 %v4593, %v5010
    %v5017 = vadd.f32 %v4594, %v4944
    %v5018 = vadd.f32 %v4595, %v5013
    %s5019 = scalar_lea.vmem %s3, 5120
    %v5020 = vld [vmem:[%s5019] sm:$0xff]
    %v5021 = vld [vmem:[%s5019 + $0x8] sm:$0xff]
    %v5022 = vld [vmem:[%s5019 + $0x10] sm:$0xff]
    %v5023 = vld [vmem:[%s5019 + $0x18] sm:$0xff]
    %v5024 = vld [vmem:[%s5019 + $0x20] sm:$0xff]
    %v5025 = vld [vmem:[%s5019 + $0x28] sm:$0xff]
    %v5026 = vld [vmem:[%s5019 + $0x30] sm:$0xff]
    %v5027 = vld [vmem:[%s5019 + $0x38] sm:$0xff]
    %v5028 = vld [vmem:[%s5019 + $0x40] sm:$0xff]
    %v5029 = vld [vmem:[%s5019 + $0x48] sm:$0xff]
    %v5030 = vld [vmem:[%s5019 + $0x50] sm:$0xff]
    %v5031 = vld [vmem:[%s5019 + $0x58] sm:$0xff]
    %v5032 = vld [vmem:[%s5019 + $0x60] sm:$0xff]
    %v5033 = vld [vmem:[%s5019 + $0x68] sm:$0xff]
    %v5034 = vld [vmem:[%s5019 + $0x70] sm:$0xff]
    %v5035 = vld [vmem:[%s5019 + $0x78] sm:$0xff]
    %v5036 = vld [vmem:[%s5019 + $0x80] sm:$0xff]
    %v5037 = vld [vmem:[%s5019 + $0x88] sm:$0xff]
    %v5038 = vld [vmem:[%s5019 + $0x90] sm:$0xff]
    %v5039 = vld [vmem:[%s5019 + $0x98] sm:$0xff]
    %v5040 = vld [vmem:[%s5019 + $0xa0] sm:$0xff]
    %v5041 = vld [vmem:[%s5019 + $0xa8] sm:$0xff]
    %v5042 = vld [vmem:[%s5019 + $0xb0] sm:$0xff]
    %v5043 = vld [vmem:[%s5019 + $0xb8] sm:$0xff]
    %v5044 = vld [vmem:[%s5019 + $0xc0] sm:$0xff]
    %v5045 = vld [vmem:[%s5019 + $0xc8] sm:$0xff]
    %v5046 = vld [vmem:[%s5019 + $0xd0] sm:$0xff]
    %v5047 = vld [vmem:[%s5019 + $0xd8] sm:$0xff]
    %v5048 = vld [vmem:[%s5019 + $0xe0] sm:$0xff]
    %v5049 = vld [vmem:[%s5019 + $0xe8] sm:$0xff]
    %v5050 = vld [vmem:[%s5019 + $0xf0] sm:$0xff]
    %v5051 = vld [vmem:[%s5019 + $0xf8] sm:$0xff]
    %v5052 = vld [vmem:[%s5019 + $0x100] sm:$0xff]
    %v5053 = vld [vmem:[%s5019 + $0x108] sm:$0xff]
    %v5054 = vld [vmem:[%s5019 + $0x110] sm:$0xff]
    %v5055 = vld [vmem:[%s5019 + $0x118] sm:$0xff]
    %v5056 = vld [vmem:[%s5019 + $0x120] sm:$0xff]
    %v5057 = vld [vmem:[%s5019 + $0x128] sm:$0xff]
    %v5058 = vld [vmem:[%s5019 + $0x130] sm:$0xff]
    %v5059 = vld [vmem:[%s5019 + $0x138] sm:$0xff]
    %v5060 = vld [vmem:[%s5019 + $0x140] sm:$0xff]
    %v5061 = vld [vmem:[%s5019 + $0x148] sm:$0xff]
    %v5062 = vld [vmem:[%s5019 + $0x150] sm:$0xff]
    %v5063 = vld [vmem:[%s5019 + $0x158] sm:$0xff]
    %v5064 = vld [vmem:[%s5019 + $0x160] sm:$0xff]
    %v5065 = vld [vmem:[%s5019 + $0x168] sm:$0xff]
    %v5066 = vld [vmem:[%s5019 + $0x170] sm:$0xff]
    %v5067 = vld [vmem:[%s5019 + $0x178] sm:$0xff]
    %v5068 = vld [vmem:[%s5019 + $0x180] sm:$0xff]
    %v5069 = vld [vmem:[%s5019 + $0x188] sm:$0xff]
    %v5070 = vld [vmem:[%s5019 + $0x190] sm:$0xff]
    %v5071 = vld [vmem:[%s5019 + $0x198] sm:$0xff]
    %v5072 = vld [vmem:[%s5019 + $0x1a0] sm:$0xff]
    %v5073 = vld [vmem:[%s5019 + $0x1a8] sm:$0xff]
    %v5074 = vld [vmem:[%s5019 + $0x1b0] sm:$0xff]
    %v5075 = vld [vmem:[%s5019 + $0x1b8] sm:$0xff]
    %v5076 = vld [vmem:[%s5019 + $0x1c0] sm:$0xff]
    %v5077 = vld [vmem:[%s5019 + $0x1c8] sm:$0xff]
    %v5078 = vld [vmem:[%s5019 + $0x1d0] sm:$0xff]
    %v5079 = vld [vmem:[%s5019 + $0x1d8] sm:$0xff]
    %v5080 = vld [vmem:[%s5019 + $0x1e0] sm:$0xff]
    %v5081 = vld [vmem:[%s5019 + $0x1e8] sm:$0xff]
    %v5082 = vld [vmem:[%s5019 + $0x1f0] sm:$0xff]
    %v5083 = vld [vmem:[%s5019 + $0x1f8] sm:$0xff]
    %v5084 = vld [vmem:[%s5019 + $0x200] sm:$0xff]
    %v5085 = vld [vmem:[%s5019 + $0x208] sm:$0xff]
    %v5086 = vld [vmem:[%s5019 + $0x210] sm:$0xff]
    %v5087 = vld [vmem:[%s5019 + $0x218] sm:$0xff]
    %v5088 = vld [vmem:[%s5019 + $0x220] sm:$0xff]
    %v5089 = vld [vmem:[%s5019 + $0x228] sm:$0xff]
    %v5090 = vld [vmem:[%s5019 + $0x230] sm:$0xff]
    %v5091 = vld [vmem:[%s5019 + $0x238] sm:$0xff]
    %v5092 = vld [vmem:[%s5019 + $0x240] sm:$0xff]
    %v5093 = vld [vmem:[%s5019 + $0x248] sm:$0xff]
    %v5094 = vld [vmem:[%s5019 + $0x250] sm:$0xff]
    %v5095 = vld [vmem:[%s5019 + $0x258] sm:$0xff]
    %v5096 = vld [vmem:[%s5019 + $0x260] sm:$0xff]
    %v5097 = vld [vmem:[%s5019 + $0x268] sm:$0xff]
    %v5098 = vld [vmem:[%s5019 + $0x270] sm:$0x7]
    %v5099 = vld [vmem:[%s5019 + $0x278] sm:$0x7]
    %v5100 = vsel %vm1971, %v1781, 0
    %v5103 = vsel %vm1109, %v5098, 0
    %v5106 = vsel %vm1109, %v5099, 0
    %5108 = vmatpush.msra.mxu0 %v5050
    %5109 = vmatpush.msra.mxu0 %v5048
    %5110 = vmatpush.msra.mxu0 %v5046
    %5111 = vmatpush.msra.mxu0 %v5044
    %5112 = vmatpush.msra.mxu0 %v5042
    %5113 = vmatpush.msra.mxu0 %v5040
    %5114 = vmatpush.msra.mxu0 %v5038
    %5115 = vmatpush.msra.mxu0 %v5036
    %5116 = vmatpush.msra.mxu0 %v5034
    %5117 = vmatpush.msra.mxu0 %v5032
    %5118 = vmatpush.msra.mxu0 %v5030
    %5119 = vmatpush.msra.mxu0 %v5028
    %5120 = vmatpush.msra.mxu0 %v5026
    %5121 = vmatpush.msra.mxu0 %v5024
    %5122 = vmatpush.msra.mxu0 %v5022
    %5123 = vmatpush.msra.mxu0 %v5020
    %5124 = vmatmul.f32.gmra.mxu0 %v1776
    %v5125 = vpop.f32.mrf.mxu0
    %v5126 = vadd.f32 0.0, %v5125
    %5127 = vmatmul.f32.gmra.mxu0 %v1779
    %v5128 = vpop.f32.mrf.mxu0
    %v5129 = vadd.f32 0.0, %v5128
    %5130 = vdwg.mxu0
    %5131 = vmatpush.msra.mxu0 %v5082
    %5132 = vmatpush.msra.mxu0 %v5080
    %5133 = vmatpush.msra.mxu0 %v5078
    %5134 = vmatpush.msra.mxu0 %v5076
    %5135 = vmatpush.msra.mxu0 %v5074
    %5136 = vmatpush.msra.mxu0 %v5072
    %5137 = vmatpush.msra.mxu0 %v5070
    %5138 = vmatpush.msra.mxu0 %v5068
    %5139 = vmatpush.msra.mxu0 %v5066
    %5140 = vmatpush.msra.mxu0 %v5064
    %5141 = vmatpush.msra.mxu0 %v5062
    %5142 = vmatpush.msra.mxu0 %v5060
    %5143 = vmatpush.msra.mxu0 %v5058
    %5144 = vmatpush.msra.mxu0 %v5056
    %5145 = vmatpush.msra.mxu0 %v5054
    %5146 = vmatpush.msra.mxu0 %v5052
    %5147 = vmatmul.f32.gmra.mxu0 %v1777
    %v5148 = vpop.f32.mrf.mxu0
    %v5149 = vadd.f32 %v5126, %v5148
    %5150 = vmatmul.f32.gmra.mxu0 %v1780
    %v5151 = vpop.f32.mrf.mxu0
    %v5152 = vadd.f32 %v5129, %v5151
    %5153 = vdwg.mxu0
    %5154 = vmatpush.msra.mxu0 0.0
    %5155 = vmatpush.msra.mxu0 0.0
    %5156 = vmatpush.msra.mxu0 0.0
    %5157 = vmatpush.msra.mxu0 0.0
    %5158 = vmatpush.msra.mxu0 0.0
    %5159 = vmatpush.msra.mxu0 0.0
    %5160 = vmatpush.msra.mxu0 0.0
    %5161 = vmatpush.msra.mxu0 0.0
    %5162 = vmatpush.msra.mxu0 %v5103
    %5163 = vmatpush.msra.mxu0 %v5096
    %5164 = vmatpush.msra.mxu0 %v5094
    %5165 = vmatpush.msra.mxu0 %v5092
    %5166 = vmatpush.msra.mxu0 %v5090
    %5167 = vmatpush.msra.mxu0 %v5088
    %5168 = vmatpush.msra.mxu0 %v5086
    %5169 = vmatpush.msra.mxu0 %v5084
    %5170 = vmatmul.f32.gmra.mxu0 %v2122
    %v5171 = vpop.f32.mrf.mxu0
    %v5172 = vadd.f32 %v5149, %v5171
    %5173 = vmatmul.f32.gmra.mxu0 %v5100
    %v5174 = vpop.f32.mrf.mxu0
    %v5175 = vadd.f32 %v5152, %v5174
    %5176 = vdwg.mxu0
    %5177 = vmatpush.msra.mxu0 %v5051
    %5178 = vmatpush.msra.mxu0 %v5049
    %5179 = vmatpush.msra.mxu0 %v5047
    %5180 = vmatpush.msra.mxu0 %v5045
    %5181 = vmatpush.msra.mxu0 %v5043
    %5182 = vmatpush.msra.mxu0 %v5041
    %5183 = vmatpush.msra.mxu0 %v5039
    %5184 = vmatpush.msra.mxu0 %v5037
    %5185 = vmatpush.msra.mxu0 %v5035
    %5186 = vmatpush.msra.mxu0 %v5033
    %5187 = vmatpush.msra.mxu0 %v5031
    %5188 = vmatpush.msra.mxu0 %v5029
    %5189 = vmatpush.msra.mxu0 %v5027
    %5190 = vmatpush.msra.mxu0 %v5025
    %5191 = vmatpush.msra.mxu0 %v5023
    %5192 = vmatpush.msra.mxu0 %v5021
    %5193 = vmatmul.f32.gmra.mxu0 %v1776
    %v5194 = vpop.f32.mrf.mxu0
    %v5195 = vadd.f32 0.0, %v5194
    %5196 = vmatmul.f32.gmra.mxu0 %v1779
    %v5197 = vpop.f32.mrf.mxu0
    %v5198 = vadd.f32 0.0, %v5197
    %5199 = vdwg.mxu0
    %5200 = vmatpush.msra.mxu0 %v5083
    %5201 = vmatpush.msra.mxu0 %v5081
    %5202 = vmatpush.msra.mxu0 %v5079
    %5203 = vmatpush.msra.mxu0 %v5077
    %5204 = vmatpush.msra.mxu0 %v5075
    %5205 = vmatpush.msra.mxu0 %v5073
    %5206 = vmatpush.msra.mxu0 %v5071
    %5207 = vmatpush.msra.mxu0 %v5069
    %5208 = vmatpush.msra.mxu0 %v5067
    %5209 = vmatpush.msra.mxu0 %v5065
    %5210 = vmatpush.msra.mxu0 %v5063
    %5211 = vmatpush.msra.mxu0 %v5061
    %5212 = vmatpush.msra.mxu0 %v5059
    %5213 = vmatpush.msra.mxu0 %v5057
    %5214 = vmatpush.msra.mxu0 %v5055
    %5215 = vmatpush.msra.mxu0 %v5053
    %5216 = vmatmul.f32.gmra.mxu0 %v1777
    %v5217 = vpop.f32.mrf.mxu0
    %v5218 = vadd.f32 %v5195, %v5217
    %5219 = vmatmul.f32.gmra.mxu0 %v1780
    %v5220 = vpop.f32.mrf.mxu0
    %v5221 = vadd.f32 %v5198, %v5220
    %5222 = vdwg.mxu0
    %5223 = vmatpush.msra.mxu0 0.0
    %5224 = vmatpush.msra.mxu0 0.0
    %5225 = vmatpush.msra.mxu0 0.0
    %5226 = vmatpush.msra.mxu0 0.0
    %5227 = vmatpush.msra.mxu0 0.0
    %5228 = vmatpush.msra.mxu0 0.0
    %5229 = vmatpush.msra.mxu0 0.0
    %5230 = vmatpush.msra.mxu0 0.0
    %5231 = vmatpush.msra.mxu0 %v5106
    %5232 = vmatpush.msra.mxu0 %v5097
    %5233 = vmatpush.msra.mxu0 %v5095
    %5234 = vmatpush.msra.mxu0 %v5093
    %5235 = vmatpush.msra.mxu0 %v5091
    %5236 = vmatpush.msra.mxu0 %v5089
    %5237 = vmatpush.msra.mxu0 %v5087
    %5238 = vmatpush.msra.mxu0 %v5085
    %5239 = vmatmul.f32.gmra.mxu0 %v2122
    %v5240 = vpop.f32.mrf.mxu0
    %v5241 = vadd.f32 %v5218, %v5240
    %5242 = vmatmul.f32.gmra.mxu0 %v5100
    %v5243 = vpop.f32.mrf.mxu0
    %v5244 = vadd.f32 %v5221, %v5243
    %5245 = vdwg.mxu0
    %v5246 = vadd.f32 %v4847, %v5172
    %v5247 = vadd.f32 %v4848, %v5241
    %v5248 = vadd.f32 %v4849, %v5175
    %v5249 = vadd.f32 %v4850, %v5244
    %v5250 = vsel %vm1971, %v1790, 0
    %5252 = vmatpush.msra.mxu0 %v5050
    %5253 = vmatpush.msra.mxu0 %v5048
    %5254 = vmatpush.msra.mxu0 %v5046
    %5255 = vmatpush.msra.mxu0 %v5044
    %5256 = vmatpush.msra.mxu0 %v5042
    %5257 = vmatpush.msra.mxu0 %v5040
    %5258 = vmatpush.msra.mxu0 %v5038
    %5259 = vmatpush.msra.mxu0 %v5036
    %5260 = vmatpush.msra.mxu0 %v5034
    %5261 = vmatpush.msra.mxu0 %v5032
    %5262 = vmatpush.msra.mxu0 %v5030
    %5263 = vmatpush.msra.mxu0 %v5028
    %5264 = vmatpush.msra.mxu0 %v5026
    %5265 = vmatpush.msra.mxu0 %v5024
    %5266 = vmatpush.msra.mxu0 %v5022
    %5267 = vmatpush.msra.mxu0 %v5020
    %5268 = vmatmul.f32.gmra.mxu0 %v1785
    %v5269 = vpop.f32.mrf.mxu0
    %v5270 = vadd.f32 0.0, %v5269
    %5271 = vmatmul.f32.gmra.mxu0 %v1788
    %v5272 = vpop.f32.mrf.mxu0
    %v5273 = vadd.f32 0.0, %v5272
    %5274 = vdwg.mxu0
    %5275 = vmatpush.msra.mxu0 %v5082
    %5276 = vmatpush.msra.mxu0 %v5080
    %5277 = vmatpush.msra.mxu0 %v5078
    %5278 = vmatpush.msra.mxu0 %v5076
    %5279 = vmatpush.msra.mxu0 %v5074
    %5280 = vmatpush.msra.mxu0 %v5072
    %5281 = vmatpush.msra.mxu0 %v5070
    %5282 = vmatpush.msra.mxu0 %v5068
    %5283 = vmatpush.msra.mxu0 %v5066
    %5284 = vmatpush.msra.mxu0 %v5064
    %5285 = vmatpush.msra.mxu0 %v5062
    %5286 = vmatpush.msra.mxu0 %v5060
    %5287 = vmatpush.msra.mxu0 %v5058
    %5288 = vmatpush.msra.mxu0 %v5056
    %5289 = vmatpush.msra.mxu0 %v5054
    %5290 = vmatpush.msra.mxu0 %v5052
    %5291 = vmatmul.f32.gmra.mxu0 %v1786
    %v5292 = vpop.f32.mrf.mxu0
    %v5293 = vadd.f32 %v5270, %v5292
    %5294 = vmatmul.f32.gmra.mxu0 %v1789
    %v5295 = vpop.f32.mrf.mxu0
    %v5296 = vadd.f32 %v5273, %v5295
    %5297 = vdwg.mxu0
    %5298 = vmatpush.msra.mxu0 0.0
    %5299 = vmatpush.msra.mxu0 0.0
    %5300 = vmatpush.msra.mxu0 0.0
    %5301 = vmatpush.msra.mxu0 0.0
    %5302 = vmatpush.msra.mxu0 0.0
    %5303 = vmatpush.msra.mxu0 0.0
    %5304 = vmatpush.msra.mxu0 0.0
    %5305 = vmatpush.msra.mxu0 0.0
    %5306 = vmatpush.msra.mxu0 %v5103
    %5307 = vmatpush.msra.mxu0 %v5096
    %5308 = vmatpush.msra.mxu0 %v5094
    %5309 = vmatpush.msra.mxu0 %v5092
    %5310 = vmatpush.msra.mxu0 %v5090
    %5311 = vmatpush.msra.mxu0 %v5088
    %5312 = vmatpush.msra.mxu0 %v5086
    %5313 = vmatpush.msra.mxu0 %v5084
    %5314 = vmatmul.f32.gmra.mxu0 %v2431
    %v5315 = vpop.f32.mrf.mxu0
    %v5316 = vadd.f32 %v5293, %v5315
    %5317 = vmatmul.f32.gmra.mxu0 %v5250
    %v5318 = vpop.f32.mrf.mxu0
    %v5319 = vadd.f32 %v5296, %v5318
    %5320 = vdwg.mxu0
    %5321 = vmatpush.msra.mxu0 %v5051
    %5322 = vmatpush.msra.mxu0 %v5049
    %5323 = vmatpush.msra.mxu0 %v5047
    %5324 = vmatpush.msra.mxu0 %v5045
    %5325 = vmatpush.msra.mxu0 %v5043
    %5326 = vmatpush.msra.mxu0 %v5041
    %5327 = vmatpush.msra.mxu0 %v5039
    %5328 = vmatpush.msra.mxu0 %v5037
    %5329 = vmatpush.msra.mxu0 %v5035
    %5330 = vmatpush.msra.mxu0 %v5033
    %5331 = vmatpush.msra.mxu0 %v5031
    %5332 = vmatpush.msra.mxu0 %v5029
    %5333 = vmatpush.msra.mxu0 %v5027
    %5334 = vmatpush.msra.mxu0 %v5025
    %5335 = vmatpush.msra.mxu0 %v5023
    %5336 = vmatpush.msra.mxu0 %v5021
    %5337 = vmatmul.f32.gmra.mxu0 %v1785
    %v5338 = vpop.f32.mrf.mxu0
    %v5339 = vadd.f32 0.0, %v5338
    %5340 = vmatmul.f32.gmra.mxu0 %v1788
    %v5341 = vpop.f32.mrf.mxu0
    %v5342 = vadd.f32 0.0, %v5341
    %5343 = vdwg.mxu0
    %5344 = vmatpush.msra.mxu0 %v5083
    %5345 = vmatpush.msra.mxu0 %v5081
    %5346 = vmatpush.msra.mxu0 %v5079
    %5347 = vmatpush.msra.mxu0 %v5077
    %5348 = vmatpush.msra.mxu0 %v5075
    %5349 = vmatpush.msra.mxu0 %v5073
    %5350 = vmatpush.msra.mxu0 %v5071
    %5351 = vmatpush.msra.mxu0 %v5069
    %5352 = vmatpush.msra.mxu0 %v5067
    %5353 = vmatpush.msra.mxu0 %v5065
    %5354 = vmatpush.msra.mxu0 %v5063
    %5355 = vmatpush.msra.mxu0 %v5061
    %5356 = vmatpush.msra.mxu0 %v5059
    %5357 = vmatpush.msra.mxu0 %v5057
    %5358 = vmatpush.msra.mxu0 %v5055
    %5359 = vmatpush.msra.mxu0 %v5053
    %5360 = vmatmul.f32.gmra.mxu0 %v1786
    %v5361 = vpop.f32.mrf.mxu0
    %v5362 = vadd.f32 %v5339, %v5361
    %5363 = vmatmul.f32.gmra.mxu0 %v1789
    %v5364 = vpop.f32.mrf.mxu0
    %v5365 = vadd.f32 %v5342, %v5364
    %5366 = vdwg.mxu0
    %5367 = vmatpush.msra.mxu0 0.0
    %5368 = vmatpush.msra.mxu0 0.0
    %5369 = vmatpush.msra.mxu0 0.0
    %5370 = vmatpush.msra.mxu0 0.0
    %5371 = vmatpush.msra.mxu0 0.0
    %5372 = vmatpush.msra.mxu0 0.0
    %5373 = vmatpush.msra.mxu0 0.0
    %5374 = vmatpush.msra.mxu0 0.0
    %5375 = vmatpush.msra.mxu0 %v5106
    %5376 = vmatpush.msra.mxu0 %v5097
    %5377 = vmatpush.msra.mxu0 %v5095
    %5378 = vmatpush.msra.mxu0 %v5093
    %5379 = vmatpush.msra.mxu0 %v5091
    %5380 = vmatpush.msra.mxu0 %v5089
    %5381 = vmatpush.msra.mxu0 %v5087
    %5382 = vmatpush.msra.mxu0 %v5085
    %5383 = vmatmul.f32.gmra.mxu0 %v2431
    %v5384 = vpop.f32.mrf.mxu0
    %v5385 = vadd.f32 %v5362, %v5384
    %5386 = vmatmul.f32.gmra.mxu0 %v5250
    %v5387 = vpop.f32.mrf.mxu0
    %v5388 = vadd.f32 %v5365, %v5387
    %5389 = vdwg.mxu0
    %v5390 = vadd.f32 %v5015, %v5316
    %v5391 = vadd.f32 %v5016, %v5385
    %v5392 = vadd.f32 %v5017, %v5319
    %v5393 = vadd.f32 %v5018, %v5388
    %s5394 = scalar_lea.vmem %s3, 5760
    %v5395 = vld [vmem:[%s5394] sm:$0xff]
    %v5396 = vld [vmem:[%s5394 + $0x8] sm:$0xff]
    %v5397 = vld [vmem:[%s5394 + $0x10] sm:$0xff]
    %v5398 = vld [vmem:[%s5394 + $0x18] sm:$0xff]
    %v5399 = vld [vmem:[%s5394 + $0x20] sm:$0xff]
    %v5400 = vld [vmem:[%s5394 + $0x28] sm:$0xff]
    %v5401 = vld [vmem:[%s5394 + $0x30] sm:$0xff]
    %v5402 = vld [vmem:[%s5394 + $0x38] sm:$0xff]
    %v5403 = vld [vmem:[%s5394 + $0x40] sm:$0xff]
    %v5404 = vld [vmem:[%s5394 + $0x48] sm:$0xff]
    %v5405 = vld [vmem:[%s5394 + $0x50] sm:$0xff]
    %v5406 = vld [vmem:[%s5394 + $0x58] sm:$0xff]
    %v5407 = vld [vmem:[%s5394 + $0x60] sm:$0xff]
    %v5408 = vld [vmem:[%s5394 + $0x68] sm:$0xff]
    %v5409 = vld [vmem:[%s5394 + $0x70] sm:$0xff]
    %v5410 = vld [vmem:[%s5394 + $0x78] sm:$0xff]
    %v5411 = vld [vmem:[%s5394 + $0x80] sm:$0xff]
    %v5412 = vld [vmem:[%s5394 + $0x88] sm:$0xff]
    %v5413 = vld [vmem:[%s5394 + $0x90] sm:$0xff]
    %v5414 = vld [vmem:[%s5394 + $0x98] sm:$0xff]
    %v5415 = vld [vmem:[%s5394 + $0xa0] sm:$0xff]
    %v5416 = vld [vmem:[%s5394 + $0xa8] sm:$0xff]
    %v5417 = vld [vmem:[%s5394 + $0xb0] sm:$0xff]
    %v5418 = vld [vmem:[%s5394 + $0xb8] sm:$0xff]
    %v5419 = vld [vmem:[%s5394 + $0xc0] sm:$0xff]
    %v5420 = vld [vmem:[%s5394 + $0xc8] sm:$0xff]
    %v5421 = vld [vmem:[%s5394 + $0xd0] sm:$0xff]
    %v5422 = vld [vmem:[%s5394 + $0xd8] sm:$0xff]
    %v5423 = vld [vmem:[%s5394 + $0xe0] sm:$0xff]
    %v5424 = vld [vmem:[%s5394 + $0xe8] sm:$0xff]
    %v5425 = vld [vmem:[%s5394 + $0xf0] sm:$0xff]
    %v5426 = vld [vmem:[%s5394 + $0xf8] sm:$0xff]
    %v5427 = vld [vmem:[%s5394 + $0x100] sm:$0xff]
    %v5428 = vld [vmem:[%s5394 + $0x108] sm:$0xff]
    %v5429 = vld [vmem:[%s5394 + $0x110] sm:$0xff]
    %v5430 = vld [vmem:[%s5394 + $0x118] sm:$0xff]
    %v5431 = vld [vmem:[%s5394 + $0x120] sm:$0xff]
    %v5432 = vld [vmem:[%s5394 + $0x128] sm:$0xff]
    %v5433 = vld [vmem:[%s5394 + $0x130] sm:$0xff]
    %v5434 = vld [vmem:[%s5394 + $0x138] sm:$0xff]
    %v5435 = vld [vmem:[%s5394 + $0x140] sm:$0xff]
    %v5436 = vld [vmem:[%s5394 + $0x148] sm:$0xff]
    %v5437 = vld [vmem:[%s5394 + $0x150] sm:$0xff]
    %v5438 = vld [vmem:[%s5394 + $0x158] sm:$0xff]
    %v5439 = vld [vmem:[%s5394 + $0x160] sm:$0xff]
    %v5440 = vld [vmem:[%s5394 + $0x168] sm:$0xff]
    %v5441 = vld [vmem:[%s5394 + $0x170] sm:$0xff]
    %v5442 = vld [vmem:[%s5394 + $0x178] sm:$0xff]
    %v5443 = vld [vmem:[%s5394 + $0x180] sm:$0xff]
    %v5444 = vld [vmem:[%s5394 + $0x188] sm:$0xff]
    %v5445 = vld [vmem:[%s5394 + $0x190] sm:$0xff]
    %v5446 = vld [vmem:[%s5394 + $0x198] sm:$0xff]
    %v5447 = vld [vmem:[%s5394 + $0x1a0] sm:$0xff]
    %v5448 = vld [vmem:[%s5394 + $0x1a8] sm:$0xff]
    %v5449 = vld [vmem:[%s5394 + $0x1b0] sm:$0xff]
    %v5450 = vld [vmem:[%s5394 + $0x1b8] sm:$0xff]
    %v5451 = vld [vmem:[%s5394 + $0x1c0] sm:$0xff]
    %v5452 = vld [vmem:[%s5394 + $0x1c8] sm:$0xff]
    %v5453 = vld [vmem:[%s5394 + $0x1d0] sm:$0xff]
    %v5454 = vld [vmem:[%s5394 + $0x1d8] sm:$0xff]
    %v5455 = vld [vmem:[%s5394 + $0x1e0] sm:$0xff]
    %v5456 = vld [vmem:[%s5394 + $0x1e8] sm:$0xff]
    %v5457 = vld [vmem:[%s5394 + $0x1f0] sm:$0xff]
    %v5458 = vld [vmem:[%s5394 + $0x1f8] sm:$0xff]
    %v5459 = vld [vmem:[%s5394 + $0x200] sm:$0xff]
    %v5460 = vld [vmem:[%s5394 + $0x208] sm:$0xff]
    %v5461 = vld [vmem:[%s5394 + $0x210] sm:$0xff]
    %v5462 = vld [vmem:[%s5394 + $0x218] sm:$0xff]
    %v5463 = vld [vmem:[%s5394 + $0x220] sm:$0xff]
    %v5464 = vld [vmem:[%s5394 + $0x228] sm:$0xff]
    %v5465 = vld [vmem:[%s5394 + $0x230] sm:$0xff]
    %v5466 = vld [vmem:[%s5394 + $0x238] sm:$0xff]
    %v5467 = vld [vmem:[%s5394 + $0x240] sm:$0xff]
    %v5468 = vld [vmem:[%s5394 + $0x248] sm:$0xff]
    %v5469 = vld [vmem:[%s5394 + $0x250] sm:$0xff]
    %v5470 = vld [vmem:[%s5394 + $0x258] sm:$0xff]
    %v5471 = vld [vmem:[%s5394 + $0x260] sm:$0xff]
    %v5472 = vld [vmem:[%s5394 + $0x268] sm:$0xff]
    %v5473 = vld [vmem:[%s5394 + $0x270] sm:$0x7]
    %v5474 = vld [vmem:[%s5394 + $0x278] sm:$0x7]
    %v5475 = vrot.slane %v1779, 1
    %v5476 = vsel %vm64, %v1959, %v5475
    %v5477 = vrot.slane %v1780, 1
    %v5478 = vsel %vm64, %v1962, %v5477
    %v5479 = vrot.slane %v1781, 1
    %v5480 = vsel %vm64, %v1965, %v5479
    %v5485 = vsel %vm1971, %v5480, 0
    %v5487 = vsel %vm1971, %v5479, 0
    %v5490 = vsel %vm1109, %v5473, 0
    %v5493 = vsel %vm1109, %v5474, 0
    %5495 = vmatpush.msra.mxu0 %v5425
    %5496 = vmatpush.msra.mxu0 %v5423
    %5497 = vmatpush.msra.mxu0 %v5421
    %5498 = vmatpush.msra.mxu0 %v5419
    %5499 = vmatpush.msra.mxu0 %v5417
    %5500 = vmatpush.msra.mxu0 %v5415
    %5501 = vmatpush.msra.mxu0 %v5413
    %5502 = vmatpush.msra.mxu0 %v5411
    %5503 = vmatpush.msra.mxu0 %v5409
    %5504 = vmatpush.msra.mxu0 %v5407
    %5505 = vmatpush.msra.mxu0 %v5405
    %5506 = vmatpush.msra.mxu0 %v5403
    %5507 = vmatpush.msra.mxu0 %v5401
    %5508 = vmatpush.msra.mxu0 %v5399
    %5509 = vmatpush.msra.mxu0 %v5397
    %5510 = vmatpush.msra.mxu0 %v5395
    %5511 = vmatmul.f32.gmra.mxu0 %v5476
    %v5512 = vpop.f32.mrf.mxu0
    %v5513 = vadd.f32 0.0, %v5512
    %5514 = vmatmul.f32.gmra.mxu0 %v5475
    %v5515 = vpop.f32.mrf.mxu0
    %v5516 = vadd.f32 0.0, %v5515
    %5517 = vdwg.mxu0
    %5518 = vmatpush.msra.mxu0 %v5457
    %5519 = vmatpush.msra.mxu0 %v5455
    %5520 = vmatpush.msra.mxu0 %v5453
    %5521 = vmatpush.msra.mxu0 %v5451
    %5522 = vmatpush.msra.mxu0 %v5449
    %5523 = vmatpush.msra.mxu0 %v5447
    %5524 = vmatpush.msra.mxu0 %v5445
    %5525 = vmatpush.msra.mxu0 %v5443
    %5526 = vmatpush.msra.mxu0 %v5441
    %5527 = vmatpush.msra.mxu0 %v5439
    %5528 = vmatpush.msra.mxu0 %v5437
    %5529 = vmatpush.msra.mxu0 %v5435
    %5530 = vmatpush.msra.mxu0 %v5433
    %5531 = vmatpush.msra.mxu0 %v5431
    %5532 = vmatpush.msra.mxu0 %v5429
    %5533 = vmatpush.msra.mxu0 %v5427
    %5534 = vmatmul.f32.gmra.mxu0 %v5478
    %v5535 = vpop.f32.mrf.mxu0
    %v5536 = vadd.f32 %v5513, %v5535
    %5537 = vmatmul.f32.gmra.mxu0 %v5477
    %v5538 = vpop.f32.mrf.mxu0
    %v5539 = vadd.f32 %v5516, %v5538
    %5540 = vdwg.mxu0
    %5541 = vmatpush.msra.mxu0 0.0
    %5542 = vmatpush.msra.mxu0 0.0
    %5543 = vmatpush.msra.mxu0 0.0
    %5544 = vmatpush.msra.mxu0 0.0
    %5545 = vmatpush.msra.mxu0 0.0
    %5546 = vmatpush.msra.mxu0 0.0
    %5547 = vmatpush.msra.mxu0 0.0
    %5548 = vmatpush.msra.mxu0 0.0
    %5549 = vmatpush.msra.mxu0 %v5490
    %5550 = vmatpush.msra.mxu0 %v5471
    %5551 = vmatpush.msra.mxu0 %v5469
    %5552 = vmatpush.msra.mxu0 %v5467
    %5553 = vmatpush.msra.mxu0 %v5465
    %5554 = vmatpush.msra.mxu0 %v5463
    %5555 = vmatpush.msra.mxu0 %v5461
    %5556 = vmatpush.msra.mxu0 %v5459
    %5557 = vmatmul.f32.gmra.mxu0 %v5485
    %v5558 = vpop.f32.mrf.mxu0
    %v5559 = vadd.f32 %v5536, %v5558
    %5560 = vmatmul.f32.gmra.mxu0 %v5487
    %v5561 = vpop.f32.mrf.mxu0
    %v5562 = vadd.f32 %v5539, %v5561
    %5563 = vdwg.mxu0
    %5564 = vmatpush.msra.mxu0 %v5426
    %5565 = vmatpush.msra.mxu0 %v5424
    %5566 = vmatpush.msra.mxu0 %v5422
    %5567 = vmatpush.msra.mxu0 %v5420
    %5568 = vmatpush.msra.mxu0 %v5418
    %5569 = vmatpush.msra.mxu0 %v5416
    %5570 = vmatpush.msra.mxu0 %v5414
    %5571 = vmatpush.msra.mxu0 %v5412
    %5572 = vmatpush.msra.mxu0 %v5410
    %5573 = vmatpush.msra.mxu0 %v5408
    %5574 = vmatpush.msra.mxu0 %v5406
    %5575 = vmatpush.msra.mxu0 %v5404
    %5576 = vmatpush.msra.mxu0 %v5402
    %5577 = vmatpush.msra.mxu0 %v5400
    %5578 = vmatpush.msra.mxu0 %v5398
    %5579 = vmatpush.msra.mxu0 %v5396
    %5580 = vmatmul.f32.gmra.mxu0 %v5476
    %v5581 = vpop.f32.mrf.mxu0
    %v5582 = vadd.f32 0.0, %v5581
    %5583 = vmatmul.f32.gmra.mxu0 %v5475
    %v5584 = vpop.f32.mrf.mxu0
    %v5585 = vadd.f32 0.0, %v5584
    %5586 = vdwg.mxu0
    %5587 = vmatpush.msra.mxu0 %v5458
    %5588 = vmatpush.msra.mxu0 %v5456
    %5589 = vmatpush.msra.mxu0 %v5454
    %5590 = vmatpush.msra.mxu0 %v5452
    %5591 = vmatpush.msra.mxu0 %v5450
    %5592 = vmatpush.msra.mxu0 %v5448
    %5593 = vmatpush.msra.mxu0 %v5446
    %5594 = vmatpush.msra.mxu0 %v5444
    %5595 = vmatpush.msra.mxu0 %v5442
    %5596 = vmatpush.msra.mxu0 %v5440
    %5597 = vmatpush.msra.mxu0 %v5438
    %5598 = vmatpush.msra.mxu0 %v5436
    %5599 = vmatpush.msra.mxu0 %v5434
    %5600 = vmatpush.msra.mxu0 %v5432
    %5601 = vmatpush.msra.mxu0 %v5430
    %5602 = vmatpush.msra.mxu0 %v5428
    %5603 = vmatmul.f32.gmra.mxu0 %v5478
    %v5604 = vpop.f32.mrf.mxu0
    %v5605 = vadd.f32 %v5582, %v5604
    %5606 = vmatmul.f32.gmra.mxu0 %v5477
    %v5607 = vpop.f32.mrf.mxu0
    %v5608 = vadd.f32 %v5585, %v5607
    %5609 = vdwg.mxu0
    %5610 = vmatpush.msra.mxu0 0.0
    %5611 = vmatpush.msra.mxu0 0.0
    %5612 = vmatpush.msra.mxu0 0.0
    %5613 = vmatpush.msra.mxu0 0.0
    %5614 = vmatpush.msra.mxu0 0.0
    %5615 = vmatpush.msra.mxu0 0.0
    %5616 = vmatpush.msra.mxu0 0.0
    %5617 = vmatpush.msra.mxu0 0.0
    %5618 = vmatpush.msra.mxu0 %v5493
    %5619 = vmatpush.msra.mxu0 %v5472
    %5620 = vmatpush.msra.mxu0 %v5470
    %5621 = vmatpush.msra.mxu0 %v5468
    %5622 = vmatpush.msra.mxu0 %v5466
    %5623 = vmatpush.msra.mxu0 %v5464
    %5624 = vmatpush.msra.mxu0 %v5462
    %5625 = vmatpush.msra.mxu0 %v5460
    %5626 = vmatmul.f32.gmra.mxu0 %v5485
    %v5627 = vpop.f32.mrf.mxu0
    %v5628 = vadd.f32 %v5605, %v5627
    %5629 = vmatmul.f32.gmra.mxu0 %v5487
    %v5630 = vpop.f32.mrf.mxu0
    %v5631 = vadd.f32 %v5608, %v5630
    %5632 = vdwg.mxu0
    %v5633 = vadd.f32 %v5246, %v5559
    %v5634 = vadd.f32 %v5247, %v5628
    %v5635 = vadd.f32 %v5248, %v5562
    %v5636 = vadd.f32 %v5249, %v5631
    %v5637 = vrot.slane %v1788, 1
    %v5638 = vsel %vm64, %v2275, %v5637
    %v5639 = vrot.slane %v1789, 1
    %v5640 = vsel %vm64, %v2278, %v5639
    %v5641 = vrot.slane %v1790, 1
    %v5642 = vsel %vm64, %v2281, %v5641
    %v5647 = vsel %vm1971, %v5642, 0
    %v5649 = vsel %vm1971, %v5641, 0
    %5651 = vmatpush.msra.mxu0 %v5425
    %5652 = vmatpush.msra.mxu0 %v5423
    %5653 = vmatpush.msra.mxu0 %v5421
    %5654 = vmatpush.msra.mxu0 %v5419
    %5655 = vmatpush.msra.mxu0 %v5417
    %5656 = vmatpush.msra.mxu0 %v5415
    %5657 = vmatpush.msra.mxu0 %v5413
    %5658 = vmatpush.msra.mxu0 %v5411
    %5659 = vmatpush.msra.mxu0 %v5409
    %5660 = vmatpush.msra.mxu0 %v5407
    %5661 = vmatpush.msra.mxu0 %v5405
    %5662 = vmatpush.msra.mxu0 %v5403
    %5663 = vmatpush.msra.mxu0 %v5401
    %5664 = vmatpush.msra.mxu0 %v5399
    %5665 = vmatpush.msra.mxu0 %v5397
    %5666 = vmatpush.msra.mxu0 %v5395
    %5667 = vmatmul.f32.gmra.mxu0 %v5638
    %v5668 = vpop.f32.mrf.mxu0
    %v5669 = vadd.f32 0.0, %v5668
    %5670 = vmatmul.f32.gmra.mxu0 %v5637
    %v5671 = vpop.f32.mrf.mxu0
    %v5672 = vadd.f32 0.0, %v5671
    %5673 = vdwg.mxu0
    %5674 = vmatpush.msra.mxu0 %v5457
    %5675 = vmatpush.msra.mxu0 %v5455
    %5676 = vmatpush.msra.mxu0 %v5453
    %5677 = vmatpush.msra.mxu0 %v5451
    %5678 = vmatpush.msra.mxu0 %v5449
    %5679 = vmatpush.msra.mxu0 %v5447
    %5680 = vmatpush.msra.mxu0 %v5445
    %5681 = vmatpush.msra.mxu0 %v5443
    %5682 = vmatpush.msra.mxu0 %v5441
    %5683 = vmatpush.msra.mxu0 %v5439
    %5684 = vmatpush.msra.mxu0 %v5437
    %5685 = vmatpush.msra.mxu0 %v5435
    %5686 = vmatpush.msra.mxu0 %v5433
    %5687 = vmatpush.msra.mxu0 %v5431
    %5688 = vmatpush.msra.mxu0 %v5429
    %5689 = vmatpush.msra.mxu0 %v5427
    %5690 = vmatmul.f32.gmra.mxu0 %v5640
    %v5691 = vpop.f32.mrf.mxu0
    %v5692 = vadd.f32 %v5669, %v5691
    %5693 = vmatmul.f32.gmra.mxu0 %v5639
    %v5694 = vpop.f32.mrf.mxu0
    %v5695 = vadd.f32 %v5672, %v5694
    %5696 = vdwg.mxu0
    %5697 = vmatpush.msra.mxu0 0.0
    %5698 = vmatpush.msra.mxu0 0.0
    %5699 = vmatpush.msra.mxu0 0.0
    %5700 = vmatpush.msra.mxu0 0.0
    %5701 = vmatpush.msra.mxu0 0.0
    %5702 = vmatpush.msra.mxu0 0.0
    %5703 = vmatpush.msra.mxu0 0.0
    %5704 = vmatpush.msra.mxu0 0.0
    %5705 = vmatpush.msra.mxu0 %v5490
    %5706 = vmatpush.msra.mxu0 %v5471
    %5707 = vmatpush.msra.mxu0 %v5469
    %5708 = vmatpush.msra.mxu0 %v5467
    %5709 = vmatpush.msra.mxu0 %v5465
    %5710 = vmatpush.msra.mxu0 %v5463
    %5711 = vmatpush.msra.mxu0 %v5461
    %5712 = vmatpush.msra.mxu0 %v5459
    %5713 = vmatmul.f32.gmra.mxu0 %v5647
    %v5714 = vpop.f32.mrf.mxu0
    %v5715 = vadd.f32 %v5692, %v5714
    %5716 = vmatmul.f32.gmra.mxu0 %v5649
    %v5717 = vpop.f32.mrf.mxu0
    %v5718 = vadd.f32 %v5695, %v5717
    %5719 = vdwg.mxu0
    %5720 = vmatpush.msra.mxu0 %v5426
    %5721 = vmatpush.msra.mxu0 %v5424
    %5722 = vmatpush.msra.mxu0 %v5422
    %5723 = vmatpush.msra.mxu0 %v5420
    %5724 = vmatpush.msra.mxu0 %v5418
    %5725 = vmatpush.msra.mxu0 %v5416
    %5726 = vmatpush.msra.mxu0 %v5414
    %5727 = vmatpush.msra.mxu0 %v5412
    %5728 = vmatpush.msra.mxu0 %v5410
    %5729 = vmatpush.msra.mxu0 %v5408
    %5730 = vmatpush.msra.mxu0 %v5406
    %5731 = vmatpush.msra.mxu0 %v5404
    %5732 = vmatpush.msra.mxu0 %v5402
    %5733 = vmatpush.msra.mxu0 %v5400
    %5734 = vmatpush.msra.mxu0 %v5398
    %5735 = vmatpush.msra.mxu0 %v5396
    %5736 = vmatmul.f32.gmra.mxu0 %v5638
    %v5737 = vpop.f32.mrf.mxu0
    %v5738 = vadd.f32 0.0, %v5737
    %5739 = vmatmul.f32.gmra.mxu0 %v5637
    %v5740 = vpop.f32.mrf.mxu0
    %v5741 = vadd.f32 0.0, %v5740
    %5742 = vdwg.mxu0
    %5743 = vmatpush.msra.mxu0 %v5458
    %5744 = vmatpush.msra.mxu0 %v5456
    %5745 = vmatpush.msra.mxu0 %v5454
    %5746 = vmatpush.msra.mxu0 %v5452
    %5747 = vmatpush.msra.mxu0 %v5450
    %5748 = vmatpush.msra.mxu0 %v5448
    %5749 = vmatpush.msra.mxu0 %v5446
    %5750 = vmatpush.msra.mxu0 %v5444
    %5751 = vmatpush.msra.mxu0 %v5442
    %5752 = vmatpush.msra.mxu0 %v5440
    %5753 = vmatpush.msra.mxu0 %v5438
    %5754 = vmatpush.msra.mxu0 %v5436
    %5755 = vmatpush.msra.mxu0 %v5434
    %5756 = vmatpush.msra.mxu0 %v5432
    %5757 = vmatpush.msra.mxu0 %v5430
    %5758 = vmatpush.msra.mxu0 %v5428
    %5759 = vmatmul.f32.gmra.mxu0 %v5640
    %v5760 = vpop.f32.mrf.mxu0
    %v5761 = vadd.f32 %v5738, %v5760
    %5762 = vmatmul.f32.gmra.mxu0 %v5639
    %v5763 = vpop.f32.mrf.mxu0
    %v5764 = vadd.f32 %v5741, %v5763
    %5765 = vdwg.mxu0
    %5766 = vmatpush.msra.mxu0 0.0
    %5767 = vmatpush.msra.mxu0 0.0
    %5768 = vmatpush.msra.mxu0 0.0
    %5769 = vmatpush.msra.mxu0 0.0
    %5770 = vmatpush.msra.mxu0 0.0
    %5771 = vmatpush.msra.mxu0 0.0
    %5772 = vmatpush.msra.mxu0 0.0
    %5773 = vmatpush.msra.mxu0 0.0
    %5774 = vmatpush.msra.mxu0 %v5493
    %5775 = vmatpush.msra.mxu0 %v5472
    %5776 = vmatpush.msra.mxu0 %v5470
    %5777 = vmatpush.msra.mxu0 %v5468
    %5778 = vmatpush.msra.mxu0 %v5466
    %5779 = vmatpush.msra.mxu0 %v5464
    %5780 = vmatpush.msra.mxu0 %v5462
    %5781 = vmatpush.msra.mxu0 %v5460
    %5782 = vmatmul.f32.gmra.mxu0 %v5647
    %v5783 = vpop.f32.mrf.mxu0
    %v5784 = vadd.f32 %v5761, %v5783
    %5785 = vmatmul.f32.gmra.mxu0 %v5649
    %v5786 = vpop.f32.mrf.mxu0
    %v5787 = vadd.f32 %v5764, %v5786
    %5788 = vdwg.mxu0
    %v5789 = vadd.f32 %v5390, %v5715
    %v5790 = vadd.f32 %v5391, %v5784
    %v5791 = vadd.f32 %v5392, %v5718
    %v5792 = vadd.f32 %v5393, %v5787
    %s5793 = scalar_lea.vmem %s3, 6400
    %v5794 = vld [vmem:[%s5793] sm:$0xff]
    %v5795 = vld [vmem:[%s5793 + $0x8] sm:$0xff]
    %v5796 = vld [vmem:[%s5793 + $0x10] sm:$0xff]
    %v5797 = vld [vmem:[%s5793 + $0x18] sm:$0xff]
    %v5798 = vld [vmem:[%s5793 + $0x20] sm:$0xff]
    %v5799 = vld [vmem:[%s5793 + $0x28] sm:$0xff]
    %v5800 = vld [vmem:[%s5793 + $0x30] sm:$0xff]
    %v5801 = vld [vmem:[%s5793 + $0x38] sm:$0xff]
    %v5802 = vld [vmem:[%s5793 + $0x40] sm:$0xff]
    %v5803 = vld [vmem:[%s5793 + $0x48] sm:$0xff]
    %v5804 = vld [vmem:[%s5793 + $0x50] sm:$0xff]
    %v5805 = vld [vmem:[%s5793 + $0x58] sm:$0xff]
    %v5806 = vld [vmem:[%s5793 + $0x60] sm:$0xff]
    %v5807 = vld [vmem:[%s5793 + $0x68] sm:$0xff]
    %v5808 = vld [vmem:[%s5793 + $0x70] sm:$0xff]
    %v5809 = vld [vmem:[%s5793 + $0x78] sm:$0xff]
    %v5810 = vld [vmem:[%s5793 + $0x80] sm:$0xff]
    %v5811 = vld [vmem:[%s5793 + $0x88] sm:$0xff]
    %v5812 = vld [vmem:[%s5793 + $0x90] sm:$0xff]
    %v5813 = vld [vmem:[%s5793 + $0x98] sm:$0xff]
    %v5814 = vld [vmem:[%s5793 + $0xa0] sm:$0xff]
    %v5815 = vld [vmem:[%s5793 + $0xa8] sm:$0xff]
    %v5816 = vld [vmem:[%s5793 + $0xb0] sm:$0xff]
    %v5817 = vld [vmem:[%s5793 + $0xb8] sm:$0xff]
    %v5818 = vld [vmem:[%s5793 + $0xc0] sm:$0xff]
    %v5819 = vld [vmem:[%s5793 + $0xc8] sm:$0xff]
    %v5820 = vld [vmem:[%s5793 + $0xd0] sm:$0xff]
    %v5821 = vld [vmem:[%s5793 + $0xd8] sm:$0xff]
    %v5822 = vld [vmem:[%s5793 + $0xe0] sm:$0xff]
    %v5823 = vld [vmem:[%s5793 + $0xe8] sm:$0xff]
    %v5824 = vld [vmem:[%s5793 + $0xf0] sm:$0xff]
    %v5825 = vld [vmem:[%s5793 + $0xf8] sm:$0xff]
    %v5826 = vld [vmem:[%s5793 + $0x100] sm:$0xff]
    %v5827 = vld [vmem:[%s5793 + $0x108] sm:$0xff]
    %v5828 = vld [vmem:[%s5793 + $0x110] sm:$0xff]
    %v5829 = vld [vmem:[%s5793 + $0x118] sm:$0xff]
    %v5830 = vld [vmem:[%s5793 + $0x120] sm:$0xff]
    %v5831 = vld [vmem:[%s5793 + $0x128] sm:$0xff]
    %v5832 = vld [vmem:[%s5793 + $0x130] sm:$0xff]
    %v5833 = vld [vmem:[%s5793 + $0x138] sm:$0xff]
    %v5834 = vld [vmem:[%s5793 + $0x140] sm:$0xff]
    %v5835 = vld [vmem:[%s5793 + $0x148] sm:$0xff]
    %v5836 = vld [vmem:[%s5793 + $0x150] sm:$0xff]
    %v5837 = vld [vmem:[%s5793 + $0x158] sm:$0xff]
    %v5838 = vld [vmem:[%s5793 + $0x160] sm:$0xff]
    %v5839 = vld [vmem:[%s5793 + $0x168] sm:$0xff]
    %v5840 = vld [vmem:[%s5793 + $0x170] sm:$0xff]
    %v5841 = vld [vmem:[%s5793 + $0x178] sm:$0xff]
    %v5842 = vld [vmem:[%s5793 + $0x180] sm:$0xff]
    %v5843 = vld [vmem:[%s5793 + $0x188] sm:$0xff]
    %v5844 = vld [vmem:[%s5793 + $0x190] sm:$0xff]
    %v5845 = vld [vmem:[%s5793 + $0x198] sm:$0xff]
    %v5846 = vld [vmem:[%s5793 + $0x1a0] sm:$0xff]
    %v5847 = vld [vmem:[%s5793 + $0x1a8] sm:$0xff]
    %v5848 = vld [vmem:[%s5793 + $0x1b0] sm:$0xff]
    %v5849 = vld [vmem:[%s5793 + $0x1b8] sm:$0xff]
    %v5850 = vld [vmem:[%s5793 + $0x1c0] sm:$0xff]
    %v5851 = vld [vmem:[%s5793 + $0x1c8] sm:$0xff]
    %v5852 = vld [vmem:[%s5793 + $0x1d0] sm:$0xff]
    %v5853 = vld [vmem:[%s5793 + $0x1d8] sm:$0xff]
    %v5854 = vld [vmem:[%s5793 + $0x1e0] sm:$0xff]
    %v5855 = vld [vmem:[%s5793 + $0x1e8] sm:$0xff]
    %v5856 = vld [vmem:[%s5793 + $0x1f0] sm:$0xff]
    %v5857 = vld [vmem:[%s5793 + $0x1f8] sm:$0xff]
    %v5858 = vld [vmem:[%s5793 + $0x200] sm:$0xff]
    %v5859 = vld [vmem:[%s5793 + $0x208] sm:$0xff]
    %v5860 = vld [vmem:[%s5793 + $0x210] sm:$0xff]
    %v5861 = vld [vmem:[%s5793 + $0x218] sm:$0xff]
    %v5862 = vld [vmem:[%s5793 + $0x220] sm:$0xff]
    %v5863 = vld [vmem:[%s5793 + $0x228] sm:$0xff]
    %v5864 = vld [vmem:[%s5793 + $0x230] sm:$0xff]
    %v5865 = vld [vmem:[%s5793 + $0x238] sm:$0xff]
    %v5866 = vld [vmem:[%s5793 + $0x240] sm:$0xff]
    %v5867 = vld [vmem:[%s5793 + $0x248] sm:$0xff]
    %v5868 = vld [vmem:[%s5793 + $0x250] sm:$0xff]
    %v5869 = vld [vmem:[%s5793 + $0x258] sm:$0xff]
    %v5870 = vld [vmem:[%s5793 + $0x260] sm:$0xff]
    %v5871 = vld [vmem:[%s5793 + $0x268] sm:$0xff]
    %v5872 = vld [vmem:[%s5793 + $0x270] sm:$0x7]
    %v5873 = vld [vmem:[%s5793 + $0x278] sm:$0x7]
    %v5874 = vrot.slane %v1779, 2
    %v5875 = vsel %vm447, %v2653, %v5874
    %v5876 = vrot.slane %v1780, 2
    %v5877 = vsel %vm447, %v2656, %v5876
    %v5878 = vrot.slane %v1781, 2
    %v5879 = vsel %vm447, %v2659, %v5878
    %v5884 = vsel %vm1971, %v5879, 0
    %v5886 = vsel %vm1971, %v5878, 0
    %v5889 = vsel %vm1109, %v5872, 0
    %v5892 = vsel %vm1109, %v5873, 0
    %5894 = vmatpush.msra.mxu0 %v5824
    %5895 = vmatpush.msra.mxu0 %v5822
    %5896 = vmatpush.msra.mxu0 %v5820
    %5897 = vmatpush.msra.mxu0 %v5818
    %5898 = vmatpush.msra.mxu0 %v5816
    %5899 = vmatpush.msra.mxu0 %v5814
    %5900 = vmatpush.msra.mxu0 %v5812
    %5901 = vmatpush.msra.mxu0 %v5810
    %5902 = vmatpush.msra.mxu0 %v5808
    %5903 = vmatpush.msra.mxu0 %v5806
    %5904 = vmatpush.msra.mxu0 %v5804
    %5905 = vmatpush.msra.mxu0 %v5802
    %5906 = vmatpush.msra.mxu0 %v5800
    %5907 = vmatpush.msra.mxu0 %v5798
    %5908 = vmatpush.msra.mxu0 %v5796
    %5909 = vmatpush.msra.mxu0 %v5794
    %5910 = vmatmul.f32.gmra.mxu0 %v5875
    %v5911 = vpop.f32.mrf.mxu0
    %v5912 = vadd.f32 0.0, %v5911
    %5913 = vmatmul.f32.gmra.mxu0 %v5874
    %v5914 = vpop.f32.mrf.mxu0
    %v5915 = vadd.f32 0.0, %v5914
    %5916 = vdwg.mxu0
    %5917 = vmatpush.msra.mxu0 %v5856
    %5918 = vmatpush.msra.mxu0 %v5854
    %5919 = vmatpush.msra.mxu0 %v5852
    %5920 = vmatpush.msra.mxu0 %v5850
    %5921 = vmatpush.msra.mxu0 %v5848
    %5922 = vmatpush.msra.mxu0 %v5846
    %5923 = vmatpush.msra.mxu0 %v5844
    %5924 = vmatpush.msra.mxu0 %v5842
    %5925 = vmatpush.msra.mxu0 %v5840
    %5926 = vmatpush.msra.mxu0 %v5838
    %5927 = vmatpush.msra.mxu0 %v5836
    %5928 = vmatpush.msra.mxu0 %v5834
    %5929 = vmatpush.msra.mxu0 %v5832
    %5930 = vmatpush.msra.mxu0 %v5830
    %5931 = vmatpush.msra.mxu0 %v5828
    %5932 = vmatpush.msra.mxu0 %v5826
    %5933 = vmatmul.f32.gmra.mxu0 %v5877
    %v5934 = vpop.f32.mrf.mxu0
    %v5935 = vadd.f32 %v5912, %v5934
    %5936 = vmatmul.f32.gmra.mxu0 %v5876
    %v5937 = vpop.f32.mrf.mxu0
    %v5938 = vadd.f32 %v5915, %v5937
    %5939 = vdwg.mxu0
    %5940 = vmatpush.msra.mxu0 0.0
    %5941 = vmatpush.msra.mxu0 0.0
    %5942 = vmatpush.msra.mxu0 0.0
    %5943 = vmatpush.msra.mxu0 0.0
    %5944 = vmatpush.msra.mxu0 0.0
    %5945 = vmatpush.msra.mxu0 0.0
    %5946 = vmatpush.msra.mxu0 0.0
    %5947 = vmatpush.msra.mxu0 0.0
    %5948 = vmatpush.msra.mxu0 %v5889
    %5949 = vmatpush.msra.mxu0 %v5870
    %5950 = vmatpush.msra.mxu0 %v5868
    %5951 = vmatpush.msra.mxu0 %v5866
    %5952 = vmatpush.msra.mxu0 %v5864
    %5953 = vmatpush.msra.mxu0 %v5862
    %5954 = vmatpush.msra.mxu0 %v5860
    %5955 = vmatpush.msra.mxu0 %v5858
    %5956 = vmatmul.f32.gmra.mxu0 %v5884
    %v5957 = vpop.f32.mrf.mxu0
    %v5958 = vadd.f32 %v5935, %v5957
    %5959 = vmatmul.f32.gmra.mxu0 %v5886
    %v5960 = vpop.f32.mrf.mxu0
    %v5961 = vadd.f32 %v5938, %v5960
    %5962 = vdwg.mxu0
    %5963 = vmatpush.msra.mxu0 %v5825
    %5964 = vmatpush.msra.mxu0 %v5823
    %5965 = vmatpush.msra.mxu0 %v5821
    %5966 = vmatpush.msra.mxu0 %v5819
    %5967 = vmatpush.msra.mxu0 %v5817
    %5968 = vmatpush.msra.mxu0 %v5815
    %5969 = vmatpush.msra.mxu0 %v5813
    %5970 = vmatpush.msra.mxu0 %v5811
    %5971 = vmatpush.msra.mxu0 %v5809
    %5972 = vmatpush.msra.mxu0 %v5807
    %5973 = vmatpush.msra.mxu0 %v5805
    %5974 = vmatpush.msra.mxu0 %v5803
    %5975 = vmatpush.msra.mxu0 %v5801
    %5976 = vmatpush.msra.mxu0 %v5799
    %5977 = vmatpush.msra.mxu0 %v5797
    %5978 = vmatpush.msra.mxu0 %v5795
    %5979 = vmatmul.f32.gmra.mxu0 %v5875
    %v5980 = vpop.f32.mrf.mxu0
    %v5981 = vadd.f32 0.0, %v5980
    %5982 = vmatmul.f32.gmra.mxu0 %v5874
    %v5983 = vpop.f32.mrf.mxu0
    %v5984 = vadd.f32 0.0, %v5983
    %5985 = vdwg.mxu0
    %5986 = vmatpush.msra.mxu0 %v5857
    %5987 = vmatpush.msra.mxu0 %v5855
    %5988 = vmatpush.msra.mxu0 %v5853
    %5989 = vmatpush.msra.mxu0 %v5851
    %5990 = vmatpush.msra.mxu0 %v5849
    %5991 = vmatpush.msra.mxu0 %v5847
    %5992 = vmatpush.msra.mxu0 %v5845
    %5993 = vmatpush.msra.mxu0 %v5843
    %5994 = vmatpush.msra.mxu0 %v5841
    %5995 = vmatpush.msra.mxu0 %v5839
    %5996 = vmatpush.msra.mxu0 %v5837
    %5997 = vmatpush.msra.mxu0 %v5835
    %5998 = vmatpush.msra.mxu0 %v5833
    %5999 = vmatpush.msra.mxu0 %v5831
    %6000 = vmatpush.msra.mxu0 %v5829
    %6001 = vmatpush.msra.mxu0 %v5827
    %6002 = vmatmul.f32.gmra.mxu0 %v5877
    %v6003 = vpop.f32.mrf.mxu0
    %v6004 = vadd.f32 %v5981, %v6003
    %6005 = vmatmul.f32.gmra.mxu0 %v5876
    %v6006 = vpop.f32.mrf.mxu0
    %v6007 = vadd.f32 %v5984, %v6006
    %6008 = vdwg.mxu0
    %6009 = vmatpush.msra.mxu0 0.0
    %6010 = vmatpush.msra.mxu0 0.0
    %6011 = vmatpush.msra.mxu0 0.0
    %6012 = vmatpush.msra.mxu0 0.0
    %6013 = vmatpush.msra.mxu0 0.0
    %6014 = vmatpush.msra.mxu0 0.0
    %6015 = vmatpush.msra.mxu0 0.0
    %6016 = vmatpush.msra.mxu0 0.0
    %6017 = vmatpush.msra.mxu0 %v5892
    %6018 = vmatpush.msra.mxu0 %v5871
    %6019 = vmatpush.msra.mxu0 %v5869
    %6020 = vmatpush.msra.mxu0 %v5867
    %6021 = vmatpush.msra.mxu0 %v5865
    %6022 = vmatpush.msra.mxu0 %v5863
    %6023 = vmatpush.msra.mxu0 %v5861
    %6024 = vmatpush.msra.mxu0 %v5859
    %6025 = vmatmul.f32.gmra.mxu0 %v5884
    %v6026 = vpop.f32.mrf.mxu0
    %v6027 = vadd.f32 %v6004, %v6026
    %6028 = vmatmul.f32.gmra.mxu0 %v5886
    %v6029 = vpop.f32.mrf.mxu0
    %v6030 = vadd.f32 %v6007, %v6029
    %6031 = vdwg.mxu0
    %v6032 = vadd.f32 %v5633, %v5958
    %v6033 = vadd.f32 %v5634, %v6027
    %v6034 = vadd.f32 %v5635, %v5961
    %v6035 = vadd.f32 %v5636, %v6030
    %v6036 = vrot.slane %v1788, 2
    %v6037 = vsel %vm447, %v2818, %v6036
    %v6038 = vrot.slane %v1789, 2
    %v6039 = vsel %vm447, %v2821, %v6038
    %v6040 = vrot.slane %v1790, 2
    %v6041 = vsel %vm447, %v2824, %v6040
    %v6046 = vsel %vm1971, %v6041, 0
    %v6048 = vsel %vm1971, %v6040, 0
    %6050 = vmatpush.msra.mxu0 %v5824
    %6051 = vmatpush.msra.mxu0 %v5822
    %6052 = vmatpush.msra.mxu0 %v5820
    %6053 = vmatpush.msra.mxu0 %v5818
    %6054 = vmatpush.msra.mxu0 %v5816
    %6055 = vmatpush.msra.mxu0 %v5814
    %6056 = vmatpush.msra.mxu0 %v5812
    %6057 = vmatpush.msra.mxu0 %v5810
    %6058 = vmatpush.msra.mxu0 %v5808
    %6059 = vmatpush.msra.mxu0 %v5806
    %6060 = vmatpush.msra.mxu0 %v5804
    %6061 = vmatpush.msra.mxu0 %v5802
    %6062 = vmatpush.msra.mxu0 %v5800
    %6063 = vmatpush.msra.mxu0 %v5798
    %6064 = vmatpush.msra.mxu0 %v5796
    %6065 = vmatpush.msra.mxu0 %v5794
    %6066 = vmatmul.f32.gmra.mxu0 %v6037
    %v6067 = vpop.f32.mrf.mxu0
    %v6068 = vadd.f32 0.0, %v6067
    %6069 = vmatmul.f32.gmra.mxu0 %v6036
    %v6070 = vpop.f32.mrf.mxu0
    %v6071 = vadd.f32 0.0, %v6070
    %6072 = vdwg.mxu0
    %6073 = vmatpush.msra.mxu0 %v5856
    %6074 = vmatpush.msra.mxu0 %v5854
    %6075 = vmatpush.msra.mxu0 %v5852
    %6076 = vmatpush.msra.mxu0 %v5850
    %6077 = vmatpush.msra.mxu0 %v5848
    %6078 = vmatpush.msra.mxu0 %v5846
    %6079 = vmatpush.msra.mxu0 %v5844
    %6080 = vmatpush.msra.mxu0 %v5842
    %6081 = vmatpush.msra.mxu0 %v5840
    %6082 = vmatpush.msra.mxu0 %v5838
    %6083 = vmatpush.msra.mxu0 %v5836
    %6084 = vmatpush.msra.mxu0 %v5834
    %6085 = vmatpush.msra.mxu0 %v5832
    %6086 = vmatpush.msra.mxu0 %v5830
    %6087 = vmatpush.msra.mxu0 %v5828
    %6088 = vmatpush.msra.mxu0 %v5826
    %6089 = vmatmul.f32.gmra.mxu0 %v6039
    %v6090 = vpop.f32.mrf.mxu0
    %v6091 = vadd.f32 %v6068, %v6090
    %6092 = vmatmul.f32.gmra.mxu0 %v6038
    %v6093 = vpop.f32.mrf.mxu0
    %v6094 = vadd.f32 %v6071, %v6093
    %6095 = vdwg.mxu0
    %6096 = vmatpush.msra.mxu0 0.0
    %6097 = vmatpush.msra.mxu0 0.0
    %6098 = vmatpush.msra.mxu0 0.0
    %6099 = vmatpush.msra.mxu0 0.0
    %6100 = vmatpush.msra.mxu0 0.0
    %6101 = vmatpush.msra.mxu0 0.0
    %6102 = vmatpush.msra.mxu0 0.0
    %6103 = vmatpush.msra.mxu0 0.0
    %6104 = vmatpush.msra.mxu0 %v5889
    %6105 = vmatpush.msra.mxu0 %v5870
    %6106 = vmatpush.msra.mxu0 %v5868
    %6107 = vmatpush.msra.mxu0 %v5866
    %6108 = vmatpush.msra.mxu0 %v5864
    %6109 = vmatpush.msra.mxu0 %v5862
    %6110 = vmatpush.msra.mxu0 %v5860
    %6111 = vmatpush.msra.mxu0 %v5858
    %6112 = vmatmul.f32.gmra.mxu0 %v6046
    %v6113 = vpop.f32.mrf.mxu0
    %v6114 = vadd.f32 %v6091, %v6113
    %6115 = vmatmul.f32.gmra.mxu0 %v6048
    %v6116 = vpop.f32.mrf.mxu0
    %v6117 = vadd.f32 %v6094, %v6116
    %6118 = vdwg.mxu0
    %6119 = vmatpush.msra.mxu0 %v5825
    %6120 = vmatpush.msra.mxu0 %v5823
    %6121 = vmatpush.msra.mxu0 %v5821
    %6122 = vmatpush.msra.mxu0 %v5819
    %6123 = vmatpush.msra.mxu0 %v5817
    %6124 = vmatpush.msra.mxu0 %v5815
    %6125 = vmatpush.msra.mxu0 %v5813
    %6126 = vmatpush.msra.mxu0 %v5811
    %6127 = vmatpush.msra.mxu0 %v5809
    %6128 = vmatpush.msra.mxu0 %v5807
    %6129 = vmatpush.msra.mxu0 %v5805
    %6130 = vmatpush.msra.mxu0 %v5803
    %6131 = vmatpush.msra.mxu0 %v5801
    %6132 = vmatpush.msra.mxu0 %v5799
    %6133 = vmatpush.msra.mxu0 %v5797
    %6134 = vmatpush.msra.mxu0 %v5795
    %6135 = vmatmul.f32.gmra.mxu0 %v6037
    %v6136 = vpop.f32.mrf.mxu0
    %v6137 = vadd.f32 0.0, %v6136
    %6138 = vmatmul.f32.gmra.mxu0 %v6036
    %v6139 = vpop.f32.mrf.mxu0
    %v6140 = vadd.f32 0.0, %v6139
    %6141 = vdwg.mxu0
    %6142 = vmatpush.msra.mxu0 %v5857
    %6143 = vmatpush.msra.mxu0 %v5855
    %6144 = vmatpush.msra.mxu0 %v5853
    %6145 = vmatpush.msra.mxu0 %v5851
    %6146 = vmatpush.msra.mxu0 %v5849
    %6147 = vmatpush.msra.mxu0 %v5847
    %6148 = vmatpush.msra.mxu0 %v5845
    %6149 = vmatpush.msra.mxu0 %v5843
    %6150 = vmatpush.msra.mxu0 %v5841
    %6151 = vmatpush.msra.mxu0 %v5839
    %6152 = vmatpush.msra.mxu0 %v5837
    %6153 = vmatpush.msra.mxu0 %v5835
    %6154 = vmatpush.msra.mxu0 %v5833
    %6155 = vmatpush.msra.mxu0 %v5831
    %6156 = vmatpush.msra.mxu0 %v5829
    %6157 = vmatpush.msra.mxu0 %v5827
    %6158 = vmatmul.f32.gmra.mxu0 %v6039
    %v6159 = vpop.f32.mrf.mxu0
    %v6160 = vadd.f32 %v6137, %v6159
    %6161 = vmatmul.f32.gmra.mxu0 %v6038
    %v6162 = vpop.f32.mrf.mxu0
    %v6163 = vadd.f32 %v6140, %v6162
    %6164 = vdwg.mxu0
    %6165 = vmatpush.msra.mxu0 0.0
    %6166 = vmatpush.msra.mxu0 0.0
    %6167 = vmatpush.msra.mxu0 0.0
    %6168 = vmatpush.msra.mxu0 0.0
    %6169 = vmatpush.msra.mxu0 0.0
    %6170 = vmatpush.msra.mxu0 0.0
    %6171 = vmatpush.msra.mxu0 0.0
    %6172 = vmatpush.msra.mxu0 0.0
    %6173 = vmatpush.msra.mxu0 %v5892
    %6174 = vmatpush.msra.mxu0 %v5871
    %6175 = vmatpush.msra.mxu0 %v5869
    %6176 = vmatpush.msra.mxu0 %v5867
    %6177 = vmatpush.msra.mxu0 %v5865
    %6178 = vmatpush.msra.mxu0 %v5863
    %6179 = vmatpush.msra.mxu0 %v5861
    %6180 = vmatpush.msra.mxu0 %v5859
    %6181 = vmatmul.f32.gmra.mxu0 %v6046
    %v6182 = vpop.f32.mrf.mxu0
    %v6183 = vadd.f32 %v6160, %v6182
    %6184 = vmatmul.f32.gmra.mxu0 %v6048
    %v6185 = vpop.f32.mrf.mxu0
    %v6186 = vadd.f32 %v6163, %v6185
    %6187 = vdwg.mxu0
    %v6188 = vadd.f32 %v5789, %v6114
    %v6189 = vadd.f32 %v5790, %v6183
    %v6190 = vadd.f32 %v5791, %v6117
    %v6191 = vadd.f32 %v5792, %v6186
    %s6192 = scalar_lea.vmem %s3, 7040
    %v6193 = vld [vmem:[%s6192] sm:$0xff]
    %v6194 = vld [vmem:[%s6192 + $0x8] sm:$0xff]
    %v6195 = vld [vmem:[%s6192 + $0x10] sm:$0xff]
    %v6196 = vld [vmem:[%s6192 + $0x18] sm:$0xff]
    %v6197 = vld [vmem:[%s6192 + $0x20] sm:$0xff]
    %v6198 = vld [vmem:[%s6192 + $0x28] sm:$0xff]
    %v6199 = vld [vmem:[%s6192 + $0x30] sm:$0xff]
    %v6200 = vld [vmem:[%s6192 + $0x38] sm:$0xff]
    %v6201 = vld [vmem:[%s6192 + $0x40] sm:$0xff]
    %v6202 = vld [vmem:[%s6192 + $0x48] sm:$0xff]
    %v6203 = vld [vmem:[%s6192 + $0x50] sm:$0xff]
    %v6204 = vld [vmem:[%s6192 + $0x58] sm:$0xff]
    %v6205 = vld [vmem:[%s6192 + $0x60] sm:$0xff]
    %v6206 = vld [vmem:[%s6192 + $0x68] sm:$0xff]
    %v6207 = vld [vmem:[%s6192 + $0x70] sm:$0xff]
    %v6208 = vld [vmem:[%s6192 + $0x78] sm:$0xff]
    %v6209 = vld [vmem:[%s6192 + $0x80] sm:$0xff]
    %v6210 = vld [vmem:[%s6192 + $0x88] sm:$0xff]
    %v6211 = vld [vmem:[%s6192 + $0x90] sm:$0xff]
    %v6212 = vld [vmem:[%s6192 + $0x98] sm:$0xff]
    %v6213 = vld [vmem:[%s6192 + $0xa0] sm:$0xff]
    %v6214 = vld [vmem:[%s6192 + $0xa8] sm:$0xff]
    %v6215 = vld [vmem:[%s6192 + $0xb0] sm:$0xff]
    %v6216 = vld [vmem:[%s6192 + $0xb8] sm:$0xff]
    %v6217 = vld [vmem:[%s6192 + $0xc0] sm:$0xff]
    %v6218 = vld [vmem:[%s6192 + $0xc8] sm:$0xff]
    %v6219 = vld [vmem:[%s6192 + $0xd0] sm:$0xff]
    %v6220 = vld [vmem:[%s6192 + $0xd8] sm:$0xff]
    %v6221 = vld [vmem:[%s6192 + $0xe0] sm:$0xff]
    %v6222 = vld [vmem:[%s6192 + $0xe8] sm:$0xff]
    %v6223 = vld [vmem:[%s6192 + $0xf0] sm:$0xff]
    %v6224 = vld [vmem:[%s6192 + $0xf8] sm:$0xff]
    %v6225 = vld [vmem:[%s6192 + $0x100] sm:$0xff]
    %v6226 = vld [vmem:[%s6192 + $0x108] sm:$0xff]
    %v6227 = vld [vmem:[%s6192 + $0x110] sm:$0xff]
    %v6228 = vld [vmem:[%s6192 + $0x118] sm:$0xff]
    %v6229 = vld [vmem:[%s6192 + $0x120] sm:$0xff]
    %v6230 = vld [vmem:[%s6192 + $0x128] sm:$0xff]
    %v6231 = vld [vmem:[%s6192 + $0x130] sm:$0xff]
    %v6232 = vld [vmem:[%s6192 + $0x138] sm:$0xff]
    %v6233 = vld [vmem:[%s6192 + $0x140] sm:$0xff]
    %v6234 = vld [vmem:[%s6192 + $0x148] sm:$0xff]
    %v6235 = vld [vmem:[%s6192 + $0x150] sm:$0xff]
    %v6236 = vld [vmem:[%s6192 + $0x158] sm:$0xff]
    %v6237 = vld [vmem:[%s6192 + $0x160] sm:$0xff]
    %v6238 = vld [vmem:[%s6192 + $0x168] sm:$0xff]
    %v6239 = vld [vmem:[%s6192 + $0x170] sm:$0xff]
    %v6240 = vld [vmem:[%s6192 + $0x178] sm:$0xff]
    %v6241 = vld [vmem:[%s6192 + $0x180] sm:$0xff]
    %v6242 = vld [vmem:[%s6192 + $0x188] sm:$0xff]
    %v6243 = vld [vmem:[%s6192 + $0x190] sm:$0xff]
    %v6244 = vld [vmem:[%s6192 + $0x198] sm:$0xff]
    %v6245 = vld [vmem:[%s6192 + $0x1a0] sm:$0xff]
    %v6246 = vld [vmem:[%s6192 + $0x1a8] sm:$0xff]
    %v6247 = vld [vmem:[%s6192 + $0x1b0] sm:$0xff]
    %v6248 = vld [vmem:[%s6192 + $0x1b8] sm:$0xff]
    %v6249 = vld [vmem:[%s6192 + $0x1c0] sm:$0xff]
    %v6250 = vld [vmem:[%s6192 + $0x1c8] sm:$0xff]
    %v6251 = vld [vmem:[%s6192 + $0x1d0] sm:$0xff]
    %v6252 = vld [vmem:[%s6192 + $0x1d8] sm:$0xff]
    %v6253 = vld [vmem:[%s6192 + $0x1e0] sm:$0xff]
    %v6254 = vld [vmem:[%s6192 + $0x1e8] sm:$0xff]
    %v6255 = vld [vmem:[%s6192 + $0x1f0] sm:$0xff]
    %v6256 = vld [vmem:[%s6192 + $0x1f8] sm:$0xff]
    %v6257 = vld [vmem:[%s6192 + $0x200] sm:$0xff]
    %v6258 = vld [vmem:[%s6192 + $0x208] sm:$0xff]
    %v6259 = vld [vmem:[%s6192 + $0x210] sm:$0xff]
    %v6260 = vld [vmem:[%s6192 + $0x218] sm:$0xff]
    %v6261 = vld [vmem:[%s6192 + $0x220] sm:$0xff]
    %v6262 = vld [vmem:[%s6192 + $0x228] sm:$0xff]
    %v6263 = vld [vmem:[%s6192 + $0x230] sm:$0xff]
    %v6264 = vld [vmem:[%s6192 + $0x238] sm:$0xff]
    %v6265 = vld [vmem:[%s6192 + $0x240] sm:$0xff]
    %v6266 = vld [vmem:[%s6192 + $0x248] sm:$0xff]
    %v6267 = vld [vmem:[%s6192 + $0x250] sm:$0xff]
    %v6268 = vld [vmem:[%s6192 + $0x258] sm:$0xff]
    %v6269 = vld [vmem:[%s6192 + $0x260] sm:$0xff]
    %v6270 = vld [vmem:[%s6192 + $0x268] sm:$0xff]
    %v6271 = vld [vmem:[%s6192 + $0x270] sm:$0x7]
    %v6272 = vld [vmem:[%s6192 + $0x278] sm:$0x7]
    %v6273 = vrot.slane %v1779, 3
    %v6274 = vsel %vm666, %v3058, %v6273
    %v6275 = vrot.slane %v1780, 3
    %v6276 = vsel %vm666, %v3061, %v6275
    %v6277 = vrot.slane %v1781, 3
    %v6278 = vsel %vm666, %v3064, %v6277
    %v6283 = vsel %vm1971, %v6278, 0
    %v6285 = vsel %vm1971, %v6277, 0
    %v6288 = vsel %vm1109, %v6271, 0
    %v6291 = vsel %vm1109, %v6272, 0
    %6293 = vmatpush.msra.mxu0 %v6223
    %6294 = vmatpush.msra.mxu0 %v6221
    %6295 = vmatpush.msra.mxu0 %v6219
    %6296 = vmatpush.msra.mxu0 %v6217
    %6297 = vmatpush.msra.mxu0 %v6215
    %6298 = vmatpush.msra.mxu0 %v6213
    %6299 = vmatpush.msra.mxu0 %v6211
    %6300 = vmatpush.msra.mxu0 %v6209
    %6301 = vmatpush.msra.mxu0 %v6207
    %6302 = vmatpush.msra.mxu0 %v6205
    %6303 = vmatpush.msra.mxu0 %v6203
    %6304 = vmatpush.msra.mxu0 %v6201
    %6305 = vmatpush.msra.mxu0 %v6199
    %6306 = vmatpush.msra.mxu0 %v6197
    %6307 = vmatpush.msra.mxu0 %v6195
    %6308 = vmatpush.msra.mxu0 %v6193
    %6309 = vmatmul.f32.gmra.mxu0 %v6274
    %v6310 = vpop.f32.mrf.mxu0
    %v6311 = vadd.f32 0.0, %v6310
    %6312 = vmatmul.f32.gmra.mxu0 %v6273
    %v6313 = vpop.f32.mrf.mxu0
    %v6314 = vadd.f32 0.0, %v6313
    %6315 = vdwg.mxu0
    %6316 = vmatpush.msra.mxu0 %v6255
    %6317 = vmatpush.msra.mxu0 %v6253
    %6318 = vmatpush.msra.mxu0 %v6251
    %6319 = vmatpush.msra.mxu0 %v6249
    %6320 = vmatpush.msra.mxu0 %v6247
    %6321 = vmatpush.msra.mxu0 %v6245
    %6322 = vmatpush.msra.mxu0 %v6243
    %6323 = vmatpush.msra.mxu0 %v6241
    %6324 = vmatpush.msra.mxu0 %v6239
    %6325 = vmatpush.msra.mxu0 %v6237
    %6326 = vmatpush.msra.mxu0 %v6235
    %6327 = vmatpush.msra.mxu0 %v6233
    %6328 = vmatpush.msra.mxu0 %v6231
    %6329 = vmatpush.msra.mxu0 %v6229
    %6330 = vmatpush.msra.mxu0 %v6227
    %6331 = vmatpush.msra.mxu0 %v6225
    %6332 = vmatmul.f32.gmra.mxu0 %v6276
    %v6333 = vpop.f32.mrf.mxu0
    %v6334 = vadd.f32 %v6311, %v6333
    %6335 = vmatmul.f32.gmra.mxu0 %v6275
    %v6336 = vpop.f32.mrf.mxu0
    %v6337 = vadd.f32 %v6314, %v6336
    %6338 = vdwg.mxu0
    %6339 = vmatpush.msra.mxu0 0.0
    %6340 = vmatpush.msra.mxu0 0.0
    %6341 = vmatpush.msra.mxu0 0.0
    %6342 = vmatpush.msra.mxu0 0.0
    %6343 = vmatpush.msra.mxu0 0.0
    %6344 = vmatpush.msra.mxu0 0.0
    %6345 = vmatpush.msra.mxu0 0.0
    %6346 = vmatpush.msra.mxu0 0.0
    %6347 = vmatpush.msra.mxu0 %v6288
    %6348 = vmatpush.msra.mxu0 %v6269
    %6349 = vmatpush.msra.mxu0 %v6267
    %6350 = vmatpush.msra.mxu0 %v6265
    %6351 = vmatpush.msra.mxu0 %v6263
    %6352 = vmatpush.msra.mxu0 %v6261
    %6353 = vmatpush.msra.mxu0 %v6259
    %6354 = vmatpush.msra.mxu0 %v6257
    %6355 = vmatmul.f32.gmra.mxu0 %v6283
    %v6356 = vpop.f32.mrf.mxu0
    %v6357 = vadd.f32 %v6334, %v6356
    %6358 = vmatmul.f32.gmra.mxu0 %v6285
    %v6359 = vpop.f32.mrf.mxu0
    %v6360 = vadd.f32 %v6337, %v6359
    %6361 = vdwg.mxu0
    %6362 = vmatpush.msra.mxu0 %v6224
    %6363 = vmatpush.msra.mxu0 %v6222
    %6364 = vmatpush.msra.mxu0 %v6220
    %6365 = vmatpush.msra.mxu0 %v6218
    %6366 = vmatpush.msra.mxu0 %v6216
    %6367 = vmatpush.msra.mxu0 %v6214
    %6368 = vmatpush.msra.mxu0 %v6212
    %6369 = vmatpush.msra.mxu0 %v6210
    %6370 = vmatpush.msra.mxu0 %v6208
    %6371 = vmatpush.msra.mxu0 %v6206
    %6372 = vmatpush.msra.mxu0 %v6204
    %6373 = vmatpush.msra.mxu0 %v6202
    %6374 = vmatpush.msra.mxu0 %v6200
    %6375 = vmatpush.msra.mxu0 %v6198
    %6376 = vmatpush.msra.mxu0 %v6196
    %6377 = vmatpush.msra.mxu0 %v6194
    %6378 = vmatmul.f32.gmra.mxu0 %v6274
    %v6379 = vpop.f32.mrf.mxu0
    %v6380 = vadd.f32 0.0, %v6379
    %6381 = vmatmul.f32.gmra.mxu0 %v6273
    %v6382 = vpop.f32.mrf.mxu0
    %v6383 = vadd.f32 0.0, %v6382
    %6384 = vdwg.mxu0
    %6385 = vmatpush.msra.mxu0 %v6256
    %6386 = vmatpush.msra.mxu0 %v6254
    %6387 = vmatpush.msra.mxu0 %v6252
    %6388 = vmatpush.msra.mxu0 %v6250
    %6389 = vmatpush.msra.mxu0 %v6248
    %6390 = vmatpush.msra.mxu0 %v6246
    %6391 = vmatpush.msra.mxu0 %v6244
    %6392 = vmatpush.msra.mxu0 %v6242
    %6393 = vmatpush.msra.mxu0 %v6240
    %6394 = vmatpush.msra.mxu0 %v6238
    %6395 = vmatpush.msra.mxu0 %v6236
    %6396 = vmatpush.msra.mxu0 %v6234
    %6397 = vmatpush.msra.mxu0 %v6232
    %6398 = vmatpush.msra.mxu0 %v6230
    %6399 = vmatpush.msra.mxu0 %v6228
    %6400 = vmatpush.msra.mxu0 %v6226
    %6401 = vmatmul.f32.gmra.mxu0 %v6276
    %v6402 = vpop.f32.mrf.mxu0
    %v6403 = vadd.f32 %v6380, %v6402
    %6404 = vmatmul.f32.gmra.mxu0 %v6275
    %v6405 = vpop.f32.mrf.mxu0
    %v6406 = vadd.f32 %v6383, %v6405
    %6407 = vdwg.mxu0
    %6408 = vmatpush.msra.mxu0 0.0
    %6409 = vmatpush.msra.mxu0 0.0
    %6410 = vmatpush.msra.mxu0 0.0
    %6411 = vmatpush.msra.mxu0 0.0
    %6412 = vmatpush.msra.mxu0 0.0
    %6413 = vmatpush.msra.mxu0 0.0
    %6414 = vmatpush.msra.mxu0 0.0
    %6415 = vmatpush.msra.mxu0 0.0
    %6416 = vmatpush.msra.mxu0 %v6291
    %6417 = vmatpush.msra.mxu0 %v6270
    %6418 = vmatpush.msra.mxu0 %v6268
    %6419 = vmatpush.msra.mxu0 %v6266
    %6420 = vmatpush.msra.mxu0 %v6264
    %6421 = vmatpush.msra.mxu0 %v6262
    %6422 = vmatpush.msra.mxu0 %v6260
    %6423 = vmatpush.msra.mxu0 %v6258
    %6424 = vmatmul.f32.gmra.mxu0 %v6283
    %v6425 = vpop.f32.mrf.mxu0
    %v6426 = vadd.f32 %v6403, %v6425
    %6427 = vmatmul.f32.gmra.mxu0 %v6285
    %v6428 = vpop.f32.mrf.mxu0
    %v6429 = vadd.f32 %v6406, %v6428
    %6430 = vdwg.mxu0
    %v6431 = vadd.f32 %v6032, %v6357
    %v6432 = vadd.f32 %v6033, %v6426
    %v6433 = vadd.f32 %v6034, %v6360
    %v6434 = vadd.f32 %v6035, %v6429
    %v6435 = vrot.slane %v1788, 3
    %v6436 = vsel %vm666, %v3223, %v6435
    %v6437 = vrot.slane %v1789, 3
    %v6438 = vsel %vm666, %v3226, %v6437
    %v6439 = vrot.slane %v1790, 3
    %v6440 = vsel %vm666, %v3229, %v6439
    %v6445 = vsel %vm1971, %v6440, 0
    %v6447 = vsel %vm1971, %v6439, 0
    %6449 = vmatpush.msra.mxu0 %v6223
    %6450 = vmatpush.msra.mxu0 %v6221
    %6451 = vmatpush.msra.mxu0 %v6219
    %6452 = vmatpush.msra.mxu0 %v6217
    %6453 = vmatpush.msra.mxu0 %v6215
    %6454 = vmatpush.msra.mxu0 %v6213
    %6455 = vmatpush.msra.mxu0 %v6211
    %6456 = vmatpush.msra.mxu0 %v6209
    %6457 = vmatpush.msra.mxu0 %v6207
    %6458 = vmatpush.msra.mxu0 %v6205
    %6459 = vmatpush.msra.mxu0 %v6203
    %6460 = vmatpush.msra.mxu0 %v6201
    %6461 = vmatpush.msra.mxu0 %v6199
    %6462 = vmatpush.msra.mxu0 %v6197
    %6463 = vmatpush.msra.mxu0 %v6195
    %6464 = vmatpush.msra.mxu0 %v6193
    %6465 = vmatmul.f32.gmra.mxu0 %v6436
    %v6466 = vpop.f32.mrf.mxu0
    %v6467 = vadd.f32 0.0, %v6466
    %6468 = vmatmul.f32.gmra.mxu0 %v6435
    %v6469 = vpop.f32.mrf.mxu0
    %v6470 = vadd.f32 0.0, %v6469
    %6471 = vdwg.mxu0
    %6472 = vmatpush.msra.mxu0 %v6255
    %6473 = vmatpush.msra.mxu0 %v6253
    %6474 = vmatpush.msra.mxu0 %v6251
    %6475 = vmatpush.msra.mxu0 %v6249
    %6476 = vmatpush.msra.mxu0 %v6247
    %6477 = vmatpush.msra.mxu0 %v6245
    %6478 = vmatpush.msra.mxu0 %v6243
    %6479 = vmatpush.msra.mxu0 %v6241
    %6480 = vmatpush.msra.mxu0 %v6239
    %6481 = vmatpush.msra.mxu0 %v6237
    %6482 = vmatpush.msra.mxu0 %v6235
    %6483 = vmatpush.msra.mxu0 %v6233
    %6484 = vmatpush.msra.mxu0 %v6231
    %6485 = vmatpush.msra.mxu0 %v6229
    %6486 = vmatpush.msra.mxu0 %v6227
    %6487 = vmatpush.msra.mxu0 %v6225
    %6488 = vmatmul.f32.gmra.mxu0 %v6438
    %v6489 = vpop.f32.mrf.mxu0
    %v6490 = vadd.f32 %v6467, %v6489
    %6491 = vmatmul.f32.gmra.mxu0 %v6437
    %v6492 = vpop.f32.mrf.mxu0
    %v6493 = vadd.f32 %v6470, %v6492
    %6494 = vdwg.mxu0
    %6495 = vmatpush.msra.mxu0 0.0
    %6496 = vmatpush.msra.mxu0 0.0
    %6497 = vmatpush.msra.mxu0 0.0
    %6498 = vmatpush.msra.mxu0 0.0
    %6499 = vmatpush.msra.mxu0 0.0
    %6500 = vmatpush.msra.mxu0 0.0
    %6501 = vmatpush.msra.mxu0 0.0
    %6502 = vmatpush.msra.mxu0 0.0
    %6503 = vmatpush.msra.mxu0 %v6288
    %6504 = vmatpush.msra.mxu0 %v6269
    %6505 = vmatpush.msra.mxu0 %v6267
    %6506 = vmatpush.msra.mxu0 %v6265
    %6507 = vmatpush.msra.mxu0 %v6263
    %6508 = vmatpush.msra.mxu0 %v6261
    %6509 = vmatpush.msra.mxu0 %v6259
    %6510 = vmatpush.msra.mxu0 %v6257
    %6511 = vmatmul.f32.gmra.mxu0 %v6445
    %v6512 = vpop.f32.mrf.mxu0
    %v6513 = vadd.f32 %v6490, %v6512
    %6514 = vmatmul.f32.gmra.mxu0 %v6447
    %v6515 = vpop.f32.mrf.mxu0
    %v6516 = vadd.f32 %v6493, %v6515
    %6517 = vdwg.mxu0
    %6518 = vmatpush.msra.mxu0 %v6224
    %6519 = vmatpush.msra.mxu0 %v6222
    %6520 = vmatpush.msra.mxu0 %v6220
    %6521 = vmatpush.msra.mxu0 %v6218
    %6522 = vmatpush.msra.mxu0 %v6216
    %6523 = vmatpush.msra.mxu0 %v6214
    %6524 = vmatpush.msra.mxu0 %v6212
    %6525 = vmatpush.msra.mxu0 %v6210
    %6526 = vmatpush.msra.mxu0 %v6208
    %6527 = vmatpush.msra.mxu0 %v6206
    %6528 = vmatpush.msra.mxu0 %v6204
    %6529 = vmatpush.msra.mxu0 %v6202
    %6530 = vmatpush.msra.mxu0 %v6200
    %6531 = vmatpush.msra.mxu0 %v6198
    %6532 = vmatpush.msra.mxu0 %v6196
    %6533 = vmatpush.msra.mxu0 %v6194
    %6534 = vmatmul.f32.gmra.mxu0 %v6436
    %v6535 = vpop.f32.mrf.mxu0
    %v6536 = vadd.f32 0.0, %v6535
    %6537 = vmatmul.f32.gmra.mxu0 %v6435
    %v6538 = vpop.f32.mrf.mxu0
    %v6539 = vadd.f32 0.0, %v6538
    %6540 = vdwg.mxu0
    %6541 = vmatpush.msra.mxu0 %v6256
    %6542 = vmatpush.msra.mxu0 %v6254
    %6543 = vmatpush.msra.mxu0 %v6252
    %6544 = vmatpush.msra.mxu0 %v6250
    %6545 = vmatpush.msra.mxu0 %v6248
    %6546 = vmatpush.msra.mxu0 %v6246
    %6547 = vmatpush.msra.mxu0 %v6244
    %6548 = vmatpush.msra.mxu0 %v6242
    %6549 = vmatpush.msra.mxu0 %v6240
    %6550 = vmatpush.msra.mxu0 %v6238
    %6551 = vmatpush.msra.mxu0 %v6236
    %6552 = vmatpush.msra.mxu0 %v6234
    %6553 = vmatpush.msra.mxu0 %v6232
    %6554 = vmatpush.msra.mxu0 %v6230
    %6555 = vmatpush.msra.mxu0 %v6228
    %6556 = vmatpush.msra.mxu0 %v6226
    %6557 = vmatmul.f32.gmra.mxu0 %v6438
    %v6558 = vpop.f32.mrf.mxu0
    %v6559 = vadd.f32 %v6536, %v6558
    %6560 = vmatmul.f32.gmra.mxu0 %v6437
    %v6561 = vpop.f32.mrf.mxu0
    %v6562 = vadd.f32 %v6539, %v6561
    %6563 = vdwg.mxu0
    %6564 = vmatpush.msra.mxu0 0.0
    %6565 = vmatpush.msra.mxu0 0.0
    %6566 = vmatpush.msra.mxu0 0.0
    %6567 = vmatpush.msra.mxu0 0.0
    %6568 = vmatpush.msra.mxu0 0.0
    %6569 = vmatpush.msra.mxu0 0.0
    %6570 = vmatpush.msra.mxu0 0.0
    %6571 = vmatpush.msra.mxu0 0.0
    %6572 = vmatpush.msra.mxu0 %v6291
    %6573 = vmatpush.msra.mxu0 %v6270
    %6574 = vmatpush.msra.mxu0 %v6268
    %6575 = vmatpush.msra.mxu0 %v6266
    %6576 = vmatpush.msra.mxu0 %v6264
    %6577 = vmatpush.msra.mxu0 %v6262
    %6578 = vmatpush.msra.mxu0 %v6260
    %6579 = vmatpush.msra.mxu0 %v6258
    %6580 = vmatmul.f32.gmra.mxu0 %v6445
    %v6581 = vpop.f32.mrf.mxu0
    %v6582 = vadd.f32 %v6559, %v6581
    %6583 = vmatmul.f32.gmra.mxu0 %v6447
    %v6584 = vpop.f32.mrf.mxu0
    %v6585 = vadd.f32 %v6562, %v6584
    %6586 = vdwg.mxu0
    %v6587 = vadd.f32 %v6188, %v6513
    %v6588 = vadd.f32 %v6189, %v6582
    %v6589 = vadd.f32 %v6190, %v6516
    %v6590 = vadd.f32 %v6191, %v6585
    %v6591 = vld [vmem:[%s4] sm:$0xff]
    %v6592 = vld [vmem:[%s4 + $0x8] sm:$0xff]
    %v6593 = vld [vmem:[%s4 + $0x10] sm:$0xff]
    %v6594 = vld [vmem:[%s4 + $0x18] sm:$0xff]
    %v6595 = vld [vmem:[%s4 + $0x20] sm:$0xff]
    %v6596 = vld [vmem:[%s4 + $0x28] sm:$0xff]
    %v6597 = vld [vmem:[%s4 + $0x30] sm:$0xff]
    %v6598 = vld [vmem:[%s4 + $0x38] sm:$0xff]
    %v6599 = vld [vmem:[%s4 + $0x40] sm:$0xff]
    %v6600 = vld [vmem:[%s4 + $0x48] sm:$0xff]
    %v6601 = vld [vmem:[%s4 + $0x50] sm:$0xff]
    %v6602 = vld [vmem:[%s4 + $0x58] sm:$0xff]
    %v6603 = vld [vmem:[%s4 + $0x60] sm:$0xff]
    %v6604 = vld [vmem:[%s4 + $0x68] sm:$0xff]
    %v6605 = vld [vmem:[%s4 + $0x70] sm:$0xff]
    %v6606 = vld [vmem:[%s4 + $0x78] sm:$0xff]
    %v6607 = vld [vmem:[%s4 + $0x80] sm:$0xff]
    %v6608 = vld [vmem:[%s4 + $0x88] sm:$0xff]
    %v6609 = vld [vmem:[%s4 + $0x90] sm:$0xff]
    %v6610 = vld [vmem:[%s4 + $0x98] sm:$0xff]
    %v6611 = vld [vmem:[%s4 + $0xa0] sm:$0xff]
    %v6612 = vld [vmem:[%s4 + $0xa8] sm:$0xff]
    %v6613 = vld [vmem:[%s4 + $0xb0] sm:$0xff]
    %v6614 = vld [vmem:[%s4 + $0xb8] sm:$0xff]
    %v6615 = vld [vmem:[%s4 + $0xc0] sm:$0xff]
    %v6616 = vld [vmem:[%s4 + $0xc8] sm:$0xff]
    %v6617 = vld [vmem:[%s4 + $0xd0] sm:$0xff]
    %v6618 = vld [vmem:[%s4 + $0xd8] sm:$0xff]
    %v6619 = vld [vmem:[%s4 + $0xe0] sm:$0xff]
    %v6620 = vld [vmem:[%s4 + $0xe8] sm:$0xff]
    %v6621 = vld [vmem:[%s4 + $0xf0] sm:$0xff]
    %v6622 = vld [vmem:[%s4 + $0xf8] sm:$0xff]
    %v6623 = vld [vmem:[%s4 + $0x100] sm:$0xff]
    %v6624 = vld [vmem:[%s4 + $0x108] sm:$0xff]
    %v6625 = vld [vmem:[%s4 + $0x110] sm:$0xff]
    %v6626 = vld [vmem:[%s4 + $0x118] sm:$0xff]
    %v6627 = vld [vmem:[%s4 + $0x120] sm:$0xff]
    %v6628 = vld [vmem:[%s4 + $0x128] sm:$0xff]
    %v6629 = vld [vmem:[%s4 + $0x130] sm:$0xff]
    %v6630 = vld [vmem:[%s4 + $0x138] sm:$0xff]
    %v6631 = vld [vmem:[%s4 + $0x140] sm:$0xff]
    %v6632 = vld [vmem:[%s4 + $0x148] sm:$0xff]
    %v6633 = vld [vmem:[%s4 + $0x150] sm:$0xff]
    %v6634 = vld [vmem:[%s4 + $0x158] sm:$0xff]
    %v6635 = vld [vmem:[%s4 + $0x160] sm:$0xff]
    %v6636 = vld [vmem:[%s4 + $0x168] sm:$0xff]
    %v6637 = vld [vmem:[%s4 + $0x170] sm:$0xff]
    %v6638 = vld [vmem:[%s4 + $0x178] sm:$0xff]
    %v6639 = vld [vmem:[%s4 + $0x180] sm:$0xff]
    %v6640 = vld [vmem:[%s4 + $0x188] sm:$0xff]
    %v6641 = vld [vmem:[%s4 + $0x190] sm:$0xff]
    %v6642 = vld [vmem:[%s4 + $0x198] sm:$0xff]
    %v6643 = vld [vmem:[%s4 + $0x1a0] sm:$0xff]
    %v6644 = vld [vmem:[%s4 + $0x1a8] sm:$0xff]
    %v6645 = vld [vmem:[%s4 + $0x1b0] sm:$0xff]
    %v6646 = vld [vmem:[%s4 + $0x1b8] sm:$0xff]
    %v6647 = vld [vmem:[%s4 + $0x1c0] sm:$0xff]
    %v6648 = vld [vmem:[%s4 + $0x1c8] sm:$0xff]
    %v6649 = vld [vmem:[%s4 + $0x1d0] sm:$0xff]
    %v6650 = vld [vmem:[%s4 + $0x1d8] sm:$0xff]
    %v6651 = vld [vmem:[%s4 + $0x1e0] sm:$0xff]
    %v6652 = vld [vmem:[%s4 + $0x1e8] sm:$0xff]
    %v6653 = vld [vmem:[%s4 + $0x1f0] sm:$0xff]
    %v6654 = vld [vmem:[%s4 + $0x1f8] sm:$0xff]
    %v6655 = vld [vmem:[%s4 + $0x200] sm:$0xff]
    %v6656 = vld [vmem:[%s4 + $0x208] sm:$0xff]
    %v6657 = vld [vmem:[%s4 + $0x210] sm:$0xff]
    %v6658 = vld [vmem:[%s4 + $0x218] sm:$0xff]
    %v6659 = vld [vmem:[%s4 + $0x220] sm:$0xff]
    %v6660 = vld [vmem:[%s4 + $0x228] sm:$0x3f]
    %v6661 = vld [vmem:[%s4 + $0x230] sm:$0x3f]
    %v6662 = vld [vmem:[%s4 + $0x238] sm:$0x3f]
    %s6663 = scalar_lea.vmem %s4, 576
    %v6664 = vld [vmem:[%s6663] sm:$0xff]
    %v6665 = vld [vmem:[%s6663 + $0x8] sm:$0xff]
    %v6666 = vld [vmem:[%s6663 + $0x10] sm:$0xff]
    %v6667 = vld [vmem:[%s6663 + $0x18] sm:$0xff]
    %v6668 = vld [vmem:[%s6663 + $0x20] sm:$0xff]
    %v6669 = vld [vmem:[%s6663 + $0x28] sm:$0xff]
    %v6670 = vld [vmem:[%s6663 + $0x30] sm:$0xff]
    %v6671 = vld [vmem:[%s6663 + $0x38] sm:$0xff]
    %v6672 = vld [vmem:[%s6663 + $0x40] sm:$0xff]
    %v6673 = vld [vmem:[%s6663 + $0x48] sm:$0xff]
    %v6674 = vld [vmem:[%s6663 + $0x50] sm:$0xff]
    %v6675 = vld [vmem:[%s6663 + $0x58] sm:$0xff]
    %v6676 = vld [vmem:[%s6663 + $0x60] sm:$0xff]
    %v6677 = vld [vmem:[%s6663 + $0x68] sm:$0xff]
    %v6678 = vld [vmem:[%s6663 + $0x70] sm:$0xff]
    %v6679 = vld [vmem:[%s6663 + $0x78] sm:$0xff]
    %v6680 = vld [vmem:[%s6663 + $0x80] sm:$0xff]
    %v6681 = vld [vmem:[%s6663 + $0x88] sm:$0xff]
    %v6682 = vld [vmem:[%s6663 + $0x90] sm:$0xff]
    %v6683 = vld [vmem:[%s6663 + $0x98] sm:$0xff]
    %v6684 = vld [vmem:[%s6663 + $0xa0] sm:$0xff]
    %v6685 = vld [vmem:[%s6663 + $0xa8] sm:$0xff]
    %v6686 = vld [vmem:[%s6663 + $0xb0] sm:$0xff]
    %v6687 = vld [vmem:[%s6663 + $0xb8] sm:$0xff]
    %v6688 = vld [vmem:[%s6663 + $0xc0] sm:$0xff]
    %v6689 = vld [vmem:[%s6663 + $0xc8] sm:$0xff]
    %v6690 = vld [vmem:[%s6663 + $0xd0] sm:$0xff]
    %v6691 = vld [vmem:[%s6663 + $0xd8] sm:$0xff]
    %v6692 = vld [vmem:[%s6663 + $0xe0] sm:$0xff]
    %v6693 = vld [vmem:[%s6663 + $0xe8] sm:$0xff]
    %v6694 = vld [vmem:[%s6663 + $0xf0] sm:$0xff]
    %v6695 = vld [vmem:[%s6663 + $0xf8] sm:$0xff]
    %v6696 = vld [vmem:[%s6663 + $0x100] sm:$0xff]
    %v6697 = vld [vmem:[%s6663 + $0x108] sm:$0xff]
    %v6698 = vld [vmem:[%s6663 + $0x110] sm:$0xff]
    %v6699 = vld [vmem:[%s6663 + $0x118] sm:$0xff]
    %v6700 = vld [vmem:[%s6663 + $0x120] sm:$0xff]
    %v6701 = vld [vmem:[%s6663 + $0x128] sm:$0xff]
    %v6702 = vld [vmem:[%s6663 + $0x130] sm:$0xff]
    %v6703 = vld [vmem:[%s6663 + $0x138] sm:$0xff]
    %v6704 = vld [vmem:[%s6663 + $0x140] sm:$0xff]
    %v6705 = vld [vmem:[%s6663 + $0x148] sm:$0xff]
    %v6706 = vld [vmem:[%s6663 + $0x150] sm:$0xff]
    %v6707 = vld [vmem:[%s6663 + $0x158] sm:$0xff]
    %v6708 = vld [vmem:[%s6663 + $0x160] sm:$0xff]
    %v6709 = vld [vmem:[%s6663 + $0x168] sm:$0xff]
    %v6710 = vld [vmem:[%s6663 + $0x170] sm:$0xff]
    %v6711 = vld [vmem:[%s6663 + $0x178] sm:$0xff]
    %v6712 = vld [vmem:[%s6663 + $0x180] sm:$0xff]
    %v6713 = vld [vmem:[%s6663 + $0x188] sm:$0xff]
    %v6714 = vld [vmem:[%s6663 + $0x190] sm:$0xff]
    %v6715 = vld [vmem:[%s6663 + $0x198] sm:$0xff]
    %v6716 = vld [vmem:[%s6663 + $0x1a0] sm:$0xff]
    %v6717 = vld [vmem:[%s6663 + $0x1a8] sm:$0xff]
    %v6718 = vld [vmem:[%s6663 + $0x1b0] sm:$0xff]
    %v6719 = vld [vmem:[%s6663 + $0x1b8] sm:$0xff]
    %v6720 = vld [vmem:[%s6663 + $0x1c0] sm:$0xff]
    %v6721 = vld [vmem:[%s6663 + $0x1c8] sm:$0xff]
    %v6722 = vld [vmem:[%s6663 + $0x1d0] sm:$0xff]
    %v6723 = vld [vmem:[%s6663 + $0x1d8] sm:$0xff]
    %v6724 = vld [vmem:[%s6663 + $0x1e0] sm:$0xff]
    %v6725 = vld [vmem:[%s6663 + $0x1e8] sm:$0xff]
    %v6726 = vld [vmem:[%s6663 + $0x1f0] sm:$0xff]
    %v6727 = vld [vmem:[%s6663 + $0x1f8] sm:$0xff]
    %v6728 = vld [vmem:[%s6663 + $0x200] sm:$0xff]
    %v6729 = vld [vmem:[%s6663 + $0x208] sm:$0xff]
    %v6730 = vld [vmem:[%s6663 + $0x210] sm:$0xff]
    %v6731 = vld [vmem:[%s6663 + $0x218] sm:$0xff]
    %v6732 = vld [vmem:[%s6663 + $0x220] sm:$0xff]
    %v6733 = vld [vmem:[%s6663 + $0x228] sm:$0x3f]
    %v6734 = vld [vmem:[%s6663 + $0x230] sm:$0x3f]
    %v6735 = vld [vmem:[%s6663 + $0x238] sm:$0x3f]
    %v6738 = vrot.slane %v6431, 1
    %v6739 = vrot.slane %v6432, 1
    %vm6741 = vcmask 506880
    %v6742 = vsel %vm6741, %v6739, 0
    %v6745 = vsel %vm447, %v6733, 0
    %v6748 = vsel %vm447, %v6734, 0
    %v6751 = vsel %vm447, %v6735, 0
    %6753 = vmatpush.msra.mxu0 %v6709
    %6754 = vmatpush.msra.mxu0 %v6706
    %6755 = vmatpush.msra.mxu0 %v6703
    %6756 = vmatpush.msra.mxu0 %v6700
    %6757 = vmatpush.msra.mxu0 %v6697
    %6758 = vmatpush.msra.mxu0 %v6694
    %6759 = vmatpush.msra.mxu0 %v6691
    %6760 = vmatpush.msra.mxu0 %v6688
    %6761 = vmatpush.msra.mxu0 %v6685
    %6762 = vmatpush.msra.mxu0 %v6682
    %6763 = vmatpush.msra.mxu0 %v6679
    %6764 = vmatpush.msra.mxu0 %v6676
    %6765 = vmatpush.msra.mxu0 %v6673
    %6766 = vmatpush.msra.mxu0 %v6670
    %6767 = vmatpush.msra.mxu0 %v6667
    %6768 = vmatpush.msra.mxu0 %v6664
    %6769 = vmatmul.f32.gmra.mxu0 %v6738
    %v6770 = vpop.f32.mrf.mxu0
    %v6771 = vadd.f32 0.0, %v6770
    %6772 = vdwg.mxu0
    %6773 = vmatpush.msra.mxu0 0.0
    %6774 = vmatpush.msra.mxu0 0.0
    %6775 = vmatpush.msra.mxu0 0.0
    %6776 = vmatpush.msra.mxu0 0.0
    %6777 = vmatpush.msra.mxu0 0.0
    %6778 = vmatpush.msra.mxu0 0.0
    %6779 = vmatpush.msra.mxu0 0.0
    %6780 = vmatpush.msra.mxu0 0.0
    %6781 = vmatpush.msra.mxu0 %v6745
    %6782 = vmatpush.msra.mxu0 %v6730
    %6783 = vmatpush.msra.mxu0 %v6727
    %6784 = vmatpush.msra.mxu0 %v6724
    %6785 = vmatpush.msra.mxu0 %v6721
    %6786 = vmatpush.msra.mxu0 %v6718
    %6787 = vmatpush.msra.mxu0 %v6715
    %6788 = vmatpush.msra.mxu0 %v6712
    %6789 = vmatmul.f32.gmra.mxu0 %v6742
    %v6790 = vpop.f32.mrf.mxu0
    %v6791 = vadd.f32 %v6771, %v6790
    %6792 = vdwg.mxu0
    %6793 = vmatpush.msra.mxu0 %v6710
    %6794 = vmatpush.msra.mxu0 %v6707
    %6795 = vmatpush.msra.mxu0 %v6704
    %6796 = vmatpush.msra.mxu0 %v6701
    %6797 = vmatpush.msra.mxu0 %v6698
    %6798 = vmatpush.msra.mxu0 %v6695
    %6799 = vmatpush.msra.mxu0 %v6692
    %6800 = vmatpush.msra.mxu0 %v6689
    %6801 = vmatpush.msra.mxu0 %v6686
    %6802 = vmatpush.msra.mxu0 %v6683
    %6803 = vmatpush.msra.mxu0 %v6680
    %6804 = vmatpush.msra.mxu0 %v6677
    %6805 = vmatpush.msra.mxu0 %v6674
    %6806 = vmatpush.msra.mxu0 %v6671
    %6807 = vmatpush.msra.mxu0 %v6668
    %6808 = vmatpush.msra.mxu0 %v6665
    %6809 = vmatmul.f32.gmra.mxu0 %v6738
    %v6810 = vpop.f32.mrf.mxu0
    %v6811 = vadd.f32 0.0, %v6810
    %6812 = vdwg.mxu0
    %6813 = vmatpush.msra.mxu0 0.0
    %6814 = vmatpush.msra.mxu0 0.0
    %6815 = vmatpush.msra.mxu0 0.0
    %6816 = vmatpush.msra.mxu0 0.0
    %6817 = vmatpush.msra.mxu0 0.0
    %6818 = vmatpush.msra.mxu0 0.0
    %6819 = vmatpush.msra.mxu0 0.0
    %6820 = vmatpush.msra.mxu0 0.0
    %6821 = vmatpush.msra.mxu0 %v6748
    %6822 = vmatpush.msra.mxu0 %v6731
    %6823 = vmatpush.msra.mxu0 %v6728
    %6824 = vmatpush.msra.mxu0 %v6725
    %6825 = vmatpush.msra.mxu0 %v6722
    %6826 = vmatpush.msra.mxu0 %v6719
    %6827 = vmatpush.msra.mxu0 %v6716
    %6828 = vmatpush.msra.mxu0 %v6713
    %6829 = vmatmul.f32.gmra.mxu0 %v6742
    %v6830 = vpop.f32.mrf.mxu0
    %v6831 = vadd.f32 %v6811, %v6830
    %6832 = vdwg.mxu0
    %6833 = vmatpush.msra.mxu0 %v6711
    %6834 = vmatpush.msra.mxu0 %v6708
    %6835 = vmatpush.msra.mxu0 %v6705
    %6836 = vmatpush.msra.mxu0 %v6702
    %6837 = vmatpush.msra.mxu0 %v6699
    %6838 = vmatpush.msra.mxu0 %v6696
    %6839 = vmatpush.msra.mxu0 %v6693
    %6840 = vmatpush.msra.mxu0 %v6690
    %6841 = vmatpush.msra.mxu0 %v6687
    %6842 = vmatpush.msra.mxu0 %v6684
    %6843 = vmatpush.msra.mxu0 %v6681
    %6844 = vmatpush.msra.mxu0 %v6678
    %6845 = vmatpush.msra.mxu0 %v6675
    %6846 = vmatpush.msra.mxu0 %v6672
    %6847 = vmatpush.msra.mxu0 %v6669
    %6848 = vmatpush.msra.mxu0 %v6666
    %6849 = vmatmul.f32.gmra.mxu0 %v6738
    %v6850 = vpop.f32.mrf.mxu0
    %v6851 = vadd.f32 0.0, %v6850
    %6852 = vdwg.mxu0
    %6853 = vmatpush.msra.mxu0 0.0
    %6854 = vmatpush.msra.mxu0 0.0
    %6855 = vmatpush.msra.mxu0 0.0
    %6856 = vmatpush.msra.mxu0 0.0
    %6857 = vmatpush.msra.mxu0 0.0
    %6858 = vmatpush.msra.mxu0 0.0
    %6859 = vmatpush.msra.mxu0 0.0
    %6860 = vmatpush.msra.mxu0 0.0
    %6861 = vmatpush.msra.mxu0 %v6751
    %6862 = vmatpush.msra.mxu0 %v6732
    %6863 = vmatpush.msra.mxu0 %v6729
    %6864 = vmatpush.msra.mxu0 %v6726
    %6865 = vmatpush.msra.mxu0 %v6723
    %6866 = vmatpush.msra.mxu0 %v6720
    %6867 = vmatpush.msra.mxu0 %v6717
    %6868 = vmatpush.msra.mxu0 %v6714
    %6869 = vmatmul.f32.gmra.mxu0 %v6742
    %v6870 = vpop.f32.mrf.mxu0
    %v6871 = vadd.f32 %v6851, %v6870
    %6872 = vdwg.mxu0
    %v6873 = vsel %vm6741, %v6432, 0
    %v6876 = vsel %vm447, %v6660, 0
    %v6879 = vsel %vm447, %v6661, 0
    %v6882 = vsel %vm447, %v6662, 0
    %6884 = vmatpush.msra.mxu0 %v6636
    %6885 = vmatpush.msra.mxu0 %v6633
    %6886 = vmatpush.msra.mxu0 %v6630
    %6887 = vmatpush.msra.mxu0 %v6627
    %6888 = vmatpush.msra.mxu0 %v6624
    %6889 = vmatpush.msra.mxu0 %v6621
    %6890 = vmatpush.msra.mxu0 %v6618
    %6891 = vmatpush.msra.mxu0 %v6615
    %6892 = vmatpush.msra.mxu0 %v6612
    %6893 = vmatpush.msra.mxu0 %v6609
    %6894 = vmatpush.msra.mxu0 %v6606
    %6895 = vmatpush.msra.mxu0 %v6603
    %6896 = vmatpush.msra.mxu0 %v6600
    %6897 = vmatpush.msra.mxu0 %v6597
    %6898 = vmatpush.msra.mxu0 %v6594
    %6899 = vmatpush.msra.mxu0 %v6591
    %6900 = vmatmul.f32.gmra.mxu0 %v6431
    %v6901 = vpop.f32.mrf.mxu0
    %v6902 = vadd.f32 %v6791, %v6901
    %6903 = vdwg.mxu0
    %6904 = vmatpush.msra.mxu0 0.0
    %6905 = vmatpush.msra.mxu0 0.0
    %6906 = vmatpush.msra.mxu0 0.0
    %6907 = vmatpush.msra.mxu0 0.0
    %6908 = vmatpush.msra.mxu0 0.0
    %6909 = vmatpush.msra.mxu0 0.0
    %6910 = vmatpush.msra.mxu0 0.0
    %6911 = vmatpush.msra.mxu0 0.0
    %6912 = vmatpush.msra.mxu0 %v6876
    %6913 = vmatpush.msra.mxu0 %v6657
    %6914 = vmatpush.msra.mxu0 %v6654
    %6915 = vmatpush.msra.mxu0 %v6651
    %6916 = vmatpush.msra.mxu0 %v6648
    %6917 = vmatpush.msra.mxu0 %v6645
    %6918 = vmatpush.msra.mxu0 %v6642
    %6919 = vmatpush.msra.mxu0 %v6639
    %6920 = vmatmul.f32.gmra.mxu0 %v6873
    %v6921 = vpop.f32.mrf.mxu0
    %v6922 = vadd.f32 %v6902, %v6921
    %6923 = vdwg.mxu0
    %6924 = vmatpush.msra.mxu0 %v6637
    %6925 = vmatpush.msra.mxu0 %v6634
    %6926 = vmatpush.msra.mxu0 %v6631
    %6927 = vmatpush.msra.mxu0 %v6628
    %6928 = vmatpush.msra.mxu0 %v6625
    %6929 = vmatpush.msra.mxu0 %v6622
    %6930 = vmatpush.msra.mxu0 %v6619
    %6931 = vmatpush.msra.mxu0 %v6616
    %6932 = vmatpush.msra.mxu0 %v6613
    %6933 = vmatpush.msra.mxu0 %v6610
    %6934 = vmatpush.msra.mxu0 %v6607
    %6935 = vmatpush.msra.mxu0 %v6604
    %6936 = vmatpush.msra.mxu0 %v6601
    %6937 = vmatpush.msra.mxu0 %v6598
    %6938 = vmatpush.msra.mxu0 %v6595
    %6939 = vmatpush.msra.mxu0 %v6592
    %6940 = vmatmul.f32.gmra.mxu0 %v6431
    %v6941 = vpop.f32.mrf.mxu0
    %v6942 = vadd.f32 %v6831, %v6941
    %6943 = vdwg.mxu0
    %6944 = vmatpush.msra.mxu0 0.0
    %6945 = vmatpush.msra.mxu0 0.0
    %6946 = vmatpush.msra.mxu0 0.0
    %6947 = vmatpush.msra.mxu0 0.0
    %6948 = vmatpush.msra.mxu0 0.0
    %6949 = vmatpush.msra.mxu0 0.0
    %6950 = vmatpush.msra.mxu0 0.0
    %6951 = vmatpush.msra.mxu0 0.0
    %6952 = vmatpush.msra.mxu0 %v6879
    %6953 = vmatpush.msra.mxu0 %v6658
    %6954 = vmatpush.msra.mxu0 %v6655
    %6955 = vmatpush.msra.mxu0 %v6652
    %6956 = vmatpush.msra.mxu0 %v6649
    %6957 = vmatpush.msra.mxu0 %v6646
    %6958 = vmatpush.msra.mxu0 %v6643
    %6959 = vmatpush.msra.mxu0 %v6640
    %6960 = vmatmul.f32.gmra.mxu0 %v6873
    %v6961 = vpop.f32.mrf.mxu0
    %v6962 = vadd.f32 %v6942, %v6961
    %6963 = vdwg.mxu0
    %6964 = vmatpush.msra.mxu0 %v6638
    %6965 = vmatpush.msra.mxu0 %v6635
    %6966 = vmatpush.msra.mxu0 %v6632
    %6967 = vmatpush.msra.mxu0 %v6629
    %6968 = vmatpush.msra.mxu0 %v6626
    %6969 = vmatpush.msra.mxu0 %v6623
    %6970 = vmatpush.msra.mxu0 %v6620
    %6971 = vmatpush.msra.mxu0 %v6617
    %6972 = vmatpush.msra.mxu0 %v6614
    %6973 = vmatpush.msra.mxu0 %v6611
    %6974 = vmatpush.msra.mxu0 %v6608
    %6975 = vmatpush.msra.mxu0 %v6605
    %6976 = vmatpush.msra.mxu0 %v6602
    %6977 = vmatpush.msra.mxu0 %v6599
    %6978 = vmatpush.msra.mxu0 %v6596
    %6979 = vmatpush.msra.mxu0 %v6593
    %6980 = vmatmul.f32.gmra.mxu0 %v6431
    %v6981 = vpop.f32.mrf.mxu0
    %v6982 = vadd.f32 %v6871, %v6981
    %6983 = vdwg.mxu0
    %6984 = vmatpush.msra.mxu0 0.0
    %6985 = vmatpush.msra.mxu0 0.0
    %6986 = vmatpush.msra.mxu0 0.0
    %6987 = vmatpush.msra.mxu0 0.0
    %6988 = vmatpush.msra.mxu0 0.0
    %6989 = vmatpush.msra.mxu0 0.0
    %6990 = vmatpush.msra.mxu0 0.0
    %6991 = vmatpush.msra.mxu0 0.0
    %6992 = vmatpush.msra.mxu0 %v6882
    %6993 = vmatpush.msra.mxu0 %v6659
    %6994 = vmatpush.msra.mxu0 %v6656
    %6995 = vmatpush.msra.mxu0 %v6653
    %6996 = vmatpush.msra.mxu0 %v6650
    %6997 = vmatpush.msra.mxu0 %v6647
    %6998 = vmatpush.msra.mxu0 %v6644
    %6999 = vmatpush.msra.mxu0 %v6641
    %7000 = vmatmul.f32.gmra.mxu0 %v6873
    %v7001 = vpop.f32.mrf.mxu0
    %v7002 = vadd.f32 %v6982, %v7001
    %7003 = vdwg.mxu0
    %v7006 = vrot.slane %v6587, 1
    %v7007 = vrot.slane %v6588, 1
    %v7009 = vsel %vm6741, %v7007, 0
    %7011 = vmatpush.msra.mxu0 %v6709
    %7012 = vmatpush.msra.mxu0 %v6706
    %7013 = vmatpush.msra.mxu0 %v6703
    %7014 = vmatpush.msra.mxu0 %v6700
    %7015 = vmatpush.msra.mxu0 %v6697
    %7016 = vmatpush.msra.mxu0 %v6694
    %7017 = vmatpush.msra.mxu0 %v6691
    %7018 = vmatpush.msra.mxu0 %v6688
    %7019 = vmatpush.msra.mxu0 %v6685
    %7020 = vmatpush.msra.mxu0 %v6682
    %7021 = vmatpush.msra.mxu0 %v6679
    %7022 = vmatpush.msra.mxu0 %v6676
    %7023 = vmatpush.msra.mxu0 %v6673
    %7024 = vmatpush.msra.mxu0 %v6670
    %7025 = vmatpush.msra.mxu0 %v6667
    %7026 = vmatpush.msra.mxu0 %v6664
    %7027 = vmatmul.f32.gmra.mxu0 %v7006
    %v7028 = vpop.f32.mrf.mxu0
    %v7029 = vadd.f32 0.0, %v7028
    %7030 = vdwg.mxu0
    %7031 = vmatpush.msra.mxu0 0.0
    %7032 = vmatpush.msra.mxu0 0.0
    %7033 = vmatpush.msra.mxu0 0.0
    %7034 = vmatpush.msra.mxu0 0.0
    %7035 = vmatpush.msra.mxu0 0.0
    %7036 = vmatpush.msra.mxu0 0.0
    %7037 = vmatpush.msra.mxu0 0.0
    %7038 = vmatpush.msra.mxu0 0.0
    %7039 = vmatpush.msra.mxu0 %v6745
    %7040 = vmatpush.msra.mxu0 %v6730
    %7041 = vmatpush.msra.mxu0 %v6727
    %7042 = vmatpush.msra.mxu0 %v6724
    %7043 = vmatpush.msra.mxu0 %v6721
    %7044 = vmatpush.msra.mxu0 %v6718
    %7045 = vmatpush.msra.mxu0 %v6715
    %7046 = vmatpush.msra.mxu0 %v6712
    %7047 = vmatmul.f32.gmra.mxu0 %v7009
    %v7048 = vpop.f32.mrf.mxu0
    %v7049 = vadd.f32 %v7029, %v7048
    %7050 = vdwg.mxu0
    %7051 = vmatpush.msra.mxu0 %v6710
    %7052 = vmatpush.msra.mxu0 %v6707
    %7053 = vmatpush.msra.mxu0 %v6704
    %7054 = vmatpush.msra.mxu0 %v6701
    %7055 = vmatpush.msra.mxu0 %v6698
    %7056 = vmatpush.msra.mxu0 %v6695
    %7057 = vmatpush.msra.mxu0 %v6692
    %7058 = vmatpush.msra.mxu0 %v6689
    %7059 = vmatpush.msra.mxu0 %v6686
    %7060 = vmatpush.msra.mxu0 %v6683
    %7061 = vmatpush.msra.mxu0 %v6680
    %7062 = vmatpush.msra.mxu0 %v6677
    %7063 = vmatpush.msra.mxu0 %v6674
    %7064 = vmatpush.msra.mxu0 %v6671
    %7065 = vmatpush.msra.mxu0 %v6668
    %7066 = vmatpush.msra.mxu0 %v6665
    %7067 = vmatmul.f32.gmra.mxu0 %v7006
    %v7068 = vpop.f32.mrf.mxu0
    %v7069 = vadd.f32 0.0, %v7068
    %7070 = vdwg.mxu0
    %7071 = vmatpush.msra.mxu0 0.0
    %7072 = vmatpush.msra.mxu0 0.0
    %7073 = vmatpush.msra.mxu0 0.0
    %7074 = vmatpush.msra.mxu0 0.0
    %7075 = vmatpush.msra.mxu0 0.0
    %7076 = vmatpush.msra.mxu0 0.0
    %7077 = vmatpush.msra.mxu0 0.0
    %7078 = vmatpush.msra.mxu0 0.0
    %7079 = vmatpush.msra.mxu0 %v6748
    %7080 = vmatpush.msra.mxu0 %v6731
    %7081 = vmatpush.msra.mxu0 %v6728
    %7082 = vmatpush.msra.mxu0 %v6725
    %7083 = vmatpush.msra.mxu0 %v6722
    %7084 = vmatpush.msra.mxu0 %v6719
    %7085 = vmatpush.msra.mxu0 %v6716
    %7086 = vmatpush.msra.mxu0 %v6713
    %7087 = vmatmul.f32.gmra.mxu0 %v7009
    %v7088 = vpop.f32.mrf.mxu0
    %v7089 = vadd.f32 %v7069, %v7088
    %7090 = vdwg.mxu0
    %7091 = vmatpush.msra.mxu0 %v6711
    %7092 = vmatpush.msra.mxu0 %v6708
    %7093 = vmatpush.msra.mxu0 %v6705
    %7094 = vmatpush.msra.mxu0 %v6702
    %7095 = vmatpush.msra.mxu0 %v6699
    %7096 = vmatpush.msra.mxu0 %v6696
    %7097 = vmatpush.msra.mxu0 %v6693
    %7098 = vmatpush.msra.mxu0 %v6690
    %7099 = vmatpush.msra.mxu0 %v6687
    %7100 = vmatpush.msra.mxu0 %v6684
    %7101 = vmatpush.msra.mxu0 %v6681
    %7102 = vmatpush.msra.mxu0 %v6678
    %7103 = vmatpush.msra.mxu0 %v6675
    %7104 = vmatpush.msra.mxu0 %v6672
    %7105 = vmatpush.msra.mxu0 %v6669
    %7106 = vmatpush.msra.mxu0 %v6666
    %7107 = vmatmul.f32.gmra.mxu0 %v7006
    %v7108 = vpop.f32.mrf.mxu0
    %v7109 = vadd.f32 0.0, %v7108
    %7110 = vdwg.mxu0
    %7111 = vmatpush.msra.mxu0 0.0
    %7112 = vmatpush.msra.mxu0 0.0
    %7113 = vmatpush.msra.mxu0 0.0
    %7114 = vmatpush.msra.mxu0 0.0
    %7115 = vmatpush.msra.mxu0 0.0
    %7116 = vmatpush.msra.mxu0 0.0
    %7117 = vmatpush.msra.mxu0 0.0
    %7118 = vmatpush.msra.mxu0 0.0
    %7119 = vmatpush.msra.mxu0 %v6751
    %7120 = vmatpush.msra.mxu0 %v6732
    %7121 = vmatpush.msra.mxu0 %v6729
    %7122 = vmatpush.msra.mxu0 %v6726
    %7123 = vmatpush.msra.mxu0 %v6723
    %7124 = vmatpush.msra.mxu0 %v6720
    %7125 = vmatpush.msra.mxu0 %v6717
    %7126 = vmatpush.msra.mxu0 %v6714
    %7127 = vmatmul.f32.gmra.mxu0 %v7009
    %v7128 = vpop.f32.mrf.mxu0
    %v7129 = vadd.f32 %v7109, %v7128
    %7130 = vdwg.mxu0
    %v7131 = vsel %vm6741, %v6588, 0
    %7133 = vmatpush.msra.mxu0 %v6636
    %7134 = vmatpush.msra.mxu0 %v6633
    %7135 = vmatpush.msra.mxu0 %v6630
    %7136 = vmatpush.msra.mxu0 %v6627
    %7137 = vmatpush.msra.mxu0 %v6624
    %7138 = vmatpush.msra.mxu0 %v6621
    %7139 = vmatpush.msra.mxu0 %v6618
    %7140 = vmatpush.msra.mxu0 %v6615
    %7141 = vmatpush.msra.mxu0 %v6612
    %7142 = vmatpush.msra.mxu0 %v6609
    %7143 = vmatpush.msra.mxu0 %v6606
    %7144 = vmatpush.msra.mxu0 %v6603
    %7145 = vmatpush.msra.mxu0 %v6600
    %7146 = vmatpush.msra.mxu0 %v6597
    %7147 = vmatpush.msra.mxu0 %v6594
    %7148 = vmatpush.msra.mxu0 %v6591
    %7149 = vmatmul.f32.gmra.mxu0 %v6587
    %v7150 = vpop.f32.mrf.mxu0
    %v7151 = vadd.f32 %v7049, %v7150
    %7152 = vdwg.mxu0
    %7153 = vmatpush.msra.mxu0 0.0
    %7154 = vmatpush.msra.mxu0 0.0
    %7155 = vmatpush.msra.mxu0 0.0
    %7156 = vmatpush.msra.mxu0 0.0
    %7157 = vmatpush.msra.mxu0 0.0
    %7158 = vmatpush.msra.mxu0 0.0
    %7159 = vmatpush.msra.mxu0 0.0
    %7160 = vmatpush.msra.mxu0 0.0
    %7161 = vmatpush.msra.mxu0 %v6876
    %7162 = vmatpush.msra.mxu0 %v6657
    %7163 = vmatpush.msra.mxu0 %v6654
    %7164 = vmatpush.msra.mxu0 %v6651
    %7165 = vmatpush.msra.mxu0 %v6648
    %7166 = vmatpush.msra.mxu0 %v6645
    %7167 = vmatpush.msra.mxu0 %v6642
    %7168 = vmatpush.msra.mxu0 %v6639
    %7169 = vmatmul.f32.gmra.mxu0 %v7131
    %v7170 = vpop.f32.mrf.mxu0
    %v7171 = vadd.f32 %v7151, %v7170
    %7172 = vdwg.mxu0
    %7173 = vmatpush.msra.mxu0 %v6637
    %7174 = vmatpush.msra.mxu0 %v6634
    %7175 = vmatpush.msra.mxu0 %v6631
    %7176 = vmatpush.msra.mxu0 %v6628
    %7177 = vmatpush.msra.mxu0 %v6625
    %7178 = vmatpush.msra.mxu0 %v6622
    %7179 = vmatpush.msra.mxu0 %v6619
    %7180 = vmatpush.msra.mxu0 %v6616
    %7181 = vmatpush.msra.mxu0 %v6613
    %7182 = vmatpush.msra.mxu0 %v6610
    %7183 = vmatpush.msra.mxu0 %v6607
    %7184 = vmatpush.msra.mxu0 %v6604
    %7185 = vmatpush.msra.mxu0 %v6601
    %7186 = vmatpush.msra.mxu0 %v6598
    %7187 = vmatpush.msra.mxu0 %v6595
    %7188 = vmatpush.msra.mxu0 %v6592
    %7189 = vmatmul.f32.gmra.mxu0 %v6587
    %v7190 = vpop.f32.mrf.mxu0
    %v7191 = vadd.f32 %v7089, %v7190
    %7192 = vdwg.mxu0
    %7193 = vmatpush.msra.mxu0 0.0
    %7194 = vmatpush.msra.mxu0 0.0
    %7195 = vmatpush.msra.mxu0 0.0
    %7196 = vmatpush.msra.mxu0 0.0
    %7197 = vmatpush.msra.mxu0 0.0
    %7198 = vmatpush.msra.mxu0 0.0
    %7199 = vmatpush.msra.mxu0 0.0
    %7200 = vmatpush.msra.mxu0 0.0
    %7201 = vmatpush.msra.mxu0 %v6879
    %7202 = vmatpush.msra.mxu0 %v6658
    %7203 = vmatpush.msra.mxu0 %v6655
    %7204 = vmatpush.msra.mxu0 %v6652
    %7205 = vmatpush.msra.mxu0 %v6649
    %7206 = vmatpush.msra.mxu0 %v6646
    %7207 = vmatpush.msra.mxu0 %v6643
    %7208 = vmatpush.msra.mxu0 %v6640
    %7209 = vmatmul.f32.gmra.mxu0 %v7131
    %v7210 = vpop.f32.mrf.mxu0
    %v7211 = vadd.f32 %v7191, %v7210
    %7212 = vdwg.mxu0
    %7213 = vmatpush.msra.mxu0 %v6638
    %7214 = vmatpush.msra.mxu0 %v6635
    %7215 = vmatpush.msra.mxu0 %v6632
    %7216 = vmatpush.msra.mxu0 %v6629
    %7217 = vmatpush.msra.mxu0 %v6626
    %7218 = vmatpush.msra.mxu0 %v6623
    %7219 = vmatpush.msra.mxu0 %v6620
    %7220 = vmatpush.msra.mxu0 %v6617
    %7221 = vmatpush.msra.mxu0 %v6614
    %7222 = vmatpush.msra.mxu0 %v6611
    %7223 = vmatpush.msra.mxu0 %v6608
    %7224 = vmatpush.msra.mxu0 %v6605
    %7225 = vmatpush.msra.mxu0 %v6602
    %7226 = vmatpush.msra.mxu0 %v6599
    %7227 = vmatpush.msra.mxu0 %v6596
    %7228 = vmatpush.msra.mxu0 %v6593
    %7229 = vmatmul.f32.gmra.mxu0 %v6587
    %v7230 = vpop.f32.mrf.mxu0
    %v7231 = vadd.f32 %v7129, %v7230
    %7232 = vdwg.mxu0
    %7233 = vmatpush.msra.mxu0 0.0
    %7234 = vmatpush.msra.mxu0 0.0
    %7235 = vmatpush.msra.mxu0 0.0
    %7236 = vmatpush.msra.mxu0 0.0
    %7237 = vmatpush.msra.mxu0 0.0
    %7238 = vmatpush.msra.mxu0 0.0
    %7239 = vmatpush.msra.mxu0 0.0
    %7240 = vmatpush.msra.mxu0 0.0
    %7241 = vmatpush.msra.mxu0 %v6882
    %7242 = vmatpush.msra.mxu0 %v6659
    %7243 = vmatpush.msra.mxu0 %v6656
    %7244 = vmatpush.msra.mxu0 %v6653
    %7245 = vmatpush.msra.mxu0 %v6650
    %7246 = vmatpush.msra.mxu0 %v6647
    %7247 = vmatpush.msra.mxu0 %v6644
    %7248 = vmatpush.msra.mxu0 %v6641
    %7249 = vmatmul.f32.gmra.mxu0 %v7131
    %v7250 = vpop.f32.mrf.mxu0
    %v7251 = vadd.f32 %v7231, %v7250
    %7252 = vdwg.mxu0
    %s7253 = scalar_lea.vmem %s4, 1152
    %v7254 = vld [vmem:[%s7253] sm:$0xff]
    %v7255 = vld [vmem:[%s7253 + $0x8] sm:$0xff]
    %v7256 = vld [vmem:[%s7253 + $0x10] sm:$0xff]
    %v7257 = vld [vmem:[%s7253 + $0x18] sm:$0xff]
    %v7258 = vld [vmem:[%s7253 + $0x20] sm:$0xff]
    %v7259 = vld [vmem:[%s7253 + $0x28] sm:$0xff]
    %v7260 = vld [vmem:[%s7253 + $0x30] sm:$0xff]
    %v7261 = vld [vmem:[%s7253 + $0x38] sm:$0xff]
    %v7262 = vld [vmem:[%s7253 + $0x40] sm:$0xff]
    %v7263 = vld [vmem:[%s7253 + $0x48] sm:$0xff]
    %v7264 = vld [vmem:[%s7253 + $0x50] sm:$0xff]
    %v7265 = vld [vmem:[%s7253 + $0x58] sm:$0xff]
    %v7266 = vld [vmem:[%s7253 + $0x60] sm:$0xff]
    %v7267 = vld [vmem:[%s7253 + $0x68] sm:$0xff]
    %v7268 = vld [vmem:[%s7253 + $0x70] sm:$0xff]
    %v7269 = vld [vmem:[%s7253 + $0x78] sm:$0xff]
    %v7270 = vld [vmem:[%s7253 + $0x80] sm:$0xff]
    %v7271 = vld [vmem:[%s7253 + $0x88] sm:$0xff]
    %v7272 = vld [vmem:[%s7253 + $0x90] sm:$0xff]
    %v7273 = vld [vmem:[%s7253 + $0x98] sm:$0xff]
    %v7274 = vld [vmem:[%s7253 + $0xa0] sm:$0xff]
    %v7275 = vld [vmem:[%s7253 + $0xa8] sm:$0xff]
    %v7276 = vld [vmem:[%s7253 + $0xb0] sm:$0xff]
    %v7277 = vld [vmem:[%s7253 + $0xb8] sm:$0xff]
    %v7278 = vld [vmem:[%s7253 + $0xc0] sm:$0xff]
    %v7279 = vld [vmem:[%s7253 + $0xc8] sm:$0xff]
    %v7280 = vld [vmem:[%s7253 + $0xd0] sm:$0xff]
    %v7281 = vld [vmem:[%s7253 + $0xd8] sm:$0xff]
    %v7282 = vld [vmem:[%s7253 + $0xe0] sm:$0xff]
    %v7283 = vld [vmem:[%s7253 + $0xe8] sm:$0xff]
    %v7284 = vld [vmem:[%s7253 + $0xf0] sm:$0xff]
    %v7285 = vld [vmem:[%s7253 + $0xf8] sm:$0xff]
    %v7286 = vld [vmem:[%s7253 + $0x100] sm:$0xff]
    %v7287 = vld [vmem:[%s7253 + $0x108] sm:$0xff]
    %v7288 = vld [vmem:[%s7253 + $0x110] sm:$0xff]
    %v7289 = vld [vmem:[%s7253 + $0x118] sm:$0xff]
    %v7290 = vld [vmem:[%s7253 + $0x120] sm:$0xff]
    %v7291 = vld [vmem:[%s7253 + $0x128] sm:$0xff]
    %v7292 = vld [vmem:[%s7253 + $0x130] sm:$0xff]
    %v7293 = vld [vmem:[%s7253 + $0x138] sm:$0xff]
    %v7294 = vld [vmem:[%s7253 + $0x140] sm:$0xff]
    %v7295 = vld [vmem:[%s7253 + $0x148] sm:$0xff]
    %v7296 = vld [vmem:[%s7253 + $0x150] sm:$0xff]
    %v7297 = vld [vmem:[%s7253 + $0x158] sm:$0xff]
    %v7298 = vld [vmem:[%s7253 + $0x160] sm:$0xff]
    %v7299 = vld [vmem:[%s7253 + $0x168] sm:$0xff]
    %v7300 = vld [vmem:[%s7253 + $0x170] sm:$0xff]
    %v7301 = vld [vmem:[%s7253 + $0x178] sm:$0xff]
    %v7302 = vld [vmem:[%s7253 + $0x180] sm:$0xff]
    %v7303 = vld [vmem:[%s7253 + $0x188] sm:$0xff]
    %v7304 = vld [vmem:[%s7253 + $0x190] sm:$0xff]
    %v7305 = vld [vmem:[%s7253 + $0x198] sm:$0xff]
    %v7306 = vld [vmem:[%s7253 + $0x1a0] sm:$0xff]
    %v7307 = vld [vmem:[%s7253 + $0x1a8] sm:$0xff]
    %v7308 = vld [vmem:[%s7253 + $0x1b0] sm:$0xff]
    %v7309 = vld [vmem:[%s7253 + $0x1b8] sm:$0xff]
    %v7310 = vld [vmem:[%s7253 + $0x1c0] sm:$0xff]
    %v7311 = vld [vmem:[%s7253 + $0x1c8] sm:$0xff]
    %v7312 = vld [vmem:[%s7253 + $0x1d0] sm:$0xff]
    %v7313 = vld [vmem:[%s7253 + $0x1d8] sm:$0xff]
    %v7314 = vld [vmem:[%s7253 + $0x1e0] sm:$0xff]
    %v7315 = vld [vmem:[%s7253 + $0x1e8] sm:$0xff]
    %v7316 = vld [vmem:[%s7253 + $0x1f0] sm:$0xff]
    %v7317 = vld [vmem:[%s7253 + $0x1f8] sm:$0xff]
    %v7318 = vld [vmem:[%s7253 + $0x200] sm:$0xff]
    %v7319 = vld [vmem:[%s7253 + $0x208] sm:$0xff]
    %v7320 = vld [vmem:[%s7253 + $0x210] sm:$0xff]
    %v7321 = vld [vmem:[%s7253 + $0x218] sm:$0xff]
    %v7322 = vld [vmem:[%s7253 + $0x220] sm:$0xff]
    %v7323 = vld [vmem:[%s7253 + $0x228] sm:$0x3f]
    %v7324 = vld [vmem:[%s7253 + $0x230] sm:$0x3f]
    %v7325 = vld [vmem:[%s7253 + $0x238] sm:$0x3f]
    %v7326 = vrot.slane %v6431, 2
    %v7327 = vrot.slane %v6432, 2
    %v7329 = vsel %vm6741, %v7327, 0
    %v7332 = vsel %vm447, %v7323, 0
    %v7335 = vsel %vm447, %v7324, 0
    %v7338 = vsel %vm447, %v7325, 0
    %7340 = vmatpush.msra.mxu0 %v7299
    %7341 = vmatpush.msra.mxu0 %v7296
    %7342 = vmatpush.msra.mxu0 %v7293
    %7343 = vmatpush.msra.mxu0 %v7290
    %7344 = vmatpush.msra.mxu0 %v7287
    %7345 = vmatpush.msra.mxu0 %v7284
    %7346 = vmatpush.msra.mxu0 %v7281
    %7347 = vmatpush.msra.mxu0 %v7278
    %7348 = vmatpush.msra.mxu0 %v7275
    %7349 = vmatpush.msra.mxu0 %v7272
    %7350 = vmatpush.msra.mxu0 %v7269
    %7351 = vmatpush.msra.mxu0 %v7266
    %7352 = vmatpush.msra.mxu0 %v7263
    %7353 = vmatpush.msra.mxu0 %v7260
    %7354 = vmatpush.msra.mxu0 %v7257
    %7355 = vmatpush.msra.mxu0 %v7254
    %7356 = vmatmul.f32.gmra.mxu0 %v7326
    %v7357 = vpop.f32.mrf.mxu0
    %v7358 = vadd.f32 0.0, %v7357
    %7359 = vdwg.mxu0
    %7360 = vmatpush.msra.mxu0 0.0
    %7361 = vmatpush.msra.mxu0 0.0
    %7362 = vmatpush.msra.mxu0 0.0
    %7363 = vmatpush.msra.mxu0 0.0
    %7364 = vmatpush.msra.mxu0 0.0
    %7365 = vmatpush.msra.mxu0 0.0
    %7366 = vmatpush.msra.mxu0 0.0
    %7367 = vmatpush.msra.mxu0 0.0
    %7368 = vmatpush.msra.mxu0 %v7332
    %7369 = vmatpush.msra.mxu0 %v7320
    %7370 = vmatpush.msra.mxu0 %v7317
    %7371 = vmatpush.msra.mxu0 %v7314
    %7372 = vmatpush.msra.mxu0 %v7311
    %7373 = vmatpush.msra.mxu0 %v7308
    %7374 = vmatpush.msra.mxu0 %v7305
    %7375 = vmatpush.msra.mxu0 %v7302
    %7376 = vmatmul.f32.gmra.mxu0 %v7329
    %v7377 = vpop.f32.mrf.mxu0
    %v7378 = vadd.f32 %v7358, %v7377
    %7379 = vdwg.mxu0
    %7380 = vmatpush.msra.mxu0 %v7300
    %7381 = vmatpush.msra.mxu0 %v7297
    %7382 = vmatpush.msra.mxu0 %v7294
    %7383 = vmatpush.msra.mxu0 %v7291
    %7384 = vmatpush.msra.mxu0 %v7288
    %7385 = vmatpush.msra.mxu0 %v7285
    %7386 = vmatpush.msra.mxu0 %v7282
    %7387 = vmatpush.msra.mxu0 %v7279
    %7388 = vmatpush.msra.mxu0 %v7276
    %7389 = vmatpush.msra.mxu0 %v7273
    %7390 = vmatpush.msra.mxu0 %v7270
    %7391 = vmatpush.msra.mxu0 %v7267
    %7392 = vmatpush.msra.mxu0 %v7264
    %7393 = vmatpush.msra.mxu0 %v7261
    %7394 = vmatpush.msra.mxu0 %v7258
    %7395 = vmatpush.msra.mxu0 %v7255
    %7396 = vmatmul.f32.gmra.mxu0 %v7326
    %v7397 = vpop.f32.mrf.mxu0
    %v7398 = vadd.f32 0.0, %v7397
    %7399 = vdwg.mxu0
    %7400 = vmatpush.msra.mxu0 0.0
    %7401 = vmatpush.msra.mxu0 0.0
    %7402 = vmatpush.msra.mxu0 0.0
    %7403 = vmatpush.msra.mxu0 0.0
    %7404 = vmatpush.msra.mxu0 0.0
    %7405 = vmatpush.msra.mxu0 0.0
    %7406 = vmatpush.msra.mxu0 0.0
    %7407 = vmatpush.msra.mxu0 0.0
    %7408 = vmatpush.msra.mxu0 %v7335
    %7409 = vmatpush.msra.mxu0 %v7321
    %7410 = vmatpush.msra.mxu0 %v7318
    %7411 = vmatpush.msra.mxu0 %v7315
    %7412 = vmatpush.msra.mxu0 %v7312
    %7413 = vmatpush.msra.mxu0 %v7309
    %7414 = vmatpush.msra.mxu0 %v7306
    %7415 = vmatpush.msra.mxu0 %v7303
    %7416 = vmatmul.f32.gmra.mxu0 %v7329
    %v7417 = vpop.f32.mrf.mxu0
    %v7418 = vadd.f32 %v7398, %v7417
    %7419 = vdwg.mxu0
    %7420 = vmatpush.msra.mxu0 %v7301
    %7421 = vmatpush.msra.mxu0 %v7298
    %7422 = vmatpush.msra.mxu0 %v7295
    %7423 = vmatpush.msra.mxu0 %v7292
    %7424 = vmatpush.msra.mxu0 %v7289
    %7425 = vmatpush.msra.mxu0 %v7286
    %7426 = vmatpush.msra.mxu0 %v7283
    %7427 = vmatpush.msra.mxu0 %v7280
    %7428 = vmatpush.msra.mxu0 %v7277
    %7429 = vmatpush.msra.mxu0 %v7274
    %7430 = vmatpush.msra.mxu0 %v7271
    %7431 = vmatpush.msra.mxu0 %v7268
    %7432 = vmatpush.msra.mxu0 %v7265
    %7433 = vmatpush.msra.mxu0 %v7262
    %7434 = vmatpush.msra.mxu0 %v7259
    %7435 = vmatpush.msra.mxu0 %v7256
    %7436 = vmatmul.f32.gmra.mxu0 %v7326
    %v7437 = vpop.f32.mrf.mxu0
    %v7438 = vadd.f32 0.0, %v7437
    %7439 = vdwg.mxu0
    %7440 = vmatpush.msra.mxu0 0.0
    %7441 = vmatpush.msra.mxu0 0.0
    %7442 = vmatpush.msra.mxu0 0.0
    %7443 = vmatpush.msra.mxu0 0.0
    %7444 = vmatpush.msra.mxu0 0.0
    %7445 = vmatpush.msra.mxu0 0.0
    %7446 = vmatpush.msra.mxu0 0.0
    %7447 = vmatpush.msra.mxu0 0.0
    %7448 = vmatpush.msra.mxu0 %v7338
    %7449 = vmatpush.msra.mxu0 %v7322
    %7450 = vmatpush.msra.mxu0 %v7319
    %7451 = vmatpush.msra.mxu0 %v7316
    %7452 = vmatpush.msra.mxu0 %v7313
    %7453 = vmatpush.msra.mxu0 %v7310
    %7454 = vmatpush.msra.mxu0 %v7307
    %7455 = vmatpush.msra.mxu0 %v7304
    %7456 = vmatmul.f32.gmra.mxu0 %v7329
    %v7457 = vpop.f32.mrf.mxu0
    %v7458 = vadd.f32 %v7438, %v7457
    %7459 = vdwg.mxu0
    %v7460 = vadd.f32 %v6922, %v7378
    %v7461 = vadd.f32 %v6962, %v7418
    %v7462 = vadd.f32 %v7002, %v7458
    %v7463 = vrot.slane %v6587, 2
    %v7464 = vrot.slane %v6588, 2
    %v7466 = vsel %vm6741, %v7464, 0
    %7468 = vmatpush.msra.mxu0 %v7299
    %7469 = vmatpush.msra.mxu0 %v7296
    %7470 = vmatpush.msra.mxu0 %v7293
    %7471 = vmatpush.msra.mxu0 %v7290
    %7472 = vmatpush.msra.mxu0 %v7287
    %7473 = vmatpush.msra.mxu0 %v7284
    %7474 = vmatpush.msra.mxu0 %v7281
    %7475 = vmatpush.msra.mxu0 %v7278
    %7476 = vmatpush.msra.mxu0 %v7275
    %7477 = vmatpush.msra.mxu0 %v7272
    %7478 = vmatpush.msra.mxu0 %v7269
    %7479 = vmatpush.msra.mxu0 %v7266
    %7480 = vmatpush.msra.mxu0 %v7263
    %7481 = vmatpush.msra.mxu0 %v7260
    %7482 = vmatpush.msra.mxu0 %v7257
    %7483 = vmatpush.msra.mxu0 %v7254
    %7484 = vmatmul.f32.gmra.mxu0 %v7463
    %v7485 = vpop.f32.mrf.mxu0
    %v7486 = vadd.f32 0.0, %v7485
    %7487 = vdwg.mxu0
    %7488 = vmatpush.msra.mxu0 0.0
    %7489 = vmatpush.msra.mxu0 0.0
    %7490 = vmatpush.msra.mxu0 0.0
    %7491 = vmatpush.msra.mxu0 0.0
    %7492 = vmatpush.msra.mxu0 0.0
    %7493 = vmatpush.msra.mxu0 0.0
    %7494 = vmatpush.msra.mxu0 0.0
    %7495 = vmatpush.msra.mxu0 0.0
    %7496 = vmatpush.msra.mxu0 %v7332
    %7497 = vmatpush.msra.mxu0 %v7320
    %7498 = vmatpush.msra.mxu0 %v7317
    %7499 = vmatpush.msra.mxu0 %v7314
    %7500 = vmatpush.msra.mxu0 %v7311
    %7501 = vmatpush.msra.mxu0 %v7308
    %7502 = vmatpush.msra.mxu0 %v7305
    %7503 = vmatpush.msra.mxu0 %v7302
    %7504 = vmatmul.f32.gmra.mxu0 %v7466
    %v7505 = vpop.f32.mrf.mxu0
    %v7506 = vadd.f32 %v7486, %v7505
    %7507 = vdwg.mxu0
    %7508 = vmatpush.msra.mxu0 %v7300
    %7509 = vmatpush.msra.mxu0 %v7297
    %7510 = vmatpush.msra.mxu0 %v7294
    %7511 = vmatpush.msra.mxu0 %v7291
    %7512 = vmatpush.msra.mxu0 %v7288
    %7513 = vmatpush.msra.mxu0 %v7285
    %7514 = vmatpush.msra.mxu0 %v7282
    %7515 = vmatpush.msra.mxu0 %v7279
    %7516 = vmatpush.msra.mxu0 %v7276
    %7517 = vmatpush.msra.mxu0 %v7273
    %7518 = vmatpush.msra.mxu0 %v7270
    %7519 = vmatpush.msra.mxu0 %v7267
    %7520 = vmatpush.msra.mxu0 %v7264
    %7521 = vmatpush.msra.mxu0 %v7261
    %7522 = vmatpush.msra.mxu0 %v7258
    %7523 = vmatpush.msra.mxu0 %v7255
    %7524 = vmatmul.f32.gmra.mxu0 %v7463
    %v7525 = vpop.f32.mrf.mxu0
    %v7526 = vadd.f32 0.0, %v7525
    %7527 = vdwg.mxu0
    %7528 = vmatpush.msra.mxu0 0.0
    %7529 = vmatpush.msra.mxu0 0.0
    %7530 = vmatpush.msra.mxu0 0.0
    %7531 = vmatpush.msra.mxu0 0.0
    %7532 = vmatpush.msra.mxu0 0.0
    %7533 = vmatpush.msra.mxu0 0.0
    %7534 = vmatpush.msra.mxu0 0.0
    %7535 = vmatpush.msra.mxu0 0.0
    %7536 = vmatpush.msra.mxu0 %v7335
    %7537 = vmatpush.msra.mxu0 %v7321
    %7538 = vmatpush.msra.mxu0 %v7318
    %7539 = vmatpush.msra.mxu0 %v7315
    %7540 = vmatpush.msra.mxu0 %v7312
    %7541 = vmatpush.msra.mxu0 %v7309
    %7542 = vmatpush.msra.mxu0 %v7306
    %7543 = vmatpush.msra.mxu0 %v7303
    %7544 = vmatmul.f32.gmra.mxu0 %v7466
    %v7545 = vpop.f32.mrf.mxu0
    %v7546 = vadd.f32 %v7526, %v7545
    %7547 = vdwg.mxu0
    %7548 = vmatpush.msra.mxu0 %v7301
    %7549 = vmatpush.msra.mxu0 %v7298
    %7550 = vmatpush.msra.mxu0 %v7295
    %7551 = vmatpush.msra.mxu0 %v7292
    %7552 = vmatpush.msra.mxu0 %v7289
    %7553 = vmatpush.msra.mxu0 %v7286
    %7554 = vmatpush.msra.mxu0 %v7283
    %7555 = vmatpush.msra.mxu0 %v7280
    %7556 = vmatpush.msra.mxu0 %v7277
    %7557 = vmatpush.msra.mxu0 %v7274
    %7558 = vmatpush.msra.mxu0 %v7271
    %7559 = vmatpush.msra.mxu0 %v7268
    %7560 = vmatpush.msra.mxu0 %v7265
    %7561 = vmatpush.msra.mxu0 %v7262
    %7562 = vmatpush.msra.mxu0 %v7259
    %7563 = vmatpush.msra.mxu0 %v7256
    %7564 = vmatmul.f32.gmra.mxu0 %v7463
    %v7565 = vpop.f32.mrf.mxu0
    %v7566 = vadd.f32 0.0, %v7565
    %7567 = vdwg.mxu0
    %7568 = vmatpush.msra.mxu0 0.0
    %7569 = vmatpush.msra.mxu0 0.0
    %7570 = vmatpush.msra.mxu0 0.0
    %7571 = vmatpush.msra.mxu0 0.0
    %7572 = vmatpush.msra.mxu0 0.0
    %7573 = vmatpush.msra.mxu0 0.0
    %7574 = vmatpush.msra.mxu0 0.0
    %7575 = vmatpush.msra.mxu0 0.0
    %7576 = vmatpush.msra.mxu0 %v7338
    %7577 = vmatpush.msra.mxu0 %v7322
    %7578 = vmatpush.msra.mxu0 %v7319
    %7579 = vmatpush.msra.mxu0 %v7316
    %7580 = vmatpush.msra.mxu0 %v7313
    %7581 = vmatpush.msra.mxu0 %v7310
    %7582 = vmatpush.msra.mxu0 %v7307
    %7583 = vmatpush.msra.mxu0 %v7304
    %7584 = vmatmul.f32.gmra.mxu0 %v7466
    %v7585 = vpop.f32.mrf.mxu0
    %v7586 = vadd.f32 %v7566, %v7585
    %7587 = vdwg.mxu0
    %v7588 = vadd.f32 %v7171, %v7506
    %v7589 = vadd.f32 %v7211, %v7546
    %v7590 = vadd.f32 %v7251, %v7586
    %s7591 = scalar_lea.vmem %s4, 1728
    %v7592 = vld [vmem:[%s7591] sm:$0xff]
    %v7593 = vld [vmem:[%s7591 + $0x8] sm:$0xff]
    %v7594 = vld [vmem:[%s7591 + $0x10] sm:$0xff]
    %v7595 = vld [vmem:[%s7591 + $0x18] sm:$0xff]
    %v7596 = vld [vmem:[%s7591 + $0x20] sm:$0xff]
    %v7597 = vld [vmem:[%s7591 + $0x28] sm:$0xff]
    %v7598 = vld [vmem:[%s7591 + $0x30] sm:$0xff]
    %v7599 = vld [vmem:[%s7591 + $0x38] sm:$0xff]
    %v7600 = vld [vmem:[%s7591 + $0x40] sm:$0xff]
    %v7601 = vld [vmem:[%s7591 + $0x48] sm:$0xff]
    %v7602 = vld [vmem:[%s7591 + $0x50] sm:$0xff]
    %v7603 = vld [vmem:[%s7591 + $0x58] sm:$0xff]
    %v7604 = vld [vmem:[%s7591 + $0x60] sm:$0xff]
    %v7605 = vld [vmem:[%s7591 + $0x68] sm:$0xff]
    %v7606 = vld [vmem:[%s7591 + $0x70] sm:$0xff]
    %v7607 = vld [vmem:[%s7591 + $0x78] sm:$0xff]
    %v7608 = vld [vmem:[%s7591 + $0x80] sm:$0xff]
    %v7609 = vld [vmem:[%s7591 + $0x88] sm:$0xff]
    %v7610 = vld [vmem:[%s7591 + $0x90] sm:$0xff]
    %v7611 = vld [vmem:[%s7591 + $0x98] sm:$0xff]
    %v7612 = vld [vmem:[%s7591 + $0xa0] sm:$0xff]
    %v7613 = vld [vmem:[%s7591 + $0xa8] sm:$0xff]
    %v7614 = vld [vmem:[%s7591 + $0xb0] sm:$0xff]
    %v7615 = vld [vmem:[%s7591 + $0xb8] sm:$0xff]
    %v7616 = vld [vmem:[%s7591 + $0xc0] sm:$0xff]
    %v7617 = vld [vmem:[%s7591 + $0xc8] sm:$0xff]
    %v7618 = vld [vmem:[%s7591 + $0xd0] sm:$0xff]
    %v7619 = vld [vmem:[%s7591 + $0xd8] sm:$0xff]
    %v7620 = vld [vmem:[%s7591 + $0xe0] sm:$0xff]
    %v7621 = vld [vmem:[%s7591 + $0xe8] sm:$0xff]
    %v7622 = vld [vmem:[%s7591 + $0xf0] sm:$0xff]
    %v7623 = vld [vmem:[%s7591 + $0xf8] sm:$0xff]
    %v7624 = vld [vmem:[%s7591 + $0x100] sm:$0xff]
    %v7625 = vld [vmem:[%s7591 + $0x108] sm:$0xff]
    %v7626 = vld [vmem:[%s7591 + $0x110] sm:$0xff]
    %v7627 = vld [vmem:[%s7591 + $0x118] sm:$0xff]
    %v7628 = vld [vmem:[%s7591 + $0x120] sm:$0xff]
    %v7629 = vld [vmem:[%s7591 + $0x128] sm:$0xff]
    %v7630 = vld [vmem:[%s7591 + $0x130] sm:$0xff]
    %v7631 = vld [vmem:[%s7591 + $0x138] sm:$0xff]
    %v7632 = vld [vmem:[%s7591 + $0x140] sm:$0xff]
    %v7633 = vld [vmem:[%s7591 + $0x148] sm:$0xff]
    %v7634 = vld [vmem:[%s7591 + $0x150] sm:$0xff]
    %v7635 = vld [vmem:[%s7591 + $0x158] sm:$0xff]
    %v7636 = vld [vmem:[%s7591 + $0x160] sm:$0xff]
    %v7637 = vld [vmem:[%s7591 + $0x168] sm:$0xff]
    %v7638 = vld [vmem:[%s7591 + $0x170] sm:$0xff]
    %v7639 = vld [vmem:[%s7591 + $0x178] sm:$0xff]
    %v7640 = vld [vmem:[%s7591 + $0x180] sm:$0xff]
    %v7641 = vld [vmem:[%s7591 + $0x188] sm:$0xff]
    %v7642 = vld [vmem:[%s7591 + $0x190] sm:$0xff]
    %v7643 = vld [vmem:[%s7591 + $0x198] sm:$0xff]
    %v7644 = vld [vmem:[%s7591 + $0x1a0] sm:$0xff]
    %v7645 = vld [vmem:[%s7591 + $0x1a8] sm:$0xff]
    %v7646 = vld [vmem:[%s7591 + $0x1b0] sm:$0xff]
    %v7647 = vld [vmem:[%s7591 + $0x1b8] sm:$0xff]
    %v7648 = vld [vmem:[%s7591 + $0x1c0] sm:$0xff]
    %v7649 = vld [vmem:[%s7591 + $0x1c8] sm:$0xff]
    %v7650 = vld [vmem:[%s7591 + $0x1d0] sm:$0xff]
    %v7651 = vld [vmem:[%s7591 + $0x1d8] sm:$0xff]
    %v7652 = vld [vmem:[%s7591 + $0x1e0] sm:$0xff]
    %v7653 = vld [vmem:[%s7591 + $0x1e8] sm:$0xff]
    %v7654 = vld [vmem:[%s7591 + $0x1f0] sm:$0xff]
    %v7655 = vld [vmem:[%s7591 + $0x1f8] sm:$0xff]
    %v7656 = vld [vmem:[%s7591 + $0x200] sm:$0xff]
    %v7657 = vld [vmem:[%s7591 + $0x208] sm:$0xff]
    %v7658 = vld [vmem:[%s7591 + $0x210] sm:$0xff]
    %v7659 = vld [vmem:[%s7591 + $0x218] sm:$0xff]
    %v7660 = vld [vmem:[%s7591 + $0x220] sm:$0xff]
    %v7661 = vld [vmem:[%s7591 + $0x228] sm:$0x3f]
    %v7662 = vld [vmem:[%s7591 + $0x230] sm:$0x3f]
    %v7663 = vld [vmem:[%s7591 + $0x238] sm:$0x3f]
    %v7664 = vrot.slane %v6431, 3
    %v7665 = vrot.slane %v6432, 3
    %v7667 = vsel %vm6741, %v7665, 0
    %v7670 = vsel %vm447, %v7661, 0
    %v7673 = vsel %vm447, %v7662, 0
    %v7676 = vsel %vm447, %v7663, 0
    %7678 = vmatpush.msra.mxu0 %v7637
    %7679 = vmatpush.msra.mxu0 %v7634
    %7680 = vmatpush.msra.mxu0 %v7631
    %7681 = vmatpush.msra.mxu0 %v7628
    %7682 = vmatpush.msra.mxu0 %v7625
    %7683 = vmatpush.msra.mxu0 %v7622
    %7684 = vmatpush.msra.mxu0 %v7619
    %7685 = vmatpush.msra.mxu0 %v7616
    %7686 = vmatpush.msra.mxu0 %v7613
    %7687 = vmatpush.msra.mxu0 %v7610
    %7688 = vmatpush.msra.mxu0 %v7607
    %7689 = vmatpush.msra.mxu0 %v7604
    %7690 = vmatpush.msra.mxu0 %v7601
    %7691 = vmatpush.msra.mxu0 %v7598
    %7692 = vmatpush.msra.mxu0 %v7595
    %7693 = vmatpush.msra.mxu0 %v7592
    %7694 = vmatmul.f32.gmra.mxu0 %v7664
    %v7695 = vpop.f32.mrf.mxu0
    %v7696 = vadd.f32 0.0, %v7695
    %7697 = vdwg.mxu0
    %7698 = vmatpush.msra.mxu0 0.0
    %7699 = vmatpush.msra.mxu0 0.0
    %7700 = vmatpush.msra.mxu0 0.0
    %7701 = vmatpush.msra.mxu0 0.0
    %7702 = vmatpush.msra.mxu0 0.0
    %7703 = vmatpush.msra.mxu0 0.0
    %7704 = vmatpush.msra.mxu0 0.0
    %7705 = vmatpush.msra.mxu0 0.0
    %7706 = vmatpush.msra.mxu0 %v7670
    %7707 = vmatpush.msra.mxu0 %v7658
    %7708 = vmatpush.msra.mxu0 %v7655
    %7709 = vmatpush.msra.mxu0 %v7652
    %7710 = vmatpush.msra.mxu0 %v7649
    %7711 = vmatpush.msra.mxu0 %v7646
    %7712 = vmatpush.msra.mxu0 %v7643
    %7713 = vmatpush.msra.mxu0 %v7640
    %7714 = vmatmul.f32.gmra.mxu0 %v7667
    %v7715 = vpop.f32.mrf.mxu0
    %v7716 = vadd.f32 %v7696, %v7715
    %7717 = vdwg.mxu0
    %7718 = vmatpush.msra.mxu0 %v7638
    %7719 = vmatpush.msra.mxu0 %v7635
    %7720 = vmatpush.msra.mxu0 %v7632
    %7721 = vmatpush.msra.mxu0 %v7629
    %7722 = vmatpush.msra.mxu0 %v7626
    %7723 = vmatpush.msra.mxu0 %v7623
    %7724 = vmatpush.msra.mxu0 %v7620
    %7725 = vmatpush.msra.mxu0 %v7617
    %7726 = vmatpush.msra.mxu0 %v7614
    %7727 = vmatpush.msra.mxu0 %v7611
    %7728 = vmatpush.msra.mxu0 %v7608
    %7729 = vmatpush.msra.mxu0 %v7605
    %7730 = vmatpush.msra.mxu0 %v7602
    %7731 = vmatpush.msra.mxu0 %v7599
    %7732 = vmatpush.msra.mxu0 %v7596
    %7733 = vmatpush.msra.mxu0 %v7593
    %7734 = vmatmul.f32.gmra.mxu0 %v7664
    %v7735 = vpop.f32.mrf.mxu0
    %v7736 = vadd.f32 0.0, %v7735
    %7737 = vdwg.mxu0
    %7738 = vmatpush.msra.mxu0 0.0
    %7739 = vmatpush.msra.mxu0 0.0
    %7740 = vmatpush.msra.mxu0 0.0
    %7741 = vmatpush.msra.mxu0 0.0
    %7742 = vmatpush.msra.mxu0 0.0
    %7743 = vmatpush.msra.mxu0 0.0
    %7744 = vmatpush.msra.mxu0 0.0
    %7745 = vmatpush.msra.mxu0 0.0
    %7746 = vmatpush.msra.mxu0 %v7673
    %7747 = vmatpush.msra.mxu0 %v7659
    %7748 = vmatpush.msra.mxu0 %v7656
    %7749 = vmatpush.msra.mxu0 %v7653
    %7750 = vmatpush.msra.mxu0 %v7650
    %7751 = vmatpush.msra.mxu0 %v7647
    %7752 = vmatpush.msra.mxu0 %v7644
    %7753 = vmatpush.msra.mxu0 %v7641
    %7754 = vmatmul.f32.gmra.mxu0 %v7667
    %v7755 = vpop.f32.mrf.mxu0
    %v7756 = vadd.f32 %v7736, %v7755
    %7757 = vdwg.mxu0
    %7758 = vmatpush.msra.mxu0 %v7639
    %7759 = vmatpush.msra.mxu0 %v7636
    %7760 = vmatpush.msra.mxu0 %v7633
    %7761 = vmatpush.msra.mxu0 %v7630
    %7762 = vmatpush.msra.mxu0 %v7627
    %7763 = vmatpush.msra.mxu0 %v7624
    %7764 = vmatpush.msra.mxu0 %v7621
    %7765 = vmatpush.msra.mxu0 %v7618
    %7766 = vmatpush.msra.mxu0 %v7615
    %7767 = vmatpush.msra.mxu0 %v7612
    %7768 = vmatpush.msra.mxu0 %v7609
    %7769 = vmatpush.msra.mxu0 %v7606
    %7770 = vmatpush.msra.mxu0 %v7603
    %7771 = vmatpush.msra.mxu0 %v7600
    %7772 = vmatpush.msra.mxu0 %v7597
    %7773 = vmatpush.msra.mxu0 %v7594
    %7774 = vmatmul.f32.gmra.mxu0 %v7664
    %v7775 = vpop.f32.mrf.mxu0
    %v7776 = vadd.f32 0.0, %v7775
    %7777 = vdwg.mxu0
    %7778 = vmatpush.msra.mxu0 0.0
    %7779 = vmatpush.msra.mxu0 0.0
    %7780 = vmatpush.msra.mxu0 0.0
    %7781 = vmatpush.msra.mxu0 0.0
    %7782 = vmatpush.msra.mxu0 0.0
    %7783 = vmatpush.msra.mxu0 0.0
    %7784 = vmatpush.msra.mxu0 0.0
    %7785 = vmatpush.msra.mxu0 0.0
    %7786 = vmatpush.msra.mxu0 %v7676
    %7787 = vmatpush.msra.mxu0 %v7660
    %7788 = vmatpush.msra.mxu0 %v7657
    %7789 = vmatpush.msra.mxu0 %v7654
    %7790 = vmatpush.msra.mxu0 %v7651
    %7791 = vmatpush.msra.mxu0 %v7648
    %7792 = vmatpush.msra.mxu0 %v7645
    %7793 = vmatpush.msra.mxu0 %v7642
    %7794 = vmatmul.f32.gmra.mxu0 %v7667
    %v7795 = vpop.f32.mrf.mxu0
    %v7796 = vadd.f32 %v7776, %v7795
    %7797 = vdwg.mxu0
    %v7798 = vadd.f32 %v7460, %v7716
    %v7799 = vadd.f32 %v7461, %v7756
    %v7800 = vadd.f32 %v7462, %v7796
    %v7801 = vrot.slane %v6587, 3
    %v7802 = vrot.slane %v6588, 3
    %v7804 = vsel %vm6741, %v7802, 0
    %7806 = vmatpush.msra.mxu0 %v7637
    %7807 = vmatpush.msra.mxu0 %v7634
    %7808 = vmatpush.msra.mxu0 %v7631
    %7809 = vmatpush.msra.mxu0 %v7628
    %7810 = vmatpush.msra.mxu0 %v7625
    %7811 = vmatpush.msra.mxu0 %v7622
    %7812 = vmatpush.msra.mxu0 %v7619
    %7813 = vmatpush.msra.mxu0 %v7616
    %7814 = vmatpush.msra.mxu0 %v7613
    %7815 = vmatpush.msra.mxu0 %v7610
    %7816 = vmatpush.msra.mxu0 %v7607
    %7817 = vmatpush.msra.mxu0 %v7604
    %7818 = vmatpush.msra.mxu0 %v7601
    %7819 = vmatpush.msra.mxu0 %v7598
    %7820 = vmatpush.msra.mxu0 %v7595
    %7821 = vmatpush.msra.mxu0 %v7592
    %7822 = vmatmul.f32.gmra.mxu0 %v7801
    %v7823 = vpop.f32.mrf.mxu0
    %v7824 = vadd.f32 0.0, %v7823
    %7825 = vdwg.mxu0
    %7826 = vmatpush.msra.mxu0 0.0
    %7827 = vmatpush.msra.mxu0 0.0
    %7828 = vmatpush.msra.mxu0 0.0
    %7829 = vmatpush.msra.mxu0 0.0
    %7830 = vmatpush.msra.mxu0 0.0
    %7831 = vmatpush.msra.mxu0 0.0
    %7832 = vmatpush.msra.mxu0 0.0
    %7833 = vmatpush.msra.mxu0 0.0
    %7834 = vmatpush.msra.mxu0 %v7670
    %7835 = vmatpush.msra.mxu0 %v7658
    %7836 = vmatpush.msra.mxu0 %v7655
    %7837 = vmatpush.msra.mxu0 %v7652
    %7838 = vmatpush.msra.mxu0 %v7649
    %7839 = vmatpush.msra.mxu0 %v7646
    %7840 = vmatpush.msra.mxu0 %v7643
    %7841 = vmatpush.msra.mxu0 %v7640
    %7842 = vmatmul.f32.gmra.mxu0 %v7804
    %v7843 = vpop.f32.mrf.mxu0
    %v7844 = vadd.f32 %v7824, %v7843
    %7845 = vdwg.mxu0
    %7846 = vmatpush.msra.mxu0 %v7638
    %7847 = vmatpush.msra.mxu0 %v7635
    %7848 = vmatpush.msra.mxu0 %v7632
    %7849 = vmatpush.msra.mxu0 %v7629
    %7850 = vmatpush.msra.mxu0 %v7626
    %7851 = vmatpush.msra.mxu0 %v7623
    %7852 = vmatpush.msra.mxu0 %v7620
    %7853 = vmatpush.msra.mxu0 %v7617
    %7854 = vmatpush.msra.mxu0 %v7614
    %7855 = vmatpush.msra.mxu0 %v7611
    %7856 = vmatpush.msra.mxu0 %v7608
    %7857 = vmatpush.msra.mxu0 %v7605
    %7858 = vmatpush.msra.mxu0 %v7602
    %7859 = vmatpush.msra.mxu0 %v7599
    %7860 = vmatpush.msra.mxu0 %v7596
    %7861 = vmatpush.msra.mxu0 %v7593
    %7862 = vmatmul.f32.gmra.mxu0 %v7801
    %v7863 = vpop.f32.mrf.mxu0
    %v7864 = vadd.f32 0.0, %v7863
    %7865 = vdwg.mxu0
    %7866 = vmatpush.msra.mxu0 0.0
    %7867 = vmatpush.msra.mxu0 0.0
    %7868 = vmatpush.msra.mxu0 0.0
    %7869 = vmatpush.msra.mxu0 0.0
    %7870 = vmatpush.msra.mxu0 0.0
    %7871 = vmatpush.msra.mxu0 0.0
    %7872 = vmatpush.msra.mxu0 0.0
    %7873 = vmatpush.msra.mxu0 0.0
    %7874 = vmatpush.msra.mxu0 %v7673
    %7875 = vmatpush.msra.mxu0 %v7659
    %7876 = vmatpush.msra.mxu0 %v7656
    %7877 = vmatpush.msra.mxu0 %v7653
    %7878 = vmatpush.msra.mxu0 %v7650
    %7879 = vmatpush.msra.mxu0 %v7647
    %7880 = vmatpush.msra.mxu0 %v7644
    %7881 = vmatpush.msra.mxu0 %v7641
    %7882 = vmatmul.f32.gmra.mxu0 %v7804
    %v7883 = vpop.f32.mrf.mxu0
    %v7884 = vadd.f32 %v7864, %v7883
    %7885 = vdwg.mxu0
    %7886 = vmatpush.msra.mxu0 %v7639
    %7887 = vmatpush.msra.mxu0 %v7636
    %7888 = vmatpush.msra.mxu0 %v7633
    %7889 = vmatpush.msra.mxu0 %v7630
    %7890 = vmatpush.msra.mxu0 %v7627
    %7891 = vmatpush.msra.mxu0 %v7624
    %7892 = vmatpush.msra.mxu0 %v7621
    %7893 = vmatpush.msra.mxu0 %v7618
    %7894 = vmatpush.msra.mxu0 %v7615
    %7895 = vmatpush.msra.mxu0 %v7612
    %7896 = vmatpush.msra.mxu0 %v7609
    %7897 = vmatpush.msra.mxu0 %v7606
    %7898 = vmatpush.msra.mxu0 %v7603
    %7899 = vmatpush.msra.mxu0 %v7600
    %7900 = vmatpush.msra.mxu0 %v7597
    %7901 = vmatpush.msra.mxu0 %v7594
    %7902 = vmatmul.f32.gmra.mxu0 %v7801
    %v7903 = vpop.f32.mrf.mxu0
    %v7904 = vadd.f32 0.0, %v7903
    %7905 = vdwg.mxu0
    %7906 = vmatpush.msra.mxu0 0.0
    %7907 = vmatpush.msra.mxu0 0.0
    %7908 = vmatpush.msra.mxu0 0.0
    %7909 = vmatpush.msra.mxu0 0.0
    %7910 = vmatpush.msra.mxu0 0.0
    %7911 = vmatpush.msra.mxu0 0.0
    %7912 = vmatpush.msra.mxu0 0.0
    %7913 = vmatpush.msra.mxu0 0.0
    %7914 = vmatpush.msra.mxu0 %v7676
    %7915 = vmatpush.msra.mxu0 %v7660
    %7916 = vmatpush.msra.mxu0 %v7657
    %7917 = vmatpush.msra.mxu0 %v7654
    %7918 = vmatpush.msra.mxu0 %v7651
    %7919 = vmatpush.msra.mxu0 %v7648
    %7920 = vmatpush.msra.mxu0 %v7645
    %7921 = vmatpush.msra.mxu0 %v7642
    %7922 = vmatmul.f32.gmra.mxu0 %v7804
    %v7923 = vpop.f32.mrf.mxu0
    %v7924 = vadd.f32 %v7904, %v7923
    %7925 = vdwg.mxu0
    %v7926 = vadd.f32 %v7588, %v7844
    %v7927 = vadd.f32 %v7589, %v7884
    %v7928 = vadd.f32 %v7590, %v7924
    %s7929 = scalar_lea.vmem %s4, 2304
    %v7930 = vld [vmem:[%s7929] sm:$0xff]
    %v7931 = vld [vmem:[%s7929 + $0x8] sm:$0xff]
    %v7932 = vld [vmem:[%s7929 + $0x10] sm:$0xff]
    %v7933 = vld [vmem:[%s7929 + $0x18] sm:$0xff]
    %v7934 = vld [vmem:[%s7929 + $0x20] sm:$0xff]
    %v7935 = vld [vmem:[%s7929 + $0x28] sm:$0xff]
    %v7936 = vld [vmem:[%s7929 + $0x30] sm:$0xff]
    %v7937 = vld [vmem:[%s7929 + $0x38] sm:$0xff]
    %v7938 = vld [vmem:[%s7929 + $0x40] sm:$0xff]
    %v7939 = vld [vmem:[%s7929 + $0x48] sm:$0xff]
    %v7940 = vld [vmem:[%s7929 + $0x50] sm:$0xff]
    %v7941 = vld [vmem:[%s7929 + $0x58] sm:$0xff]
    %v7942 = vld [vmem:[%s7929 + $0x60] sm:$0xff]
    %v7943 = vld [vmem:[%s7929 + $0x68] sm:$0xff]
    %v7944 = vld [vmem:[%s7929 + $0x70] sm:$0xff]
    %v7945 = vld [vmem:[%s7929 + $0x78] sm:$0xff]
    %v7946 = vld [vmem:[%s7929 + $0x80] sm:$0xff]
    %v7947 = vld [vmem:[%s7929 + $0x88] sm:$0xff]
    %v7948 = vld [vmem:[%s7929 + $0x90] sm:$0xff]
    %v7949 = vld [vmem:[%s7929 + $0x98] sm:$0xff]
    %v7950 = vld [vmem:[%s7929 + $0xa0] sm:$0xff]
    %v7951 = vld [vmem:[%s7929 + $0xa8] sm:$0xff]
    %v7952 = vld [vmem:[%s7929 + $0xb0] sm:$0xff]
    %v7953 = vld [vmem:[%s7929 + $0xb8] sm:$0xff]
    %v7954 = vld [vmem:[%s7929 + $0xc0] sm:$0xff]
    %v7955 = vld [vmem:[%s7929 + $0xc8] sm:$0xff]
    %v7956 = vld [vmem:[%s7929 + $0xd0] sm:$0xff]
    %v7957 = vld [vmem:[%s7929 + $0xd8] sm:$0xff]
    %v7958 = vld [vmem:[%s7929 + $0xe0] sm:$0xff]
    %v7959 = vld [vmem:[%s7929 + $0xe8] sm:$0xff]
    %v7960 = vld [vmem:[%s7929 + $0xf0] sm:$0xff]
    %v7961 = vld [vmem:[%s7929 + $0xf8] sm:$0xff]
    %v7962 = vld [vmem:[%s7929 + $0x100] sm:$0xff]
    %v7963 = vld [vmem:[%s7929 + $0x108] sm:$0xff]
    %v7964 = vld [vmem:[%s7929 + $0x110] sm:$0xff]
    %v7965 = vld [vmem:[%s7929 + $0x118] sm:$0xff]
    %v7966 = vld [vmem:[%s7929 + $0x120] sm:$0xff]
    %v7967 = vld [vmem:[%s7929 + $0x128] sm:$0xff]
    %v7968 = vld [vmem:[%s7929 + $0x130] sm:$0xff]
    %v7969 = vld [vmem:[%s7929 + $0x138] sm:$0xff]
    %v7970 = vld [vmem:[%s7929 + $0x140] sm:$0xff]
    %v7971 = vld [vmem:[%s7929 + $0x148] sm:$0xff]
    %v7972 = vld [vmem:[%s7929 + $0x150] sm:$0xff]
    %v7973 = vld [vmem:[%s7929 + $0x158] sm:$0xff]
    %v7974 = vld [vmem:[%s7929 + $0x160] sm:$0xff]
    %v7975 = vld [vmem:[%s7929 + $0x168] sm:$0xff]
    %v7976 = vld [vmem:[%s7929 + $0x170] sm:$0xff]
    %v7977 = vld [vmem:[%s7929 + $0x178] sm:$0xff]
    %v7978 = vld [vmem:[%s7929 + $0x180] sm:$0xff]
    %v7979 = vld [vmem:[%s7929 + $0x188] sm:$0xff]
    %v7980 = vld [vmem:[%s7929 + $0x190] sm:$0xff]
    %v7981 = vld [vmem:[%s7929 + $0x198] sm:$0xff]
    %v7982 = vld [vmem:[%s7929 + $0x1a0] sm:$0xff]
    %v7983 = vld [vmem:[%s7929 + $0x1a8] sm:$0xff]
    %v7984 = vld [vmem:[%s7929 + $0x1b0] sm:$0xff]
    %v7985 = vld [vmem:[%s7929 + $0x1b8] sm:$0xff]
    %v7986 = vld [vmem:[%s7929 + $0x1c0] sm:$0xff]
    %v7987 = vld [vmem:[%s7929 + $0x1c8] sm:$0xff]
    %v7988 = vld [vmem:[%s7929 + $0x1d0] sm:$0xff]
    %v7989 = vld [vmem:[%s7929 + $0x1d8] sm:$0xff]
    %v7990 = vld [vmem:[%s7929 + $0x1e0] sm:$0xff]
    %v7991 = vld [vmem:[%s7929 + $0x1e8] sm:$0xff]
    %v7992 = vld [vmem:[%s7929 + $0x1f0] sm:$0xff]
    %v7993 = vld [vmem:[%s7929 + $0x1f8] sm:$0xff]
    %v7994 = vld [vmem:[%s7929 + $0x200] sm:$0xff]
    %v7995 = vld [vmem:[%s7929 + $0x208] sm:$0xff]
    %v7996 = vld [vmem:[%s7929 + $0x210] sm:$0xff]
    %v7997 = vld [vmem:[%s7929 + $0x218] sm:$0xff]
    %v7998 = vld [vmem:[%s7929 + $0x220] sm:$0xff]
    %v7999 = vld [vmem:[%s7929 + $0x228] sm:$0x3f]
    %v8000 = vld [vmem:[%s7929 + $0x230] sm:$0x3f]
    %v8001 = vld [vmem:[%s7929 + $0x238] sm:$0x3f]
    %v8004 = vrot.slane %v6431, 4
    %v8005 = vrot.slane %v6433, 4
    %v8006 = vsel %vm77, %v8004, %v8005
    %v8007 = vrot.slane %v6432, 4
    %v8008 = vrot.slane %v6434, 4
    %v8009 = vsel %vm77, %v8007, %v8008
    %v8011 = vsel %vm6741, %v8009, 0
    %v8014 = vsel %vm447, %v7999, 0
    %v8017 = vsel %vm447, %v8000, 0
    %v8020 = vsel %vm447, %v8001, 0
    %8022 = vmatpush.msra.mxu0 %v7975
    %8023 = vmatpush.msra.mxu0 %v7972
    %8024 = vmatpush.msra.mxu0 %v7969
    %8025 = vmatpush.msra.mxu0 %v7966
    %8026 = vmatpush.msra.mxu0 %v7963
    %8027 = vmatpush.msra.mxu0 %v7960
    %8028 = vmatpush.msra.mxu0 %v7957
    %8029 = vmatpush.msra.mxu0 %v7954
    %8030 = vmatpush.msra.mxu0 %v7951
    %8031 = vmatpush.msra.mxu0 %v7948
    %8032 = vmatpush.msra.mxu0 %v7945
    %8033 = vmatpush.msra.mxu0 %v7942
    %8034 = vmatpush.msra.mxu0 %v7939
    %8035 = vmatpush.msra.mxu0 %v7936
    %8036 = vmatpush.msra.mxu0 %v7933
    %8037 = vmatpush.msra.mxu0 %v7930
    %8038 = vmatmul.f32.gmra.mxu0 %v8006
    %v8039 = vpop.f32.mrf.mxu0
    %v8040 = vadd.f32 0.0, %v8039
    %8041 = vdwg.mxu0
    %8042 = vmatpush.msra.mxu0 0.0
    %8043 = vmatpush.msra.mxu0 0.0
    %8044 = vmatpush.msra.mxu0 0.0
    %8045 = vmatpush.msra.mxu0 0.0
    %8046 = vmatpush.msra.mxu0 0.0
    %8047 = vmatpush.msra.mxu0 0.0
    %8048 = vmatpush.msra.mxu0 0.0
    %8049 = vmatpush.msra.mxu0 0.0
    %8050 = vmatpush.msra.mxu0 %v8014
    %8051 = vmatpush.msra.mxu0 %v7996
    %8052 = vmatpush.msra.mxu0 %v7993
    %8053 = vmatpush.msra.mxu0 %v7990
    %8054 = vmatpush.msra.mxu0 %v7987
    %8055 = vmatpush.msra.mxu0 %v7984
    %8056 = vmatpush.msra.mxu0 %v7981
    %8057 = vmatpush.msra.mxu0 %v7978
    %8058 = vmatmul.f32.gmra.mxu0 %v8011
    %v8059 = vpop.f32.mrf.mxu0
    %v8060 = vadd.f32 %v8040, %v8059
    %8061 = vdwg.mxu0
    %8062 = vmatpush.msra.mxu0 %v7976
    %8063 = vmatpush.msra.mxu0 %v7973
    %8064 = vmatpush.msra.mxu0 %v7970
    %8065 = vmatpush.msra.mxu0 %v7967
    %8066 = vmatpush.msra.mxu0 %v7964
    %8067 = vmatpush.msra.mxu0 %v7961
    %8068 = vmatpush.msra.mxu0 %v7958
    %8069 = vmatpush.msra.mxu0 %v7955
    %8070 = vmatpush.msra.mxu0 %v7952
    %8071 = vmatpush.msra.mxu0 %v7949
    %8072 = vmatpush.msra.mxu0 %v7946
    %8073 = vmatpush.msra.mxu0 %v7943
    %8074 = vmatpush.msra.mxu0 %v7940
    %8075 = vmatpush.msra.mxu0 %v7937
    %8076 = vmatpush.msra.mxu0 %v7934
    %8077 = vmatpush.msra.mxu0 %v7931
    %8078 = vmatmul.f32.gmra.mxu0 %v8006
    %v8079 = vpop.f32.mrf.mxu0
    %v8080 = vadd.f32 0.0, %v8079
    %8081 = vdwg.mxu0
    %8082 = vmatpush.msra.mxu0 0.0
    %8083 = vmatpush.msra.mxu0 0.0
    %8084 = vmatpush.msra.mxu0 0.0
    %8085 = vmatpush.msra.mxu0 0.0
    %8086 = vmatpush.msra.mxu0 0.0
    %8087 = vmatpush.msra.mxu0 0.0
    %8088 = vmatpush.msra.mxu0 0.0
    %8089 = vmatpush.msra.mxu0 0.0
    %8090 = vmatpush.msra.mxu0 %v8017
    %8091 = vmatpush.msra.mxu0 %v7997
    %8092 = vmatpush.msra.mxu0 %v7994
    %8093 = vmatpush.msra.mxu0 %v7991
    %8094 = vmatpush.msra.mxu0 %v7988
    %8095 = vmatpush.msra.mxu0 %v7985
    %8096 = vmatpush.msra.mxu0 %v7982
    %8097 = vmatpush.msra.mxu0 %v7979
    %8098 = vmatmul.f32.gmra.mxu0 %v8011
    %v8099 = vpop.f32.mrf.mxu0
    %v8100 = vadd.f32 %v8080, %v8099
    %8101 = vdwg.mxu0
    %8102 = vmatpush.msra.mxu0 %v7977
    %8103 = vmatpush.msra.mxu0 %v7974
    %8104 = vmatpush.msra.mxu0 %v7971
    %8105 = vmatpush.msra.mxu0 %v7968
    %8106 = vmatpush.msra.mxu0 %v7965
    %8107 = vmatpush.msra.mxu0 %v7962
    %8108 = vmatpush.msra.mxu0 %v7959
    %8109 = vmatpush.msra.mxu0 %v7956
    %8110 = vmatpush.msra.mxu0 %v7953
    %8111 = vmatpush.msra.mxu0 %v7950
    %8112 = vmatpush.msra.mxu0 %v7947
    %8113 = vmatpush.msra.mxu0 %v7944
    %8114 = vmatpush.msra.mxu0 %v7941
    %8115 = vmatpush.msra.mxu0 %v7938
    %8116 = vmatpush.msra.mxu0 %v7935
    %8117 = vmatpush.msra.mxu0 %v7932
    %8118 = vmatmul.f32.gmra.mxu0 %v8006
    %v8119 = vpop.f32.mrf.mxu0
    %v8120 = vadd.f32 0.0, %v8119
    %8121 = vdwg.mxu0
    %8122 = vmatpush.msra.mxu0 0.0
    %8123 = vmatpush.msra.mxu0 0.0
    %8124 = vmatpush.msra.mxu0 0.0
    %8125 = vmatpush.msra.mxu0 0.0
    %8126 = vmatpush.msra.mxu0 0.0
    %8127 = vmatpush.msra.mxu0 0.0
    %8128 = vmatpush.msra.mxu0 0.0
    %8129 = vmatpush.msra.mxu0 0.0
    %8130 = vmatpush.msra.mxu0 %v8020
    %8131 = vmatpush.msra.mxu0 %v7998
    %8132 = vmatpush.msra.mxu0 %v7995
    %8133 = vmatpush.msra.mxu0 %v7992
    %8134 = vmatpush.msra.mxu0 %v7989
    %8135 = vmatpush.msra.mxu0 %v7986
    %8136 = vmatpush.msra.mxu0 %v7983
    %8137 = vmatpush.msra.mxu0 %v7980
    %8138 = vmatmul.f32.gmra.mxu0 %v8011
    %v8139 = vpop.f32.mrf.mxu0
    %v8140 = vadd.f32 %v8120, %v8139
    %8141 = vdwg.mxu0
    %v8142 = vadd.f32 %v7798, %v8060
    %v8143 = vadd.f32 %v7799, %v8100
    %v8144 = vadd.f32 %v7800, %v8140
    %v8147 = vrot.slane %v6587, 4
    %v8148 = vrot.slane %v6589, 4
    %v8149 = vsel %vm77, %v8147, %v8148
    %v8150 = vrot.slane %v6588, 4
    %v8151 = vrot.slane %v6590, 4
    %v8152 = vsel %vm77, %v8150, %v8151
    %v8154 = vsel %vm6741, %v8152, 0
    %8156 = vmatpush.msra.mxu0 %v7975
    %8157 = vmatpush.msra.mxu0 %v7972
    %8158 = vmatpush.msra.mxu0 %v7969
    %8159 = vmatpush.msra.mxu0 %v7966
    %8160 = vmatpush.msra.mxu0 %v7963
    %8161 = vmatpush.msra.mxu0 %v7960
    %8162 = vmatpush.msra.mxu0 %v7957
    %8163 = vmatpush.msra.mxu0 %v7954
    %8164 = vmatpush.msra.mxu0 %v7951
    %8165 = vmatpush.msra.mxu0 %v7948
    %8166 = vmatpush.msra.mxu0 %v7945
    %8167 = vmatpush.msra.mxu0 %v7942
    %8168 = vmatpush.msra.mxu0 %v7939
    %8169 = vmatpush.msra.mxu0 %v7936
    %8170 = vmatpush.msra.mxu0 %v7933
    %8171 = vmatpush.msra.mxu0 %v7930
    %8172 = vmatmul.f32.gmra.mxu0 %v8149
    %v8173 = vpop.f32.mrf.mxu0
    %v8174 = vadd.f32 0.0, %v8173
    %8175 = vdwg.mxu0
    %8176 = vmatpush.msra.mxu0 0.0
    %8177 = vmatpush.msra.mxu0 0.0
    %8178 = vmatpush.msra.mxu0 0.0
    %8179 = vmatpush.msra.mxu0 0.0
    %8180 = vmatpush.msra.mxu0 0.0
    %8181 = vmatpush.msra.mxu0 0.0
    %8182 = vmatpush.msra.mxu0 0.0
    %8183 = vmatpush.msra.mxu0 0.0
    %8184 = vmatpush.msra.mxu0 %v8014
    %8185 = vmatpush.msra.mxu0 %v7996
    %8186 = vmatpush.msra.mxu0 %v7993
    %8187 = vmatpush.msra.mxu0 %v7990
    %8188 = vmatpush.msra.mxu0 %v7987
    %8189 = vmatpush.msra.mxu0 %v7984
    %8190 = vmatpush.msra.mxu0 %v7981
    %8191 = vmatpush.msra.mxu0 %v7978
    %8192 = vmatmul.f32.gmra.mxu0 %v8154
    %v8193 = vpop.f32.mrf.mxu0
    %v8194 = vadd.f32 %v8174, %v8193
    %8195 = vdwg.mxu0
    %8196 = vmatpush.msra.mxu0 %v7976
    %8197 = vmatpush.msra.mxu0 %v7973
    %8198 = vmatpush.msra.mxu0 %v7970
    %8199 = vmatpush.msra.mxu0 %v7967
    %8200 = vmatpush.msra.mxu0 %v7964
    %8201 = vmatpush.msra.mxu0 %v7961
    %8202 = vmatpush.msra.mxu0 %v7958
    %8203 = vmatpush.msra.mxu0 %v7955
    %8204 = vmatpush.msra.mxu0 %v7952
    %8205 = vmatpush.msra.mxu0 %v7949
    %8206 = vmatpush.msra.mxu0 %v7946
    %8207 = vmatpush.msra.mxu0 %v7943
    %8208 = vmatpush.msra.mxu0 %v7940
    %8209 = vmatpush.msra.mxu0 %v7937
    %8210 = vmatpush.msra.mxu0 %v7934
    %8211 = vmatpush.msra.mxu0 %v7931
    %8212 = vmatmul.f32.gmra.mxu0 %v8149
    %v8213 = vpop.f32.mrf.mxu0
    %v8214 = vadd.f32 0.0, %v8213
    %8215 = vdwg.mxu0
    %8216 = vmatpush.msra.mxu0 0.0
    %8217 = vmatpush.msra.mxu0 0.0
    %8218 = vmatpush.msra.mxu0 0.0
    %8219 = vmatpush.msra.mxu0 0.0
    %8220 = vmatpush.msra.mxu0 0.0
    %8221 = vmatpush.msra.mxu0 0.0
    %8222 = vmatpush.msra.mxu0 0.0
    %8223 = vmatpush.msra.mxu0 0.0
    %8224 = vmatpush.msra.mxu0 %v8017
    %8225 = vmatpush.msra.mxu0 %v7997
    %8226 = vmatpush.msra.mxu0 %v7994
    %8227 = vmatpush.msra.mxu0 %v7991
    %8228 = vmatpush.msra.mxu0 %v7988
    %8229 = vmatpush.msra.mxu0 %v7985
    %8230 = vmatpush.msra.mxu0 %v7982
    %8231 = vmatpush.msra.mxu0 %v7979
    %8232 = vmatmul.f32.gmra.mxu0 %v8154
    %v8233 = vpop.f32.mrf.mxu0
    %v8234 = vadd.f32 %v8214, %v8233
    %8235 = vdwg.mxu0
    %8236 = vmatpush.msra.mxu0 %v7977
    %8237 = vmatpush.msra.mxu0 %v7974
    %8238 = vmatpush.msra.mxu0 %v7971
    %8239 = vmatpush.msra.mxu0 %v7968
    %8240 = vmatpush.msra.mxu0 %v7965
    %8241 = vmatpush.msra.mxu0 %v7962
    %8242 = vmatpush.msra.mxu0 %v7959
    %8243 = vmatpush.msra.mxu0 %v7956
    %8244 = vmatpush.msra.mxu0 %v7953
    %8245 = vmatpush.msra.mxu0 %v7950
    %8246 = vmatpush.msra.mxu0 %v7947
    %8247 = vmatpush.msra.mxu0 %v7944
    %8248 = vmatpush.msra.mxu0 %v7941
    %8249 = vmatpush.msra.mxu0 %v7938
    %8250 = vmatpush.msra.mxu0 %v7935
    %8251 = vmatpush.msra.mxu0 %v7932
    %8252 = vmatmul.f32.gmra.mxu0 %v8149
    %v8253 = vpop.f32.mrf.mxu0
    %v8254 = vadd.f32 0.0, %v8253
    %8255 = vdwg.mxu0
    %8256 = vmatpush.msra.mxu0 0.0
    %8257 = vmatpush.msra.mxu0 0.0
    %8258 = vmatpush.msra.mxu0 0.0
    %8259 = vmatpush.msra.mxu0 0.0
    %8260 = vmatpush.msra.mxu0 0.0
    %8261 = vmatpush.msra.mxu0 0.0
    %8262 = vmatpush.msra.mxu0 0.0
    %8263 = vmatpush.msra.mxu0 0.0
    %8264 = vmatpush.msra.mxu0 %v8020
    %8265 = vmatpush.msra.mxu0 %v7998
    %8266 = vmatpush.msra.mxu0 %v7995
    %8267 = vmatpush.msra.mxu0 %v7992
    %8268 = vmatpush.msra.mxu0 %v7989
    %8269 = vmatpush.msra.mxu0 %v7986
    %8270 = vmatpush.msra.mxu0 %v7983
    %8271 = vmatpush.msra.mxu0 %v7980
    %8272 = vmatmul.f32.gmra.mxu0 %v8154
    %v8273 = vpop.f32.mrf.mxu0
    %v8274 = vadd.f32 %v8254, %v8273
    %8275 = vdwg.mxu0
    %v8276 = vadd.f32 %v7926, %v8194
    %v8277 = vadd.f32 %v7927, %v8234
    %v8278 = vadd.f32 %v7928, %v8274
    %s8279 = scalar_lea.vmem %s4, 2880
    %v8280 = vld [vmem:[%s8279] sm:$0xff]
    %v8281 = vld [vmem:[%s8279 + $0x8] sm:$0xff]
    %v8282 = vld [vmem:[%s8279 + $0x10] sm:$0xff]
    %v8283 = vld [vmem:[%s8279 + $0x18] sm:$0xff]
    %v8284 = vld [vmem:[%s8279 + $0x20] sm:$0xff]
    %v8285 = vld [vmem:[%s8279 + $0x28] sm:$0xff]
    %v8286 = vld [vmem:[%s8279 + $0x30] sm:$0xff]
    %v8287 = vld [vmem:[%s8279 + $0x38] sm:$0xff]
    %v8288 = vld [vmem:[%s8279 + $0x40] sm:$0xff]
    %v8289 = vld [vmem:[%s8279 + $0x48] sm:$0xff]
    %v8290 = vld [vmem:[%s8279 + $0x50] sm:$0xff]
    %v8291 = vld [vmem:[%s8279 + $0x58] sm:$0xff]
    %v8292 = vld [vmem:[%s8279 + $0x60] sm:$0xff]
    %v8293 = vld [vmem:[%s8279 + $0x68] sm:$0xff]
    %v8294 = vld [vmem:[%s8279 + $0x70] sm:$0xff]
    %v8295 = vld [vmem:[%s8279 + $0x78] sm:$0xff]
    %v8296 = vld [vmem:[%s8279 + $0x80] sm:$0xff]
    %v8297 = vld [vmem:[%s8279 + $0x88] sm:$0xff]
    %v8298 = vld [vmem:[%s8279 + $0x90] sm:$0xff]
    %v8299 = vld [vmem:[%s8279 + $0x98] sm:$0xff]
    %v8300 = vld [vmem:[%s8279 + $0xa0] sm:$0xff]
    %v8301 = vld [vmem:[%s8279 + $0xa8] sm:$0xff]
    %v8302 = vld [vmem:[%s8279 + $0xb0] sm:$0xff]
    %v8303 = vld [vmem:[%s8279 + $0xb8] sm:$0xff]
    %v8304 = vld [vmem:[%s8279 + $0xc0] sm:$0xff]
    %v8305 = vld [vmem:[%s8279 + $0xc8] sm:$0xff]
    %v8306 = vld [vmem:[%s8279 + $0xd0] sm:$0xff]
    %v8307 = vld [vmem:[%s8279 + $0xd8] sm:$0xff]
    %v8308 = vld [vmem:[%s8279 + $0xe0] sm:$0xff]
    %v8309 = vld [vmem:[%s8279 + $0xe8] sm:$0xff]
    %v8310 = vld [vmem:[%s8279 + $0xf0] sm:$0xff]
    %v8311 = vld [vmem:[%s8279 + $0xf8] sm:$0xff]
    %v8312 = vld [vmem:[%s8279 + $0x100] sm:$0xff]
    %v8313 = vld [vmem:[%s8279 + $0x108] sm:$0xff]
    %v8314 = vld [vmem:[%s8279 + $0x110] sm:$0xff]
    %v8315 = vld [vmem:[%s8279 + $0x118] sm:$0xff]
    %v8316 = vld [vmem:[%s8279 + $0x120] sm:$0xff]
    %v8317 = vld [vmem:[%s8279 + $0x128] sm:$0xff]
    %v8318 = vld [vmem:[%s8279 + $0x130] sm:$0xff]
    %v8319 = vld [vmem:[%s8279 + $0x138] sm:$0xff]
    %v8320 = vld [vmem:[%s8279 + $0x140] sm:$0xff]
    %v8321 = vld [vmem:[%s8279 + $0x148] sm:$0xff]
    %v8322 = vld [vmem:[%s8279 + $0x150] sm:$0xff]
    %v8323 = vld [vmem:[%s8279 + $0x158] sm:$0xff]
    %v8324 = vld [vmem:[%s8279 + $0x160] sm:$0xff]
    %v8325 = vld [vmem:[%s8279 + $0x168] sm:$0xff]
    %v8326 = vld [vmem:[%s8279 + $0x170] sm:$0xff]
    %v8327 = vld [vmem:[%s8279 + $0x178] sm:$0xff]
    %v8328 = vld [vmem:[%s8279 + $0x180] sm:$0xff]
    %v8329 = vld [vmem:[%s8279 + $0x188] sm:$0xff]
    %v8330 = vld [vmem:[%s8279 + $0x190] sm:$0xff]
    %v8331 = vld [vmem:[%s8279 + $0x198] sm:$0xff]
    %v8332 = vld [vmem:[%s8279 + $0x1a0] sm:$0xff]
    %v8333 = vld [vmem:[%s8279 + $0x1a8] sm:$0xff]
    %v8334 = vld [vmem:[%s8279 + $0x1b0] sm:$0xff]
    %v8335 = vld [vmem:[%s8279 + $0x1b8] sm:$0xff]
    %v8336 = vld [vmem:[%s8279 + $0x1c0] sm:$0xff]
    %v8337 = vld [vmem:[%s8279 + $0x1c8] sm:$0xff]
    %v8338 = vld [vmem:[%s8279 + $0x1d0] sm:$0xff]
    %v8339 = vld [vmem:[%s8279 + $0x1d8] sm:$0xff]
    %v8340 = vld [vmem:[%s8279 + $0x1e0] sm:$0xff]
    %v8341 = vld [vmem:[%s8279 + $0x1e8] sm:$0xff]
    %v8342 = vld [vmem:[%s8279 + $0x1f0] sm:$0xff]
    %v8343 = vld [vmem:[%s8279 + $0x1f8] sm:$0xff]
    %v8344 = vld [vmem:[%s8279 + $0x200] sm:$0xff]
    %v8345 = vld [vmem:[%s8279 + $0x208] sm:$0xff]
    %v8346 = vld [vmem:[%s8279 + $0x210] sm:$0xff]
    %v8347 = vld [vmem:[%s8279 + $0x218] sm:$0xff]
    %v8348 = vld [vmem:[%s8279 + $0x220] sm:$0xff]
    %v8349 = vld [vmem:[%s8279 + $0x228] sm:$0x3f]
    %v8350 = vld [vmem:[%s8279 + $0x230] sm:$0x3f]
    %v8351 = vld [vmem:[%s8279 + $0x238] sm:$0x3f]
    %v8352 = vrot.slane %v6431, 5
    %v8353 = vrot.slane %v6433, 5
    %v8354 = vsel %vm1109, %v8352, %v8353
    %v8355 = vrot.slane %v6432, 5
    %v8356 = vrot.slane %v6434, 5
    %v8357 = vsel %vm1109, %v8355, %v8356
    %v8359 = vsel %vm6741, %v8357, 0
    %v8362 = vsel %vm447, %v8349, 0
    %v8365 = vsel %vm447, %v8350, 0
    %v8368 = vsel %vm447, %v8351, 0
    %8370 = vmatpush.msra.mxu0 %v8325
    %8371 = vmatpush.msra.mxu0 %v8322
    %8372 = vmatpush.msra.mxu0 %v8319
    %8373 = vmatpush.msra.mxu0 %v8316
    %8374 = vmatpush.msra.mxu0 %v8313
    %8375 = vmatpush.msra.mxu0 %v8310
    %8376 = vmatpush.msra.mxu0 %v8307
    %8377 = vmatpush.msra.mxu0 %v8304
    %8378 = vmatpush.msra.mxu0 %v8301
    %8379 = vmatpush.msra.mxu0 %v8298
    %8380 = vmatpush.msra.mxu0 %v8295
    %8381 = vmatpush.msra.mxu0 %v8292
    %8382 = vmatpush.msra.mxu0 %v8289
    %8383 = vmatpush.msra.mxu0 %v8286
    %8384 = vmatpush.msra.mxu0 %v8283
    %8385 = vmatpush.msra.mxu0 %v8280
    %8386 = vmatmul.f32.gmra.mxu0 %v8354
    %v8387 = vpop.f32.mrf.mxu0
    %v8388 = vadd.f32 0.0, %v8387
    %8389 = vdwg.mxu0
    %8390 = vmatpush.msra.mxu0 0.0
    %8391 = vmatpush.msra.mxu0 0.0
    %8392 = vmatpush.msra.mxu0 0.0
    %8393 = vmatpush.msra.mxu0 0.0
    %8394 = vmatpush.msra.mxu0 0.0
    %8395 = vmatpush.msra.mxu0 0.0
    %8396 = vmatpush.msra.mxu0 0.0
    %8397 = vmatpush.msra.mxu0 0.0
    %8398 = vmatpush.msra.mxu0 %v8362
    %8399 = vmatpush.msra.mxu0 %v8346
    %8400 = vmatpush.msra.mxu0 %v8343
    %8401 = vmatpush.msra.mxu0 %v8340
    %8402 = vmatpush.msra.mxu0 %v8337
    %8403 = vmatpush.msra.mxu0 %v8334
    %8404 = vmatpush.msra.mxu0 %v8331
    %8405 = vmatpush.msra.mxu0 %v8328
    %8406 = vmatmul.f32.gmra.mxu0 %v8359
    %v8407 = vpop.f32.mrf.mxu0
    %v8408 = vadd.f32 %v8388, %v8407
    %8409 = vdwg.mxu0
    %8410 = vmatpush.msra.mxu0 %v8326
    %8411 = vmatpush.msra.mxu0 %v8323
    %8412 = vmatpush.msra.mxu0 %v8320
    %8413 = vmatpush.msra.mxu0 %v8317
    %8414 = vmatpush.msra.mxu0 %v8314
    %8415 = vmatpush.msra.mxu0 %v8311
    %8416 = vmatpush.msra.mxu0 %v8308
    %8417 = vmatpush.msra.mxu0 %v8305
    %8418 = vmatpush.msra.mxu0 %v8302
    %8419 = vmatpush.msra.mxu0 %v8299
    %8420 = vmatpush.msra.mxu0 %v8296
    %8421 = vmatpush.msra.mxu0 %v8293
    %8422 = vmatpush.msra.mxu0 %v8290
    %8423 = vmatpush.msra.mxu0 %v8287
    %8424 = vmatpush.msra.mxu0 %v8284
    %8425 = vmatpush.msra.mxu0 %v8281
    %8426 = vmatmul.f32.gmra.mxu0 %v8354
    %v8427 = vpop.f32.mrf.mxu0
    %v8428 = vadd.f32 0.0, %v8427
    %8429 = vdwg.mxu0
    %8430 = vmatpush.msra.mxu0 0.0
    %8431 = vmatpush.msra.mxu0 0.0
    %8432 = vmatpush.msra.mxu0 0.0
    %8433 = vmatpush.msra.mxu0 0.0
    %8434 = vmatpush.msra.mxu0 0.0
    %8435 = vmatpush.msra.mxu0 0.0
    %8436 = vmatpush.msra.mxu0 0.0
    %8437 = vmatpush.msra.mxu0 0.0
    %8438 = vmatpush.msra.mxu0 %v8365
    %8439 = vmatpush.msra.mxu0 %v8347
    %8440 = vmatpush.msra.mxu0 %v8344
    %8441 = vmatpush.msra.mxu0 %v8341
    %8442 = vmatpush.msra.mxu0 %v8338
    %8443 = vmatpush.msra.mxu0 %v8335
    %8444 = vmatpush.msra.mxu0 %v8332
    %8445 = vmatpush.msra.mxu0 %v8329
    %8446 = vmatmul.f32.gmra.mxu0 %v8359
    %v8447 = vpop.f32.mrf.mxu0
    %v8448 = vadd.f32 %v8428, %v8447
    %8449 = vdwg.mxu0
    %8450 = vmatpush.msra.mxu0 %v8327
    %8451 = vmatpush.msra.mxu0 %v8324
    %8452 = vmatpush.msra.mxu0 %v8321
    %8453 = vmatpush.msra.mxu0 %v8318
    %8454 = vmatpush.msra.mxu0 %v8315
    %8455 = vmatpush.msra.mxu0 %v8312
    %8456 = vmatpush.msra.mxu0 %v8309
    %8457 = vmatpush.msra.mxu0 %v8306
    %8458 = vmatpush.msra.mxu0 %v8303
    %8459 = vmatpush.msra.mxu0 %v8300
    %8460 = vmatpush.msra.mxu0 %v8297
    %8461 = vmatpush.msra.mxu0 %v8294
    %8462 = vmatpush.msra.mxu0 %v8291
    %8463 = vmatpush.msra.mxu0 %v8288
    %8464 = vmatpush.msra.mxu0 %v8285
    %8465 = vmatpush.msra.mxu0 %v8282
    %8466 = vmatmul.f32.gmra.mxu0 %v8354
    %v8467 = vpop.f32.mrf.mxu0
    %v8468 = vadd.f32 0.0, %v8467
    %8469 = vdwg.mxu0
    %8470 = vmatpush.msra.mxu0 0.0
    %8471 = vmatpush.msra.mxu0 0.0
    %8472 = vmatpush.msra.mxu0 0.0
    %8473 = vmatpush.msra.mxu0 0.0
    %8474 = vmatpush.msra.mxu0 0.0
    %8475 = vmatpush.msra.mxu0 0.0
    %8476 = vmatpush.msra.mxu0 0.0
    %8477 = vmatpush.msra.mxu0 0.0
    %8478 = vmatpush.msra.mxu0 %v8368
    %8479 = vmatpush.msra.mxu0 %v8348
    %8480 = vmatpush.msra.mxu0 %v8345
    %8481 = vmatpush.msra.mxu0 %v8342
    %8482 = vmatpush.msra.mxu0 %v8339
    %8483 = vmatpush.msra.mxu0 %v8336
    %8484 = vmatpush.msra.mxu0 %v8333
    %8485 = vmatpush.msra.mxu0 %v8330
    %8486 = vmatmul.f32.gmra.mxu0 %v8359
    %v8487 = vpop.f32.mrf.mxu0
    %v8488 = vadd.f32 %v8468, %v8487
    %8489 = vdwg.mxu0
    %v8490 = vadd.f32 %v8142, %v8408
    %v8491 = vadd.f32 %v8143, %v8448
    %v8492 = vadd.f32 %v8144, %v8488
    %v8493 = vrot.slane %v6587, 5
    %v8494 = vrot.slane %v6589, 5
    %v8495 = vsel %vm1109, %v8493, %v8494
    %v8496 = vrot.slane %v6588, 5
    %v8497 = vrot.slane %v6590, 5
    %v8498 = vsel %vm1109, %v8496, %v8497
    %v8500 = vsel %vm6741, %v8498, 0
    %8502 = vmatpush.msra.mxu0 %v8325
    %8503 = vmatpush.msra.mxu0 %v8322
    %8504 = vmatpush.msra.mxu0 %v8319
    %8505 = vmatpush.msra.mxu0 %v8316
    %8506 = vmatpush.msra.mxu0 %v8313
    %8507 = vmatpush.msra.mxu0 %v8310
    %8508 = vmatpush.msra.mxu0 %v8307
    %8509 = vmatpush.msra.mxu0 %v8304
    %8510 = vmatpush.msra.mxu0 %v8301
    %8511 = vmatpush.msra.mxu0 %v8298
    %8512 = vmatpush.msra.mxu0 %v8295
    %8513 = vmatpush.msra.mxu0 %v8292
    %8514 = vmatpush.msra.mxu0 %v8289
    %8515 = vmatpush.msra.mxu0 %v8286
    %8516 = vmatpush.msra.mxu0 %v8283
    %8517 = vmatpush.msra.mxu0 %v8280
    %8518 = vmatmul.f32.gmra.mxu0 %v8495
    %v8519 = vpop.f32.mrf.mxu0
    %v8520 = vadd.f32 0.0, %v8519
    %8521 = vdwg.mxu0
    %8522 = vmatpush.msra.mxu0 0.0
    %8523 = vmatpush.msra.mxu0 0.0
    %8524 = vmatpush.msra.mxu0 0.0
    %8525 = vmatpush.msra.mxu0 0.0
    %8526 = vmatpush.msra.mxu0 0.0
    %8527 = vmatpush.msra.mxu0 0.0
    %8528 = vmatpush.msra.mxu0 0.0
    %8529 = vmatpush.msra.mxu0 0.0
    %8530 = vmatpush.msra.mxu0 %v8362
    %8531 = vmatpush.msra.mxu0 %v8346
    %8532 = vmatpush.msra.mxu0 %v8343
    %8533 = vmatpush.msra.mxu0 %v8340
    %8534 = vmatpush.msra.mxu0 %v8337
    %8535 = vmatpush.msra.mxu0 %v8334
    %8536 = vmatpush.msra.mxu0 %v8331
    %8537 = vmatpush.msra.mxu0 %v8328
    %8538 = vmatmul.f32.gmra.mxu0 %v8500
    %v8539 = vpop.f32.mrf.mxu0
    %v8540 = vadd.f32 %v8520, %v8539
    %8541 = vdwg.mxu0
    %8542 = vmatpush.msra.mxu0 %v8326
    %8543 = vmatpush.msra.mxu0 %v8323
    %8544 = vmatpush.msra.mxu0 %v8320
    %8545 = vmatpush.msra.mxu0 %v8317
    %8546 = vmatpush.msra.mxu0 %v8314
    %8547 = vmatpush.msra.mxu0 %v8311
    %8548 = vmatpush.msra.mxu0 %v8308
    %8549 = vmatpush.msra.mxu0 %v8305
    %8550 = vmatpush.msra.mxu0 %v8302
    %8551 = vmatpush.msra.mxu0 %v8299
    %8552 = vmatpush.msra.mxu0 %v8296
    %8553 = vmatpush.msra.mxu0 %v8293
    %8554 = vmatpush.msra.mxu0 %v8290
    %8555 = vmatpush.msra.mxu0 %v8287
    %8556 = vmatpush.msra.mxu0 %v8284
    %8557 = vmatpush.msra.mxu0 %v8281
    %8558 = vmatmul.f32.gmra.mxu0 %v8495
    %v8559 = vpop.f32.mrf.mxu0
    %v8560 = vadd.f32 0.0, %v8559
    %8561 = vdwg.mxu0
    %8562 = vmatpush.msra.mxu0 0.0
    %8563 = vmatpush.msra.mxu0 0.0
    %8564 = vmatpush.msra.mxu0 0.0
    %8565 = vmatpush.msra.mxu0 0.0
    %8566 = vmatpush.msra.mxu0 0.0
    %8567 = vmatpush.msra.mxu0 0.0
    %8568 = vmatpush.msra.mxu0 0.0
    %8569 = vmatpush.msra.mxu0 0.0
    %8570 = vmatpush.msra.mxu0 %v8365
    %8571 = vmatpush.msra.mxu0 %v8347
    %8572 = vmatpush.msra.mxu0 %v8344
    %8573 = vmatpush.msra.mxu0 %v8341
    %8574 = vmatpush.msra.mxu0 %v8338
    %8575 = vmatpush.msra.mxu0 %v8335
    %8576 = vmatpush.msra.mxu0 %v8332
    %8577 = vmatpush.msra.mxu0 %v8329
    %8578 = vmatmul.f32.gmra.mxu0 %v8500
    %v8579 = vpop.f32.mrf.mxu0
    %v8580 = vadd.f32 %v8560, %v8579
    %8581 = vdwg.mxu0
    %8582 = vmatpush.msra.mxu0 %v8327
    %8583 = vmatpush.msra.mxu0 %v8324
    %8584 = vmatpush.msra.mxu0 %v8321
    %8585 = vmatpush.msra.mxu0 %v8318
    %8586 = vmatpush.msra.mxu0 %v8315
    %8587 = vmatpush.msra.mxu0 %v8312
    %8588 = vmatpush.msra.mxu0 %v8309
    %8589 = vmatpush.msra.mxu0 %v8306
    %8590 = vmatpush.msra.mxu0 %v8303
    %8591 = vmatpush.msra.mxu0 %v8300
    %8592 = vmatpush.msra.mxu0 %v8297
    %8593 = vmatpush.msra.mxu0 %v8294
    %8594 = vmatpush.msra.mxu0 %v8291
    %8595 = vmatpush.msra.mxu0 %v8288
    %8596 = vmatpush.msra.mxu0 %v8285
    %8597 = vmatpush.msra.mxu0 %v8282
    %8598 = vmatmul.f32.gmra.mxu0 %v8495
    %v8599 = vpop.f32.mrf.mxu0
    %v8600 = vadd.f32 0.0, %v8599
    %8601 = vdwg.mxu0
    %8602 = vmatpush.msra.mxu0 0.0
    %8603 = vmatpush.msra.mxu0 0.0
    %8604 = vmatpush.msra.mxu0 0.0
    %8605 = vmatpush.msra.mxu0 0.0
    %8606 = vmatpush.msra.mxu0 0.0
    %8607 = vmatpush.msra.mxu0 0.0
    %8608 = vmatpush.msra.mxu0 0.0
    %8609 = vmatpush.msra.mxu0 0.0
    %8610 = vmatpush.msra.mxu0 %v8368
    %8611 = vmatpush.msra.mxu0 %v8348
    %8612 = vmatpush.msra.mxu0 %v8345
    %8613 = vmatpush.msra.mxu0 %v8342
    %8614 = vmatpush.msra.mxu0 %v8339
    %8615 = vmatpush.msra.mxu0 %v8336
    %8616 = vmatpush.msra.mxu0 %v8333
    %8617 = vmatpush.msra.mxu0 %v8330
    %8618 = vmatmul.f32.gmra.mxu0 %v8500
    %v8619 = vpop.f32.mrf.mxu0
    %v8620 = vadd.f32 %v8600, %v8619
    %8621 = vdwg.mxu0
    %v8622 = vadd.f32 %v8276, %v8540
    %v8623 = vadd.f32 %v8277, %v8580
    %v8624 = vadd.f32 %v8278, %v8620
    %v8625 = vld [vmem:[%s5] sm:$0xff]
    %v8626 = vld [vmem:[%s5 + $0x8] sm:$0xff]
    %v8627 = vld [vmem:[%s5 + $0x10] sm:$0xff]
    %v8628 = vld [vmem:[%s5 + $0x18] sm:$0xff]
    %v8629 = vld [vmem:[%s5 + $0x20] sm:$0xff]
    %v8630 = vld [vmem:[%s5 + $0x28] sm:$0xff]
    %v8631 = vld [vmem:[%s5 + $0x30] sm:$0xff]
    %v8632 = vld [vmem:[%s5 + $0x38] sm:$0xff]
    %v8633 = vld [vmem:[%s5 + $0x40] sm:$0xff]
    %v8634 = vld [vmem:[%s5 + $0x48] sm:$0xff]
    %v8635 = vld [vmem:[%s5 + $0x50] sm:$0xff]
    %v8636 = vld [vmem:[%s5 + $0x58] sm:$0xff]
    %v8637 = vld [vmem:[%s5 + $0x60] sm:$0xff]
    %v8638 = vld [vmem:[%s5 + $0x68] sm:$0xff]
    %v8639 = vld [vmem:[%s5 + $0x70] sm:$0xff]
    %v8640 = vld [vmem:[%s5 + $0x78] sm:$0xff]
    %v8641 = vld [vmem:[%s5 + $0x80] sm:$0xff]
    %v8642 = vld [vmem:[%s5 + $0x88] sm:$0xff]
    %v8643 = vld [vmem:[%s5 + $0x90] sm:$0xff]
    %v8644 = vld [vmem:[%s5 + $0x98] sm:$0xff]
    %v8645 = vld [vmem:[%s5 + $0xa0] sm:$0xff]
    %v8646 = vld [vmem:[%s5 + $0xa8] sm:$0xff]
    %v8647 = vld [vmem:[%s5 + $0xb0] sm:$0xff]
    %v8648 = vld [vmem:[%s5 + $0xb8] sm:$0xff]
    %v8649 = vld [vmem:[%s5 + $0xc0] sm:$0xff]
    %v8650 = vld [vmem:[%s5 + $0xc8] sm:$0xff]
    %v8651 = vld [vmem:[%s5 + $0xd0] sm:$0xff]
    %v8652 = vld [vmem:[%s5 + $0xd8] sm:$0xff]
    %v8653 = vld [vmem:[%s5 + $0xe0] sm:$0xff]
    %v8654 = vld [vmem:[%s5 + $0xe8] sm:$0xff]
    %v8655 = vld [vmem:[%s5 + $0xf0] sm:$0xff]
    %v8656 = vld [vmem:[%s5 + $0xf8] sm:$0xff]
    %v8657 = vld [vmem:[%s5 + $0x100] sm:$0xff]
    %v8658 = vld [vmem:[%s5 + $0x108] sm:$0xff]
    %v8659 = vld [vmem:[%s5 + $0x110] sm:$0xff]
    %v8660 = vld [vmem:[%s5 + $0x118] sm:$0xff]
    %v8661 = vld [vmem:[%s5 + $0x120] sm:$0xff]
    %v8662 = vld [vmem:[%s5 + $0x128] sm:$0xff]
    %v8663 = vld [vmem:[%s5 + $0x130] sm:$0xff]
    %v8664 = vld [vmem:[%s5 + $0x138] sm:$0x7]
    %s8665 = scalar_lea.vmem %s5, 320
    %v8666 = vld [vmem:[%s8665] sm:$0xff]
    %v8667 = vld [vmem:[%s8665 + $0x8] sm:$0xff]
    %v8668 = vld [vmem:[%s8665 + $0x10] sm:$0xff]
    %v8669 = vld [vmem:[%s8665 + $0x18] sm:$0xff]
    %v8670 = vld [vmem:[%s8665 + $0x20] sm:$0xff]
    %v8671 = vld [vmem:[%s8665 + $0x28] sm:$0xff]
    %v8672 = vld [vmem:[%s8665 + $0x30] sm:$0xff]
    %v8673 = vld [vmem:[%s8665 + $0x38] sm:$0xff]
    %v8674 = vld [vmem:[%s8665 + $0x40] sm:$0xff]
    %v8675 = vld [vmem:[%s8665 + $0x48] sm:$0xff]
    %v8676 = vld [vmem:[%s8665 + $0x50] sm:$0xff]
    %v8677 = vld [vmem:[%s8665 + $0x58] sm:$0xff]
    %v8678 = vld [vmem:[%s8665 + $0x60] sm:$0xff]
    %v8679 = vld [vmem:[%s8665 + $0x68] sm:$0xff]
    %v8680 = vld [vmem:[%s8665 + $0x70] sm:$0xff]
    %v8681 = vld [vmem:[%s8665 + $0x78] sm:$0xff]
    %v8682 = vld [vmem:[%s8665 + $0x80] sm:$0xff]
    %v8683 = vld [vmem:[%s8665 + $0x88] sm:$0xff]
    %v8684 = vld [vmem:[%s8665 + $0x90] sm:$0xff]
    %v8685 = vld [vmem:[%s8665 + $0x98] sm:$0xff]
    %v8686 = vld [vmem:[%s8665 + $0xa0] sm:$0xff]
    %v8687 = vld [vmem:[%s8665 + $0xa8] sm:$0xff]
    %v8688 = vld [vmem:[%s8665 + $0xb0] sm:$0xff]
    %v8689 = vld [vmem:[%s8665 + $0xb8] sm:$0xff]
    %v8690 = vld [vmem:[%s8665 + $0xc0] sm:$0xff]
    %v8691 = vld [vmem:[%s8665 + $0xc8] sm:$0xff]
    %v8692 = vld [vmem:[%s8665 + $0xd0] sm:$0xff]
    %v8693 = vld [vmem:[%s8665 + $0xd8] sm:$0xff]
    %v8694 = vld [vmem:[%s8665 + $0xe0] sm:$0xff]
    %v8695 = vld [vmem:[%s8665 + $0xe8] sm:$0xff]
    %v8696 = vld [vmem:[%s8665 + $0xf0] sm:$0xff]
    %v8697 = vld [vmem:[%s8665 + $0xf8] sm:$0xff]
    %v8698 = vld [vmem:[%s8665 + $0x100] sm:$0xff]
    %v8699 = vld [vmem:[%s8665 + $0x108] sm:$0xff]
    %v8700 = vld [vmem:[%s8665 + $0x110] sm:$0xff]
    %v8701 = vld [vmem:[%s8665 + $0x118] sm:$0xff]
    %v8702 = vld [vmem:[%s8665 + $0x120] sm:$0xff]
    %v8703 = vld [vmem:[%s8665 + $0x128] sm:$0xff]
    %v8704 = vld [vmem:[%s8665 + $0x130] sm:$0xff]
    %v8705 = vld [vmem:[%s8665 + $0x138] sm:$0x7]
    %v8709 = vrot.slane %v8490, 1
    %v8710 = vrot.slane %v8491, 1
    %v8711 = vrot.slane %v8492, 1
    %v8714 = vsel %vm1971, %v8711, 0
    %v8717 = vsel %vm1109, %v8705, 0
    %8719 = vmatpush.msra.mxu0 %v8681
    %8720 = vmatpush.msra.mxu0 %v8680
    %8721 = vmatpush.msra.mxu0 %v8679
    %8722 = vmatpush.msra.mxu0 %v8678
    %8723 = vmatpush.msra.mxu0 %v8677
    %8724 = vmatpush.msra.mxu0 %v8676
    %8725 = vmatpush.msra.mxu0 %v8675
    %8726 = vmatpush.msra.mxu0 %v8674
    %8727 = vmatpush.msra.mxu0 %v8673
    %8728 = vmatpush.msra.mxu0 %v8672
    %8729 = vmatpush.msra.mxu0 %v8671
    %8730 = vmatpush.msra.mxu0 %v8670
    %8731 = vmatpush.msra.mxu0 %v8669
    %8732 = vmatpush.msra.mxu0 %v8668
    %8733 = vmatpush.msra.mxu0 %v8667
    %8734 = vmatpush.msra.mxu0 %v8666
    %8735 = vmatmul.f32.gmra.mxu0 %v8709
    %v8736 = vpop.f32.mrf.mxu0
    %v8737 = vadd.f32 0.0, %v8736
    %8738 = vdwg.mxu0
    %8739 = vmatpush.msra.mxu0 %v8697
    %8740 = vmatpush.msra.mxu0 %v8696
    %8741 = vmatpush.msra.mxu0 %v8695
    %8742 = vmatpush.msra.mxu0 %v8694
    %8743 = vmatpush.msra.mxu0 %v8693
    %8744 = vmatpush.msra.mxu0 %v8692
    %8745 = vmatpush.msra.mxu0 %v8691
    %8746 = vmatpush.msra.mxu0 %v8690
    %8747 = vmatpush.msra.mxu0 %v8689
    %8748 = vmatpush.msra.mxu0 %v8688
    %8749 = vmatpush.msra.mxu0 %v8687
    %8750 = vmatpush.msra.mxu0 %v8686
    %8751 = vmatpush.msra.mxu0 %v8685
    %8752 = vmatpush.msra.mxu0 %v8684
    %8753 = vmatpush.msra.mxu0 %v8683
    %8754 = vmatpush.msra.mxu0 %v8682
    %8755 = vmatmul.f32.gmra.mxu0 %v8710
    %v8756 = vpop.f32.mrf.mxu0
    %v8757 = vadd.f32 %v8737, %v8756
    %8758 = vdwg.mxu0
    %8759 = vmatpush.msra.mxu0 0.0
    %8760 = vmatpush.msra.mxu0 0.0
    %8761 = vmatpush.msra.mxu0 0.0
    %8762 = vmatpush.msra.mxu0 0.0
    %8763 = vmatpush.msra.mxu0 0.0
    %8764 = vmatpush.msra.mxu0 0.0
    %8765 = vmatpush.msra.mxu0 0.0
    %8766 = vmatpush.msra.mxu0 0.0
    %8767 = vmatpush.msra.mxu0 %v8717
    %8768 = vmatpush.msra.mxu0 %v8704
    %8769 = vmatpush.msra.mxu0 %v8703
    %8770 = vmatpush.msra.mxu0 %v8702
    %8771 = vmatpush.msra.mxu0 %v8701
    %8772 = vmatpush.msra.mxu0 %v8700
    %8773 = vmatpush.msra.mxu0 %v8699
    %8774 = vmatpush.msra.mxu0 %v8698
    %8775 = vmatmul.f32.gmra.mxu0 %v8714
    %v8776 = vpop.f32.mrf.mxu0
    %v8777 = vadd.f32 %v8757, %v8776
    %8778 = vdwg.mxu0
    %v8779 = vsel %vm1971, %v8492, 0
    %v8782 = vsel %vm1109, %v8664, 0
    %8784 = vmatpush.msra.mxu0 %v8640
    %8785 = vmatpush.msra.mxu0 %v8639
    %8786 = vmatpush.msra.mxu0 %v8638
    %8787 = vmatpush.msra.mxu0 %v8637
    %8788 = vmatpush.msra.mxu0 %v8636
    %8789 = vmatpush.msra.mxu0 %v8635
    %8790 = vmatpush.msra.mxu0 %v8634
    %8791 = vmatpush.msra.mxu0 %v8633
    %8792 = vmatpush.msra.mxu0 %v8632
    %8793 = vmatpush.msra.mxu0 %v8631
    %8794 = vmatpush.msra.mxu0 %v8630
    %8795 = vmatpush.msra.mxu0 %v8629
    %8796 = vmatpush.msra.mxu0 %v8628
    %8797 = vmatpush.msra.mxu0 %v8627
    %8798 = vmatpush.msra.mxu0 %v8626
    %8799 = vmatpush.msra.mxu0 %v8625
    %8800 = vmatmul.f32.gmra.mxu0 %v8490
    %v8801 = vpop.f32.mrf.mxu0
    %v8802 = vadd.f32 %v8777, %v8801
    %8803 = vdwg.mxu0
    %8804 = vmatpush.msra.mxu0 %v8656
    %8805 = vmatpush.msra.mxu0 %v8655
    %8806 = vmatpush.msra.mxu0 %v8654
    %8807 = vmatpush.msra.mxu0 %v8653
    %8808 = vmatpush.msra.mxu0 %v8652
    %8809 = vmatpush.msra.mxu0 %v8651
    %8810 = vmatpush.msra.mxu0 %v8650
    %8811 = vmatpush.msra.mxu0 %v8649
    %8812 = vmatpush.msra.mxu0 %v8648
    %8813 = vmatpush.msra.mxu0 %v8647
    %8814 = vmatpush.msra.mxu0 %v8646
    %8815 = vmatpush.msra.mxu0 %v8645
    %8816 = vmatpush.msra.mxu0 %v8644
    %8817 = vmatpush.msra.mxu0 %v8643
    %8818 = vmatpush.msra.mxu0 %v8642
    %8819 = vmatpush.msra.mxu0 %v8641
    %8820 = vmatmul.f32.gmra.mxu0 %v8491
    %v8821 = vpop.f32.mrf.mxu0
    %v8822 = vadd.f32 %v8802, %v8821
    %8823 = vdwg.mxu0
    %8824 = vmatpush.msra.mxu0 0.0
    %8825 = vmatpush.msra.mxu0 0.0
    %8826 = vmatpush.msra.mxu0 0.0
    %8827 = vmatpush.msra.mxu0 0.0
    %8828 = vmatpush.msra.mxu0 0.0
    %8829 = vmatpush.msra.mxu0 0.0
    %8830 = vmatpush.msra.mxu0 0.0
    %8831 = vmatpush.msra.mxu0 0.0
    %8832 = vmatpush.msra.mxu0 %v8782
    %8833 = vmatpush.msra.mxu0 %v8663
    %8834 = vmatpush.msra.mxu0 %v8662
    %8835 = vmatpush.msra.mxu0 %v8661
    %8836 = vmatpush.msra.mxu0 %v8660
    %8837 = vmatpush.msra.mxu0 %v8659
    %8838 = vmatpush.msra.mxu0 %v8658
    %8839 = vmatpush.msra.mxu0 %v8657
    %8840 = vmatmul.f32.gmra.mxu0 %v8779
    %v8841 = vpop.f32.mrf.mxu0
    %v8842 = vadd.f32 %v8822, %v8841
    %8843 = vdwg.mxu0
    %v8847 = vrot.slane %v8622, 1
    %v8848 = vrot.slane %v8623, 1
    %v8849 = vrot.slane %v8624, 1
    %v8852 = vsel %vm1971, %v8849, 0
    %8854 = vmatpush.msra.mxu0 %v8681
    %8855 = vmatpush.msra.mxu0 %v8680
    %8856 = vmatpush.msra.mxu0 %v8679
    %8857 = vmatpush.msra.mxu0 %v8678
    %8858 = vmatpush.msra.mxu0 %v8677
    %8859 = vmatpush.msra.mxu0 %v8676
    %8860 = vmatpush.msra.mxu0 %v8675
    %8861 = vmatpush.msra.mxu0 %v8674
    %8862 = vmatpush.msra.mxu0 %v8673
    %8863 = vmatpush.msra.mxu0 %v8672
    %8864 = vmatpush.msra.mxu0 %v8671
    %8865 = vmatpush.msra.mxu0 %v8670
    %8866 = vmatpush.msra.mxu0 %v8669
    %8867 = vmatpush.msra.mxu0 %v8668
    %8868 = vmatpush.msra.mxu0 %v8667
    %8869 = vmatpush.msra.mxu0 %v8666
    %8870 = vmatmul.f32.gmra.mxu0 %v8847
    %v8871 = vpop.f32.mrf.mxu0
    %v8872 = vadd.f32 0.0, %v8871
    %8873 = vdwg.mxu0
    %8874 = vmatpush.msra.mxu0 %v8697
    %8875 = vmatpush.msra.mxu0 %v8696
    %8876 = vmatpush.msra.mxu0 %v8695
    %8877 = vmatpush.msra.mxu0 %v8694
    %8878 = vmatpush.msra.mxu0 %v8693
    %8879 = vmatpush.msra.mxu0 %v8692
    %8880 = vmatpush.msra.mxu0 %v8691
    %8881 = vmatpush.msra.mxu0 %v8690
    %8882 = vmatpush.msra.mxu0 %v8689
    %8883 = vmatpush.msra.mxu0 %v8688
    %8884 = vmatpush.msra.mxu0 %v8687
    %8885 = vmatpush.msra.mxu0 %v8686
    %8886 = vmatpush.msra.mxu0 %v8685
    %8887 = vmatpush.msra.mxu0 %v8684
    %8888 = vmatpush.msra.mxu0 %v8683
    %8889 = vmatpush.msra.mxu0 %v8682
    %8890 = vmatmul.f32.gmra.mxu0 %v8848
    %v8891 = vpop.f32.mrf.mxu0
    %v8892 = vadd.f32 %v8872, %v8891
    %8893 = vdwg.mxu0
    %8894 = vmatpush.msra.mxu0 0.0
    %8895 = vmatpush.msra.mxu0 0.0
    %8896 = vmatpush.msra.mxu0 0.0
    %8897 = vmatpush.msra.mxu0 0.0
    %8898 = vmatpush.msra.mxu0 0.0
    %8899 = vmatpush.msra.mxu0 0.0
    %8900 = vmatpush.msra.mxu0 0.0
    %8901 = vmatpush.msra.mxu0 0.0
    %8902 = vmatpush.msra.mxu0 %v8717
    %8903 = vmatpush.msra.mxu0 %v8704
    %8904 = vmatpush.msra.mxu0 %v8703
    %8905 = vmatpush.msra.mxu0 %v8702
    %8906 = vmatpush.msra.mxu0 %v8701
    %8907 = vmatpush.msra.mxu0 %v8700
    %8908 = vmatpush.msra.mxu0 %v8699
    %8909 = vmatpush.msra.mxu0 %v8698
    %8910 = vmatmul.f32.gmra.mxu0 %v8852
    %v8911 = vpop.f32.mrf.mxu0
    %v8912 = vadd.f32 %v8892, %v8911
    %8913 = vdwg.mxu0
    %v8914 = vsel %vm1971, %v8624, 0
    %8916 = vmatpush.msra.mxu0 %v8640
    %8917 = vmatpush.msra.mxu0 %v8639
    %8918 = vmatpush.msra.mxu0 %v8638
    %8919 = vmatpush.msra.mxu0 %v8637
    %8920 = vmatpush.msra.mxu0 %v8636
    %8921 = vmatpush.msra.mxu0 %v8635
    %8922 = vmatpush.msra.mxu0 %v8634
    %8923 = vmatpush.msra.mxu0 %v8633
    %8924 = vmatpush.msra.mxu0 %v8632
    %8925 = vmatpush.msra.mxu0 %v8631
    %8926 = vmatpush.msra.mxu0 %v8630
    %8927 = vmatpush.msra.mxu0 %v8629
    %8928 = vmatpush.msra.mxu0 %v8628
    %8929 = vmatpush.msra.mxu0 %v8627
    %8930 = vmatpush.msra.mxu0 %v8626
    %8931 = vmatpush.msra.mxu0 %v8625
    %8932 = vmatmul.f32.gmra.mxu0 %v8622
    %v8933 = vpop.f32.mrf.mxu0
    %v8934 = vadd.f32 %v8912, %v8933
    %8935 = vdwg.mxu0
    %8936 = vmatpush.msra.mxu0 %v8656
    %8937 = vmatpush.msra.mxu0 %v8655
    %8938 = vmatpush.msra.mxu0 %v8654
    %8939 = vmatpush.msra.mxu0 %v8653
    %8940 = vmatpush.msra.mxu0 %v8652
    %8941 = vmatpush.msra.mxu0 %v8651
    %8942 = vmatpush.msra.mxu0 %v8650
    %8943 = vmatpush.msra.mxu0 %v8649
    %8944 = vmatpush.msra.mxu0 %v8648
    %8945 = vmatpush.msra.mxu0 %v8647
    %8946 = vmatpush.msra.mxu0 %v8646
    %8947 = vmatpush.msra.mxu0 %v8645
    %8948 = vmatpush.msra.mxu0 %v8644
    %8949 = vmatpush.msra.mxu0 %v8643
    %8950 = vmatpush.msra.mxu0 %v8642
    %8951 = vmatpush.msra.mxu0 %v8641
    %8952 = vmatmul.f32.gmra.mxu0 %v8623
    %v8953 = vpop.f32.mrf.mxu0
    %v8954 = vadd.f32 %v8934, %v8953
    %8955 = vdwg.mxu0
    %8956 = vmatpush.msra.mxu0 0.0
    %8957 = vmatpush.msra.mxu0 0.0
    %8958 = vmatpush.msra.mxu0 0.0
    %8959 = vmatpush.msra.mxu0 0.0
    %8960 = vmatpush.msra.mxu0 0.0
    %8961 = vmatpush.msra.mxu0 0.0
    %8962 = vmatpush.msra.mxu0 0.0
    %8963 = vmatpush.msra.mxu0 0.0
    %8964 = vmatpush.msra.mxu0 %v8782
    %8965 = vmatpush.msra.mxu0 %v8663
    %8966 = vmatpush.msra.mxu0 %v8662
    %8967 = vmatpush.msra.mxu0 %v8661
    %8968 = vmatpush.msra.mxu0 %v8660
    %8969 = vmatpush.msra.mxu0 %v8659
    %8970 = vmatpush.msra.mxu0 %v8658
    %8971 = vmatpush.msra.mxu0 %v8657
    %8972 = vmatmul.f32.gmra.mxu0 %v8914
    %v8973 = vpop.f32.mrf.mxu0
    %v8974 = vadd.f32 %v8954, %v8973
    %8975 = vdwg.mxu0
    %s8976 = scalar_lea.vmem %s5, 640
    %v8977 = vld [vmem:[%s8976] sm:$0xff]
    %v8978 = vld [vmem:[%s8976 + $0x8] sm:$0xff]
    %v8979 = vld [vmem:[%s8976 + $0x10] sm:$0xff]
    %v8980 = vld [vmem:[%s8976 + $0x18] sm:$0xff]
    %v8981 = vld [vmem:[%s8976 + $0x20] sm:$0xff]
    %v8982 = vld [vmem:[%s8976 + $0x28] sm:$0xff]
    %v8983 = vld [vmem:[%s8976 + $0x30] sm:$0xff]
    %v8984 = vld [vmem:[%s8976 + $0x38] sm:$0xff]
    %v8985 = vld [vmem:[%s8976 + $0x40] sm:$0xff]
    %v8986 = vld [vmem:[%s8976 + $0x48] sm:$0xff]
    %v8987 = vld [vmem:[%s8976 + $0x50] sm:$0xff]
    %v8988 = vld [vmem:[%s8976 + $0x58] sm:$0xff]
    %v8989 = vld [vmem:[%s8976 + $0x60] sm:$0xff]
    %v8990 = vld [vmem:[%s8976 + $0x68] sm:$0xff]
    %v8991 = vld [vmem:[%s8976 + $0x70] sm:$0xff]
    %v8992 = vld [vmem:[%s8976 + $0x78] sm:$0xff]
    %v8993 = vld [vmem:[%s8976 + $0x80] sm:$0xff]
    %v8994 = vld [vmem:[%s8976 + $0x88] sm:$0xff]
    %v8995 = vld [vmem:[%s8976 + $0x90] sm:$0xff]
    %v8996 = vld [vmem:[%s8976 + $0x98] sm:$0xff]
    %v8997 = vld [vmem:[%s8976 + $0xa0] sm:$0xff]
    %v8998 = vld [vmem:[%s8976 + $0xa8] sm:$0xff]
    %v8999 = vld [vmem:[%s8976 + $0xb0] sm:$0xff]
    %v9000 = vld [vmem:[%s8976 + $0xb8] sm:$0xff]
    %v9001 = vld [vmem:[%s8976 + $0xc0] sm:$0xff]
    %v9002 = vld [vmem:[%s8976 + $0xc8] sm:$0xff]
    %v9003 = vld [vmem:[%s8976 + $0xd0] sm:$0xff]
    %v9004 = vld [vmem:[%s8976 + $0xd8] sm:$0xff]
    %v9005 = vld [vmem:[%s8976 + $0xe0] sm:$0xff]
    %v9006 = vld [vmem:[%s8976 + $0xe8] sm:$0xff]
    %v9007 = vld [vmem:[%s8976 + $0xf0] sm:$0xff]
    %v9008 = vld [vmem:[%s8976 + $0xf8] sm:$0xff]
    %v9009 = vld [vmem:[%s8976 + $0x100] sm:$0xff]
    %v9010 = vld [vmem:[%s8976 + $0x108] sm:$0xff]
    %v9011 = vld [vmem:[%s8976 + $0x110] sm:$0xff]
    %v9012 = vld [vmem:[%s8976 + $0x118] sm:$0xff]
    %v9013 = vld [vmem:[%s8976 + $0x120] sm:$0xff]
    %v9014 = vld [vmem:[%s8976 + $0x128] sm:$0xff]
    %v9015 = vld [vmem:[%s8976 + $0x130] sm:$0xff]
    %v9016 = vld [vmem:[%s8976 + $0x138] sm:$0x7]
    %v9017 = vrot.slane %v8490, 2
    %v9018 = vrot.slane %v8491, 2
    %v9019 = vrot.slane %v8492, 2
    %v9022 = vsel %vm1971, %v9019, 0
    %v9025 = vsel %vm1109, %v9016, 0
    %9027 = vmatpush.msra.mxu0 %v8992
    %9028 = vmatpush.msra.mxu0 %v8991
    %9029 = vmatpush.msra.mxu0 %v8990
    %9030 = vmatpush.msra.mxu0 %v8989
    %9031 = vmatpush.msra.mxu0 %v8988
    %9032 = vmatpush.msra.mxu0 %v8987
    %9033 = vmatpush.msra.mxu0 %v8986
    %9034 = vmatpush.msra.mxu0 %v8985
    %9035 = vmatpush.msra.mxu0 %v8984
    %9036 = vmatpush.msra.mxu0 %v8983
    %9037 = vmatpush.msra.mxu0 %v8982
    %9038 = vmatpush.msra.mxu0 %v8981
    %9039 = vmatpush.msra.mxu0 %v8980
    %9040 = vmatpush.msra.mxu0 %v8979
    %9041 = vmatpush.msra.mxu0 %v8978
    %9042 = vmatpush.msra.mxu0 %v8977
    %9043 = vmatmul.f32.gmra.mxu0 %v9017
    %v9044 = vpop.f32.mrf.mxu0
    %v9045 = vadd.f32 0.0, %v9044
    %9046 = vdwg.mxu0
    %9047 = vmatpush.msra.mxu0 %v9008
    %9048 = vmatpush.msra.mxu0 %v9007
    %9049 = vmatpush.msra.mxu0 %v9006
    %9050 = vmatpush.msra.mxu0 %v9005
    %9051 = vmatpush.msra.mxu0 %v9004
    %9052 = vmatpush.msra.mxu0 %v9003
    %9053 = vmatpush.msra.mxu0 %v9002
    %9054 = vmatpush.msra.mxu0 %v9001
    %9055 = vmatpush.msra.mxu0 %v9000
    %9056 = vmatpush.msra.mxu0 %v8999
    %9057 = vmatpush.msra.mxu0 %v8998
    %9058 = vmatpush.msra.mxu0 %v8997
    %9059 = vmatpush.msra.mxu0 %v8996
    %9060 = vmatpush.msra.mxu0 %v8995
    %9061 = vmatpush.msra.mxu0 %v8994
    %9062 = vmatpush.msra.mxu0 %v8993
    %9063 = vmatmul.f32.gmra.mxu0 %v9018
    %v9064 = vpop.f32.mrf.mxu0
    %v9065 = vadd.f32 %v9045, %v9064
    %9066 = vdwg.mxu0
    %9067 = vmatpush.msra.mxu0 0.0
    %9068 = vmatpush.msra.mxu0 0.0
    %9069 = vmatpush.msra.mxu0 0.0
    %9070 = vmatpush.msra.mxu0 0.0
    %9071 = vmatpush.msra.mxu0 0.0
    %9072 = vmatpush.msra.mxu0 0.0
    %9073 = vmatpush.msra.mxu0 0.0
    %9074 = vmatpush.msra.mxu0 0.0
    %9075 = vmatpush.msra.mxu0 %v9025
    %9076 = vmatpush.msra.mxu0 %v9015
    %9077 = vmatpush.msra.mxu0 %v9014
    %9078 = vmatpush.msra.mxu0 %v9013
    %9079 = vmatpush.msra.mxu0 %v9012
    %9080 = vmatpush.msra.mxu0 %v9011
    %9081 = vmatpush.msra.mxu0 %v9010
    %9082 = vmatpush.msra.mxu0 %v9009
    %9083 = vmatmul.f32.gmra.mxu0 %v9022
    %v9084 = vpop.f32.mrf.mxu0
    %v9085 = vadd.f32 %v9065, %v9084
    %9086 = vdwg.mxu0
    %v9087 = vadd.f32 %v8842, %v9085
    %v9088 = vrot.slane %v8622, 2
    %v9089 = vrot.slane %v8623, 2
    %v9090 = vrot.slane %v8624, 2
    %v9093 = vsel %vm1971, %v9090, 0
    %9095 = vmatpush.msra.mxu0 %v8992
    %9096 = vmatpush.msra.mxu0 %v8991
    %9097 = vmatpush.msra.mxu0 %v8990
    %9098 = vmatpush.msra.mxu0 %v8989
    %9099 = vmatpush.msra.mxu0 %v8988
    %9100 = vmatpush.msra.mxu0 %v8987
    %9101 = vmatpush.msra.mxu0 %v8986
    %9102 = vmatpush.msra.mxu0 %v8985
    %9103 = vmatpush.msra.mxu0 %v8984
    %9104 = vmatpush.msra.mxu0 %v8983
    %9105 = vmatpush.msra.mxu0 %v8982
    %9106 = vmatpush.msra.mxu0 %v8981
    %9107 = vmatpush.msra.mxu0 %v8980
    %9108 = vmatpush.msra.mxu0 %v8979
    %9109 = vmatpush.msra.mxu0 %v8978
    %9110 = vmatpush.msra.mxu0 %v8977
    %9111 = vmatmul.f32.gmra.mxu0 %v9088
    %v9112 = vpop.f32.mrf.mxu0
    %v9113 = vadd.f32 0.0, %v9112
    %9114 = vdwg.mxu0
    %9115 = vmatpush.msra.mxu0 %v9008
    %9116 = vmatpush.msra.mxu0 %v9007
    %9117 = vmatpush.msra.mxu0 %v9006
    %9118 = vmatpush.msra.mxu0 %v9005
    %9119 = vmatpush.msra.mxu0 %v9004
    %9120 = vmatpush.msra.mxu0 %v9003
    %9121 = vmatpush.msra.mxu0 %v9002
    %9122 = vmatpush.msra.mxu0 %v9001
    %9123 = vmatpush.msra.mxu0 %v9000
    %9124 = vmatpush.msra.mxu0 %v8999
    %9125 = vmatpush.msra.mxu0 %v8998
    %9126 = vmatpush.msra.mxu0 %v8997
    %9127 = vmatpush.msra.mxu0 %v8996
    %9128 = vmatpush.msra.mxu0 %v8995
    %9129 = vmatpush.msra.mxu0 %v8994
    %9130 = vmatpush.msra.mxu0 %v8993
    %9131 = vmatmul.f32.gmra.mxu0 %v9089
    %v9132 = vpop.f32.mrf.mxu0
    %v9133 = vadd.f32 %v9113, %v9132
    %9134 = vdwg.mxu0
    %9135 = vmatpush.msra.mxu0 0.0
    %9136 = vmatpush.msra.mxu0 0.0
    %9137 = vmatpush.msra.mxu0 0.0
    %9138 = vmatpush.msra.mxu0 0.0
    %9139 = vmatpush.msra.mxu0 0.0
    %9140 = vmatpush.msra.mxu0 0.0
    %9141 = vmatpush.msra.mxu0 0.0
    %9142 = vmatpush.msra.mxu0 0.0
    %9143 = vmatpush.msra.mxu0 %v9025
    %9144 = vmatpush.msra.mxu0 %v9015
    %9145 = vmatpush.msra.mxu0 %v9014
    %9146 = vmatpush.msra.mxu0 %v9013
    %9147 = vmatpush.msra.mxu0 %v9012
    %9148 = vmatpush.msra.mxu0 %v9011
    %9149 = vmatpush.msra.mxu0 %v9010
    %9150 = vmatpush.msra.mxu0 %v9009
    %9151 = vmatmul.f32.gmra.mxu0 %v9093
    %v9152 = vpop.f32.mrf.mxu0
    %v9153 = vadd.f32 %v9133, %v9152
    %9154 = vdwg.mxu0
    %v9155 = vadd.f32 %v8974, %v9153
    %s9156 = scalar_lea.vmem %s5, 960
    %v9157 = vld [vmem:[%s9156] sm:$0xff]
    %v9158 = vld [vmem:[%s9156 + $0x8] sm:$0xff]
    %v9159 = vld [vmem:[%s9156 + $0x10] sm:$0xff]
    %v9160 = vld [vmem:[%s9156 + $0x18] sm:$0xff]
    %v9161 = vld [vmem:[%s9156 + $0x20] sm:$0xff]
    %v9162 = vld [vmem:[%s9156 + $0x28] sm:$0xff]
    %v9163 = vld [vmem:[%s9156 + $0x30] sm:$0xff]
    %v9164 = vld [vmem:[%s9156 + $0x38] sm:$0xff]
    %v9165 = vld [vmem:[%s9156 + $0x40] sm:$0xff]
    %v9166 = vld [vmem:[%s9156 + $0x48] sm:$0xff]
    %v9167 = vld [vmem:[%s9156 + $0x50] sm:$0xff]
    %v9168 = vld [vmem:[%s9156 + $0x58] sm:$0xff]
    %v9169 = vld [vmem:[%s9156 + $0x60] sm:$0xff]
    %v9170 = vld [vmem:[%s9156 + $0x68] sm:$0xff]
    %v9171 = vld [vmem:[%s9156 + $0x70] sm:$0xff]
    %v9172 = vld [vmem:[%s9156 + $0x78] sm:$0xff]
    %v9173 = vld [vmem:[%s9156 + $0x80] sm:$0xff]
    %v9174 = vld [vmem:[%s9156 + $0x88] sm:$0xff]
    %v9175 = vld [vmem:[%s9156 + $0x90] sm:$0xff]
    %v9176 = vld [vmem:[%s9156 + $0x98] sm:$0xff]
    %v9177 = vld [vmem:[%s9156 + $0xa0] sm:$0xff]
    %v9178 = vld [vmem:[%s9156 + $0xa8] sm:$0xff]
    %v9179 = vld [vmem:[%s9156 + $0xb0] sm:$0xff]
    %v9180 = vld [vmem:[%s9156 + $0xb8] sm:$0xff]
    %v9181 = vld [vmem:[%s9156 + $0xc0] sm:$0xff]
    %v9182 = vld [vmem:[%s9156 + $0xc8] sm:$0xff]
    %v9183 = vld [vmem:[%s9156 + $0xd0] sm:$0xff]
    %v9184 = vld [vmem:[%s9156 + $0xd8] sm:$0xff]
    %v9185 = vld [vmem:[%s9156 + $0xe0] sm:$0xff]
    %v9186 = vld [vmem:[%s9156 + $0xe8] sm:$0xff]
    %v9187 = vld [vmem:[%s9156 + $0xf0] sm:$0xff]
    %v9188 = vld [vmem:[%s9156 + $0xf8] sm:$0xff]
    %v9189 = vld [vmem:[%s9156 + $0x100] sm:$0xff]
    %v9190 = vld [vmem:[%s9156 + $0x108] sm:$0xff]
    %v9191 = vld [vmem:[%s9156 + $0x110] sm:$0xff]
    %v9192 = vld [vmem:[%s9156 + $0x118] sm:$0xff]
    %v9193 = vld [vmem:[%s9156 + $0x120] sm:$0xff]
    %v9194 = vld [vmem:[%s9156 + $0x128] sm:$0xff]
    %v9195 = vld [vmem:[%s9156 + $0x130] sm:$0xff]
    %v9196 = vld [vmem:[%s9156 + $0x138] sm:$0x7]
    %v9197 = vrot.slane %v8490, 3
    %v9198 = vrot.slane %v8491, 3
    %v9199 = vrot.slane %v8492, 3
    %v9202 = vsel %vm1971, %v9199, 0
    %v9205 = vsel %vm1109, %v9196, 0
    %9207 = vmatpush.msra.mxu0 %v9172
    %9208 = vmatpush.msra.mxu0 %v9171
    %9209 = vmatpush.msra.mxu0 %v9170
    %9210 = vmatpush.msra.mxu0 %v9169
    %9211 = vmatpush.msra.mxu0 %v9168
    %9212 = vmatpush.msra.mxu0 %v9167
    %9213 = vmatpush.msra.mxu0 %v9166
    %9214 = vmatpush.msra.mxu0 %v9165
    %9215 = vmatpush.msra.mxu0 %v9164
    %9216 = vmatpush.msra.mxu0 %v9163
    %9217 = vmatpush.msra.mxu0 %v9162
    %9218 = vmatpush.msra.mxu0 %v9161
    %9219 = vmatpush.msra.mxu0 %v9160
    %9220 = vmatpush.msra.mxu0 %v9159
    %9221 = vmatpush.msra.mxu0 %v9158
    %9222 = vmatpush.msra.mxu0 %v9157
    %9223 = vmatmul.f32.gmra.mxu0 %v9197
    %v9224 = vpop.f32.mrf.mxu0
    %v9225 = vadd.f32 0.0, %v9224
    %9226 = vdwg.mxu0
    %9227 = vmatpush.msra.mxu0 %v9188
    %9228 = vmatpush.msra.mxu0 %v9187
    %9229 = vmatpush.msra.mxu0 %v9186
    %9230 = vmatpush.msra.mxu0 %v9185
    %9231 = vmatpush.msra.mxu0 %v9184
    %9232 = vmatpush.msra.mxu0 %v9183
    %9233 = vmatpush.msra.mxu0 %v9182
    %9234 = vmatpush.msra.mxu0 %v9181
    %9235 = vmatpush.msra.mxu0 %v9180
    %9236 = vmatpush.msra.mxu0 %v9179
    %9237 = vmatpush.msra.mxu0 %v9178
    %9238 = vmatpush.msra.mxu0 %v9177
    %9239 = vmatpush.msra.mxu0 %v9176
    %9240 = vmatpush.msra.mxu0 %v9175
    %9241 = vmatpush.msra.mxu0 %v9174
    %9242 = vmatpush.msra.mxu0 %v9173
    %9243 = vmatmul.f32.gmra.mxu0 %v9198
    %v9244 = vpop.f32.mrf.mxu0
    %v9245 = vadd.f32 %v9225, %v9244
    %9246 = vdwg.mxu0
    %9247 = vmatpush.msra.mxu0 0.0
    %9248 = vmatpush.msra.mxu0 0.0
    %9249 = vmatpush.msra.mxu0 0.0
    %9250 = vmatpush.msra.mxu0 0.0
    %9251 = vmatpush.msra.mxu0 0.0
    %9252 = vmatpush.msra.mxu0 0.0
    %9253 = vmatpush.msra.mxu0 0.0
    %9254 = vmatpush.msra.mxu0 0.0
    %9255 = vmatpush.msra.mxu0 %v9205
    %9256 = vmatpush.msra.mxu0 %v9195
    %9257 = vmatpush.msra.mxu0 %v9194
    %9258 = vmatpush.msra.mxu0 %v9193
    %9259 = vmatpush.msra.mxu0 %v9192
    %9260 = vmatpush.msra.mxu0 %v9191
    %9261 = vmatpush.msra.mxu0 %v9190
    %9262 = vmatpush.msra.mxu0 %v9189
    %9263 = vmatmul.f32.gmra.mxu0 %v9202
    %v9264 = vpop.f32.mrf.mxu0
    %v9265 = vadd.f32 %v9245, %v9264
    %9266 = vdwg.mxu0
    %v9267 = vadd.f32 %v9087, %v9265
    %v9268 = vrot.slane %v8622, 3
    %v9269 = vrot.slane %v8623, 3
    %v9270 = vrot.slane %v8624, 3
    %v9273 = vsel %vm1971, %v9270, 0
    %9275 = vmatpush.msra.mxu0 %v9172
    %9276 = vmatpush.msra.mxu0 %v9171
    %9277 = vmatpush.msra.mxu0 %v9170
    %9278 = vmatpush.msra.mxu0 %v9169
    %9279 = vmatpush.msra.mxu0 %v9168
    %9280 = vmatpush.msra.mxu0 %v9167
    %9281 = vmatpush.msra.mxu0 %v9166
    %9282 = vmatpush.msra.mxu0 %v9165
    %9283 = vmatpush.msra.mxu0 %v9164
    %9284 = vmatpush.msra.mxu0 %v9163
    %9285 = vmatpush.msra.mxu0 %v9162
    %9286 = vmatpush.msra.mxu0 %v9161
    %9287 = vmatpush.msra.mxu0 %v9160
    %9288 = vmatpush.msra.mxu0 %v9159
    %9289 = vmatpush.msra.mxu0 %v9158
    %9290 = vmatpush.msra.mxu0 %v9157
    %9291 = vmatmul.f32.gmra.mxu0 %v9268
    %v9292 = vpop.f32.mrf.mxu0
    %v9293 = vadd.f32 0.0, %v9292
    %9294 = vdwg.mxu0
    %9295 = vmatpush.msra.mxu0 %v9188
    %9296 = vmatpush.msra.mxu0 %v9187
    %9297 = vmatpush.msra.mxu0 %v9186
    %9298 = vmatpush.msra.mxu0 %v9185
    %9299 = vmatpush.msra.mxu0 %v9184
    %9300 = vmatpush.msra.mxu0 %v9183
    %9301 = vmatpush.msra.mxu0 %v9182
    %9302 = vmatpush.msra.mxu0 %v9181
    %9303 = vmatpush.msra.mxu0 %v9180
    %9304 = vmatpush.msra.mxu0 %v9179
    %9305 = vmatpush.msra.mxu0 %v9178
    %9306 = vmatpush.msra.mxu0 %v9177
    %9307 = vmatpush.msra.mxu0 %v9176
    %9308 = vmatpush.msra.mxu0 %v9175
    %9309 = vmatpush.msra.mxu0 %v9174
    %9310 = vmatpush.msra.mxu0 %v9173
    %9311 = vmatmul.f32.gmra.mxu0 %v9269
    %v9312 = vpop.f32.mrf.mxu0
    %v9313 = vadd.f32 %v9293, %v9312
    %9314 = vdwg.mxu0
    %9315 = vmatpush.msra.mxu0 0.0
    %9316 = vmatpush.msra.mxu0 0.0
    %9317 = vmatpush.msra.mxu0 0.0
    %9318 = vmatpush.msra.mxu0 0.0
    %9319 = vmatpush.msra.mxu0 0.0
    %9320 = vmatpush.msra.mxu0 0.0
    %9321 = vmatpush.msra.mxu0 0.0
    %9322 = vmatpush.msra.mxu0 0.0
    %9323 = vmatpush.msra.mxu0 %v9205
    %9324 = vmatpush.msra.mxu0 %v9195
    %9325 = vmatpush.msra.mxu0 %v9194
    %9326 = vmatpush.msra.mxu0 %v9193
    %9327 = vmatpush.msra.mxu0 %v9192
    %9328 = vmatpush.msra.mxu0 %v9191
    %9329 = vmatpush.msra.mxu0 %v9190
    %9330 = vmatpush.msra.mxu0 %v9189
    %9331 = vmatmul.f32.gmra.mxu0 %v9273
    %v9332 = vpop.f32.mrf.mxu0
    %v9333 = vadd.f32 %v9313, %v9332
    %9334 = vdwg.mxu0
    %v9335 = vadd.f32 %v9155, %v9333
    %s9336 = scalar_lea.vmem %s5, 1280
    %v9337 = vld [vmem:[%s9336] sm:$0xff]
    %v9338 = vld [vmem:[%s9336 + $0x8] sm:$0xff]
    %v9339 = vld [vmem:[%s9336 + $0x10] sm:$0xff]
    %v9340 = vld [vmem:[%s9336 + $0x18] sm:$0xff]
    %v9341 = vld [vmem:[%s9336 + $0x20] sm:$0xff]
    %v9342 = vld [vmem:[%s9336 + $0x28] sm:$0xff]
    %v9343 = vld [vmem:[%s9336 + $0x30] sm:$0xff]
    %v9344 = vld [vmem:[%s9336 + $0x38] sm:$0xff]
    %v9345 = vld [vmem:[%s9336 + $0x40] sm:$0xff]
    %v9346 = vld [vmem:[%s9336 + $0x48] sm:$0xff]
    %v9347 = vld [vmem:[%s9336 + $0x50] sm:$0xff]
    %v9348 = vld [vmem:[%s9336 + $0x58] sm:$0xff]
    %v9349 = vld [vmem:[%s9336 + $0x60] sm:$0xff]
    %v9350 = vld [vmem:[%s9336 + $0x68] sm:$0xff]
    %v9351 = vld [vmem:[%s9336 + $0x70] sm:$0xff]
    %v9352 = vld [vmem:[%s9336 + $0x78] sm:$0xff]
    %v9353 = vld [vmem:[%s9336 + $0x80] sm:$0xff]
    %v9354 = vld [vmem:[%s9336 + $0x88] sm:$0xff]
    %v9355 = vld [vmem:[%s9336 + $0x90] sm:$0xff]
    %v9356 = vld [vmem:[%s9336 + $0x98] sm:$0xff]
    %v9357 = vld [vmem:[%s9336 + $0xa0] sm:$0xff]
    %v9358 = vld [vmem:[%s9336 + $0xa8] sm:$0xff]
    %v9359 = vld [vmem:[%s9336 + $0xb0] sm:$0xff]
    %v9360 = vld [vmem:[%s9336 + $0xb8] sm:$0xff]
    %v9361 = vld [vmem:[%s9336 + $0xc0] sm:$0xff]
    %v9362 = vld [vmem:[%s9336 + $0xc8] sm:$0xff]
    %v9363 = vld [vmem:[%s9336 + $0xd0] sm:$0xff]
    %v9364 = vld [vmem:[%s9336 + $0xd8] sm:$0xff]
    %v9365 = vld [vmem:[%s9336 + $0xe0] sm:$0xff]
    %v9366 = vld [vmem:[%s9336 + $0xe8] sm:$0xff]
    %v9367 = vld [vmem:[%s9336 + $0xf0] sm:$0xff]
    %v9368 = vld [vmem:[%s9336 + $0xf8] sm:$0xff]
    %v9369 = vld [vmem:[%s9336 + $0x100] sm:$0xff]
    %v9370 = vld [vmem:[%s9336 + $0x108] sm:$0xff]
    %v9371 = vld [vmem:[%s9336 + $0x110] sm:$0xff]
    %v9372 = vld [vmem:[%s9336 + $0x118] sm:$0xff]
    %v9373 = vld [vmem:[%s9336 + $0x120] sm:$0xff]
    %v9374 = vld [vmem:[%s9336 + $0x128] sm:$0xff]
    %v9375 = vld [vmem:[%s9336 + $0x130] sm:$0xff]
    %v9376 = vld [vmem:[%s9336 + $0x138] sm:$0x7]
    %v9377 = vrot.slane %v8490, 4
    %v9378 = vrot.slane %v8491, 4
    %v9379 = vrot.slane %v8492, 4
    %v9382 = vsel %vm1971, %v9379, 0
    %v9385 = vsel %vm1109, %v9376, 0
    %9387 = vmatpush.msra.mxu0 %v9352
    %9388 = vmatpush.msra.mxu0 %v9351
    %9389 = vmatpush.msra.mxu0 %v9350
    %9390 = vmatpush.msra.mxu0 %v9349
    %9391 = vmatpush.msra.mxu0 %v9348
    %9392 = vmatpush.msra.mxu0 %v9347
    %9393 = vmatpush.msra.mxu0 %v9346
    %9394 = vmatpush.msra.mxu0 %v9345
    %9395 = vmatpush.msra.mxu0 %v9344
    %9396 = vmatpush.msra.mxu0 %v9343
    %9397 = vmatpush.msra.mxu0 %v9342
    %9398 = vmatpush.msra.mxu0 %v9341
    %9399 = vmatpush.msra.mxu0 %v9340
    %9400 = vmatpush.msra.mxu0 %v9339
    %9401 = vmatpush.msra.mxu0 %v9338
    %9402 = vmatpush.msra.mxu0 %v9337
    %9403 = vmatmul.f32.gmra.mxu0 %v9377
    %v9404 = vpop.f32.mrf.mxu0
    %v9405 = vadd.f32 0.0, %v9404
    %9406 = vdwg.mxu0
    %9407 = vmatpush.msra.mxu0 %v9368
    %9408 = vmatpush.msra.mxu0 %v9367
    %9409 = vmatpush.msra.mxu0 %v9366
    %9410 = vmatpush.msra.mxu0 %v9365
    %9411 = vmatpush.msra.mxu0 %v9364
    %9412 = vmatpush.msra.mxu0 %v9363
    %9413 = vmatpush.msra.mxu0 %v9362
    %9414 = vmatpush.msra.mxu0 %v9361
    %9415 = vmatpush.msra.mxu0 %v9360
    %9416 = vmatpush.msra.mxu0 %v9359
    %9417 = vmatpush.msra.mxu0 %v9358
    %9418 = vmatpush.msra.mxu0 %v9357
    %9419 = vmatpush.msra.mxu0 %v9356
    %9420 = vmatpush.msra.mxu0 %v9355
    %9421 = vmatpush.msra.mxu0 %v9354
    %9422 = vmatpush.msra.mxu0 %v9353
    %9423 = vmatmul.f32.gmra.mxu0 %v9378
    %v9424 = vpop.f32.mrf.mxu0
    %v9425 = vadd.f32 %v9405, %v9424
    %9426 = vdwg.mxu0
    %9427 = vmatpush.msra.mxu0 0.0
    %9428 = vmatpush.msra.mxu0 0.0
    %9429 = vmatpush.msra.mxu0 0.0
    %9430 = vmatpush.msra.mxu0 0.0
    %9431 = vmatpush.msra.mxu0 0.0
    %9432 = vmatpush.msra.mxu0 0.0
    %9433 = vmatpush.msra.mxu0 0.0
    %9434 = vmatpush.msra.mxu0 0.0
    %9435 = vmatpush.msra.mxu0 %v9385
    %9436 = vmatpush.msra.mxu0 %v9375
    %9437 = vmatpush.msra.mxu0 %v9374
    %9438 = vmatpush.msra.mxu0 %v9373
    %9439 = vmatpush.msra.mxu0 %v9372
    %9440 = vmatpush.msra.mxu0 %v9371
    %9441 = vmatpush.msra.mxu0 %v9370
    %9442 = vmatpush.msra.mxu0 %v9369
    %9443 = vmatmul.f32.gmra.mxu0 %v9382
    %v9444 = vpop.f32.mrf.mxu0
    %v9445 = vadd.f32 %v9425, %v9444
    %9446 = vdwg.mxu0
    %v9447 = vadd.f32 %v9267, %v9445
    %v9448 = vrot.slane %v8622, 4
    %v9449 = vrot.slane %v8623, 4
    %v9450 = vrot.slane %v8624, 4
    %v9453 = vsel %vm1971, %v9450, 0
    %9455 = vmatpush.msra.mxu0 %v9352
    %9456 = vmatpush.msra.mxu0 %v9351
    %9457 = vmatpush.msra.mxu0 %v9350
    %9458 = vmatpush.msra.mxu0 %v9349
    %9459 = vmatpush.msra.mxu0 %v9348
    %9460 = vmatpush.msra.mxu0 %v9347
    %9461 = vmatpush.msra.mxu0 %v9346
    %9462 = vmatpush.msra.mxu0 %v9345
    %9463 = vmatpush.msra.mxu0 %v9344
    %9464 = vmatpush.msra.mxu0 %v9343
    %9465 = vmatpush.msra.mxu0 %v9342
    %9466 = vmatpush.msra.mxu0 %v9341
    %9467 = vmatpush.msra.mxu0 %v9340
    %9468 = vmatpush.msra.mxu0 %v9339
    %9469 = vmatpush.msra.mxu0 %v9338
    %9470 = vmatpush.msra.mxu0 %v9337
    %9471 = vmatmul.f32.gmra.mxu0 %v9448
    %v9472 = vpop.f32.mrf.mxu0
    %v9473 = vadd.f32 0.0, %v9472
    %9474 = vdwg.mxu0
    %9475 = vmatpush.msra.mxu0 %v9368
    %9476 = vmatpush.msra.mxu0 %v9367
    %9477 = vmatpush.msra.mxu0 %v9366
    %9478 = vmatpush.msra.mxu0 %v9365
    %9479 = vmatpush.msra.mxu0 %v9364
    %9480 = vmatpush.msra.mxu0 %v9363
    %9481 = vmatpush.msra.mxu0 %v9362
    %9482 = vmatpush.msra.mxu0 %v9361
    %9483 = vmatpush.msra.mxu0 %v9360
    %9484 = vmatpush.msra.mxu0 %v9359
    %9485 = vmatpush.msra.mxu0 %v9358
    %9486 = vmatpush.msra.mxu0 %v9357
    %9487 = vmatpush.msra.mxu0 %v9356
    %9488 = vmatpush.msra.mxu0 %v9355
    %9489 = vmatpush.msra.mxu0 %v9354
    %9490 = vmatpush.msra.mxu0 %v9353
    %9491 = vmatmul.f32.gmra.mxu0 %v9449
    %v9492 = vpop.f32.mrf.mxu0
    %v9493 = vadd.f32 %v9473, %v9492
    %9494 = vdwg.mxu0
    %9495 = vmatpush.msra.mxu0 0.0
    %9496 = vmatpush.msra.mxu0 0.0
    %9497 = vmatpush.msra.mxu0 0.0
    %9498 = vmatpush.msra.mxu0 0.0
    %9499 = vmatpush.msra.mxu0 0.0
    %9500 = vmatpush.msra.mxu0 0.0
    %9501 = vmatpush.msra.mxu0 0.0
    %9502 = vmatpush.msra.mxu0 0.0
    %9503 = vmatpush.msra.mxu0 %v9385
    %9504 = vmatpush.msra.mxu0 %v9375
    %9505 = vmatpush.msra.mxu0 %v9374
    %9506 = vmatpush.msra.mxu0 %v9373
    %9507 = vmatpush.msra.mxu0 %v9372
    %9508 = vmatpush.msra.mxu0 %v9371
    %9509 = vmatpush.msra.mxu0 %v9370
    %9510 = vmatpush.msra.mxu0 %v9369
    %9511 = vmatmul.f32.gmra.mxu0 %v9453
    %v9512 = vpop.f32.mrf.mxu0
    %v9513 = vadd.f32 %v9493, %v9512
    %9514 = vdwg.mxu0
    %v9515 = vadd.f32 %v9335, %v9513
    %v9516 = vld [vmem:[%s6] sm:$0x1]
    %v9517 = vadd.f32 %v9447, %v9516
    %v9518 = vadd.f32 %v9515, %v9516
    %vm9519 = vcmask 73728
    %v9520 = vsel %vm9519, %v9517, -inf
    %9521 = vmax.xlane.f32.xlu0 %v9520
    %v9522 = vpop.xlane.xlu0 %9521
    %v9523 = vsub.f32 %v9517, %v9522
    %v9524 = vmul.f32 %v9523, 1.442695
    %v9525 = vpow.pop %v9524
    %v9526 = vsel %vm9519, %v9525, 0.0
    %9527 = vadd.xlane.f32.xlu0 %v9526
    %v9528 = vpop.xlane.xlu0 %9527
    %v9529 = vlog2.pop %v9528
    %v9530 = vmul.f32 %v9529, 0.6931472
    %v9531 = vsub.f32 %v9523, %v9530
    %9532 = vst.msk [vmem:[#allocation2] sm:$0x1] %vm9519, %v9531
    %v9533 = vsel %vm9519, %v9518, -inf
    %9534 = vmax.xlane.f32.xlu0 %v9533
    %v9535 = vpop.xlane.xlu0 %9534
    %v9536 = vsub.f32 %v9518, %v9535
    %v9537 = vmul.f32 %v9536, 1.442695
    %v9538 = vpow.pop %v9537
    %v9539 = vsel %vm9519, %v9538, 0.0
    %9540 = vadd.xlane.f32.xlu0 %v9539
    %v9541 = vpop.xlane.xlu0 %9540
    %v9542 = vlog2.pop %v9541
    %v9543 = vmul.f32 %v9542, 0.6931472
    %v9544 = vsub.f32 %v9536, %v9543
    %9545 = vst.msk [vmem:[#allocation2 + $0x1] sm:$0x1] %vm9519, %v9544
    // Predicated region
    $region30: #{forward.1} parent=1 // pred_check
      _
    $region31: #{forward.1} parent=1 // pred_check_branch
      %9547 = sbr.rel (0) target = $region33
    $region32: #{forward.1} parent=1 // pred_region
      %9549 = vsyncadd [#allocation3], 0
      %s9551 = sshll.u32 [#allocation2], 4
      %s9552 = int_to_ptr.vmem [resolvable:$true] %s9551
      %s9553 = sshll.u32 %s7, 4
      %s9554 = int_to_ptr.hbm [resolvable:$true] %s9553
      %9556 = dma.vmem_to_hbm [thread:$0]  %s9552, 32, %s9554, [#allocation3]
    $region33: #{forward.1} parent=1 // pred_fallthru
      _
    // Predicated region
    $region34: #{forward.1} parent=1 // pred_check
      _
    $region35: #{forward.1} parent=1 // pred_check_branch
      %9558 = sbr.rel (0) target = $region37
    $region36: #{forward.1} parent=1 // pred_region
      %9560 = dma.done [#allocation3], 32
    $region37: #{forward.1} parent=1 // pred_fallthru
      _
    %9561 = vsyncpa [#allocation3], 1

</llo_original>
